<compile_context>
chip_gen: v6e
topology: v6e:2x2x1
jax: 0.10.0
libtpu: 0.0.40
codegen_flags: <defaults>
</compile_context>

<pallas_src>
import jax
import jax.numpy as jnp
import numpy as np
from jax.experimental import pallas as pl
from jax.experimental.pallas import tpu as pltpu


# ------------------------------ Pallas kernel --------------------------------


def _conv3x3_tapcat(xp, w_ref, b_ref, dilation, ho, wo, relu):
    """3x3 conv over a pre-padded activation as a single MXU dot.

    xp:    (ho + 2*d, wo + 2*d, Cin)  value (already staged in VMEM)
    w_ref: (9*Cin, Cout)              HWIO weights reshaped; BN scale (and,
                                      for branch-final convs, the decay 1x1)
                                      already folded in
    b_ref: (1, Cout)                  folded bias
    """
    d = dilation
    taps = [xp[kh * d:kh * d + ho, kw * d:kw * d + wo, :]
            for kh in range(3) for kw in range(3)]
    patches = jnp.concatenate(taps, axis=-1)              # (ho, wo, 9*Cin)
    y = jax.lax.dot_general(
        patches, w_ref[...],
        dimension_numbers=(((2,), (0,)), ((), ())),
        preferred_element_type=jnp.float32)
    y = y + b_ref[...].astype(jnp.float32)
    if relu:
        y = jnp.maximum(y, 0.0)
    return y


def _res_dilation_block_kernel(
        x_ref,
        w11_ref, b11_ref, w12_ref, b12_ref,
        w21_ref, b21_ref, w22_ref, b22_ref, w23_ref, b23_ref,
        wsc_ref, bsc_ref,
        o_ref,
        xpad_ref, h1_ref, h2a_ref, h2b_ref):
    _, H, W, _ = o_ref.shape

    # Stage the input with a 1-px zero halo (both branch-entry convs are d=1).
    xpad_ref[...] = jnp.zeros_like(xpad_ref)
    xpad_ref[1:H + 1, 1:W + 1, :] = x_ref[0].astype(xpad_ref.dtype)
    xpad = xpad_ref[...]

    # ---- left_1: conv3x3(d=1)+BN+ReLU -> conv3x3(d=1)+BN   (decay[:C] folded)
    h1_ref[...] = jnp.zeros_like(h1_ref)
    h1_ref[1:H + 1, 1:W + 1, :] = _conv3x3_tapcat(
        xpad, w11_ref, b11_ref, 1, H, W, relu=True).astype(h1_ref.dtype)
    l1 = _conv3x3_tapcat(h1_ref[...], w12_ref, b12_ref, 1, H, W, relu=False)

    # ---- left_2: conv(d=1)+ReLU -> conv(d=2)+ReLU -> conv(d=5)  (decay[C:] folded)
    h2a_ref[...] = jnp.zeros_like(h2a_ref)
    h2a_ref[2:H + 2, 2:W + 2, :] = _conv3x3_tapcat(
        xpad, w21_ref, b21_ref, 1, H, W, relu=True).astype(h2a_ref.dtype)
    h2b_ref[...] = jnp.zeros_like(h2b_ref)
    h2b_ref[5:H + 5, 5:W + 5, :] = _conv3x3_tapcat(
        h2a_ref[...], w22_ref, b22_ref, 2, H, W, relu=True).astype(h2b_ref.dtype)
    l2 = _conv3x3_tapcat(h2b_ref[...], w23_ref, b23_ref, 5, H, W, relu=False)

    # ---- shortcut: 1x1 projection conv (BN folded into weights / bias)
    sc = jax.lax.dot_general(
        x_ref[0], wsc_ref[...],
        dimension_numbers=(((2,), (0,)), ((), ())),
        preferred_element_type=jnp.float32) + bsc_ref[...].astype(jnp.float32)

    # decay(cat(l1, l2)) + shortcut is already folded into l1 / l2 above.
    o_ref[0] = jnp.maximum(l1 + l2 + sc, 0.0).astype(o_ref.dtype)


# -------------------------------- wrapper -------------------------------------


def res_dilation_block_forward(x_nchw, fp):
    """Fused forward pass.  `fp` is the folded parameter dict (fold_params)."""
    x = jnp.transpose(x_nchw, (0, 2, 3, 1))              # NCHW -> NHWC
    n, h, w, cin = x.shape
    cout = fp['w_sc'].shape[-1]

    vmem = pltpu.MemorySpace.VMEM
    param_spec = pl.BlockSpec(memory_space=vmem)
    in_specs = ([pl.BlockSpec((1, h, w, cin), lambda i: (i, 0, 0, 0))]
                + [param_spec] * 12)
    out_specs = pl.BlockSpec((1, h, w, cout), lambda i: (i, 0, 0, 0))

    out = pl.pallas_call(
        _res_dilation_block_kernel,
        out_shape=jax.ShapeDtypeStruct((n, h, w, cout), x.dtype),
        grid_spec=pltpu.PrefetchScalarGridSpec(
            num_scalar_prefetch=0,
            grid=(n,),
            in_specs=in_specs,
            out_specs=out_specs,
            scratch_shapes=[
                pltpu.VMEM((h + 2, w + 2, cin), jnp.float32),    # x, halo 1
                pltpu.VMEM((h + 2, w + 2, cout), jnp.float32),   # l1 relu, halo 1
                pltpu.VMEM((h + 4, w + 4, cout), jnp.float32),   # l2 relu, halo 2
                pltpu.VMEM((h + 10, w + 10, cout), jnp.float32), # l2 relu, halo 5
            ]),
        compiler_params=pltpu.CompilerParams(
            dimension_semantics=("parallel",),           # megacore over batch
            vmem_limit_bytes=32 * 1024 * 1024),          # tiny tiles; safe on v5e/v6e/v7x
    )(x,
      fp['w11'], fp['b11'], fp['w12'], fp['b12'],
      fp['w21'], fp['b21'], fp['w22'], fp['b22'], fp['w23'], fp['b23'],
      fp['w_sc'], fp['b_sc'])
    return jnp.transpose(out, (0, 3, 1, 2))              # NHWC -> NCHW


# --------------------------- parameter creation --------------------------------


def _fold_bn(key, c, eps=1e-5):
    k1, k2, k3, k4 = jax.random.split(key, 4)
    gamma = 1.0 + 0.1 * jax.random.normal(k1, (c,), jnp.float32)
    beta = 0.1 * jax.random.normal(k2, (c,), jnp.float32)
    mean = 0.1 * jax.random.normal(k3, (c,), jnp.float32)
    var = 0.5 + jnp.abs(jax.random.normal(k4, (c,), jnp.float32))
    scale = gamma / jnp.sqrt(var + eps)
    bias = beta - mean * scale
    return scale, bias


def init_params(key, cin, cout):
    keys = jax.random.split(key, 16)
    s = 0.2
    p = {}
    # left_1: conv3x3 -> BN -> ReLU -> conv3x3 -> BN
    p['l1_w1'] = s * jax.random.normal(keys[0], (3, 3, cin, cout), jnp.float32)
    p['l1_bn1'] = _fold_bn(keys[1], cout)
    p['l1_w2'] = s * jax.random.normal(keys[2], (3, 3, cout, cout), jnp.float32)
    p['l1_bn2'] = _fold_bn(keys[3], cout)
    # left_2: conv3x3 -> BN -> ReLU -> conv3x3(d=2) -> BN -> ReLU -> conv3x3(d=5) -> BN
    p['l2_w1'] = s * jax.random.normal(keys[4], (3, 3, cin, cout), jnp.float32)
    p['l2_bn1'] = _fold_bn(keys[5], cout)
    p['l2_w2'] = s * jax.random.normal(keys[6], (3, 3, cout, cout), jnp.float32)
    p['l2_bn2'] = _fold_bn(keys[7], cout)
    p['l2_w3'] = s * jax.random.normal(keys[8], (3, 3, cout, cout), jnp.float32)
    p['l2_bn3'] = _fold_bn(keys[9], cout)
    # decay: 1x1 conv (2*cout -> cout), stored as (2*cout, cout) matrix
    p['decay_w'] = s * jax.random.normal(keys[10], (2 * cout, cout), jnp.float32)
    # shortcut: 1x1 conv + BN (cin != cout -> projection path)
    p['sc_w'] = s * jax.random.normal(keys[11], (cin, cout), jnp.float32)
    p['sc_bn'] = _fold_bn(keys[12], cout)
    return p


def fold_params(p):
    """Fold BN scales, the decay 1x1 and the shortcut BN into conv weights."""
    cout = p['decay_w'].shape[-1]
    wd1 = p['decay_w'][:cout]                    # decay rows for l1 channels
    wd2 = p['decay_w'][cout:]                    # decay rows for l2 channels

    def fold(w_hwio, bn, post=None):
        scale, bias = bn
        w = w_hwio * scale                       # fold BN scale (per out-chan)
        b = bias
        if post is not None:                     # fold trailing 1x1 conv
            w = jnp.einsum('hwic,co->hwio', w, post)
            b = b @ post
        kh, kw, cin, co = w.shape
        return w.reshape(kh * kw * cin, co), b.reshape(1, co)

    fp = {}
    fp['w11'], fp['b11'] = fold(p['l1_w1'], p['l1_bn1'])
    fp['w12'], fp['b12'] = fold(p['l1_w2'], p['l1_bn2'], wd1)
    fp['w21'], fp['b21'] = fold(p['l2_w1'], p['l2_bn1'])
    fp['w22'], fp['b22'] = fold(p['l2_w2'], p['l2_bn2'])
    fp['w23'], fp['b23'] = fold(p['l2_w3'], p['l2_bn3'], wd2)
    sc_scale, sc_bias = p['sc_bn']
    fp['w_sc'] = p['sc_w'] * sc_scale
    fp['b_sc'] = sc_bias.reshape(1, cout)
    return fp


# ----------------------------- pure-JAX reference ------------------------------


def _ref_conv(x, w, dilation):
    pad = dilation
    return jax.lax.conv_general_dilated(
        x, w, window_strides=(1, 1), padding=((pad, pad), (pad, pad)),
        rhs_dilation=(dilation, dilation),
        dimension_numbers=('NHWC', 'HWIO', 'NHWC'))


def reference_forward(x_nchw, p):
    """Unfused reference (also validates the parameter folding)."""
    cout = p['decay_w'].shape[-1]
    x = jnp.transpose(x_nchw, (0, 2, 3, 1))

    def bn(y, sb):
        return y * sb[0] + sb[1]

    h = jax.nn.relu(bn(_ref_conv(x, p['l1_w1'], 1), p['l1_bn1']))
    l1 = bn(_ref_conv(h, p['l1_w2'], 1), p['l1_bn2'])

    h = jax.nn.relu(bn(_ref_conv(x, p['l2_w1'], 1), p['l2_bn1']))
    h = jax.nn.relu(bn(_ref_conv(h, p['l2_w2'], 2), p['l2_bn2']))
    l2 = bn(_ref_conv(h, p['l2_w3'], 5), p['l2_bn3'])

    sc = bn(jnp.einsum('nhwi,io->nhwo', x, p['sc_w']), p['sc_bn'])
    left = (jnp.einsum('nhwi,io->nhwo', l1, p['decay_w'][:cout]) +
            jnp.einsum('nhwi,io->nhwo', l2, p['decay_w'][cout:]))
    out = jax.nn.relu(left + sc)
    return jnp.transpose(out, (0, 3, 1, 2))


# ----------------------------------- main --------------------------------------


if __name__ == "__main__":
    key = jax.random.PRNGKey(0)
    k_x, k_p = jax.random.split(key)

    N, CIN, COUT, H, W = 2, 4, 8, 16, 16
    x = jax.random.normal(k_x, (N, CIN, H, W), jnp.float32)   # PyTorch NCHW input
    params = init_params(k_p, CIN, COUT)
    fused_params = fold_params(params)

    fwd = jax.jit(res_dilation_block_forward)
    out = jax.block_until_ready(fwd(x, fused_params))
    assert out.shape == (N, COUT, H, W), out.shape

    ref = jax.block_until_ready(reference_forward(x, params))
    np.testing.assert_allclose(np.asarray(out), np.asarray(ref),
                               rtol=1e-4, atol=1e-4)

    print("KERNEL_OK")
</pallas_src>

<mosaic_0001>
module attributes {stable_mosaic.version = 11 : i64} {
  func.func @_res_dilation_block_kernel(%arg0: i32, %arg1: memref<1x16x16x4xf32, #tpu.memory_space<vmem>>, %arg2: memref<36x8xf32, #tpu.memory_space<vmem>>, %arg3: memref<1x8xf32, #tpu.memory_space<vmem>>, %arg4: memref<72x8xf32, #tpu.memory_space<vmem>>, %arg5: memref<1x8xf32, #tpu.memory_space<vmem>>, %arg6: memref<36x8xf32, #tpu.memory_space<vmem>>, %arg7: memref<1x8xf32, #tpu.memory_space<vmem>>, %arg8: memref<72x8xf32, #tpu.memory_space<vmem>>, %arg9: memref<1x8xf32, #tpu.memory_space<vmem>>, %arg10: memref<72x8xf32, #tpu.memory_space<vmem>>, %arg11: memref<1x8xf32, #tpu.memory_space<vmem>>, %arg12: memref<4x8xf32, #tpu.memory_space<vmem>>, %arg13: memref<1x8xf32, #tpu.memory_space<vmem>>, %arg14: memref<1x16x16x8xf32, #tpu.memory_space<vmem>>, %arg15: memref<18x18x4xf32, #tpu.memory_space<vmem>>, %arg16: memref<18x18x8xf32, #tpu.memory_space<vmem>>, %arg17: memref<20x20x8xf32, #tpu.memory_space<vmem>>, %arg18: memref<26x26x8xf32, #tpu.memory_space<vmem>>) attributes {dimension_semantics = [#tpu.dimension_semantics<parallel>], iteration_bounds = array<i64: 2>, scalar_prefetch = 0 : i64, scratch_operands = 4 : i64, tpu.core_type = #tpu.core_type<tc>, window_params = [{transform_indices = @transform_0, window_bounds = array<i64: 1, 16, 16, 4>}, {pipeline_mode = #tpu.pipeline_mode<synchronous>, transform_indices = @transform_1, window_bounds = array<i64: 36, 8>}, {pipeline_mode = #tpu.pipeline_mode<synchronous>, transform_indices = @transform_2, window_bounds = array<i64: 1, 8>}, {pipeline_mode = #tpu.pipeline_mode<synchronous>, transform_indices = @transform_3, window_bounds = array<i64: 72, 8>}, {pipeline_mode = #tpu.pipeline_mode<synchronous>, transform_indices = @transform_4, window_bounds = array<i64: 1, 8>}, {pipeline_mode = #tpu.pipeline_mode<synchronous>, transform_indices = @transform_5, window_bounds = array<i64: 36, 8>}, {pipeline_mode = #tpu.pipeline_mode<synchronous>, transform_indices = @transform_6, window_bounds = array<i64: 1, 8>}, {pipeline_mode = #tpu.pipeline_mode<synchronous>, transform_indices = @transform_7, window_bounds = array<i64: 72, 8>}, {pipeline_mode = #tpu.pipeline_mode<synchronous>, transform_indices = @transform_8, window_bounds = array<i64: 1, 8>}, {pipeline_mode = #tpu.pipeline_mode<synchronous>, transform_indices = @transform_9, window_bounds = array<i64: 72, 8>}, {pipeline_mode = #tpu.pipeline_mode<synchronous>, transform_indices = @transform_10, window_bounds = array<i64: 1, 8>}, {pipeline_mode = #tpu.pipeline_mode<synchronous>, transform_indices = @transform_11, window_bounds = array<i64: 4, 8>}, {pipeline_mode = #tpu.pipeline_mode<synchronous>, transform_indices = @transform_12, window_bounds = array<i64: 1, 8>}, {transform_indices = @transform_13, window_bounds = array<i64: 1, 16, 16, 8>}]} {
    %cst = arith.constant 0.000000e+00 : f32
    %0 = vector.broadcast %cst : f32 to vector<18x18x4xf32>
    %c0 = arith.constant 0 : index
    %c0_0 = arith.constant 0 : index
    %c0_1 = arith.constant 0 : index
    %1 = vector.load %arg15[%c0, %c0_0, %c0_1] : memref<18x18x4xf32, #tpu.memory_space<vmem>>, vector<18x18x4xf32>
    tpu.vector_store %arg15[%c0, %c0_0, %c0_1], %0 {strides = array<i32>} : memref<18x18x4xf32, #tpu.memory_space<vmem>>, vector<18x18x4xf32>,
    %c0_2 = arith.constant 0 : index
    %c0_3 = arith.constant 0 : index
    %c0_4 = arith.constant 0 : index
    %c0_5 = arith.constant 0 : index
    %2 = vector.load %arg1[%c0_2, %c0_3, %c0_4, %c0_5] : memref<1x16x16x4xf32, #tpu.memory_space<vmem>>, vector<1x16x16x4xf32>
    %3 = vector.shape_cast %2 : vector<1x16x16x4xf32> to vector<16x16x4xf32>
    %c1 = arith.constant 1 : index
    %c1_6 = arith.constant 1 : index
    %c0_7 = arith.constant 0 : index
    %4 = vector.load %arg15[%c1, %c1_6, %c0_7] : memref<18x18x4xf32, #tpu.memory_space<vmem>>, vector<16x16x4xf32>
    tpu.vector_store %arg15[%c1, %c1_6, %c0_7], %3 {strides = array<i32>} : memref<18x18x4xf32, #tpu.memory_space<vmem>>, vector<16x16x4xf32>,
    %c0_8 = arith.constant 0 : index
    %c0_9 = arith.constant 0 : index
    %c0_10 = arith.constant 0 : index
    %5 = vector.load %arg15[%c0_8, %c0_9, %c0_10] : memref<18x18x4xf32, #tpu.memory_space<vmem>>, vector<18x18x4xf32>
    %cst_11 = arith.constant 0.000000e+00 : f32
    %6 = vector.broadcast %cst_11 : f32 to vector<18x18x8xf32>
    %c0_12 = arith.constant 0 : index
    %c0_13 = arith.constant 0 : index
    %c0_14 = arith.constant 0 : index
    %7 = vector.load %arg16[%c0_12, %c0_13, %c0_14] : memref<18x18x8xf32, #tpu.memory_space<vmem>>, vector<18x18x8xf32>
    tpu.vector_store %arg16[%c0_12, %c0_13, %c0_14], %6 {strides = array<i32>} : memref<18x18x8xf32, #tpu.memory_space<vmem>>, vector<18x18x8xf32>,
    %8 = vector.extract_strided_slice %5 {offsets = [0, 0, 0], sizes = [16, 16, 4], strides = [1, 1, 1]} : vector<18x18x4xf32> to vector<16x16x4xf32>
    %9 = vector.extract_strided_slice %5 {offsets = [0, 1, 0], sizes = [16, 16, 4], strides = [1, 1, 1]} : vector<18x18x4xf32> to vector<16x16x4xf32>
    %10 = vector.extract_strided_slice %5 {offsets = [0, 2, 0], sizes = [16, 16, 4], strides = [1, 1, 1]} : vector<18x18x4xf32> to vector<16x16x4xf32>
    %11 = vector.extract_strided_slice %5 {offsets = [1, 0, 0], sizes = [16, 16, 4], strides = [1, 1, 1]} : vector<18x18x4xf32> to vector<16x16x4xf32>
    %12 = vector.extract_strided_slice %5 {offsets = [1, 1, 0], sizes = [16, 16, 4], strides = [1, 1, 1]} : vector<18x18x4xf32> to vector<16x16x4xf32>
    %13 = vector.extract_strided_slice %5 {offsets = [1, 2, 0], sizes = [16, 16, 4], strides = [1, 1, 1]} : vector<18x18x4xf32> to vector<16x16x4xf32>
    %14 = vector.extract_strided_slice %5 {offsets = [2, 0, 0], sizes = [16, 16, 4], strides = [1, 1, 1]} : vector<18x18x4xf32> to vector<16x16x4xf32>
    %15 = vector.extract_strided_slice %5 {offsets = [2, 1, 0], sizes = [16, 16, 4], strides = [1, 1, 1]} : vector<18x18x4xf32> to vector<16x16x4xf32>
    %16 = vector.extract_strided_slice %5 {offsets = [2, 2, 0], sizes = [16, 16, 4], strides = [1, 1, 1]} : vector<18x18x4xf32> to vector<16x16x4xf32>
    %17 = tpu.concatenate %8, %9, %10, %11, %12, %13, %14, %15, %16 in 2 : vector<16x16x4xf32>, vector<16x16x4xf32>, vector<16x16x4xf32>, vector<16x16x4xf32>, vector<16x16x4xf32>, vector<16x16x4xf32>, vector<16x16x4xf32>, vector<16x16x4xf32>, vector<16x16x4xf32> -> vector<16x16x36xf32>
    %c0_15 = arith.constant 0 : index
    %c0_16 = arith.constant 0 : index
    %18 = vector.load %arg2[%c0_15, %c0_16] : memref<36x8xf32, #tpu.memory_space<vmem>>, vector<36x8xf32>
    %cst_17 = arith.constant dense<0.000000e+00> : vector<16x16x8xf32>
    %19 = tpu.matmul %17, %18, %cst_17 {dimension_numbers = #tpu.dot_dimension_numbers<[2], [0], [0, 1], [1], [0, 0, 0, 1, 1, 1], [], []>} : vector<16x16x36xf32>, vector<36x8xf32>, vector<16x16x8xf32> -> vector<16x16x8xf32>
    %c0_18 = arith.constant 0 : index
    %c0_19 = arith.constant 0 : index
    %20 = vector.load %arg3[%c0_18, %c0_19] : memref<1x8xf32, #tpu.memory_space<vmem>>, vector<1x8xf32>
    %21 = vector.shape_cast %20 : vector<1x8xf32> to vector<1x1x8xf32>
    %22 = vector.broadcast %21 : vector<1x1x8xf32> to vector<16x16x8xf32>
    %23 = arith.addf %19, %22 : vector<16x16x8xf32>
    %cst_20 = arith.constant 0.000000e+00 : f32
    %24 = vector.broadcast %cst_20 : f32 to vector<16x16x8xf32>
    %25 = arith.maximumf %23, %24 : vector<16x16x8xf32>
    %c1_21 = arith.constant 1 : index
    %c1_22 = arith.constant 1 : index
    %c0_23 = arith.constant 0 : index
    %26 = vector.load %arg16[%c1_21, %c1_22, %c0_23] : memref<18x18x8xf32, #tpu.memory_space<vmem>>, vector<16x16x8xf32>
    tpu.vector_store %arg16[%c1_21, %c1_22, %c0_23], %25 {strides = array<i32>} : memref<18x18x8xf32, #tpu.memory_space<vmem>>, vector<16x16x8xf32>,
    %c0_24 = arith.constant 0 : index
    %c0_25 = arith.constant 0 : index
    %c0_26 = arith.constant 0 : index
    %27 = vector.load %arg16[%c0_24, %c0_25, %c0_26] : memref<18x18x8xf32, #tpu.memory_space<vmem>>, vector<18x18x8xf32>
    %28 = vector.extract_strided_slice %27 {offsets = [0, 0, 0], sizes = [16, 16, 8], strides = [1, 1, 1]} : vector<18x18x8xf32> to vector<16x16x8xf32>
    %29 = vector.extract_strided_slice %27 {offsets = [0, 1, 0], sizes = [16, 16, 8], strides = [1, 1, 1]} : vector<18x18x8xf32> to vector<16x16x8xf32>
    %30 = vector.extract_strided_slice %27 {offsets = [0, 2, 0], sizes = [16, 16, 8], strides = [1, 1, 1]} : vector<18x18x8xf32> to vector<16x16x8xf32>
    %31 = vector.extract_strided_slice %27 {offsets = [1, 0, 0], sizes = [16, 16, 8], strides = [1, 1, 1]} : vector<18x18x8xf32> to vector<16x16x8xf32>
    %32 = vector.extract_strided_slice %27 {offsets = [1, 1, 0], sizes = [16, 16, 8], strides = [1, 1, 1]} : vector<18x18x8xf32> to vector<16x16x8xf32>
    %33 = vector.extract_strided_slice %27 {offsets = [1, 2, 0], sizes = [16, 16, 8], strides = [1, 1, 1]} : vector<18x18x8xf32> to vector<16x16x8xf32>
    %34 = vector.extract_strided_slice %27 {offsets = [2, 0, 0], sizes = [16, 16, 8], strides = [1, 1, 1]} : vector<18x18x8xf32> to vector<16x16x8xf32>
    %35 = vector.extract_strided_slice %27 {offsets = [2, 1, 0], sizes = [16, 16, 8], strides = [1, 1, 1]} : vector<18x18x8xf32> to vector<16x16x8xf32>
    %36 = vector.extract_strided_slice %27 {offsets = [2, 2, 0], sizes = [16, 16, 8], strides = [1, 1, 1]} : vector<18x18x8xf32> to vector<16x16x8xf32>
    %37 = tpu.concatenate %28, %29, %30, %31, %32, %33, %34, %35, %36 in 2 : vector<16x16x8xf32>, vector<16x16x8xf32>, vector<16x16x8xf32>, vector<16x16x8xf32>, vector<16x16x8xf32>, vector<16x16x8xf32>, vector<16x16x8xf32>, vector<16x16x8xf32>, vector<16x16x8xf32> -> vector<16x16x72xf32>
    %c0_27 = arith.constant 0 : index
    %c0_28 = arith.constant 0 : index
    %38 = vector.load %arg4[%c0_27, %c0_28] : memref<72x8xf32, #tpu.memory_space<vmem>>, vector<72x8xf32>
    %cst_29 = arith.constant dense<0.000000e+00> : vector<16x16x8xf32>
    %39 = tpu.matmul %37, %38, %cst_29 {dimension_numbers = #tpu.dot_dimension_numbers<[2], [0], [0, 1], [1], [0, 0, 0, 1, 1, 1], [], []>} : vector<16x16x72xf32>, vector<72x8xf32>, vector<16x16x8xf32> -> vector<16x16x8xf32>
    %c0_30 = arith.constant 0 : index
    %c0_31 = arith.constant 0 : index
    %40 = vector.load %arg5[%c0_30, %c0_31] : memref<1x8xf32, #tpu.memory_space<vmem>>, vector<1x8xf32>
    %41 = vector.shape_cast %40 : vector<1x8xf32> to vector<1x1x8xf32>
    %42 = vector.broadcast %41 : vector<1x1x8xf32> to vector<16x16x8xf32>
    %43 = arith.addf %39, %42 : vector<16x16x8xf32>
    %cst_32 = arith.constant 0.000000e+00 : f32
    %44 = vector.broadcast %cst_32 : f32 to vector<20x20x8xf32>
    %c0_33 = arith.constant 0 : index
    %c0_34 = arith.constant 0 : index
    %c0_35 = arith.constant 0 : index
    %45 = vector.load %arg17[%c0_33, %c0_34, %c0_35] : memref<20x20x8xf32, #tpu.memory_space<vmem>>, vector<20x20x8xf32>
    tpu.vector_store %arg17[%c0_33, %c0_34, %c0_35], %44 {strides = array<i32>} : memref<20x20x8xf32, #tpu.memory_space<vmem>>, vector<20x20x8xf32>,
    %46 = vector.extract_strided_slice %5 {offsets = [0, 0, 0], sizes = [16, 16, 4], strides = [1, 1, 1]} : vector<18x18x4xf32> to vector<16x16x4xf32>
    %47 = vector.extract_strided_slice %5 {offsets = [0, 1, 0], sizes = [16, 16, 4], strides = [1, 1, 1]} : vector<18x18x4xf32> to vector<16x16x4xf32>
    %48 = vector.extract_strided_slice %5 {offsets = [0, 2, 0], sizes = [16, 16, 4], strides = [1, 1, 1]} : vector<18x18x4xf32> to vector<16x16x4xf32>
    %49 = vector.extract_strided_slice %5 {offsets = [1, 0, 0], sizes = [16, 16, 4], strides = [1, 1, 1]} : vector<18x18x4xf32> to vector<16x16x4xf32>
    %50 = vector.extract_strided_slice %5 {offsets = [1, 1, 0], sizes = [16, 16, 4], strides = [1, 1, 1]} : vector<18x18x4xf32> to vector<16x16x4xf32>
    %51 = vector.extract_strided_slice %5 {offsets = [1, 2, 0], sizes = [16, 16, 4], strides = [1, 1, 1]} : vector<18x18x4xf32> to vector<16x16x4xf32>
    %52 = vector.extract_strided_slice %5 {offsets = [2, 0, 0], sizes = [16, 16, 4], strides = [1, 1, 1]} : vector<18x18x4xf32> to vector<16x16x4xf32>
    %53 = vector.extract_strided_slice %5 {offsets = [2, 1, 0], sizes = [16, 16, 4], strides = [1, 1, 1]} : vector<18x18x4xf32> to vector<16x16x4xf32>
    %54 = vector.extract_strided_slice %5 {offsets = [2, 2, 0], sizes = [16, 16, 4], strides = [1, 1, 1]} : vector<18x18x4xf32> to vector<16x16x4xf32>
    %55 = tpu.concatenate %46, %47, %48, %49, %50, %51, %52, %53, %54 in 2 : vector<16x16x4xf32>, vector<16x16x4xf32>, vector<16x16x4xf32>, vector<16x16x4xf32>, vector<16x16x4xf32>, vector<16x16x4xf32>, vector<16x16x4xf32>, vector<16x16x4xf32>, vector<16x16x4xf32> -> vector<16x16x36xf32>
    %c0_36 = arith.constant 0 : index
    %c0_37 = arith.constant 0 : index
    %56 = vector.load %arg6[%c0_36, %c0_37] : memref<36x8xf32, #tpu.memory_space<vmem>>, vector<36x8xf32>
    %cst_38 = arith.constant dense<0.000000e+00> : vector<16x16x8xf32>
    %57 = tpu.matmul %55, %56, %cst_38 {dimension_numbers = #tpu.dot_dimension_numbers<[2], [0], [0, 1], [1], [0, 0, 0, 1, 1, 1], [], []>} : vector<16x16x36xf32>, vector<36x8xf32>, vector<16x16x8xf32> -> vector<16x16x8xf32>
    %c0_39 = arith.constant 0 : index
    %c0_40 = arith.constant 0 : index
    %58 = vector.load %arg7[%c0_39, %c0_40] : memref<1x8xf32, #tpu.memory_space<vmem>>, vector<1x8xf32>
    %59 = vector.shape_cast %58 : vector<1x8xf32> to vector<1x1x8xf32>
    %60 = vector.broadcast %59 : vector<1x1x8xf32> to vector<16x16x8xf32>
    %61 = arith.addf %57, %60 : vector<16x16x8xf32>
    %cst_41 = arith.constant 0.000000e+00 : f32
    %62 = vector.broadcast %cst_41 : f32 to vector<16x16x8xf32>
    %63 = arith.maximumf %61, %62 : vector<16x16x8xf32>
    %c2 = arith.constant 2 : index
    %c2_42 = arith.constant 2 : index
    %c0_43 = arith.constant 0 : index
    %64 = vector.load %arg17[%c2, %c2_42, %c0_43] : memref<20x20x8xf32, #tpu.memory_space<vmem>>, vector<16x16x8xf32>
    tpu.vector_store %arg17[%c2, %c2_42, %c0_43], %63 {strides = array<i32>} : memref<20x20x8xf32, #tpu.memory_space<vmem>>, vector<16x16x8xf32>,
    %cst_44 = arith.constant 0.000000e+00 : f32
    %65 = vector.broadcast %cst_44 : f32 to vector<26x26x8xf32>
    %c0_45 = arith.constant 0 : index
    %c0_46 = arith.constant 0 : index
    %c0_47 = arith.constant 0 : index
    %66 = vector.load %arg18[%c0_45, %c0_46, %c0_47] : memref<26x26x8xf32, #tpu.memory_space<vmem>>, vector<26x26x8xf32>
    tpu.vector_store %arg18[%c0_45, %c0_46, %c0_47], %65 {strides = array<i32>} : memref<26x26x8xf32, #tpu.memory_space<vmem>>, vector<26x26x8xf32>,
    %c0_48 = arith.constant 0 : index
    %c0_49 = arith.constant 0 : index
    %c0_50 = arith.constant 0 : index
    %67 = vector.load %arg17[%c0_48, %c0_49, %c0_50] : memref<20x20x8xf32, #tpu.memory_space<vmem>>, vector<20x20x8xf32>
    %68 = vector.extract_strided_slice %67 {offsets = [0, 0, 0], sizes = [16, 16, 8], strides = [1, 1, 1]} : vector<20x20x8xf32> to vector<16x16x8xf32>
    %69 = vector.extract_strided_slice %67 {offsets = [0, 2, 0], sizes = [16, 16, 8], strides = [1, 1, 1]} : vector<20x20x8xf32> to vector<16x16x8xf32>
    %70 = vector.extract_strided_slice %67 {offsets = [0, 4, 0], sizes = [16, 16, 8], strides = [1, 1, 1]} : vector<20x20x8xf32> to vector<16x16x8xf32>
    %71 = vector.extract_strided_slice %67 {offsets = [2, 0, 0], sizes = [16, 16, 8], strides = [1, 1, 1]} : vector<20x20x8xf32> to vector<16x16x8xf32>
    %72 = vector.extract_strided_slice %67 {offsets = [2, 2, 0], sizes = [16, 16, 8], strides = [1, 1, 1]} : vector<20x20x8xf32> to vector<16x16x8xf32>
    %73 = vector.extract_strided_slice %67 {offsets = [2, 4, 0], sizes = [16, 16, 8], strides = [1, 1, 1]} : vector<20x20x8xf32> to vector<16x16x8xf32>
    %74 = vector.extract_strided_slice %67 {offsets = [4, 0, 0], sizes = [16, 16, 8], strides = [1, 1, 1]} : vector<20x20x8xf32> to vector<16x16x8xf32>
    %75 = vector.extract_strided_slice %67 {offsets = [4, 2, 0], sizes = [16, 16, 8], strides = [1, 1, 1]} : vector<20x20x8xf32> to vector<16x16x8xf32>
    %76 = vector.extract_strided_slice %67 {offsets = [4, 4, 0], sizes = [16, 16, 8], strides = [1, 1, 1]} : vector<20x20x8xf32> to vector<16x16x8xf32>
    %77 = tpu.concatenate %68, %69, %70, %71, %72, %73, %74, %75, %76 in 2 : vector<16x16x8xf32>, vector<16x16x8xf32>, vector<16x16x8xf32>, vector<16x16x8xf32>, vector<16x16x8xf32>, vector<16x16x8xf32>, vector<16x16x8xf32>, vector<16x16x8xf32>, vector<16x16x8xf32> -> vector<16x16x72xf32>
    %c0_51 = arith.constant 0 : index
    %c0_52 = arith.constant 0 : index
    %78 = vector.load %arg8[%c0_51, %c0_52] : memref<72x8xf32, #tpu.memory_space<vmem>>, vector<72x8xf32>
    %cst_53 = arith.constant dense<0.000000e+00> : vector<16x16x8xf32>
    %79 = tpu.matmul %77, %78, %cst_53 {dimension_numbers = #tpu.dot_dimension_numbers<[2], [0], [0, 1], [1], [0, 0, 0, 1, 1, 1], [], []>} : vector<16x16x72xf32>, vector<72x8xf32>, vector<16x16x8xf32> -> vector<16x16x8xf32>
    %c0_54 = arith.constant 0 : index
    %c0_55 = arith.constant 0 : index
    %80 = vector.load %arg9[%c0_54, %c0_55] : memref<1x8xf32, #tpu.memory_space<vmem>>, vector<1x8xf32>
    %81 = vector.shape_cast %80 : vector<1x8xf32> to vector<1x1x8xf32>
    %82 = vector.broadcast %81 : vector<1x1x8xf32> to vector<16x16x8xf32>
    %83 = arith.addf %79, %82 : vector<16x16x8xf32>
    %cst_56 = arith.constant 0.000000e+00 : f32
    %84 = vector.broadcast %cst_56 : f32 to vector<16x16x8xf32>
    %85 = arith.maximumf %83, %84 : vector<16x16x8xf32>
    %c5 = arith.constant 5 : index
    %c5_57 = arith.constant 5 : index
    %c0_58 = arith.constant 0 : index
    %86 = vector.load %arg18[%c5, %c5_57, %c0_58] : memref<26x26x8xf32, #tpu.memory_space<vmem>>, vector<16x16x8xf32>
    tpu.vector_store %arg18[%c5, %c5_57, %c0_58], %85 {strides = array<i32>} : memref<26x26x8xf32, #tpu.memory_space<vmem>>, vector<16x16x8xf32>,
    %c0_59 = arith.constant 0 : index
    %c0_60 = arith.constant 0 : index
    %c0_61 = arith.constant 0 : index
    %87 = vector.load %arg18[%c0_59, %c0_60, %c0_61] : memref<26x26x8xf32, #tpu.memory_space<vmem>>, vector<26x26x8xf32>
    %88 = vector.extract_strided_slice %87 {offsets = [0, 0, 0], sizes = [16, 16, 8], strides = [1, 1, 1]} : vector<26x26x8xf32> to vector<16x16x8xf32>
    %89 = vector.extract_strided_slice %87 {offsets = [0, 5, 0], sizes = [16, 16, 8], strides = [1, 1, 1]} : vector<26x26x8xf32> to vector<16x16x8xf32>
    %90 = vector.extract_strided_slice %87 {offsets = [0, 10, 0], sizes = [16, 16, 8], strides = [1, 1, 1]} : vector<26x26x8xf32> to vector<16x16x8xf32>
    %91 = vector.extract_strided_slice %87 {offsets = [5, 0, 0], sizes = [16, 16, 8], strides = [1, 1, 1]} : vector<26x26x8xf32> to vector<16x16x8xf32>
    %92 = vector.extract_strided_slice %87 {offsets = [5, 5, 0], sizes = [16, 16, 8], strides = [1, 1, 1]} : vector<26x26x8xf32> to vector<16x16x8xf32>
    %93 = vector.extract_strided_slice %87 {offsets = [5, 10, 0], sizes = [16, 16, 8], strides = [1, 1, 1]} : vector<26x26x8xf32> to vector<16x16x8xf32>
    %94 = vector.extract_strided_slice %87 {offsets = [10, 0, 0], sizes = [16, 16, 8], strides = [1, 1, 1]} : vector<26x26x8xf32> to vector<16x16x8xf32>
    %95 = vector.extract_strided_slice %87 {offsets = [10, 5, 0], sizes = [16, 16, 8], strides = [1, 1, 1]} : vector<26x26x8xf32> to vector<16x16x8xf32>
    %96 = vector.extract_strided_slice %87 {offsets = [10, 10, 0], sizes = [16, 16, 8], strides = [1, 1, 1]} : vector<26x26x8xf32> to vector<16x16x8xf32>
    %97 = tpu.concatenate %88, %89, %90, %91, %92, %93, %94, %95, %96 in 2 : vector<16x16x8xf32>, vector<16x16x8xf32>, vector<16x16x8xf32>, vector<16x16x8xf32>, vector<16x16x8xf32>, vector<16x16x8xf32>, vector<16x16x8xf32>, vector<16x16x8xf32>, vector<16x16x8xf32> -> vector<16x16x72xf32>
    %c0_62 = arith.constant 0 : index
    %c0_63 = arith.constant 0 : index
    %98 = vector.load %arg10[%c0_62, %c0_63] : memref<72x8xf32, #tpu.memory_space<vmem>>, vector<72x8xf32>
    %cst_64 = arith.constant dense<0.000000e+00> : vector<16x16x8xf32>
    %99 = tpu.matmul %97, %98, %cst_64 {dimension_numbers = #tpu.dot_dimension_numbers<[2], [0], [0, 1], [1], [0, 0, 0, 1, 1, 1], [], []>} : vector<16x16x72xf32>, vector<72x8xf32>, vector<16x16x8xf32> -> vector<16x16x8xf32>
    %c0_65 = arith.constant 0 : index
    %c0_66 = arith.constant 0 : index
    %100 = vector.load %arg11[%c0_65, %c0_66] : memref<1x8xf32, #tpu.memory_space<vmem>>, vector<1x8xf32>
    %101 = vector.shape_cast %100 : vector<1x8xf32> to vector<1x1x8xf32>
    %102 = vector.broadcast %101 : vector<1x1x8xf32> to vector<16x16x8xf32>
    %103 = arith.addf %99, %102 : vector<16x16x8xf32>
    %c0_67 = arith.constant 0 : index
    %c0_68 = arith.constant 0 : index
    %c0_69 = arith.constant 0 : index
    %c0_70 = arith.constant 0 : index
    %104 = vector.load %arg1[%c0_67, %c0_68, %c0_69, %c0_70] : memref<1x16x16x4xf32, #tpu.memory_space<vmem>>, vector<1x16x16x4xf32>
    %105 = vector.shape_cast %104 : vector<1x16x16x4xf32> to vector<16x16x4xf32>
    %c0_71 = arith.constant 0 : index
    %c0_72 = arith.constant 0 : index
    %106 = vector.load %arg12[%c0_71, %c0_72] : memref<4x8xf32, #tpu.memory_space<vmem>>, vector<4x8xf32>
    %cst_73 = arith.constant dense<0.000000e+00> : vector<16x16x8xf32>
    %107 = tpu.matmul %105, %106, %cst_73 {dimension_numbers = #tpu.dot_dimension_numbers<[2], [0], [0, 1], [1], [0, 0, 0, 1, 1, 1], [], []>} : vector<16x16x4xf32>, vector<4x8xf32>, vector<16x16x8xf32> -> vector<16x16x8xf32>
    %c0_74 = arith.constant 0 : index
    %c0_75 = arith.constant 0 : index
    %108 = vector.load %arg13[%c0_74, %c0_75] : memref<1x8xf32, #tpu.memory_space<vmem>>, vector<1x8xf32>
    %109 = vector.shape_cast %108 : vector<1x8xf32> to vector<1x1x8xf32>
    %110 = vector.broadcast %109 : vector<1x1x8xf32> to vector<16x16x8xf32>
    %111 = arith.addf %107, %110 : vector<16x16x8xf32>
    %112 = arith.addf %43, %103 : vector<16x16x8xf32>
    %113 = arith.addf %112, %111 : vector<16x16x8xf32>
    %cst_76 = arith.constant 0.000000e+00 : f32
    %114 = vector.broadcast %cst_76 : f32 to vector<16x16x8xf32>
    %115 = arith.maximumf %113, %114 : vector<16x16x8xf32>
    %c0_77 = arith.constant 0 : index
    %c0_78 = arith.constant 0 : index
    %c0_79 = arith.constant 0 : index
    %c0_80 = arith.constant 0 : index
    %116 = vector.load %arg14[%c0_77, %c0_78, %c0_79, %c0_80] : memref<1x16x16x8xf32, #tpu.memory_space<vmem>>, vector<1x16x16x8xf32>
    %117 = vector.shape_cast %116 : vector<1x16x16x8xf32> to vector<16x16x8xf32>
    %118 = vector.shape_cast %115 : vector<16x16x8xf32> to vector<1x16x16x8xf32>
    tpu.vector_store %arg14[%c0_77, %c0_78, %c0_79, %c0_80], %118 {strides = array<i32>} : memref<1x16x16x8xf32, #tpu.memory_space<vmem>>, vector<1x16x16x8xf32>,
    return
  }
  func.func @transform_0(%arg0: i32) -> (i32, i32, i32, i32) {
    %c0_i32 = arith.constant 0 : i32
    %c0_i32_0 = arith.constant 0 : i32
    %c0_i32_1 = arith.constant 0 : i32
    %c0_i32_2 = arith.constant 0 : i32
    return %arg0, %c0_i32, %c0_i32_0, %c0_i32_1 : i32, i32, i32, i32
  }
  func.func @transform_1(%arg0: i32) -> (i32, i32) {
    %c0_i32 = arith.constant 0 : i32
    %c0_i32_0 = arith.constant 0 : i32
    %c0_i32_1 = arith.constant 0 : i32
    return %c0_i32, %c0_i32_0 : i32, i32
  }
  func.func @transform_2(%arg0: i32) -> (i32, i32) {
    %c0_i32 = arith.constant 0 : i32
    %c0_i32_0 = arith.constant 0 : i32
    %c0_i32_1 = arith.constant 0 : i32
    return %c0_i32, %c0_i32_0 : i32, i32
  }
  func.func @transform_3(%arg0: i32) -> (i32, i32) {
    %c0_i32 = arith.constant 0 : i32
    %c0_i32_0 = arith.constant 0 : i32
    %c0_i32_1 = arith.constant 0 : i32
    return %c0_i32, %c0_i32_0 : i32, i32
  }
  func.func @transform_4(%arg0: i32) -> (i32, i32) {
    %c0_i32 = arith.constant 0 : i32
    %c0_i32_0 = arith.constant 0 : i32
    %c0_i32_1 = arith.constant 0 : i32
    return %c0_i32, %c0_i32_0 : i32, i32
  }
  func.func @transform_5(%arg0: i32) -> (i32, i32) {
    %c0_i32 = arith.constant 0 : i32
    %c0_i32_0 = arith.constant 0 : i32
    %c0_i32_1 = arith.constant 0 : i32
    return %c0_i32, %c0_i32_0 : i32, i32
  }
  func.func @transform_6(%arg0: i32) -> (i32, i32) {
    %c0_i32 = arith.constant 0 : i32
    %c0_i32_0 = arith.constant 0 : i32
    %c0_i32_1 = arith.constant 0 : i32
    return %c0_i32, %c0_i32_0 : i32, i32
  }
  func.func @transform_7(%arg0: i32) -> (i32, i32) {
    %c0_i32 = arith.constant 0 : i32
    %c0_i32_0 = arith.constant 0 : i32
    %c0_i32_1 = arith.constant 0 : i32
    return %c0_i32, %c0_i32_0 : i32, i32
  }
  func.func @transform_8(%arg0: i32) -> (i32, i32) {
    %c0_i32 = arith.constant 0 : i32
    %c0_i32_0 = arith.constant 0 : i32
    %c0_i32_1 = arith.constant 0 : i32
    return %c0_i32, %c0_i32_0 : i32, i32
  }
  func.func @transform_9(%arg0: i32) -> (i32, i32) {
    %c0_i32 = arith.constant 0 : i32
    %c0_i32_0 = arith.constant 0 : i32
    %c0_i32_1 = arith.constant 0 : i32
    return %c0_i32, %c0_i32_0 : i32, i32
  }
  func.func @transform_10(%arg0: i32) -> (i32, i32) {
    %c0_i32 = arith.constant 0 : i32
    %c0_i32_0 = arith.constant 0 : i32
    %c0_i32_1 = arith.constant 0 : i32
    return %c0_i32, %c0_i32_0 : i32, i32
  }
  func.func @transform_11(%arg0: i32) -> (i32, i32) {
    %c0_i32 = arith.constant 0 : i32
    %c0_i32_0 = arith.constant 0 : i32
    %c0_i32_1 = arith.constant 0 : i32
    return %c0_i32, %c0_i32_0 : i32, i32
  }
  func.func @transform_12(%arg0: i32) -> (i32, i32) {
    %c0_i32 = arith.constant 0 : i32
    %c0_i32_0 = arith.constant 0 : i32
    %c0_i32_1 = arith.constant 0 : i32
    return %c0_i32, %c0_i32_0 : i32, i32
  }
  func.func @transform_13(%arg0: i32) -> (i32, i32, i32, i32) {
    %c0_i32 = arith.constant 0 : i32
    %c0_i32_0 = arith.constant 0 : i32
    %c0_i32_1 = arith.constant 0 : i32
    %c0_i32_2 = arith.constant 0 : i32
    return %arg0, %c0_i32, %c0_i32_0, %c0_i32_1 : i32, i32, i32, i32
  }
}

</mosaic_0001>

<llo_original>
// kernel: res_dilation_block_forward.1
$region0: #{res_dilation_block_forward.1}
  #allocation0 [shape = 'u32[]', space=smem, size = 0x4, offset = 0x4, fixed_abs, tag = 'smem constant byte address 0x4 - core index']
  #allocation1 [shape = 'u32[144,128]{1,0:T(1,128)}', space=vmem, size = 0x12000, scoped, tag = 'internal scratch']
  #allocation2 [shape = 'f32[18,18,4]{2,1,0:T(8,128)}', space=vmem, size = 0x36000, scoped, tag = 'scratch operand']
  #allocation3 [shape = 'f32[18,18,8]{2,1,0:T(8,128)}', space=vmem, size = 0x36000, scoped, tag = 'scratch operand']
  #allocation4 [shape = 'f32[20,20,8]{2,1,0:T(8,128)}', space=vmem, size = 0x3c000, scoped, tag = 'scratch operand']
  #allocation5 [shape = 'f32[26,26,8]{2,1,0:T(8,128)}', space=vmem, size = 0x68000, scoped, tag = 'scratch operand']
  %s0 = inlined_call_operand.vmem [shape: f32[2,16,16,4], index: 0, kind: input, shape index: {}]
  %s1 = inlined_call_operand.vmem [shape: f32[36,8], index: 1, kind: input, shape index: {}]
  %s2 = inlined_call_operand.vmem [shape: f32[1,8], index: 2, kind: input, shape index: {}]
  %s3 = inlined_call_operand.vmem [shape: f32[72,8], index: 3, kind: input, shape index: {}]
  %s4 = inlined_call_operand.vmem [shape: f32[1,8], index: 4, kind: input, shape index: {}]
  %s5 = inlined_call_operand.vmem [shape: f32[36,8], index: 5, kind: input, shape index: {}]
  %s6 = inlined_call_operand.vmem [shape: f32[1,8], index: 6, kind: input, shape index: {}]
  %s7 = inlined_call_operand.vmem [shape: f32[72,8], index: 7, kind: input, shape index: {}]
  %s8 = inlined_call_operand.vmem [shape: f32[1,8], index: 8, kind: input, shape index: {}]
  %s9 = inlined_call_operand.vmem [shape: f32[72,8], index: 9, kind: input, shape index: {}]
  %s10 = inlined_call_operand.vmem [shape: f32[1,8], index: 10, kind: input, shape index: {}]
  %s11 = inlined_call_operand.vmem [shape: f32[4,8], index: 11, kind: input, shape index: {}]
  %s12 = inlined_call_operand.vmem [shape: f32[1,8], index: 12, kind: input, shape index: {}]
  %s13 = inlined_call_operand.vmem [shape: f32[2,16,16,8], index: 13, kind: output, shape index: {}]
  %s14 = sld [smem:[#allocation0]]
  $region85: #{res_dilation_block_forward.1} parent=0
    _
  %s16 = ssub.s32 1, %s14
  %s17 = scalar_select 0, %s16, %s14
  loop: start=0, step=1, limit=4
  $region2: #{res_dilation_block_forward.1} parent=0 // loop_pre_header
    _
  $region3: #{res_dilation_block_forward.1} parent=0 // loop_header
    %s19 = sphi 0, %s23
    %p20 = scmp.ge.s32.totalorder %s19, 4
    %s29 = sphi 0, %s31
    %s32 = sphi 0, %s29
    %s33 = sphi 0, %s32
    %s49 = sphi 0, %s33
    %s53 = sphi 0, %s53
    %s55 = sphi 0, %s53
    %s56 = sphi 0, %s55
    %s70 = sphi 0, %s56
    %s74 = sphi 0, %s74
    %s76 = sphi 0, %s74
    %s77 = sphi 0, %s76
    %s91 = sphi 0, %s77
    %s95 = sphi 0, %s95
    %s97 = sphi 0, %s95
    %s98 = sphi 0, %s97
    %s112 = sphi 0, %s98
    %s116 = sphi 0, %s116
    %s118 = sphi 0, %s116
    %s119 = sphi 0, %s118
    %s133 = sphi 0, %s119
    %s137 = sphi 0, %s137
    %s139 = sphi 0, %s137
    %s140 = sphi 0, %s139
    %s154 = sphi 0, %s140
    %s158 = sphi 0, %s158
    %s160 = sphi 0, %s158
    %s161 = sphi 0, %s160
    %s175 = sphi 0, %s161
    %s179 = sphi 0, %s179
    %s181 = sphi 0, %s179
    %s182 = sphi 0, %s181
    %s196 = sphi 0, %s182
    %s200 = sphi 0, %s200
    %s202 = sphi 0, %s200
    %s203 = sphi 0, %s202
    %s217 = sphi 0, %s203
    %s221 = sphi 0, %s221
    %s223 = sphi 0, %s221
    %s224 = sphi 0, %s223
    %s238 = sphi 0, %s224
    %s242 = sphi 0, %s242
    %s244 = sphi 0, %s242
    %s245 = sphi 0, %s244
    %s259 = sphi 0, %s245
    %s263 = sphi 0, %s263
    %s265 = sphi 0, %s263
    %s266 = sphi 0, %s265
    %s280 = sphi 0, %s266
    %s284 = sphi 0, %s284
    %s286 = sphi 0, %s284
    %s287 = sphi 0, %s286
    %s301 = sphi 0, %s287
    %s307 = sphi 0, %s309
    %s310 = sphi 0, %s307
    %s311 = sphi 0, %s310
    %s327 = sphi 0, %s311
  $region4: #{res_dilation_block_forward.1} parent=0 // loop_header_branch
    %22 = sbr.rel (%p20) target = $region8
  $region5: #{res_dilation_block_forward.1} parent=0 // loop_body
    %s24 = ssub.s32 %s19, 1
    %s25 = ssub.s32 %s19, 2
    %s26 = sadd.s32 %s19, 1
    %s27 = ssub.s32 %s19, %s26
    %p28 = scmp.eq.s32.totalorder %s27, 0
    %s30 = sadd.s32 %s29, 1
    %s31 = scalar_select %p28, %s29, %s30
    %p34 = pneg %p28
    %p35 = scmp.eq.s32.totalorder %s19, 1
    %p36 = por %p34, %p35
    %p37 = scmp.ne.s32.totalorder %s29, %s32
    %p38 = scmp.eq.s32.totalorder %s19, 0
    %p39 = por %p37, %p38
    %p40 = scmp.ne.s32.totalorder %s29, %s32
    %p41 = scmp.eq.s32.totalorder %s24, 1
    %p42 = por %p40, %p41
    %p43 = scmp.ne.s32.totalorder %s32, %s33
    %p44 = scmp.eq.s32.totalorder %s24, 0
    %p45 = por %p43, %p44
    %p46 = scmp.ne.s32.totalorder %s32, %s33
    %p47 = scmp.eq.s32.totalorder %s25, 1
    %p48 = por %p46, %p47
    %p50 = scmp.ne.s32.totalorder %s33, %s49
    %p51 = scmp.eq.s32.totalorder %s25, 0
    %p52 = por %p50, %p51
    %s54 = sadd.s32 %s53, 1
    %p57 = scmp.eq.s32.totalorder %s19, 1
    %p58 = scmp.ne.s32.totalorder %s53, %s55
    %p59 = scmp.eq.s32.totalorder %s19, 0
    %p60 = por %p58, %p59
    %p61 = scmp.ne.s32.totalorder %s53, %s55
    %p62 = scmp.eq.s32.totalorder %s24, 1
    %p63 = por %p61, %p62
    %p64 = scmp.ne.s32.totalorder %s55, %s56
    %p65 = scmp.eq.s32.totalorder %s24, 0
    %p66 = por %p64, %p65
    %p67 = scmp.ne.s32.totalorder %s55, %s56
    %p68 = scmp.eq.s32.totalorder %s25, 1
    %p69 = por %p67, %p68
    %p71 = scmp.ne.s32.totalorder %s56, %s70
    %p72 = scmp.eq.s32.totalorder %s25, 0
    %p73 = por %p71, %p72
    %s75 = sadd.s32 %s74, 1
    %p78 = scmp.eq.s32.totalorder %s19, 1
    %p79 = scmp.ne.s32.totalorder %s74, %s76
    %p80 = scmp.eq.s32.totalorder %s19, 0
    %p81 = por %p79, %p80
    %p82 = scmp.ne.s32.totalorder %s74, %s76
    %p83 = scmp.eq.s32.totalorder %s24, 1
    %p84 = por %p82, %p83
    %p85 = scmp.ne.s32.totalorder %s76, %s77
    %p86 = scmp.eq.s32.totalorder %s24, 0
    %p87 = por %p85, %p86
    %p88 = scmp.ne.s32.totalorder %s76, %s77
    %p89 = scmp.eq.s32.totalorder %s25, 1
    %p90 = por %p88, %p89
    %p92 = scmp.ne.s32.totalorder %s77, %s91
    %p93 = scmp.eq.s32.totalorder %s25, 0
    %p94 = por %p92, %p93
    %s96 = sadd.s32 %s95, 1
    %p99 = scmp.eq.s32.totalorder %s19, 1
    %p100 = scmp.ne.s32.totalorder %s95, %s97
    %p101 = scmp.eq.s32.totalorder %s19, 0
    %p102 = por %p100, %p101
    %p103 = scmp.ne.s32.totalorder %s95, %s97
    %p104 = scmp.eq.s32.totalorder %s24, 1
    %p105 = por %p103, %p104
    %p106 = scmp.ne.s32.totalorder %s97, %s98
    %p107 = scmp.eq.s32.totalorder %s24, 0
    %p108 = por %p106, %p107
    %p109 = scmp.ne.s32.totalorder %s97, %s98
    %p110 = scmp.eq.s32.totalorder %s25, 1
    %p111 = por %p109, %p110
    %p113 = scmp.ne.s32.totalorder %s98, %s112
    %p114 = scmp.eq.s32.totalorder %s25, 0
    %p115 = por %p113, %p114
    %s117 = sadd.s32 %s116, 1
    %p120 = scmp.eq.s32.totalorder %s19, 1
    %p121 = scmp.ne.s32.totalorder %s116, %s118
    %p122 = scmp.eq.s32.totalorder %s19, 0
    %p123 = por %p121, %p122
    %p124 = scmp.ne.s32.totalorder %s116, %s118
    %p125 = scmp.eq.s32.totalorder %s24, 1
    %p126 = por %p124, %p125
    %p127 = scmp.ne.s32.totalorder %s118, %s119
    %p128 = scmp.eq.s32.totalorder %s24, 0
    %p129 = por %p127, %p128
    %p130 = scmp.ne.s32.totalorder %s118, %s119
    %p131 = scmp.eq.s32.totalorder %s25, 1
    %p132 = por %p130, %p131
    %p134 = scmp.ne.s32.totalorder %s119, %s133
    %p135 = scmp.eq.s32.totalorder %s25, 0
    %p136 = por %p134, %p135
    %s138 = sadd.s32 %s137, 1
    %p141 = scmp.eq.s32.totalorder %s19, 1
    %p142 = scmp.ne.s32.totalorder %s137, %s139
    %p143 = scmp.eq.s32.totalorder %s19, 0
    %p144 = por %p142, %p143
    %p145 = scmp.ne.s32.totalorder %s137, %s139
    %p146 = scmp.eq.s32.totalorder %s24, 1
    %p147 = por %p145, %p146
    %p148 = scmp.ne.s32.totalorder %s139, %s140
    %p149 = scmp.eq.s32.totalorder %s24, 0
    %p150 = por %p148, %p149
    %p151 = scmp.ne.s32.totalorder %s139, %s140
    %p152 = scmp.eq.s32.totalorder %s25, 1
    %p153 = por %p151, %p152
    %p155 = scmp.ne.s32.totalorder %s140, %s154
    %p156 = scmp.eq.s32.totalorder %s25, 0
    %p157 = por %p155, %p156
    %s159 = sadd.s32 %s158, 1
    %p162 = scmp.eq.s32.totalorder %s19, 1
    %p163 = scmp.ne.s32.totalorder %s158, %s160
    %p164 = scmp.eq.s32.totalorder %s19, 0
    %p165 = por %p163, %p164
    %p166 = scmp.ne.s32.totalorder %s158, %s160
    %p167 = scmp.eq.s32.totalorder %s24, 1
    %p168 = por %p166, %p167
    %p169 = scmp.ne.s32.totalorder %s160, %s161
    %p170 = scmp.eq.s32.totalorder %s24, 0
    %p171 = por %p169, %p170
    %p172 = scmp.ne.s32.totalorder %s160, %s161
    %p173 = scmp.eq.s32.totalorder %s25, 1
    %p174 = por %p172, %p173
    %p176 = scmp.ne.s32.totalorder %s161, %s175
    %p177 = scmp.eq.s32.totalorder %s25, 0
    %p178 = por %p176, %p177
    %s180 = sadd.s32 %s179, 1
    %p183 = scmp.eq.s32.totalorder %s19, 1
    %p184 = scmp.ne.s32.totalorder %s179, %s181
    %p185 = scmp.eq.s32.totalorder %s19, 0
    %p186 = por %p184, %p185
    %p187 = scmp.ne.s32.totalorder %s179, %s181
    %p188 = scmp.eq.s32.totalorder %s24, 1
    %p189 = por %p187, %p188
    %p190 = scmp.ne.s32.totalorder %s181, %s182
    %p191 = scmp.eq.s32.totalorder %s24, 0
    %p192 = por %p190, %p191
    %p193 = scmp.ne.s32.totalorder %s181, %s182
    %p194 = scmp.eq.s32.totalorder %s25, 1
    %p195 = por %p193, %p194
    %p197 = scmp.ne.s32.totalorder %s182, %s196
    %p198 = scmp.eq.s32.totalorder %s25, 0
    %p199 = por %p197, %p198
    %s201 = sadd.s32 %s200, 1
    %p204 = scmp.eq.s32.totalorder %s19, 1
    %p205 = scmp.ne.s32.totalorder %s200, %s202
    %p206 = scmp.eq.s32.totalorder %s19, 0
    %p207 = por %p205, %p206
    %p208 = scmp.ne.s32.totalorder %s200, %s202
    %p209 = scmp.eq.s32.totalorder %s24, 1
    %p210 = por %p208, %p209
    %p211 = scmp.ne.s32.totalorder %s202, %s203
    %p212 = scmp.eq.s32.totalorder %s24, 0
    %p213 = por %p211, %p212
    %p214 = scmp.ne.s32.totalorder %s202, %s203
    %p215 = scmp.eq.s32.totalorder %s25, 1
    %p216 = por %p214, %p215
    %p218 = scmp.ne.s32.totalorder %s203, %s217
    %p219 = scmp.eq.s32.totalorder %s25, 0
    %p220 = por %p218, %p219
    %s222 = sadd.s32 %s221, 1
    %p225 = scmp.eq.s32.totalorder %s19, 1
    %p226 = scmp.ne.s32.totalorder %s221, %s223
    %p227 = scmp.eq.s32.totalorder %s19, 0
    %p228 = por %p226, %p227
    %p229 = scmp.ne.s32.totalorder %s221, %s223
    %p230 = scmp.eq.s32.totalorder %s24, 1
    %p231 = por %p229, %p230
    %p232 = scmp.ne.s32.totalorder %s223, %s224
    %p233 = scmp.eq.s32.totalorder %s24, 0
    %p234 = por %p232, %p233
    %p235 = scmp.ne.s32.totalorder %s223, %s224
    %p236 = scmp.eq.s32.totalorder %s25, 1
    %p237 = por %p235, %p236
    %p239 = scmp.ne.s32.totalorder %s224, %s238
    %p240 = scmp.eq.s32.totalorder %s25, 0
    %p241 = por %p239, %p240
    %s243 = sadd.s32 %s242, 1
    %p246 = scmp.eq.s32.totalorder %s19, 1
    %p247 = scmp.ne.s32.totalorder %s242, %s244
    %p248 = scmp.eq.s32.totalorder %s19, 0
    %p249 = por %p247, %p248
    %p250 = scmp.ne.s32.totalorder %s242, %s244
    %p251 = scmp.eq.s32.totalorder %s24, 1
    %p252 = por %p250, %p251
    %p253 = scmp.ne.s32.totalorder %s244, %s245
    %p254 = scmp.eq.s32.totalorder %s24, 0
    %p255 = por %p253, %p254
    %p256 = scmp.ne.s32.totalorder %s244, %s245
    %p257 = scmp.eq.s32.totalorder %s25, 1
    %p258 = por %p256, %p257
    %p260 = scmp.ne.s32.totalorder %s245, %s259
    %p261 = scmp.eq.s32.totalorder %s25, 0
    %p262 = por %p260, %p261
    %s264 = sadd.s32 %s263, 1
    %p267 = scmp.eq.s32.totalorder %s19, 1
    %p268 = scmp.ne.s32.totalorder %s263, %s265
    %p269 = scmp.eq.s32.totalorder %s19, 0
    %p270 = por %p268, %p269
    %p271 = scmp.ne.s32.totalorder %s263, %s265
    %p272 = scmp.eq.s32.totalorder %s24, 1
    %p273 = por %p271, %p272
    %p274 = scmp.ne.s32.totalorder %s265, %s266
    %p275 = scmp.eq.s32.totalorder %s24, 0
    %p276 = por %p274, %p275
    %p277 = scmp.ne.s32.totalorder %s265, %s266
    %p278 = scmp.eq.s32.totalorder %s25, 1
    %p279 = por %p277, %p278
    %p281 = scmp.ne.s32.totalorder %s266, %s280
    %p282 = scmp.eq.s32.totalorder %s25, 0
    %p283 = por %p281, %p282
    %s285 = sadd.s32 %s284, 1
    %p288 = scmp.eq.s32.totalorder %s19, 1
    %p289 = scmp.ne.s32.totalorder %s284, %s286
    %p290 = scmp.eq.s32.totalorder %s19, 0
    %p291 = por %p289, %p290
    %p292 = scmp.ne.s32.totalorder %s284, %s286
    %p293 = scmp.eq.s32.totalorder %s24, 1
    %p294 = por %p292, %p293
    %p295 = scmp.ne.s32.totalorder %s286, %s287
    %p296 = scmp.eq.s32.totalorder %s24, 0
    %p297 = por %p295, %p296
    %p298 = scmp.ne.s32.totalorder %s286, %s287
    %p299 = scmp.eq.s32.totalorder %s25, 1
    %p300 = por %p298, %p299
    %p302 = scmp.ne.s32.totalorder %s287, %s301
    %p303 = scmp.eq.s32.totalorder %s25, 0
    %p304 = por %p302, %p303
    %s305 = ssub.s32 %s19, %s26
    %p306 = scmp.eq.s32.totalorder %s305, 0
    %s308 = sadd.s32 %s307, 1
    %s309 = scalar_select %p306, %s307, %s308
    %p312 = pneg %p306
    %p313 = scmp.eq.s32.totalorder %s19, 1
    %p314 = por %p312, %p313
    %p315 = scmp.ne.s32.totalorder %s307, %s310
    %p316 = scmp.eq.s32.totalorder %s19, 0
    %p317 = por %p315, %p316
    %p318 = scmp.ne.s32.totalorder %s307, %s310
    %p319 = scmp.eq.s32.totalorder %s24, 1
    %p320 = por %p318, %p319
    %p321 = scmp.ne.s32.totalorder %s310, %s311
    %p322 = scmp.eq.s32.totalorder %s24, 0
    %p323 = por %p321, %p322
    %p324 = scmp.ne.s32.totalorder %s310, %s311
    %p325 = scmp.eq.s32.totalorder %s25, 1
    %p326 = por %p324, %p325
    %p328 = scmp.ne.s32.totalorder %s311, %s327
    %p329 = scmp.eq.s32.totalorder %s25, 0
    %p330 = por %p328, %p329
    %p331 = scmp.le.s32.totalorder 1, %s19
    %p332 = scmp.lt.s32.totalorder %s19, 3
    %p333 = pnand %p331, %p332
    %p334 = pneg %p333
    // Predicated region
    $region9: #{res_dilation_block_forward.1} parent=5 // pred_check
      _
    $region10: #{res_dilation_block_forward.1} parent=5 // pred_check_branch
      %336 = sbr.rel (%p333) target = $region12
    $region11: #{res_dilation_block_forward.1} parent=5 // pred_region
      %s337 = ssub.s32 %s19, 1
      // Predicated region
      $region13: #{res_dilation_block_forward.1} parent=11 // pred_check
        %p338 = pneg %p66
      $region14: #{res_dilation_block_forward.1} parent=11 // pred_check_branch
        %340 = sbr.rel (%p338) target = $region16
      $region15: #{res_dilation_block_forward.1} parent=11 // pred_region
        _
      $region16: #{res_dilation_block_forward.1} parent=11 // pred_fallthru
        _
      // Predicated region
      $region17: #{res_dilation_block_forward.1} parent=11 // pred_check
        %p341 = pneg %p87
      $region18: #{res_dilation_block_forward.1} parent=11 // pred_check_branch
        %343 = sbr.rel (%p341) target = $region20
      $region19: #{res_dilation_block_forward.1} parent=11 // pred_region
        _
      $region20: #{res_dilation_block_forward.1} parent=11 // pred_fallthru
        _
      // Predicated region
      $region21: #{res_dilation_block_forward.1} parent=11 // pred_check
        %p344 = pneg %p108
      $region22: #{res_dilation_block_forward.1} parent=11 // pred_check_branch
        %346 = sbr.rel (%p344) target = $region24
      $region23: #{res_dilation_block_forward.1} parent=11 // pred_region
        _
      $region24: #{res_dilation_block_forward.1} parent=11 // pred_fallthru
        _
      // Predicated region
      $region25: #{res_dilation_block_forward.1} parent=11 // pred_check
        %p347 = pneg %p129
      $region26: #{res_dilation_block_forward.1} parent=11 // pred_check_branch
        %349 = sbr.rel (%p347) target = $region28
      $region27: #{res_dilation_block_forward.1} parent=11 // pred_region
        _
      $region28: #{res_dilation_block_forward.1} parent=11 // pred_fallthru
        _
      // Predicated region
      $region29: #{res_dilation_block_forward.1} parent=11 // pred_check
        %p350 = pneg %p150
      $region30: #{res_dilation_block_forward.1} parent=11 // pred_check_branch
        %352 = sbr.rel (%p350) target = $region32
      $region31: #{res_dilation_block_forward.1} parent=11 // pred_region
        _
      $region32: #{res_dilation_block_forward.1} parent=11 // pred_fallthru
        _
      // Predicated region
      $region33: #{res_dilation_block_forward.1} parent=11 // pred_check
        %p353 = pneg %p171
      $region34: #{res_dilation_block_forward.1} parent=11 // pred_check_branch
        %355 = sbr.rel (%p353) target = $region36
      $region35: #{res_dilation_block_forward.1} parent=11 // pred_region
        _
      $region36: #{res_dilation_block_forward.1} parent=11 // pred_fallthru
        _
      // Predicated region
      $region37: #{res_dilation_block_forward.1} parent=11 // pred_check
        %p356 = pneg %p192
      $region38: #{res_dilation_block_forward.1} parent=11 // pred_check_branch
        %358 = sbr.rel (%p356) target = $region40
      $region39: #{res_dilation_block_forward.1} parent=11 // pred_region
        _
      $region40: #{res_dilation_block_forward.1} parent=11 // pred_fallthru
        _
      // Predicated region
      $region41: #{res_dilation_block_forward.1} parent=11 // pred_check
        %p359 = pneg %p213
      $region42: #{res_dilation_block_forward.1} parent=11 // pred_check_branch
        %361 = sbr.rel (%p359) target = $region44
      $region43: #{res_dilation_block_forward.1} parent=11 // pred_region
        _
      $region44: #{res_dilation_block_forward.1} parent=11 // pred_fallthru
        _
      // Predicated region
      $region45: #{res_dilation_block_forward.1} parent=11 // pred_check
        %p362 = pneg %p234
      $region46: #{res_dilation_block_forward.1} parent=11 // pred_check_branch
        %364 = sbr.rel (%p362) target = $region48
      $region47: #{res_dilation_block_forward.1} parent=11 // pred_region
        _
      $region48: #{res_dilation_block_forward.1} parent=11 // pred_fallthru
        _
      // Predicated region
      $region49: #{res_dilation_block_forward.1} parent=11 // pred_check
        %p365 = pneg %p255
      $region50: #{res_dilation_block_forward.1} parent=11 // pred_check_branch
        %367 = sbr.rel (%p365) target = $region52
      $region51: #{res_dilation_block_forward.1} parent=11 // pred_region
        _
      $region52: #{res_dilation_block_forward.1} parent=11 // pred_fallthru
        _
      // Predicated region
      $region53: #{res_dilation_block_forward.1} parent=11 // pred_check
        %p368 = pneg %p276
      $region54: #{res_dilation_block_forward.1} parent=11 // pred_check_branch
        %370 = sbr.rel (%p368) target = $region56
      $region55: #{res_dilation_block_forward.1} parent=11 // pred_region
        _
      $region56: #{res_dilation_block_forward.1} parent=11 // pred_fallthru
        _
      // Predicated region
      $region57: #{res_dilation_block_forward.1} parent=11 // pred_check
        %p371 = pneg %p297
      $region58: #{res_dilation_block_forward.1} parent=11 // pred_check_branch
        %373 = sbr.rel (%p371) target = $region60
      $region59: #{res_dilation_block_forward.1} parent=11 // pred_region
        _
      $region60: #{res_dilation_block_forward.1} parent=11 // pred_fallthru
        _
    $region12: #{res_dilation_block_forward.1} parent=5 // pred_fallthru
      _
    %p374 = scmp.lt.s32.totalorder %s19, 2
    // Predicated region
    $region61: #{res_dilation_block_forward.1} parent=5 // pred_check
      %p375 = pneg %p374
    $region62: #{res_dilation_block_forward.1} parent=5 // pred_check_branch
      %377 = sbr.rel (%p375) target = $region64
    $region63: #{res_dilation_block_forward.1} parent=5 // pred_region
      // Predicated region
      $region65: #{res_dilation_block_forward.1} parent=63 // pred_check
        %p378 = pneg %p39
      $region66: #{res_dilation_block_forward.1} parent=63 // pred_check_branch
        %380 = sbr.rel (%p378) target = $region68
      $region67: #{res_dilation_block_forward.1} parent=63 // pred_region
        %p381 = scmp.lt.s32.totalorder %s19, 1
        %s382 = scalar_select %p381, %s19, 1
        %s383 = smul.addr %s382, 32
        %s384 = smul.addr %s383, 8
        %s385 = scalar_lea.vmem %s0, %s384
      $region68: #{res_dilation_block_forward.1} parent=63 // pred_fallthru
        _
    $region64: #{res_dilation_block_forward.1} parent=5 // pred_fallthru
      _
    %p386 = scmp.le.s32.totalorder 1, %s19
    %p387 = scmp.lt.s32.totalorder %s19, 3
    %p388 = pnand %p386, %p387
    %p389 = pneg %p388
    // Predicated region
    $region69: #{res_dilation_block_forward.1} parent=5 // pred_check
      _
    $region70: #{res_dilation_block_forward.1} parent=5 // pred_check_branch
      %391 = sbr.rel (%p388) target = $region72
    $region71: #{res_dilation_block_forward.1} parent=5 // pred_region
      %s392 = ssub.s32 %s19, 1
      %p393 = scmp.lt.s32.totalorder %s24, 1
      %s394 = scalar_select %p393, %s24, 1
      %s395 = smul.addr %s394, 32
      %s396 = smul.addr %s395, 8
      %s397 = scalar_lea.vmem %s0, %s396
      %p398 = pneg %p45
      %p399 = pneg %p42
      %p400 = pneg %p66
      %p401 = pneg %p63
      %p402 = pneg %p87
      %p403 = pneg %p84
      %p404 = pneg %p108
      %p405 = pneg %p105
      %p406 = pneg %p129
      %p407 = pneg %p126
      %p408 = pneg %p150
      %p409 = pneg %p147
      %p410 = pneg %p171
      %p411 = pneg %p168
      %p412 = pneg %p192
      %p413 = pneg %p189
      %p414 = pneg %p213
      %p415 = pneg %p210
      %p416 = pneg %p234
      %p417 = pneg %p231
      %p418 = pneg %p255
      %p419 = pneg %p252
      %p420 = pneg %p276
      %p421 = pneg %p273
      %p422 = pneg %p297
      %p423 = pneg %p294
      %p424 = pneg %p323
      %p425 = pneg %p320
      %p426 = scmp.lt.s32.totalorder %s24, 1
      %s427 = scalar_select %p426, %s24, 1
      %s428 = smul.addr %s427, 32
      %s429 = smul.addr %s428, 8
      %s430 = scalar_lea.vmem %s13, %s429
      %p431 = scmp.lt.s32.totalorder %s24, 1
      %s432 = scalar_select %p431, %s24, 1
      %s433 = smul.addr %s432, 32
      %s434 = smul.addr %s433, 8
      %s435 = scalar_lea.vmem %s0, %s434
      %p436 = scmp.lt.s32.totalorder %s24, 1
      %s437 = scalar_select %p436, %s24, 1
      %s438 = smul.addr %s437, 32
      %s439 = smul.addr %s438, 8
      %s440 = scalar_lea.vmem %s13, %s439
      %vm441 = vcmask 31744
      %442 = vst.msk [vmem:[#allocation2] sm:$0xff] %vm441, 0.0
      %443 = vst.msk [vmem:[#allocation2 + $0x8] sm:$0xff] %vm441, 0.0
      %vm444 = vcmask 25600
      %445 = vst.msk [vmem:[#allocation2 + $0x10] sm:$0x3] %vm444, 0.0
      %446 = vst.msk [vmem:[#allocation2 + $0x18] sm:$0xff] %vm441, 0.0
      %447 = vst.msk [vmem:[#allocation2 + $0x20] sm:$0xff] %vm441, 0.0
      %448 = vst.msk [vmem:[#allocation2 + $0x28] sm:$0x3] %vm444, 0.0
      %449 = vst.msk [vmem:[#allocation2 + $0x30] sm:$0xff] %vm441, 0.0
      %450 = vst.msk [vmem:[#allocation2 + $0x38] sm:$0xff] %vm441, 0.0
      %451 = vst.msk [vmem:[#allocation2 + $0x40] sm:$0x3] %vm444, 0.0
      %452 = vst.msk [vmem:[#allocation2 + $0x48] sm:$0xff] %vm441, 0.0
      %453 = vst.msk [vmem:[#allocation2 + $0x50] sm:$0xff] %vm441, 0.0
      %454 = vst.msk [vmem:[#allocation2 + $0x58] sm:$0x3] %vm444, 0.0
      %455 = vst.msk [vmem:[#allocation2 + $0x60] sm:$0xff] %vm441, 0.0
      %456 = vst.msk [vmem:[#allocation2 + $0x68] sm:$0xff] %vm441, 0.0
      %457 = vst.msk [vmem:[#allocation2 + $0x70] sm:$0x3] %vm444, 0.0
      %458 = vst.msk [vmem:[#allocation2 + $0x78] sm:$0xff] %vm441, 0.0
      %459 = vst.msk [vmem:[#allocation2 + $0x80] sm:$0xff] %vm441, 0.0
      %460 = vst.msk [vmem:[#allocation2 + $0x88] sm:$0x3] %vm444, 0.0
      %461 = vst.msk [vmem:[#allocation2 + $0x90] sm:$0xff] %vm441, 0.0
      %462 = vst.msk [vmem:[#allocation2 + $0x98] sm:$0xff] %vm441, 0.0
      %463 = vst.msk [vmem:[#allocation2 + $0xa0] sm:$0x3] %vm444, 0.0
      %464 = vst.msk [vmem:[#allocation2 + $0xa8] sm:$0xff] %vm441, 0.0
      %465 = vst.msk [vmem:[#allocation2 + $0xb0] sm:$0xff] %vm441, 0.0
      %466 = vst.msk [vmem:[#allocation2 + $0xb8] sm:$0x3] %vm444, 0.0
      %467 = vst.msk [vmem:[#allocation2 + $0xc0] sm:$0xff] %vm441, 0.0
      %468 = vst.msk [vmem:[#allocation2 + $0xc8] sm:$0xff] %vm441, 0.0
      %469 = vst.msk [vmem:[#allocation2 + $0xd0] sm:$0x3] %vm444, 0.0
      %470 = vst.msk [vmem:[#allocation2 + $0xd8] sm:$0xff] %vm441, 0.0
      %471 = vst.msk [vmem:[#allocation2 + $0xe0] sm:$0xff] %vm441, 0.0
      %472 = vst.msk [vmem:[#allocation2 + $0xe8] sm:$0x3] %vm444, 0.0
      %473 = vst.msk [vmem:[#allocation2 + $0xf0] sm:$0xff] %vm441, 0.0
      %474 = vst.msk [vmem:[#allocation2 + $0xf8] sm:$0xff] %vm441, 0.0
      %475 = vst.msk [vmem:[#allocation2 + $0x100] sm:$0x3] %vm444, 0.0
      %476 = vst.msk [vmem:[#allocation2 + $0x108] sm:$0xff] %vm441, 0.0
      %477 = vst.msk [vmem:[#allocation2 + $0x110] sm:$0xff] %vm441, 0.0
      %478 = vst.msk [vmem:[#allocation2 + $0x118] sm:$0x3] %vm444, 0.0
      %479 = vst.msk [vmem:[#allocation2 + $0x120] sm:$0xff] %vm441, 0.0
      %480 = vst.msk [vmem:[#allocation2 + $0x128] sm:$0xff] %vm441, 0.0
      %481 = vst.msk [vmem:[#allocation2 + $0x130] sm:$0x3] %vm444, 0.0
      %482 = vst.msk [vmem:[#allocation2 + $0x138] sm:$0xff] %vm441, 0.0
      %483 = vst.msk [vmem:[#allocation2 + $0x140] sm:$0xff] %vm441, 0.0
      %484 = vst.msk [vmem:[#allocation2 + $0x148] sm:$0x3] %vm444, 0.0
      %485 = vst.msk [vmem:[#allocation2 + $0x150] sm:$0xff] %vm441, 0.0
      %486 = vst.msk [vmem:[#allocation2 + $0x158] sm:$0xff] %vm441, 0.0
      %487 = vst.msk [vmem:[#allocation2 + $0x160] sm:$0x3] %vm444, 0.0
      %488 = vst.msk [vmem:[#allocation2 + $0x168] sm:$0xff] %vm441, 0.0
      %489 = vst.msk [vmem:[#allocation2 + $0x170] sm:$0xff] %vm441, 0.0
      %490 = vst.msk [vmem:[#allocation2 + $0x178] sm:$0x3] %vm444, 0.0
      %491 = vst.msk [vmem:[#allocation2 + $0x180] sm:$0xff] %vm441, 0.0
      %492 = vst.msk [vmem:[#allocation2 + $0x188] sm:$0xff] %vm441, 0.0
      %493 = vst.msk [vmem:[#allocation2 + $0x190] sm:$0x3] %vm444, 0.0
      %494 = vst.msk [vmem:[#allocation2 + $0x198] sm:$0xff] %vm441, 0.0
      %495 = vst.msk [vmem:[#allocation2 + $0x1a0] sm:$0xff] %vm441, 0.0
      %496 = vst.msk [vmem:[#allocation2 + $0x1a8] sm:$0x3] %vm444, 0.0
      %v497 = vld [vmem:[%s435] sm:$0xff]
      %v498 = vld [vmem:[%s435 + $0x8] sm:$0xff]
      %v499 = vld [vmem:[%s435 + $0x10] sm:$0xff]
      %v500 = vld [vmem:[%s435 + $0x18] sm:$0xff]
      %v501 = vld [vmem:[%s435 + $0x20] sm:$0xff]
      %v502 = vld [vmem:[%s435 + $0x28] sm:$0xff]
      %v503 = vld [vmem:[%s435 + $0x30] sm:$0xff]
      %v504 = vld [vmem:[%s435 + $0x38] sm:$0xff]
      %v505 = vld [vmem:[%s435 + $0x40] sm:$0xff]
      %v506 = vld [vmem:[%s435 + $0x48] sm:$0xff]
      %v507 = vld [vmem:[%s435 + $0x50] sm:$0xff]
      %v508 = vld [vmem:[%s435 + $0x58] sm:$0xff]
      %v509 = vld [vmem:[%s435 + $0x60] sm:$0xff]
      %v510 = vld [vmem:[%s435 + $0x68] sm:$0xff]
      %v511 = vld [vmem:[%s435 + $0x70] sm:$0xff]
      %v512 = vld [vmem:[%s435 + $0x78] sm:$0xff]
      %v513 = vld [vmem:[%s435 + $0x80] sm:$0xff]
      %v514 = vld [vmem:[%s435 + $0x88] sm:$0xff]
      %v515 = vld [vmem:[%s435 + $0x90] sm:$0xff]
      %v516 = vld [vmem:[%s435 + $0x98] sm:$0xff]
      %v517 = vld [vmem:[%s435 + $0xa0] sm:$0xff]
      %v518 = vld [vmem:[%s435 + $0xa8] sm:$0xff]
      %v519 = vld [vmem:[%s435 + $0xb0] sm:$0xff]
      %v520 = vld [vmem:[%s435 + $0xb8] sm:$0xff]
      %v521 = vld [vmem:[%s435 + $0xc0] sm:$0xff]
      %v522 = vld [vmem:[%s435 + $0xc8] sm:$0xff]
      %v523 = vld [vmem:[%s435 + $0xd0] sm:$0xff]
      %v524 = vld [vmem:[%s435 + $0xd8] sm:$0xff]
      %v525 = vld [vmem:[%s435 + $0xe0] sm:$0xff]
      %v526 = vld [vmem:[%s435 + $0xe8] sm:$0xff]
      %v527 = vld [vmem:[%s435 + $0xf0] sm:$0xff]
      %v528 = vld [vmem:[%s435 + $0xf8] sm:$0xff]
      %s529 = scalar_lea.vmem [#allocation2], 24
      %530 = vst.msk [vmem:[%s529 + $0x1] sm:$0xff] %vm441, %v497
      %531 = vst.msk [vmem:[%s529 + $0x9] sm:$0xff] %vm441, %v498
      %532 = vst.msk [vmem:[%s529 + $0x19] sm:$0xff] %vm441, %v499
      %533 = vst.msk [vmem:[%s529 + $0x21] sm:$0xff] %vm441, %v500
      %534 = vst.msk [vmem:[%s529 + $0x31] sm:$0xff] %vm441, %v501
      %535 = vst.msk [vmem:[%s529 + $0x39] sm:$0xff] %vm441, %v502
      %536 = vst.msk [vmem:[%s529 + $0x49] sm:$0xff] %vm441, %v503
      %537 = vst.msk [vmem:[%s529 + $0x51] sm:$0xff] %vm441, %v504
      %538 = vst.msk [vmem:[%s529 + $0x61] sm:$0xff] %vm441, %v505
      %539 = vst.msk [vmem:[%s529 + $0x69] sm:$0xff] %vm441, %v506
      %540 = vst.msk [vmem:[%s529 + $0x79] sm:$0xff] %vm441, %v507
      %541 = vst.msk [vmem:[%s529 + $0x81] sm:$0xff] %vm441, %v508
      %542 = vst.msk [vmem:[%s529 + $0x91] sm:$0xff] %vm441, %v509
      %543 = vst.msk [vmem:[%s529 + $0x99] sm:$0xff] %vm441, %v510
      %544 = vst.msk [vmem:[%s529 + $0xa9] sm:$0xff] %vm441, %v511
      %545 = vst.msk [vmem:[%s529 + $0xb1] sm:$0xff] %vm441, %v512
      %546 = vst.msk [vmem:[%s529 + $0xc1] sm:$0xff] %vm441, %v513
      %547 = vst.msk [vmem:[%s529 + $0xc9] sm:$0xff] %vm441, %v514
      %548 = vst.msk [vmem:[%s529 + $0xd9] sm:$0xff] %vm441, %v515
      %549 = vst.msk [vmem:[%s529 + $0xe1] sm:$0xff] %vm441, %v516
      %550 = vst.msk [vmem:[%s529 + $0xf1] sm:$0xff] %vm441, %v517
      %551 = vst.msk [vmem:[%s529 + $0xf9] sm:$0xff] %vm441, %v518
      %552 = vst.msk [vmem:[%s529 + $0x109] sm:$0xff] %vm441, %v519
      %553 = vst.msk [vmem:[%s529 + $0x111] sm:$0xff] %vm441, %v520
      %554 = vst.msk [vmem:[%s529 + $0x121] sm:$0xff] %vm441, %v521
      %555 = vst.msk [vmem:[%s529 + $0x129] sm:$0xff] %vm441, %v522
      %556 = vst.msk [vmem:[%s529 + $0x139] sm:$0xff] %vm441, %v523
      %557 = vst.msk [vmem:[%s529 + $0x141] sm:$0xff] %vm441, %v524
      %558 = vst.msk [vmem:[%s529 + $0x151] sm:$0xff] %vm441, %v525
      %559 = vst.msk [vmem:[%s529 + $0x159] sm:$0xff] %vm441, %v526
      %560 = vst.msk [vmem:[%s529 + $0x169] sm:$0xff] %vm441, %v527
      %561 = vst.msk [vmem:[%s529 + $0x171] sm:$0xff] %vm441, %v528
      %v562 = vld [vmem:[#allocation2] sm:$0xff]
      %v563 = vld [vmem:[#allocation2 + $0x8] sm:$0xff]
      %v564 = vld [vmem:[#allocation2 + $0x10] sm:$0x3]
      %v565 = vld [vmem:[#allocation2 + $0x18] sm:$0xff]
      %v566 = vld [vmem:[#allocation2 + $0x20] sm:$0xff]
      %v567 = vld [vmem:[#allocation2 + $0x28] sm:$0x3]
      %v568 = vld [vmem:[#allocation2 + $0x30] sm:$0xff]
      %v569 = vld [vmem:[#allocation2 + $0x38] sm:$0xff]
      %v570 = vld [vmem:[#allocation2 + $0x40] sm:$0x3]
      %v571 = vld [vmem:[#allocation2 + $0x48] sm:$0xff]
      %v572 = vld [vmem:[#allocation2 + $0x50] sm:$0xff]
      %v573 = vld [vmem:[#allocation2 + $0x58] sm:$0x3]
      %v574 = vld [vmem:[#allocation2 + $0x60] sm:$0xff]
      %v575 = vld [vmem:[#allocation2 + $0x68] sm:$0xff]
      %v576 = vld [vmem:[#allocation2 + $0x70] sm:$0x3]
      %v577 = vld [vmem:[#allocation2 + $0x78] sm:$0xff]
      %v578 = vld [vmem:[#allocation2 + $0x80] sm:$0xff]
      %v579 = vld [vmem:[#allocation2 + $0x88] sm:$0x3]
      %v580 = vld [vmem:[#allocation2 + $0x90] sm:$0xff]
      %v581 = vld [vmem:[#allocation2 + $0x98] sm:$0xff]
      %v582 = vld [vmem:[#allocation2 + $0xa0] sm:$0x3]
      %v583 = vld [vmem:[#allocation2 + $0xa8] sm:$0xff]
      %v584 = vld [vmem:[#allocation2 + $0xb0] sm:$0xff]
      %v585 = vld [vmem:[#allocation2 + $0xb8] sm:$0x3]
      %v586 = vld [vmem:[#allocation2 + $0xc0] sm:$0xff]
      %v587 = vld [vmem:[#allocation2 + $0xc8] sm:$0xff]
      %v588 = vld [vmem:[#allocation2 + $0xd0] sm:$0x3]
      %v589 = vld [vmem:[#allocation2 + $0xd8] sm:$0xff]
      %v590 = vld [vmem:[#allocation2 + $0xe0] sm:$0xff]
      %v591 = vld [vmem:[#allocation2 + $0xe8] sm:$0x3]
      %v592 = vld [vmem:[#allocation2 + $0xf0] sm:$0xff]
      %v593 = vld [vmem:[#allocation2 + $0xf8] sm:$0xff]
      %v594 = vld [vmem:[#allocation2 + $0x100] sm:$0x3]
      %v595 = vld [vmem:[#allocation2 + $0x108] sm:$0xff]
      %v596 = vld [vmem:[#allocation2 + $0x110] sm:$0xff]
      %v597 = vld [vmem:[#allocation2 + $0x118] sm:$0x3]
      %v598 = vld [vmem:[#allocation2 + $0x120] sm:$0xff]
      %v599 = vld [vmem:[#allocation2 + $0x128] sm:$0xff]
      %v600 = vld [vmem:[#allocation2 + $0x130] sm:$0x3]
      %v601 = vld [vmem:[#allocation2 + $0x138] sm:$0xff]
      %v602 = vld [vmem:[#allocation2 + $0x140] sm:$0xff]
      %v603 = vld [vmem:[#allocation2 + $0x148] sm:$0x3]
      %v604 = vld [vmem:[#allocation2 + $0x150] sm:$0xff]
      %v605 = vld [vmem:[#allocation2 + $0x158] sm:$0xff]
      %v606 = vld [vmem:[#allocation2 + $0x160] sm:$0x3]
      %v607 = vld [vmem:[#allocation2 + $0x168] sm:$0xff]
      %v608 = vld [vmem:[#allocation2 + $0x170] sm:$0xff]
      %v609 = vld [vmem:[#allocation2 + $0x178] sm:$0x3]
      %v610 = vld [vmem:[#allocation2 + $0x180] sm:$0xff]
      %v611 = vld [vmem:[#allocation2 + $0x188] sm:$0xff]
      %v612 = vld [vmem:[#allocation2 + $0x190] sm:$0x3]
      %v613 = vld [vmem:[#allocation2 + $0x198] sm:$0xff]
      %v614 = vld [vmem:[#allocation2 + $0x1a0] sm:$0xff]
      %v615 = vld [vmem:[#allocation2 + $0x1a8] sm:$0x3]
      %vm616 = vcmask 64512
      %617 = vst.msk [vmem:[#allocation3] sm:$0xff] %vm616, 0.0
      %618 = vst.msk [vmem:[#allocation3 + $0x8] sm:$0xff] %vm616, 0.0
      %vm619 = vcmask 58368
      %620 = vst.msk [vmem:[#allocation3 + $0x10] sm:$0x3] %vm619, 0.0
      %621 = vst.msk [vmem:[#allocation3 + $0x18] sm:$0xff] %vm616, 0.0
      %622 = vst.msk [vmem:[#allocation3 + $0x20] sm:$0xff] %vm616, 0.0
      %623 = vst.msk [vmem:[#allocation3 + $0x28] sm:$0x3] %vm619, 0.0
      %624 = vst.msk [vmem:[#allocation3 + $0x30] sm:$0xff] %vm616, 0.0
      %625 = vst.msk [vmem:[#allocation3 + $0x38] sm:$0xff] %vm616, 0.0
      %626 = vst.msk [vmem:[#allocation3 + $0x40] sm:$0x3] %vm619, 0.0
      %627 = vst.msk [vmem:[#allocation3 + $0x48] sm:$0xff] %vm616, 0.0
      %628 = vst.msk [vmem:[#allocation3 + $0x50] sm:$0xff] %vm616, 0.0
      %629 = vst.msk [vmem:[#allocation3 + $0x58] sm:$0x3] %vm619, 0.0
      %630 = vst.msk [vmem:[#allocation3 + $0x60] sm:$0xff] %vm616, 0.0
      %631 = vst.msk [vmem:[#allocation3 + $0x68] sm:$0xff] %vm616, 0.0
      %632 = vst.msk [vmem:[#allocation3 + $0x70] sm:$0x3] %vm619, 0.0
      %633 = vst.msk [vmem:[#allocation3 + $0x78] sm:$0xff] %vm616, 0.0
      %634 = vst.msk [vmem:[#allocation3 + $0x80] sm:$0xff] %vm616, 0.0
      %635 = vst.msk [vmem:[#allocation3 + $0x88] sm:$0x3] %vm619, 0.0
      %636 = vst.msk [vmem:[#allocation3 + $0x90] sm:$0xff] %vm616, 0.0
      %637 = vst.msk [vmem:[#allocation3 + $0x98] sm:$0xff] %vm616, 0.0
      %638 = vst.msk [vmem:[#allocation3 + $0xa0] sm:$0x3] %vm619, 0.0
      %639 = vst.msk [vmem:[#allocation3 + $0xa8] sm:$0xff] %vm616, 0.0
      %640 = vst.msk [vmem:[#allocation3 + $0xb0] sm:$0xff] %vm616, 0.0
      %641 = vst.msk [vmem:[#allocation3 + $0xb8] sm:$0x3] %vm619, 0.0
      %642 = vst.msk [vmem:[#allocation3 + $0xc0] sm:$0xff] %vm616, 0.0
      %643 = vst.msk [vmem:[#allocation3 + $0xc8] sm:$0xff] %vm616, 0.0
      %644 = vst.msk [vmem:[#allocation3 + $0xd0] sm:$0x3] %vm619, 0.0
      %645 = vst.msk [vmem:[#allocation3 + $0xd8] sm:$0xff] %vm616, 0.0
      %646 = vst.msk [vmem:[#allocation3 + $0xe0] sm:$0xff] %vm616, 0.0
      %647 = vst.msk [vmem:[#allocation3 + $0xe8] sm:$0x3] %vm619, 0.0
      %648 = vst.msk [vmem:[#allocation3 + $0xf0] sm:$0xff] %vm616, 0.0
      %649 = vst.msk [vmem:[#allocation3 + $0xf8] sm:$0xff] %vm616, 0.0
      %650 = vst.msk [vmem:[#allocation3 + $0x100] sm:$0x3] %vm619, 0.0
      %651 = vst.msk [vmem:[#allocation3 + $0x108] sm:$0xff] %vm616, 0.0
      %652 = vst.msk [vmem:[#allocation3 + $0x110] sm:$0xff] %vm616, 0.0
      %653 = vst.msk [vmem:[#allocation3 + $0x118] sm:$0x3] %vm619, 0.0
      %654 = vst.msk [vmem:[#allocation3 + $0x120] sm:$0xff] %vm616, 0.0
      %655 = vst.msk [vmem:[#allocation3 + $0x128] sm:$0xff] %vm616, 0.0
      %656 = vst.msk [vmem:[#allocation3 + $0x130] sm:$0x3] %vm619, 0.0
      %657 = vst.msk [vmem:[#allocation3 + $0x138] sm:$0xff] %vm616, 0.0
      %658 = vst.msk [vmem:[#allocation3 + $0x140] sm:$0xff] %vm616, 0.0
      %659 = vst.msk [vmem:[#allocation3 + $0x148] sm:$0x3] %vm619, 0.0
      %660 = vst.msk [vmem:[#allocation3 + $0x150] sm:$0xff] %vm616, 0.0
      %661 = vst.msk [vmem:[#allocation3 + $0x158] sm:$0xff] %vm616, 0.0
      %662 = vst.msk [vmem:[#allocation3 + $0x160] sm:$0x3] %vm619, 0.0
      %663 = vst.msk [vmem:[#allocation3 + $0x168] sm:$0xff] %vm616, 0.0
      %664 = vst.msk [vmem:[#allocation3 + $0x170] sm:$0xff] %vm616, 0.0
      %665 = vst.msk [vmem:[#allocation3 + $0x178] sm:$0x3] %vm619, 0.0
      %666 = vst.msk [vmem:[#allocation3 + $0x180] sm:$0xff] %vm616, 0.0
      %667 = vst.msk [vmem:[#allocation3 + $0x188] sm:$0xff] %vm616, 0.0
      %668 = vst.msk [vmem:[#allocation3 + $0x190] sm:$0x3] %vm619, 0.0
      %669 = vst.msk [vmem:[#allocation3 + $0x198] sm:$0xff] %vm616, 0.0
      %670 = vst.msk [vmem:[#allocation3 + $0x1a0] sm:$0xff] %vm616, 0.0
      %671 = vst.msk [vmem:[#allocation3 + $0x1a8] sm:$0x3] %vm619, 0.0
      %vm720 = vcmask 1046528
      %v721 = vrot.slane %v562, 1
      %v722 = vrot.slane %v563, 1
      %v723 = vsel %vm720, %v721, %v722
      %v724 = vrot.slane %v564, 1
      %v725 = vsel %vm720, %v722, %v724
      %v726 = vrot.slane %v565, 1
      %v727 = vrot.slane %v566, 1
      %v728 = vsel %vm720, %v726, %v727
      %v729 = vrot.slane %v567, 1
      %v730 = vsel %vm720, %v727, %v729
      %v731 = vrot.slane %v568, 1
      %v732 = vrot.slane %v569, 1
      %v733 = vsel %vm720, %v731, %v732
      %v734 = vrot.slane %v570, 1
      %v735 = vsel %vm720, %v732, %v734
      %v736 = vrot.slane %v571, 1
      %v737 = vrot.slane %v572, 1
      %v738 = vsel %vm720, %v736, %v737
      %v739 = vrot.slane %v573, 1
      %v740 = vsel %vm720, %v737, %v739
      %v741 = vrot.slane %v574, 1
      %v742 = vrot.slane %v575, 1
      %v743 = vsel %vm720, %v741, %v742
      %v744 = vrot.slane %v576, 1
      %v745 = vsel %vm720, %v742, %v744
      %v746 = vrot.slane %v577, 1
      %v747 = vrot.slane %v578, 1
      %v748 = vsel %vm720, %v746, %v747
      %v749 = vrot.slane %v579, 1
      %v750 = vsel %vm720, %v747, %v749
      %v751 = vrot.slane %v580, 1
      %v752 = vrot.slane %v581, 1
      %v753 = vsel %vm720, %v751, %v752
      %v754 = vrot.slane %v582, 1
      %v755 = vsel %vm720, %v752, %v754
      %v756 = vrot.slane %v583, 1
      %v757 = vrot.slane %v584, 1
      %v758 = vsel %vm720, %v756, %v757
      %v759 = vrot.slane %v585, 1
      %v760 = vsel %vm720, %v757, %v759
      %v761 = vrot.slane %v586, 1
      %v762 = vrot.slane %v587, 1
      %v763 = vsel %vm720, %v761, %v762
      %v764 = vrot.slane %v588, 1
      %v765 = vsel %vm720, %v762, %v764
      %v766 = vrot.slane %v589, 1
      %v767 = vrot.slane %v590, 1
      %v768 = vsel %vm720, %v766, %v767
      %v769 = vrot.slane %v591, 1
      %v770 = vsel %vm720, %v767, %v769
      %v771 = vrot.slane %v592, 1
      %v772 = vrot.slane %v593, 1
      %v773 = vsel %vm720, %v771, %v772
      %v774 = vrot.slane %v594, 1
      %v775 = vsel %vm720, %v772, %v774
      %v776 = vrot.slane %v595, 1
      %v777 = vrot.slane %v596, 1
      %v778 = vsel %vm720, %v776, %v777
      %v779 = vrot.slane %v597, 1
      %v780 = vsel %vm720, %v777, %v779
      %v781 = vrot.slane %v598, 1
      %v782 = vrot.slane %v599, 1
      %v783 = vsel %vm720, %v781, %v782
      %v784 = vrot.slane %v600, 1
      %v785 = vsel %vm720, %v782, %v784
      %v786 = vrot.slane %v601, 1
      %v787 = vrot.slane %v602, 1
      %v788 = vsel %vm720, %v786, %v787
      %v789 = vrot.slane %v603, 1
      %v790 = vsel %vm720, %v787, %v789
      %v791 = vrot.slane %v604, 1
      %v792 = vrot.slane %v605, 1
      %v793 = vsel %vm720, %v791, %v792
      %v794 = vrot.slane %v606, 1
      %v795 = vsel %vm720, %v792, %v794
      %v796 = vrot.slane %v607, 1
      %v797 = vrot.slane %v608, 1
      %v798 = vsel %vm720, %v796, %v797
      %v799 = vrot.slane %v609, 1
      %v800 = vsel %vm720, %v797, %v799
      %801 = vrot.lane.b32.xlu0 %v723, 4
      %v802 = vpop.permute.xlu0 %801
      %803 = vrot.lane.b32.xlu0 %v725, 4
      %v804 = vpop.permute.xlu0 %803
      %805 = vrot.lane.b32.xlu0 %v728, 4
      %v806 = vpop.permute.xlu0 %805
      %807 = vrot.lane.b32.xlu0 %v730, 4
      %v808 = vpop.permute.xlu0 %807
      %809 = vrot.lane.b32.xlu0 %v733, 4
      %v810 = vpop.permute.xlu0 %809
      %811 = vrot.lane.b32.xlu0 %v735, 4
      %v812 = vpop.permute.xlu0 %811
      %813 = vrot.lane.b32.xlu0 %v738, 4
      %v814 = vpop.permute.xlu0 %813
      %815 = vrot.lane.b32.xlu0 %v740, 4
      %v816 = vpop.permute.xlu0 %815
      %817 = vrot.lane.b32.xlu0 %v743, 4
      %v818 = vpop.permute.xlu0 %817
      %819 = vrot.lane.b32.xlu0 %v745, 4
      %v820 = vpop.permute.xlu0 %819
      %821 = vrot.lane.b32.xlu0 %v748, 4
      %v822 = vpop.permute.xlu0 %821
      %823 = vrot.lane.b32.xlu0 %v750, 4
      %v824 = vpop.permute.xlu0 %823
      %825 = vrot.lane.b32.xlu0 %v753, 4
      %v826 = vpop.permute.xlu0 %825
      %827 = vrot.lane.b32.xlu0 %v755, 4
      %v828 = vpop.permute.xlu0 %827
      %829 = vrot.lane.b32.xlu0 %v758, 4
      %v830 = vpop.permute.xlu0 %829
      %831 = vrot.lane.b32.xlu0 %v760, 4
      %v832 = vpop.permute.xlu0 %831
      %833 = vrot.lane.b32.xlu0 %v763, 4
      %v834 = vpop.permute.xlu0 %833
      %835 = vrot.lane.b32.xlu0 %v765, 4
      %v836 = vpop.permute.xlu0 %835
      %837 = vrot.lane.b32.xlu0 %v768, 4
      %v838 = vpop.permute.xlu0 %837
      %839 = vrot.lane.b32.xlu0 %v770, 4
      %v840 = vpop.permute.xlu0 %839
      %841 = vrot.lane.b32.xlu0 %v773, 4
      %v842 = vpop.permute.xlu0 %841
      %843 = vrot.lane.b32.xlu0 %v775, 4
      %v844 = vpop.permute.xlu0 %843
      %845 = vrot.lane.b32.xlu0 %v778, 4
      %v846 = vpop.permute.xlu0 %845
      %847 = vrot.lane.b32.xlu0 %v780, 4
      %v848 = vpop.permute.xlu0 %847
      %849 = vrot.lane.b32.xlu0 %v783, 4
      %v850 = vpop.permute.xlu0 %849
      %851 = vrot.lane.b32.xlu0 %v785, 4
      %v852 = vpop.permute.xlu0 %851
      %853 = vrot.lane.b32.xlu0 %v788, 4
      %v854 = vpop.permute.xlu0 %853
      %855 = vrot.lane.b32.xlu0 %v790, 4
      %v856 = vpop.permute.xlu0 %855
      %857 = vrot.lane.b32.xlu0 %v793, 4
      %v858 = vpop.permute.xlu0 %857
      %859 = vrot.lane.b32.xlu0 %v795, 4
      %v860 = vpop.permute.xlu0 %859
      %861 = vrot.lane.b32.xlu0 %v798, 4
      %v862 = vpop.permute.xlu0 %861
      %863 = vrot.lane.b32.xlu0 %v800, 4
      %v864 = vpop.permute.xlu0 %863
      %vm897 = vcmask 1045504
      %v898 = vrot.slane %v562, 2
      %v899 = vrot.slane %v563, 2
      %v900 = vsel %vm897, %v898, %v899
      %v901 = vrot.slane %v564, 2
      %v902 = vsel %vm897, %v899, %v901
      %v903 = vrot.slane %v565, 2
      %v904 = vrot.slane %v566, 2
      %v905 = vsel %vm897, %v903, %v904
      %v906 = vrot.slane %v567, 2
      %v907 = vsel %vm897, %v904, %v906
      %v908 = vrot.slane %v568, 2
      %v909 = vrot.slane %v569, 2
      %v910 = vsel %vm897, %v908, %v909
      %v911 = vrot.slane %v570, 2
      %v912 = vsel %vm897, %v909, %v911
      %v913 = vrot.slane %v571, 2
      %v914 = vrot.slane %v572, 2
      %v915 = vsel %vm897, %v913, %v914
      %v916 = vrot.slane %v573, 2
      %v917 = vsel %vm897, %v914, %v916
      %v918 = vrot.slane %v574, 2
      %v919 = vrot.slane %v575, 2
      %v920 = vsel %vm897, %v918, %v919
      %v921 = vrot.slane %v576, 2
      %v922 = vsel %vm897, %v919, %v921
      %v923 = vrot.slane %v577, 2
      %v924 = vrot.slane %v578, 2
      %v925 = vsel %vm897, %v923, %v924
      %v926 = vrot.slane %v579, 2
      %v927 = vsel %vm897, %v924, %v926
      %v928 = vrot.slane %v580, 2
      %v929 = vrot.slane %v581, 2
      %v930 = vsel %vm897, %v928, %v929
      %v931 = vrot.slane %v582, 2
      %v932 = vsel %vm897, %v929, %v931
      %v933 = vrot.slane %v583, 2
      %v934 = vrot.slane %v584, 2
      %v935 = vsel %vm897, %v933, %v934
      %v936 = vrot.slane %v585, 2
      %v937 = vsel %vm897, %v934, %v936
      %v938 = vrot.slane %v586, 2
      %v939 = vrot.slane %v587, 2
      %v940 = vsel %vm897, %v938, %v939
      %v941 = vrot.slane %v588, 2
      %v942 = vsel %vm897, %v939, %v941
      %v943 = vrot.slane %v589, 2
      %v944 = vrot.slane %v590, 2
      %v945 = vsel %vm897, %v943, %v944
      %v946 = vrot.slane %v591, 2
      %v947 = vsel %vm897, %v944, %v946
      %v948 = vrot.slane %v592, 2
      %v949 = vrot.slane %v593, 2
      %v950 = vsel %vm897, %v948, %v949
      %v951 = vrot.slane %v594, 2
      %v952 = vsel %vm897, %v949, %v951
      %v953 = vrot.slane %v595, 2
      %v954 = vrot.slane %v596, 2
      %v955 = vsel %vm897, %v953, %v954
      %v956 = vrot.slane %v597, 2
      %v957 = vsel %vm897, %v954, %v956
      %v958 = vrot.slane %v598, 2
      %v959 = vrot.slane %v599, 2
      %v960 = vsel %vm897, %v958, %v959
      %v961 = vrot.slane %v600, 2
      %v962 = vsel %vm897, %v959, %v961
      %v963 = vrot.slane %v601, 2
      %v964 = vrot.slane %v602, 2
      %v965 = vsel %vm897, %v963, %v964
      %v966 = vrot.slane %v603, 2
      %v967 = vsel %vm897, %v964, %v966
      %v968 = vrot.slane %v604, 2
      %v969 = vrot.slane %v605, 2
      %v970 = vsel %vm897, %v968, %v969
      %v971 = vrot.slane %v606, 2
      %v972 = vsel %vm897, %v969, %v971
      %v973 = vrot.slane %v607, 2
      %v974 = vrot.slane %v608, 2
      %v975 = vsel %vm897, %v973, %v974
      %v976 = vrot.slane %v609, 2
      %v977 = vsel %vm897, %v974, %v976
      %978 = vrot.lane.b32.xlu0 %v900, 8
      %v979 = vpop.permute.xlu0 %978
      %980 = vrot.lane.b32.xlu0 %v902, 8
      %v981 = vpop.permute.xlu0 %980
      %982 = vrot.lane.b32.xlu0 %v905, 8
      %v983 = vpop.permute.xlu0 %982
      %984 = vrot.lane.b32.xlu0 %v907, 8
      %v985 = vpop.permute.xlu0 %984
      %986 = vrot.lane.b32.xlu0 %v910, 8
      %v987 = vpop.permute.xlu0 %986
      %988 = vrot.lane.b32.xlu0 %v912, 8
      %v989 = vpop.permute.xlu0 %988
      %990 = vrot.lane.b32.xlu0 %v915, 8
      %v991 = vpop.permute.xlu0 %990
      %992 = vrot.lane.b32.xlu0 %v917, 8
      %v993 = vpop.permute.xlu0 %992
      %994 = vrot.lane.b32.xlu0 %v920, 8
      %v995 = vpop.permute.xlu0 %994
      %996 = vrot.lane.b32.xlu0 %v922, 8
      %v997 = vpop.permute.xlu0 %996
      %998 = vrot.lane.b32.xlu0 %v925, 8
      %v999 = vpop.permute.xlu0 %998
      %1000 = vrot.lane.b32.xlu0 %v927, 8
      %v1001 = vpop.permute.xlu0 %1000
      %1002 = vrot.lane.b32.xlu0 %v930, 8
      %v1003 = vpop.permute.xlu0 %1002
      %1004 = vrot.lane.b32.xlu0 %v932, 8
      %v1005 = vpop.permute.xlu0 %1004
      %1006 = vrot.lane.b32.xlu0 %v935, 8
      %v1007 = vpop.permute.xlu0 %1006
      %1008 = vrot.lane.b32.xlu0 %v937, 8
      %v1009 = vpop.permute.xlu0 %1008
      %1010 = vrot.lane.b32.xlu0 %v940, 8
      %v1011 = vpop.permute.xlu0 %1010
      %1012 = vrot.lane.b32.xlu0 %v942, 8
      %v1013 = vpop.permute.xlu0 %1012
      %1014 = vrot.lane.b32.xlu0 %v945, 8
      %v1015 = vpop.permute.xlu0 %1014
      %1016 = vrot.lane.b32.xlu0 %v947, 8
      %v1017 = vpop.permute.xlu0 %1016
      %1018 = vrot.lane.b32.xlu0 %v950, 8
      %v1019 = vpop.permute.xlu0 %1018
      %1020 = vrot.lane.b32.xlu0 %v952, 8
      %v1021 = vpop.permute.xlu0 %1020
      %1022 = vrot.lane.b32.xlu0 %v955, 8
      %v1023 = vpop.permute.xlu0 %1022
      %1024 = vrot.lane.b32.xlu0 %v957, 8
      %v1025 = vpop.permute.xlu0 %1024
      %1026 = vrot.lane.b32.xlu0 %v960, 8
      %v1027 = vpop.permute.xlu0 %1026
      %1028 = vrot.lane.b32.xlu0 %v962, 8
      %v1029 = vpop.permute.xlu0 %1028
      %1030 = vrot.lane.b32.xlu0 %v965, 8
      %v1031 = vpop.permute.xlu0 %1030
      %1032 = vrot.lane.b32.xlu0 %v967, 8
      %v1033 = vpop.permute.xlu0 %1032
      %1034 = vrot.lane.b32.xlu0 %v970, 8
      %v1035 = vpop.permute.xlu0 %1034
      %1036 = vrot.lane.b32.xlu0 %v972, 8
      %v1037 = vpop.permute.xlu0 %1036
      %1038 = vrot.lane.b32.xlu0 %v975, 8
      %v1039 = vpop.permute.xlu0 %1038
      %1040 = vrot.lane.b32.xlu0 %v977, 8
      %v1041 = vpop.permute.xlu0 %1040
      %1076 = vrot.lane.b32.xlu0 %v565, 12
      %v1077 = vpop.permute.xlu0 %1076
      %1078 = vrot.lane.b32.xlu0 %v566, 12
      %v1079 = vpop.permute.xlu0 %1078
      %1080 = vrot.lane.b32.xlu0 %v568, 12
      %v1081 = vpop.permute.xlu0 %1080
      %1082 = vrot.lane.b32.xlu0 %v569, 12
      %v1083 = vpop.permute.xlu0 %1082
      %1084 = vrot.lane.b32.xlu0 %v571, 12
      %v1085 = vpop.permute.xlu0 %1084
      %1086 = vrot.lane.b32.xlu0 %v572, 12
      %v1087 = vpop.permute.xlu0 %1086
      %1088 = vrot.lane.b32.xlu0 %v574, 12
      %v1089 = vpop.permute.xlu0 %1088
      %1090 = vrot.lane.b32.xlu0 %v575, 12
      %v1091 = vpop.permute.xlu0 %1090
      %1092 = vrot.lane.b32.xlu0 %v577, 12
      %v1093 = vpop.permute.xlu0 %1092
      %1094 = vrot.lane.b32.xlu0 %v578, 12
      %v1095 = vpop.permute.xlu0 %1094
      %1096 = vrot.lane.b32.xlu0 %v580, 12
      %v1097 = vpop.permute.xlu0 %1096
      %1098 = vrot.lane.b32.xlu0 %v581, 12
      %v1099 = vpop.permute.xlu0 %1098
      %1100 = vrot.lane.b32.xlu0 %v583, 12
      %v1101 = vpop.permute.xlu0 %1100
      %1102 = vrot.lane.b32.xlu0 %v584, 12
      %v1103 = vpop.permute.xlu0 %1102
      %1104 = vrot.lane.b32.xlu0 %v586, 12
      %v1105 = vpop.permute.xlu0 %1104
      %1106 = vrot.lane.b32.xlu0 %v587, 12
      %v1107 = vpop.permute.xlu0 %1106
      %1108 = vrot.lane.b32.xlu0 %v589, 12
      %v1109 = vpop.permute.xlu0 %1108
      %1110 = vrot.lane.b32.xlu0 %v590, 12
      %v1111 = vpop.permute.xlu0 %1110
      %1112 = vrot.lane.b32.xlu0 %v592, 12
      %v1113 = vpop.permute.xlu0 %1112
      %1114 = vrot.lane.b32.xlu0 %v593, 12
      %v1115 = vpop.permute.xlu0 %1114
      %1116 = vrot.lane.b32.xlu0 %v595, 12
      %v1117 = vpop.permute.xlu0 %1116
      %1118 = vrot.lane.b32.xlu0 %v596, 12
      %v1119 = vpop.permute.xlu0 %1118
      %1120 = vrot.lane.b32.xlu0 %v598, 12
      %v1121 = vpop.permute.xlu0 %1120
      %1122 = vrot.lane.b32.xlu0 %v599, 12
      %v1123 = vpop.permute.xlu0 %1122
      %1124 = vrot.lane.b32.xlu0 %v601, 12
      %v1125 = vpop.permute.xlu0 %1124
      %1126 = vrot.lane.b32.xlu0 %v602, 12
      %v1127 = vpop.permute.xlu0 %1126
      %1128 = vrot.lane.b32.xlu0 %v604, 12
      %v1129 = vpop.permute.xlu0 %1128
      %1130 = vrot.lane.b32.xlu0 %v605, 12
      %v1131 = vpop.permute.xlu0 %1130
      %1132 = vrot.lane.b32.xlu0 %v607, 12
      %v1133 = vpop.permute.xlu0 %1132
      %1134 = vrot.lane.b32.xlu0 %v608, 12
      %v1135 = vpop.permute.xlu0 %1134
      %1136 = vrot.lane.b32.xlu0 %v610, 12
      %v1137 = vpop.permute.xlu0 %1136
      %1138 = vrot.lane.b32.xlu0 %v611, 12
      %v1139 = vpop.permute.xlu0 %1138
      %v1173 = vrot.slane %v610, 1
      %v1174 = vrot.slane %v611, 1
      %v1175 = vsel %vm720, %v1173, %v1174
      %v1176 = vrot.slane %v612, 1
      %v1177 = vsel %vm720, %v1174, %v1176
      %1178 = vrot.lane.b32.xlu0 %v728, 16
      %v1179 = vpop.permute.xlu0 %1178
      %1180 = vrot.lane.b32.xlu0 %v730, 16
      %v1181 = vpop.permute.xlu0 %1180
      %1182 = vrot.lane.b32.xlu0 %v733, 16
      %v1183 = vpop.permute.xlu0 %1182
      %1184 = vrot.lane.b32.xlu0 %v735, 16
      %v1185 = vpop.permute.xlu0 %1184
      %1186 = vrot.lane.b32.xlu0 %v738, 16
      %v1187 = vpop.permute.xlu0 %1186
      %1188 = vrot.lane.b32.xlu0 %v740, 16
      %v1189 = vpop.permute.xlu0 %1188
      %1190 = vrot.lane.b32.xlu0 %v743, 16
      %v1191 = vpop.permute.xlu0 %1190
      %1192 = vrot.lane.b32.xlu0 %v745, 16
      %v1193 = vpop.permute.xlu0 %1192
      %1194 = vrot.lane.b32.xlu0 %v748, 16
      %v1195 = vpop.permute.xlu0 %1194
      %1196 = vrot.lane.b32.xlu0 %v750, 16
      %v1197 = vpop.permute.xlu0 %1196
      %1198 = vrot.lane.b32.xlu0 %v753, 16
      %v1199 = vpop.permute.xlu0 %1198
      %1200 = vrot.lane.b32.xlu0 %v755, 16
      %v1201 = vpop.permute.xlu0 %1200
      %1202 = vrot.lane.b32.xlu0 %v758, 16
      %v1203 = vpop.permute.xlu0 %1202
      %1204 = vrot.lane.b32.xlu0 %v760, 16
      %v1205 = vpop.permute.xlu0 %1204
      %1206 = vrot.lane.b32.xlu0 %v763, 16
      %v1207 = vpop.permute.xlu0 %1206
      %1208 = vrot.lane.b32.xlu0 %v765, 16
      %v1209 = vpop.permute.xlu0 %1208
      %1210 = vrot.lane.b32.xlu0 %v768, 16
      %v1211 = vpop.permute.xlu0 %1210
      %1212 = vrot.lane.b32.xlu0 %v770, 16
      %v1213 = vpop.permute.xlu0 %1212
      %1214 = vrot.lane.b32.xlu0 %v773, 16
      %v1215 = vpop.permute.xlu0 %1214
      %1216 = vrot.lane.b32.xlu0 %v775, 16
      %v1217 = vpop.permute.xlu0 %1216
      %1218 = vrot.lane.b32.xlu0 %v778, 16
      %v1219 = vpop.permute.xlu0 %1218
      %1220 = vrot.lane.b32.xlu0 %v780, 16
      %v1221 = vpop.permute.xlu0 %1220
      %1222 = vrot.lane.b32.xlu0 %v783, 16
      %v1223 = vpop.permute.xlu0 %1222
      %1224 = vrot.lane.b32.xlu0 %v785, 16
      %v1225 = vpop.permute.xlu0 %1224
      %1226 = vrot.lane.b32.xlu0 %v788, 16
      %v1227 = vpop.permute.xlu0 %1226
      %1228 = vrot.lane.b32.xlu0 %v790, 16
      %v1229 = vpop.permute.xlu0 %1228
      %1230 = vrot.lane.b32.xlu0 %v793, 16
      %v1231 = vpop.permute.xlu0 %1230
      %1232 = vrot.lane.b32.xlu0 %v795, 16
      %v1233 = vpop.permute.xlu0 %1232
      %1234 = vrot.lane.b32.xlu0 %v798, 16
      %v1235 = vpop.permute.xlu0 %1234
      %1236 = vrot.lane.b32.xlu0 %v800, 16
      %v1237 = vpop.permute.xlu0 %1236
      %1238 = vrot.lane.b32.xlu0 %v1175, 16
      %v1239 = vpop.permute.xlu0 %1238
      %1240 = vrot.lane.b32.xlu0 %v1177, 16
      %v1241 = vpop.permute.xlu0 %1240
      %v1274 = vrot.slane %v610, 2
      %v1275 = vrot.slane %v611, 2
      %v1276 = vsel %vm897, %v1274, %v1275
      %v1277 = vrot.slane %v612, 2
      %v1278 = vsel %vm897, %v1275, %v1277
      %1279 = vrot.lane.b32.xlu0 %v905, 20
      %v1280 = vpop.permute.xlu0 %1279
      %1281 = vrot.lane.b32.xlu0 %v907, 20
      %v1282 = vpop.permute.xlu0 %1281
      %1283 = vrot.lane.b32.xlu0 %v910, 20
      %v1284 = vpop.permute.xlu0 %1283
      %1285 = vrot.lane.b32.xlu0 %v912, 20
      %v1286 = vpop.permute.xlu0 %1285
      %1287 = vrot.lane.b32.xlu0 %v915, 20
      %v1288 = vpop.permute.xlu0 %1287
      %1289 = vrot.lane.b32.xlu0 %v917, 20
      %v1290 = vpop.permute.xlu0 %1289
      %1291 = vrot.lane.b32.xlu0 %v920, 20
      %v1292 = vpop.permute.xlu0 %1291
      %1293 = vrot.lane.b32.xlu0 %v922, 20
      %v1294 = vpop.permute.xlu0 %1293
      %1295 = vrot.lane.b32.xlu0 %v925, 20
      %v1296 = vpop.permute.xlu0 %1295
      %1297 = vrot.lane.b32.xlu0 %v927, 20
      %v1298 = vpop.permute.xlu0 %1297
      %1299 = vrot.lane.b32.xlu0 %v930, 20
      %v1300 = vpop.permute.xlu0 %1299
      %1301 = vrot.lane.b32.xlu0 %v932, 20
      %v1302 = vpop.permute.xlu0 %1301
      %1303 = vrot.lane.b32.xlu0 %v935, 20
      %v1304 = vpop.permute.xlu0 %1303
      %1305 = vrot.lane.b32.xlu0 %v937, 20
      %v1306 = vpop.permute.xlu0 %1305
      %1307 = vrot.lane.b32.xlu0 %v940, 20
      %v1308 = vpop.permute.xlu0 %1307
      %1309 = vrot.lane.b32.xlu0 %v942, 20
      %v1310 = vpop.permute.xlu0 %1309
      %1311 = vrot.lane.b32.xlu0 %v945, 20
      %v1312 = vpop.permute.xlu0 %1311
      %1313 = vrot.lane.b32.xlu0 %v947, 20
      %v1314 = vpop.permute.xlu0 %1313
      %1315 = vrot.lane.b32.xlu0 %v950, 20
      %v1316 = vpop.permute.xlu0 %1315
      %1317 = vrot.lane.b32.xlu0 %v952, 20
      %v1318 = vpop.permute.xlu0 %1317
      %1319 = vrot.lane.b32.xlu0 %v955, 20
      %v1320 = vpop.permute.xlu0 %1319
      %1321 = vrot.lane.b32.xlu0 %v957, 20
      %v1322 = vpop.permute.xlu0 %1321
      %1323 = vrot.lane.b32.xlu0 %v960, 20
      %v1324 = vpop.permute.xlu0 %1323
      %1325 = vrot.lane.b32.xlu0 %v962, 20
      %v1326 = vpop.permute.xlu0 %1325
      %1327 = vrot.lane.b32.xlu0 %v965, 20
      %v1328 = vpop.permute.xlu0 %1327
      %1329 = vrot.lane.b32.xlu0 %v967, 20
      %v1330 = vpop.permute.xlu0 %1329
      %1331 = vrot.lane.b32.xlu0 %v970, 20
      %v1332 = vpop.permute.xlu0 %1331
      %1333 = vrot.lane.b32.xlu0 %v972, 20
      %v1334 = vpop.permute.xlu0 %1333
      %1335 = vrot.lane.b32.xlu0 %v975, 20
      %v1336 = vpop.permute.xlu0 %1335
      %1337 = vrot.lane.b32.xlu0 %v977, 20
      %v1338 = vpop.permute.xlu0 %1337
      %1339 = vrot.lane.b32.xlu0 %v1276, 20
      %v1340 = vpop.permute.xlu0 %1339
      %1341 = vrot.lane.b32.xlu0 %v1278, 20
      %v1342 = vpop.permute.xlu0 %1341
      %1377 = vrot.lane.b32.xlu0 %v568, 24
      %v1378 = vpop.permute.xlu0 %1377
      %1379 = vrot.lane.b32.xlu0 %v569, 24
      %v1380 = vpop.permute.xlu0 %1379
      %1381 = vrot.lane.b32.xlu0 %v571, 24
      %v1382 = vpop.permute.xlu0 %1381
      %1383 = vrot.lane.b32.xlu0 %v572, 24
      %v1384 = vpop.permute.xlu0 %1383
      %1385 = vrot.lane.b32.xlu0 %v574, 24
      %v1386 = vpop.permute.xlu0 %1385
      %1387 = vrot.lane.b32.xlu0 %v575, 24
      %v1388 = vpop.permute.xlu0 %1387
      %1389 = vrot.lane.b32.xlu0 %v577, 24
      %v1390 = vpop.permute.xlu0 %1389
      %1391 = vrot.lane.b32.xlu0 %v578, 24
      %v1392 = vpop.permute.xlu0 %1391
      %1393 = vrot.lane.b32.xlu0 %v580, 24
      %v1394 = vpop.permute.xlu0 %1393
      %1395 = vrot.lane.b32.xlu0 %v581, 24
      %v1396 = vpop.permute.xlu0 %1395
      %1397 = vrot.lane.b32.xlu0 %v583, 24
      %v1398 = vpop.permute.xlu0 %1397
      %1399 = vrot.lane.b32.xlu0 %v584, 24
      %v1400 = vpop.permute.xlu0 %1399
      %1401 = vrot.lane.b32.xlu0 %v586, 24
      %v1402 = vpop.permute.xlu0 %1401
      %1403 = vrot.lane.b32.xlu0 %v587, 24
      %v1404 = vpop.permute.xlu0 %1403
      %1405 = vrot.lane.b32.xlu0 %v589, 24
      %v1406 = vpop.permute.xlu0 %1405
      %1407 = vrot.lane.b32.xlu0 %v590, 24
      %v1408 = vpop.permute.xlu0 %1407
      %1409 = vrot.lane.b32.xlu0 %v592, 24
      %v1410 = vpop.permute.xlu0 %1409
      %1411 = vrot.lane.b32.xlu0 %v593, 24
      %v1412 = vpop.permute.xlu0 %1411
      %1413 = vrot.lane.b32.xlu0 %v595, 24
      %v1414 = vpop.permute.xlu0 %1413
      %1415 = vrot.lane.b32.xlu0 %v596, 24
      %v1416 = vpop.permute.xlu0 %1415
      %1417 = vrot.lane.b32.xlu0 %v598, 24
      %v1418 = vpop.permute.xlu0 %1417
      %1419 = vrot.lane.b32.xlu0 %v599, 24
      %v1420 = vpop.permute.xlu0 %1419
      %1421 = vrot.lane.b32.xlu0 %v601, 24
      %v1422 = vpop.permute.xlu0 %1421
      %1423 = vrot.lane.b32.xlu0 %v602, 24
      %v1424 = vpop.permute.xlu0 %1423
      %1425 = vrot.lane.b32.xlu0 %v604, 24
      %v1426 = vpop.permute.xlu0 %1425
      %1427 = vrot.lane.b32.xlu0 %v605, 24
      %v1428 = vpop.permute.xlu0 %1427
      %1429 = vrot.lane.b32.xlu0 %v607, 24
      %v1430 = vpop.permute.xlu0 %1429
      %1431 = vrot.lane.b32.xlu0 %v608, 24
      %v1432 = vpop.permute.xlu0 %1431
      %1433 = vrot.lane.b32.xlu0 %v610, 24
      %v1434 = vpop.permute.xlu0 %1433
      %1435 = vrot.lane.b32.xlu0 %v611, 24
      %v1436 = vpop.permute.xlu0 %1435
      %1437 = vrot.lane.b32.xlu0 %v613, 24
      %v1438 = vpop.permute.xlu0 %1437
      %1439 = vrot.lane.b32.xlu0 %v614, 24
      %v1440 = vpop.permute.xlu0 %1439
      %v1474 = vrot.slane %v613, 1
      %v1475 = vrot.slane %v614, 1
      %v1476 = vsel %vm720, %v1474, %v1475
      %v1477 = vrot.slane %v615, 1
      %v1478 = vsel %vm720, %v1475, %v1477
      %1479 = vrot.lane.b32.xlu0 %v733, 28
      %v1480 = vpop.permute.xlu0 %1479
      %1481 = vrot.lane.b32.xlu0 %v735, 28
      %v1482 = vpop.permute.xlu0 %1481
      %1483 = vrot.lane.b32.xlu0 %v738, 28
      %v1484 = vpop.permute.xlu0 %1483
      %1485 = vrot.lane.b32.xlu0 %v740, 28
      %v1486 = vpop.permute.xlu0 %1485
      %1487 = vrot.lane.b32.xlu0 %v743, 28
      %v1488 = vpop.permute.xlu0 %1487
      %1489 = vrot.lane.b32.xlu0 %v745, 28
      %v1490 = vpop.permute.xlu0 %1489
      %1491 = vrot.lane.b32.xlu0 %v748, 28
      %v1492 = vpop.permute.xlu0 %1491
      %1493 = vrot.lane.b32.xlu0 %v750, 28
      %v1494 = vpop.permute.xlu0 %1493
      %1495 = vrot.lane.b32.xlu0 %v753, 28
      %v1496 = vpop.permute.xlu0 %1495
      %1497 = vrot.lane.b32.xlu0 %v755, 28
      %v1498 = vpop.permute.xlu0 %1497
      %1499 = vrot.lane.b32.xlu0 %v758, 28
      %v1500 = vpop.permute.xlu0 %1499
      %1501 = vrot.lane.b32.xlu0 %v760, 28
      %v1502 = vpop.permute.xlu0 %1501
      %1503 = vrot.lane.b32.xlu0 %v763, 28
      %v1504 = vpop.permute.xlu0 %1503
      %1505 = vrot.lane.b32.xlu0 %v765, 28
      %v1506 = vpop.permute.xlu0 %1505
      %1507 = vrot.lane.b32.xlu0 %v768, 28
      %v1508 = vpop.permute.xlu0 %1507
      %1509 = vrot.lane.b32.xlu0 %v770, 28
      %v1510 = vpop.permute.xlu0 %1509
      %1511 = vrot.lane.b32.xlu0 %v773, 28
      %v1512 = vpop.permute.xlu0 %1511
      %1513 = vrot.lane.b32.xlu0 %v775, 28
      %v1514 = vpop.permute.xlu0 %1513
      %1515 = vrot.lane.b32.xlu0 %v778, 28
      %v1516 = vpop.permute.xlu0 %1515
      %1517 = vrot.lane.b32.xlu0 %v780, 28
      %v1518 = vpop.permute.xlu0 %1517
      %1519 = vrot.lane.b32.xlu0 %v783, 28
      %v1520 = vpop.permute.xlu0 %1519
      %1521 = vrot.lane.b32.xlu0 %v785, 28
      %v1522 = vpop.permute.xlu0 %1521
      %1523 = vrot.lane.b32.xlu0 %v788, 28
      %v1524 = vpop.permute.xlu0 %1523
      %1525 = vrot.lane.b32.xlu0 %v790, 28
      %v1526 = vpop.permute.xlu0 %1525
      %1527 = vrot.lane.b32.xlu0 %v793, 28
      %v1528 = vpop.permute.xlu0 %1527
      %1529 = vrot.lane.b32.xlu0 %v795, 28
      %v1530 = vpop.permute.xlu0 %1529
      %1531 = vrot.lane.b32.xlu0 %v798, 28
      %v1532 = vpop.permute.xlu0 %1531
      %1533 = vrot.lane.b32.xlu0 %v800, 28
      %v1534 = vpop.permute.xlu0 %1533
      %1535 = vrot.lane.b32.xlu0 %v1175, 28
      %v1536 = vpop.permute.xlu0 %1535
      %1537 = vrot.lane.b32.xlu0 %v1177, 28
      %v1538 = vpop.permute.xlu0 %1537
      %1539 = vrot.lane.b32.xlu0 %v1476, 28
      %v1540 = vpop.permute.xlu0 %1539
      %1541 = vrot.lane.b32.xlu0 %v1478, 28
      %v1542 = vpop.permute.xlu0 %1541
      %v1575 = vrot.slane %v613, 2
      %v1576 = vrot.slane %v614, 2
      %v1577 = vsel %vm897, %v1575, %v1576
      %v1578 = vrot.slane %v615, 2
      %v1579 = vsel %vm897, %v1576, %v1578
      %1580 = vrot.lane.b32.xlu0 %v910, 32
      %v1581 = vpop.permute.xlu0 %1580
      %1582 = vrot.lane.b32.xlu0 %v912, 32
      %v1583 = vpop.permute.xlu0 %1582
      %1584 = vrot.lane.b32.xlu0 %v915, 32
      %v1585 = vpop.permute.xlu0 %1584
      %1586 = vrot.lane.b32.xlu0 %v917, 32
      %v1587 = vpop.permute.xlu0 %1586
      %1588 = vrot.lane.b32.xlu0 %v920, 32
      %v1589 = vpop.permute.xlu0 %1588
      %1590 = vrot.lane.b32.xlu0 %v922, 32
      %v1591 = vpop.permute.xlu0 %1590
      %1592 = vrot.lane.b32.xlu0 %v925, 32
      %v1593 = vpop.permute.xlu0 %1592
      %1594 = vrot.lane.b32.xlu0 %v927, 32
      %v1595 = vpop.permute.xlu0 %1594
      %1596 = vrot.lane.b32.xlu0 %v930, 32
      %v1597 = vpop.permute.xlu0 %1596
      %1598 = vrot.lane.b32.xlu0 %v932, 32
      %v1599 = vpop.permute.xlu0 %1598
      %1600 = vrot.lane.b32.xlu0 %v935, 32
      %v1601 = vpop.permute.xlu0 %1600
      %1602 = vrot.lane.b32.xlu0 %v937, 32
      %v1603 = vpop.permute.xlu0 %1602
      %1604 = vrot.lane.b32.xlu0 %v940, 32
      %v1605 = vpop.permute.xlu0 %1604
      %1606 = vrot.lane.b32.xlu0 %v942, 32
      %v1607 = vpop.permute.xlu0 %1606
      %1608 = vrot.lane.b32.xlu0 %v945, 32
      %v1609 = vpop.permute.xlu0 %1608
      %1610 = vrot.lane.b32.xlu0 %v947, 32
      %v1611 = vpop.permute.xlu0 %1610
      %1612 = vrot.lane.b32.xlu0 %v950, 32
      %v1613 = vpop.permute.xlu0 %1612
      %1614 = vrot.lane.b32.xlu0 %v952, 32
      %v1615 = vpop.permute.xlu0 %1614
      %1616 = vrot.lane.b32.xlu0 %v955, 32
      %v1617 = vpop.permute.xlu0 %1616
      %1618 = vrot.lane.b32.xlu0 %v957, 32
      %v1619 = vpop.permute.xlu0 %1618
      %1620 = vrot.lane.b32.xlu0 %v960, 32
      %v1621 = vpop.permute.xlu0 %1620
      %1622 = vrot.lane.b32.xlu0 %v962, 32
      %v1623 = vpop.permute.xlu0 %1622
      %1624 = vrot.lane.b32.xlu0 %v965, 32
      %v1625 = vpop.permute.xlu0 %1624
      %1626 = vrot.lane.b32.xlu0 %v967, 32
      %v1627 = vpop.permute.xlu0 %1626
      %1628 = vrot.lane.b32.xlu0 %v970, 32
      %v1629 = vpop.permute.xlu0 %1628
      %1630 = vrot.lane.b32.xlu0 %v972, 32
      %v1631 = vpop.permute.xlu0 %1630
      %1632 = vrot.lane.b32.xlu0 %v975, 32
      %v1633 = vpop.permute.xlu0 %1632
      %1634 = vrot.lane.b32.xlu0 %v977, 32
      %v1635 = vpop.permute.xlu0 %1634
      %1636 = vrot.lane.b32.xlu0 %v1276, 32
      %v1637 = vpop.permute.xlu0 %1636
      %1638 = vrot.lane.b32.xlu0 %v1278, 32
      %v1639 = vpop.permute.xlu0 %1638
      %1640 = vrot.lane.b32.xlu0 %v1577, 32
      %v1641 = vpop.permute.xlu0 %1640
      %1642 = vrot.lane.b32.xlu0 %v1579, 32
      %v1643 = vpop.permute.xlu0 %1642
      %v1676 = vsel %vm441, %v562, %v802
      %v1677 = vsel %vm441, %v563, %v804
      %v1678 = vsel %vm441, %v565, %v806
      %v1679 = vsel %vm441, %v566, %v808
      %v1680 = vsel %vm441, %v568, %v810
      %v1681 = vsel %vm441, %v569, %v812
      %v1682 = vsel %vm441, %v571, %v814
      %v1683 = vsel %vm441, %v572, %v816
      %v1684 = vsel %vm441, %v574, %v818
      %v1685 = vsel %vm441, %v575, %v820
      %v1686 = vsel %vm441, %v577, %v822
      %v1687 = vsel %vm441, %v578, %v824
      %v1688 = vsel %vm441, %v580, %v826
      %v1689 = vsel %vm441, %v581, %v828
      %v1690 = vsel %vm441, %v583, %v830
      %v1691 = vsel %vm441, %v584, %v832
      %v1692 = vsel %vm441, %v586, %v834
      %v1693 = vsel %vm441, %v587, %v836
      %v1694 = vsel %vm441, %v589, %v838
      %v1695 = vsel %vm441, %v590, %v840
      %v1696 = vsel %vm441, %v592, %v842
      %v1697 = vsel %vm441, %v593, %v844
      %v1698 = vsel %vm441, %v595, %v846
      %v1699 = vsel %vm441, %v596, %v848
      %v1700 = vsel %vm441, %v598, %v850
      %v1701 = vsel %vm441, %v599, %v852
      %v1702 = vsel %vm441, %v601, %v854
      %v1703 = vsel %vm441, %v602, %v856
      %v1704 = vsel %vm441, %v604, %v858
      %v1705 = vsel %vm441, %v605, %v860
      %v1706 = vsel %vm441, %v607, %v862
      %v1707 = vsel %vm441, %v608, %v864
      %v1708 = vsel %vm616, %v1676, %v979
      %v1709 = vsel %vm616, %v1677, %v981
      %v1710 = vsel %vm616, %v1678, %v983
      %v1711 = vsel %vm616, %v1679, %v985
      %v1712 = vsel %vm616, %v1680, %v987
      %v1713 = vsel %vm616, %v1681, %v989
      %v1714 = vsel %vm616, %v1682, %v991
      %v1715 = vsel %vm616, %v1683, %v993
      %v1716 = vsel %vm616, %v1684, %v995
      %v1717 = vsel %vm616, %v1685, %v997
      %v1718 = vsel %vm616, %v1686, %v999
      %v1719 = vsel %vm616, %v1687, %v1001
      %v1720 = vsel %vm616, %v1688, %v1003
      %v1721 = vsel %vm616, %v1689, %v1005
      %v1722 = vsel %vm616, %v1690, %v1007
      %v1723 = vsel %vm616, %v1691, %v1009
      %v1724 = vsel %vm616, %v1692, %v1011
      %v1725 = vsel %vm616, %v1693, %v1013
      %v1726 = vsel %vm616, %v1694, %v1015
      %v1727 = vsel %vm616, %v1695, %v1017
      %v1728 = vsel %vm616, %v1696, %v1019
      %v1729 = vsel %vm616, %v1697, %v1021
      %v1730 = vsel %vm616, %v1698, %v1023
      %v1731 = vsel %vm616, %v1699, %v1025
      %v1732 = vsel %vm616, %v1700, %v1027
      %v1733 = vsel %vm616, %v1701, %v1029
      %v1734 = vsel %vm616, %v1702, %v1031
      %v1735 = vsel %vm616, %v1703, %v1033
      %v1736 = vsel %vm616, %v1704, %v1035
      %v1737 = vsel %vm616, %v1705, %v1037
      %v1738 = vsel %vm616, %v1706, %v1039
      %v1739 = vsel %vm616, %v1707, %v1041
      %vm1740 = vcmask 97280
      %v1741 = vsel %vm1740, %v1708, %v1077
      %v1742 = vsel %vm1740, %v1709, %v1079
      %v1743 = vsel %vm1740, %v1710, %v1081
      %v1744 = vsel %vm1740, %v1711, %v1083
      %v1745 = vsel %vm1740, %v1712, %v1085
      %v1746 = vsel %vm1740, %v1713, %v1087
      %v1747 = vsel %vm1740, %v1714, %v1089
      %v1748 = vsel %vm1740, %v1715, %v1091
      %v1749 = vsel %vm1740, %v1716, %v1093
      %v1750 = vsel %vm1740, %v1717, %v1095
      %v1751 = vsel %vm1740, %v1718, %v1097
      %v1752 = vsel %vm1740, %v1719, %v1099
      %v1753 = vsel %vm1740, %v1720, %v1101
      %v1754 = vsel %vm1740, %v1721, %v1103
      %v1755 = vsel %vm1740, %v1722, %v1105
      %v1756 = vsel %vm1740, %v1723, %v1107
      %v1757 = vsel %vm1740, %v1724, %v1109
      %v1758 = vsel %vm1740, %v1725, %v1111
      %v1759 = vsel %vm1740, %v1726, %v1113
      %v1760 = vsel %vm1740, %v1727, %v1115
      %v1761 = vsel %vm1740, %v1728, %v1117
      %v1762 = vsel %vm1740, %v1729, %v1119
      %v1763 = vsel %vm1740, %v1730, %v1121
      %v1764 = vsel %vm1740, %v1731, %v1123
      %v1765 = vsel %vm1740, %v1732, %v1125
      %v1766 = vsel %vm1740, %v1733, %v1127
      %v1767 = vsel %vm1740, %v1734, %v1129
      %v1768 = vsel %vm1740, %v1735, %v1131
      %v1769 = vsel %vm1740, %v1736, %v1133
      %v1770 = vsel %vm1740, %v1737, %v1135
      %v1771 = vsel %vm1740, %v1738, %v1137
      %v1772 = vsel %vm1740, %v1739, %v1139
      %vm1773 = vcmask 130048
      %v1774 = vsel %vm1773, %v1741, %v1179
      %v1775 = vsel %vm1773, %v1742, %v1181
      %v1776 = vsel %vm1773, %v1743, %v1183
      %v1777 = vsel %vm1773, %v1744, %v1185
      %v1778 = vsel %vm1773, %v1745, %v1187
      %v1779 = vsel %vm1773, %v1746, %v1189
      %v1780 = vsel %vm1773, %v1747, %v1191
      %v1781 = vsel %vm1773, %v1748, %v1193
      %v1782 = vsel %vm1773, %v1749, %v1195
      %v1783 = vsel %vm1773, %v1750, %v1197
      %v1784 = vsel %vm1773, %v1751, %v1199
      %v1785 = vsel %vm1773, %v1752, %v1201
      %v1786 = vsel %vm1773, %v1753, %v1203
      %v1787 = vsel %vm1773, %v1754, %v1205
      %v1788 = vsel %vm1773, %v1755, %v1207
      %v1789 = vsel %vm1773, %v1756, %v1209
      %v1790 = vsel %vm1773, %v1757, %v1211
      %v1791 = vsel %vm1773, %v1758, %v1213
      %v1792 = vsel %vm1773, %v1759, %v1215
      %v1793 = vsel %vm1773, %v1760, %v1217
      %v1794 = vsel %vm1773, %v1761, %v1219
      %v1795 = vsel %vm1773, %v1762, %v1221
      %v1796 = vsel %vm1773, %v1763, %v1223
      %v1797 = vsel %vm1773, %v1764, %v1225
      %v1798 = vsel %vm1773, %v1765, %v1227
      %v1799 = vsel %vm1773, %v1766, %v1229
      %v1800 = vsel %vm1773, %v1767, %v1231
      %v1801 = vsel %vm1773, %v1768, %v1233
      %v1802 = vsel %vm1773, %v1769, %v1235
      %v1803 = vsel %vm1773, %v1770, %v1237
      %v1804 = vsel %vm1773, %v1771, %v1239
      %v1805 = vsel %vm1773, %v1772, %v1241
      %vm1806 = vcmask 162816
      %v1807 = vsel %vm1806, %v1774, %v1280
      %v1808 = vsel %vm1806, %v1775, %v1282
      %v1809 = vsel %vm1806, %v1776, %v1284
      %v1810 = vsel %vm1806, %v1777, %v1286
      %v1811 = vsel %vm1806, %v1778, %v1288
      %v1812 = vsel %vm1806, %v1779, %v1290
      %v1813 = vsel %vm1806, %v1780, %v1292
      %v1814 = vsel %vm1806, %v1781, %v1294
      %v1815 = vsel %vm1806, %v1782, %v1296
      %v1816 = vsel %vm1806, %v1783, %v1298
      %v1817 = vsel %vm1806, %v1784, %v1300
      %v1818 = vsel %vm1806, %v1785, %v1302
      %v1819 = vsel %vm1806, %v1786, %v1304
      %v1820 = vsel %vm1806, %v1787, %v1306
      %v1821 = vsel %vm1806, %v1788, %v1308
      %v1822 = vsel %vm1806, %v1789, %v1310
      %v1823 = vsel %vm1806, %v1790, %v1312
      %v1824 = vsel %vm1806, %v1791, %v1314
      %v1825 = vsel %vm1806, %v1792, %v1316
      %v1826 = vsel %vm1806, %v1793, %v1318
      %v1827 = vsel %vm1806, %v1794, %v1320
      %v1828 = vsel %vm1806, %v1795, %v1322
      %v1829 = vsel %vm1806, %v1796, %v1324
      %v1830 = vsel %vm1806, %v1797, %v1326
      %v1831 = vsel %vm1806, %v1798, %v1328
      %v1832 = vsel %vm1806, %v1799, %v1330
      %v1833 = vsel %vm1806, %v1800, %v1332
      %v1834 = vsel %vm1806, %v1801, %v1334
      %v1835 = vsel %vm1806, %v1802, %v1336
      %v1836 = vsel %vm1806, %v1803, %v1338
      %v1837 = vsel %vm1806, %v1804, %v1340
      %v1838 = vsel %vm1806, %v1805, %v1342
      %vm1839 = vcmask 195584
      %v1840 = vsel %vm1839, %v1807, %v1378
      %v1841 = vsel %vm1839, %v1808, %v1380
      %v1842 = vsel %vm1839, %v1809, %v1382
      %v1843 = vsel %vm1839, %v1810, %v1384
      %v1844 = vsel %vm1839, %v1811, %v1386
      %v1845 = vsel %vm1839, %v1812, %v1388
      %v1846 = vsel %vm1839, %v1813, %v1390
      %v1847 = vsel %vm1839, %v1814, %v1392
      %v1848 = vsel %vm1839, %v1815, %v1394
      %v1849 = vsel %vm1839, %v1816, %v1396
      %v1850 = vsel %vm1839, %v1817, %v1398
      %v1851 = vsel %vm1839, %v1818, %v1400
      %v1852 = vsel %vm1839, %v1819, %v1402
      %v1853 = vsel %vm1839, %v1820, %v1404
      %v1854 = vsel %vm1839, %v1821, %v1406
      %v1855 = vsel %vm1839, %v1822, %v1408
      %v1856 = vsel %vm1839, %v1823, %v1410
      %v1857 = vsel %vm1839, %v1824, %v1412
      %v1858 = vsel %vm1839, %v1825, %v1414
      %v1859 = vsel %vm1839, %v1826, %v1416
      %v1860 = vsel %vm1839, %v1827, %v1418
      %v1861 = vsel %vm1839, %v1828, %v1420
      %v1862 = vsel %vm1839, %v1829, %v1422
      %v1863 = vsel %vm1839, %v1830, %v1424
      %v1864 = vsel %vm1839, %v1831, %v1426
      %v1865 = vsel %vm1839, %v1832, %v1428
      %v1866 = vsel %vm1839, %v1833, %v1430
      %v1867 = vsel %vm1839, %v1834, %v1432
      %v1868 = vsel %vm1839, %v1835, %v1434
      %v1869 = vsel %vm1839, %v1836, %v1436
      %v1870 = vsel %vm1839, %v1837, %v1438
      %v1871 = vsel %vm1839, %v1838, %v1440
      %vm1872 = vcmask 228352
      %v1873 = vsel %vm1872, %v1840, %v1480
      %v1874 = vsel %vm1872, %v1841, %v1482
      %v1875 = vsel %vm1872, %v1842, %v1484
      %v1876 = vsel %vm1872, %v1843, %v1486
      %v1877 = vsel %vm1872, %v1844, %v1488
      %v1878 = vsel %vm1872, %v1845, %v1490
      %v1879 = vsel %vm1872, %v1846, %v1492
      %v1880 = vsel %vm1872, %v1847, %v1494
      %v1881 = vsel %vm1872, %v1848, %v1496
      %v1882 = vsel %vm1872, %v1849, %v1498
      %v1883 = vsel %vm1872, %v1850, %v1500
      %v1884 = vsel %vm1872, %v1851, %v1502
      %v1885 = vsel %vm1872, %v1852, %v1504
      %v1886 = vsel %vm1872, %v1853, %v1506
      %v1887 = vsel %vm1872, %v1854, %v1508
      %v1888 = vsel %vm1872, %v1855, %v1510
      %v1889 = vsel %vm1872, %v1856, %v1512
      %v1890 = vsel %vm1872, %v1857, %v1514
      %v1891 = vsel %vm1872, %v1858, %v1516
      %v1892 = vsel %vm1872, %v1859, %v1518
      %v1893 = vsel %vm1872, %v1860, %v1520
      %v1894 = vsel %vm1872, %v1861, %v1522
      %v1895 = vsel %vm1872, %v1862, %v1524
      %v1896 = vsel %vm1872, %v1863, %v1526
      %v1897 = vsel %vm1872, %v1864, %v1528
      %v1898 = vsel %vm1872, %v1865, %v1530
      %v1899 = vsel %vm1872, %v1866, %v1532
      %v1900 = vsel %vm1872, %v1867, %v1534
      %v1901 = vsel %vm1872, %v1868, %v1536
      %v1902 = vsel %vm1872, %v1869, %v1538
      %v1903 = vsel %vm1872, %v1870, %v1540
      %v1904 = vsel %vm1872, %v1871, %v1542
      %vm1905 = vcmask 261120
      %v1906 = vsel %vm1905, %v1873, %v1581
      %v1907 = vsel %vm1905, %v1874, %v1583
      %v1908 = vsel %vm1905, %v1875, %v1585
      %v1909 = vsel %vm1905, %v1876, %v1587
      %v1910 = vsel %vm1905, %v1877, %v1589
      %v1911 = vsel %vm1905, %v1878, %v1591
      %v1912 = vsel %vm1905, %v1879, %v1593
      %v1913 = vsel %vm1905, %v1880, %v1595
      %v1914 = vsel %vm1905, %v1881, %v1597
      %v1915 = vsel %vm1905, %v1882, %v1599
      %v1916 = vsel %vm1905, %v1883, %v1601
      %v1917 = vsel %vm1905, %v1884, %v1603
      %v1918 = vsel %vm1905, %v1885, %v1605
      %v1919 = vsel %vm1905, %v1886, %v1607
      %v1920 = vsel %vm1905, %v1887, %v1609
      %v1921 = vsel %vm1905, %v1888, %v1611
      %v1922 = vsel %vm1905, %v1889, %v1613
      %v1923 = vsel %vm1905, %v1890, %v1615
      %v1924 = vsel %vm1905, %v1891, %v1617
      %v1925 = vsel %vm1905, %v1892, %v1619
      %v1926 = vsel %vm1905, %v1893, %v1621
      %v1927 = vsel %vm1905, %v1894, %v1623
      %v1928 = vsel %vm1905, %v1895, %v1625
      %v1929 = vsel %vm1905, %v1896, %v1627
      %v1930 = vsel %vm1905, %v1897, %v1629
      %v1931 = vsel %vm1905, %v1898, %v1631
      %v1932 = vsel %vm1905, %v1899, %v1633
      %v1933 = vsel %vm1905, %v1900, %v1635
      %v1934 = vsel %vm1905, %v1901, %v1637
      %v1935 = vsel %vm1905, %v1902, %v1639
      %v1936 = vsel %vm1905, %v1903, %v1641
      %v1937 = vsel %vm1905, %v1904, %v1643
      %v1938 = vld [vmem:[%s1] sm:$0xff]
      %v1939 = vld [vmem:[%s1 + $0x8] sm:$0xff]
      %v1940 = vld [vmem:[%s1 + $0x10] sm:$0xff]
      %v1941 = vld [vmem:[%s1 + $0x18] sm:$0xff]
      %v1942 = vld [vmem:[%s1 + $0x20] sm:$0xf]
      %v1943 = vld [vmem:[%s2] sm:$0x1]
      %v1945 = vlaneseq
      %v1946 = vshrl.u32 %v1945, 7
      %v1947 = vsub.s32 0, %v1946
      %v1948 = vrot.slane %v1943, %v1947
      %vm1950 = vcmask 293888
      %v1952 = vsel %vm1950, %v1906, 0
      %v1955 = vsel %vm1950, %v1907, 0
      %v1958 = vsel %vm1950, %v1908, 0
      %v1961 = vsel %vm1950, %v1909, 0
      %v1964 = vsel %vm1950, %v1910, 0
      %v1967 = vsel %vm1950, %v1911, 0
      %v1970 = vsel %vm1950, %v1912, 0
      %v1973 = vsel %vm1950, %v1913, 0
      %v1976 = vsel %vm1950, %v1914, 0
      %v1979 = vsel %vm1950, %v1915, 0
      %v1982 = vsel %vm1950, %v1916, 0
      %v1985 = vsel %vm1950, %v1917, 0
      %v1988 = vsel %vm1950, %v1918, 0
      %v1991 = vsel %vm1950, %v1919, 0
      %v1994 = vsel %vm1950, %v1920, 0
      %v1997 = vsel %vm1950, %v1921, 0
      %v2000 = vsel %vm1950, %v1922, 0
      %v2003 = vsel %vm1950, %v1923, 0
      %v2006 = vsel %vm1950, %v1924, 0
      %v2009 = vsel %vm1950, %v1925, 0
      %v2012 = vsel %vm1950, %v1926, 0
      %v2015 = vsel %vm1950, %v1927, 0
      %v2018 = vsel %vm1950, %v1928, 0
      %v2021 = vsel %vm1950, %v1929, 0
      %v2024 = vsel %vm1950, %v1930, 0
      %v2027 = vsel %vm1950, %v1931, 0
      %v2030 = vsel %vm1950, %v1932, 0
      %v2033 = vsel %vm1950, %v1933, 0
      %v2036 = vsel %vm1950, %v1934, 0
      %v2039 = vsel %vm1950, %v1935, 0
      %v2042 = vsel %vm1950, %v1936, 0
      %v2045 = vsel %vm1950, %v1937, 0
      %vm2047 = vcmask 1043456
      %v2049 = vsel %vm2047, %v1942, 0
      %2051 = vmatprep.subr.mxu0 0.0
      %2052 = vmatpush1.msra.mxu0 0.0
      %2053 = vmatprep.subr.mxu0 0.0
      %2054 = vmatpush1.msra.mxu0 0.0
      %2055 = vmatprep.subr.mxu0 0.0
      %2056 = vmatpush1.msra.mxu0 0.0
      %2057 = vmatprep.subr.mxu0 0.0
      %2058 = vmatpush1.msra.mxu0 0.0
      %2059 = vmatprep.subr.mxu0 0.0
      %2060 = vmatpush1.msra.mxu0 0.0
      %2061 = vmatprep.subr.mxu0 0.0
      %2062 = vmatpush1.msra.mxu0 0.0
      %2063 = vmatprep.subr.mxu0 0.0
      %2064 = vmatpush1.msra.mxu0 0.0
      %2065 = vmatprep.subr.mxu0 0.0
      %2066 = vmatpush1.msra.mxu0 0.0
      %2067 = vmatprep.subr.mxu0 0.0
      %2068 = vmatpush1.msra.mxu0 0.0
      %2069 = vmatprep.subr.mxu0 0.0
      %2070 = vmatpush1.msra.mxu0 0.0
      %2071 = vmatprep.subr.mxu0 0.0
      %2072 = vmatpush1.msra.mxu0 0.0
      %2073 = vmatprep.subr.mxu0 0.0
      %2074 = vmatpush1.msra.mxu0 %v2049
      %2075 = vmatprep.subr.mxu0 0.0
      %2076 = vmatpush1.msra.mxu0 %v1941
      %2077 = vmatprep.subr.mxu0 0.0
      %2078 = vmatpush1.msra.mxu0 %v1940
      %2079 = vmatprep.subr.mxu0 0.0
      %2080 = vmatpush1.msra.mxu0 %v1939
      %2081 = vmatprep.subr.mxu0 0.0
      %2082 = vmatpush1.msra.mxu0 %v1938
      %2083 = vmatprep.subr.mxu0 0.0
      %2084 = vmatpush2.msra.mxu0 0.0
      %2085 = vmatprep.subr.mxu0 0.0
      %2086 = vmatpush2.msra.mxu0 0.0
      %2087 = vmatprep.subr.mxu0 0.0
      %2088 = vmatpush2.msra.mxu0 0.0
      %2089 = vmatprep.subr.mxu0 0.0
      %2090 = vmatpush2.msra.mxu0 0.0
      %2091 = vmatprep.subr.mxu0 0.0
      %2092 = vmatpush2.msra.mxu0 0.0
      %2093 = vmatprep.subr.mxu0 0.0
      %2094 = vmatpush2.msra.mxu0 0.0
      %2095 = vmatprep.subr.mxu0 0.0
      %2096 = vmatpush2.msra.mxu0 0.0
      %2097 = vmatprep.subr.mxu0 0.0
      %2098 = vmatpush2.msra.mxu0 0.0
      %2099 = vmatprep.subr.mxu0 0.0
      %2100 = vmatpush2.msra.mxu0 0.0
      %2101 = vmatprep.subr.mxu0 0.0
      %2102 = vmatpush2.msra.mxu0 0.0
      %2103 = vmatprep.subr.mxu0 0.0
      %2104 = vmatpush2.msra.mxu0 0.0
      %2105 = vmatprep.subr.mxu0 0.0
      %2106 = vmatpush2.msra.mxu0 0.0
      %2107 = vmatprep.subr.mxu0 0.0
      %2108 = vmatpush2.msra.mxu0 0.0
      %2109 = vmatprep.subr.mxu0 0.0
      %2110 = vmatpush2.msra.mxu0 0.0
      %2111 = vmatprep.subr.mxu0 0.0
      %2112 = vmatpush2.msra.mxu0 0.0
      %2113 = vmatprep.subr.mxu0 0.0
      %2114 = vmatpush2.msra.mxu0 0.0
      %2115 = vmatprep.mubr.f32.mxu0 0.0
      %2116 = vmatmul.mubr.f32.gmra.mxu0 %v1952
      %v2117 = vpop.f32.mrf.mxu0
      %v2118 = vadd.f32 %v1948, %v2117
      %v2119 = vpop.f32.mrf.mxu0
      %2120 = vmatprep.mubr.f32.mxu0 0.0
      %2121 = vmatmul.mubr.f32.gmra.mxu0 %v1955
      %v2122 = vpop.f32.mrf.mxu0
      %v2123 = vadd.f32 %v1948, %v2122
      %v2124 = vpop.f32.mrf.mxu0
      %2125 = vmatprep.mubr.f32.mxu0 0.0
      %2126 = vmatmul.mubr.f32.gmra.mxu0 %v1958
      %v2127 = vpop.f32.mrf.mxu0
      %v2128 = vadd.f32 %v1948, %v2127
      %v2129 = vpop.f32.mrf.mxu0
      %2130 = vmatprep.mubr.f32.mxu0 0.0
      %2131 = vmatmul.mubr.f32.gmra.mxu0 %v1961
      %v2132 = vpop.f32.mrf.mxu0
      %v2133 = vadd.f32 %v1948, %v2132
      %v2134 = vpop.f32.mrf.mxu0
      %2135 = vmatprep.mubr.f32.mxu0 0.0
      %2136 = vmatmul.mubr.f32.gmra.mxu0 %v1964
      %v2137 = vpop.f32.mrf.mxu0
      %v2138 = vadd.f32 %v1948, %v2137
      %v2139 = vpop.f32.mrf.mxu0
      %2140 = vmatprep.mubr.f32.mxu0 0.0
      %2141 = vmatmul.mubr.f32.gmra.mxu0 %v1967
      %v2142 = vpop.f32.mrf.mxu0
      %v2143 = vadd.f32 %v1948, %v2142
      %v2144 = vpop.f32.mrf.mxu0
      %2145 = vmatprep.mubr.f32.mxu0 0.0
      %2146 = vmatmul.mubr.f32.gmra.mxu0 %v1970
      %v2147 = vpop.f32.mrf.mxu0
      %v2148 = vadd.f32 %v1948, %v2147
      %v2149 = vpop.f32.mrf.mxu0
      %2150 = vmatprep.mubr.f32.mxu0 0.0
      %2151 = vmatmul.mubr.f32.gmra.mxu0 %v1973
      %v2152 = vpop.f32.mrf.mxu0
      %v2153 = vadd.f32 %v1948, %v2152
      %v2154 = vpop.f32.mrf.mxu0
      %2155 = vmatprep.mubr.f32.mxu0 0.0
      %2156 = vmatmul.mubr.f32.gmra.mxu0 %v1976
      %v2157 = vpop.f32.mrf.mxu0
      %v2158 = vadd.f32 %v1948, %v2157
      %v2159 = vpop.f32.mrf.mxu0
      %2160 = vmatprep.mubr.f32.mxu0 0.0
      %2161 = vmatmul.mubr.f32.gmra.mxu0 %v1979
      %v2162 = vpop.f32.mrf.mxu0
      %v2163 = vadd.f32 %v1948, %v2162
      %v2164 = vpop.f32.mrf.mxu0
      %2165 = vmatprep.mubr.f32.mxu0 0.0
      %2166 = vmatmul.mubr.f32.gmra.mxu0 %v1982
      %v2167 = vpop.f32.mrf.mxu0
      %v2168 = vadd.f32 %v1948, %v2167
      %v2169 = vpop.f32.mrf.mxu0
      %2170 = vmatprep.mubr.f32.mxu0 0.0
      %2171 = vmatmul.mubr.f32.gmra.mxu0 %v1985
      %v2172 = vpop.f32.mrf.mxu0
      %v2173 = vadd.f32 %v1948, %v2172
      %v2174 = vpop.f32.mrf.mxu0
      %2175 = vmatprep.mubr.f32.mxu0 0.0
      %2176 = vmatmul.mubr.f32.gmra.mxu0 %v1988
      %v2177 = vpop.f32.mrf.mxu0
      %v2178 = vadd.f32 %v1948, %v2177
      %v2179 = vpop.f32.mrf.mxu0
      %2180 = vmatprep.mubr.f32.mxu0 0.0
      %2181 = vmatmul.mubr.f32.gmra.mxu0 %v1991
      %v2182 = vpop.f32.mrf.mxu0
      %v2183 = vadd.f32 %v1948, %v2182
      %v2184 = vpop.f32.mrf.mxu0
      %2185 = vmatprep.mubr.f32.mxu0 0.0
      %2186 = vmatmul.mubr.f32.gmra.mxu0 %v1994
      %v2187 = vpop.f32.mrf.mxu0
      %v2188 = vadd.f32 %v1948, %v2187
      %v2189 = vpop.f32.mrf.mxu0
      %2190 = vmatprep.mubr.f32.mxu0 0.0
      %2191 = vmatmul.mubr.f32.gmra.mxu0 %v1997
      %v2192 = vpop.f32.mrf.mxu0
      %v2193 = vadd.f32 %v1948, %v2192
      %v2194 = vpop.f32.mrf.mxu0
      %2195 = vmatprep.mubr.f32.mxu0 0.0
      %2196 = vmatmul.mubr.f32.gmra.mxu0 %v2000
      %v2197 = vpop.f32.mrf.mxu0
      %v2198 = vadd.f32 %v1948, %v2197
      %v2199 = vpop.f32.mrf.mxu0
      %2200 = vmatprep.mubr.f32.mxu0 0.0
      %2201 = vmatmul.mubr.f32.gmra.mxu0 %v2003
      %v2202 = vpop.f32.mrf.mxu0
      %v2203 = vadd.f32 %v1948, %v2202
      %v2204 = vpop.f32.mrf.mxu0
      %2205 = vmatprep.mubr.f32.mxu0 0.0
      %2206 = vmatmul.mubr.f32.gmra.mxu0 %v2006
      %v2207 = vpop.f32.mrf.mxu0
      %v2208 = vadd.f32 %v1948, %v2207
      %v2209 = vpop.f32.mrf.mxu0
      %2210 = vmatprep.mubr.f32.mxu0 0.0
      %2211 = vmatmul.mubr.f32.gmra.mxu0 %v2009
      %v2212 = vpop.f32.mrf.mxu0
      %v2213 = vadd.f32 %v1948, %v2212
      %v2214 = vpop.f32.mrf.mxu0
      %2215 = vmatprep.mubr.f32.mxu0 0.0
      %2216 = vmatmul.mubr.f32.gmra.mxu0 %v2012
      %v2217 = vpop.f32.mrf.mxu0
      %v2218 = vadd.f32 %v1948, %v2217
      %v2219 = vpop.f32.mrf.mxu0
      %2220 = vmatprep.mubr.f32.mxu0 0.0
      %2221 = vmatmul.mubr.f32.gmra.mxu0 %v2015
      %v2222 = vpop.f32.mrf.mxu0
      %v2223 = vadd.f32 %v1948, %v2222
      %v2224 = vpop.f32.mrf.mxu0
      %2225 = vmatprep.mubr.f32.mxu0 0.0
      %2226 = vmatmul.mubr.f32.gmra.mxu0 %v2018
      %v2227 = vpop.f32.mrf.mxu0
      %v2228 = vadd.f32 %v1948, %v2227
      %v2229 = vpop.f32.mrf.mxu0
      %2230 = vmatprep.mubr.f32.mxu0 0.0
      %2231 = vmatmul.mubr.f32.gmra.mxu0 %v2021
      %v2232 = vpop.f32.mrf.mxu0
      %v2233 = vadd.f32 %v1948, %v2232
      %v2234 = vpop.f32.mrf.mxu0
      %2235 = vmatprep.mubr.f32.mxu0 0.0
      %2236 = vmatmul.mubr.f32.gmra.mxu0 %v2024
      %v2237 = vpop.f32.mrf.mxu0
      %v2238 = vadd.f32 %v1948, %v2237
      %v2239 = vpop.f32.mrf.mxu0
      %2240 = vmatprep.mubr.f32.mxu0 0.0
      %2241 = vmatmul.mubr.f32.gmra.mxu0 %v2027
      %v2242 = vpop.f32.mrf.mxu0
      %v2243 = vadd.f32 %v1948, %v2242
      %v2244 = vpop.f32.mrf.mxu0
      %2245 = vmatprep.mubr.f32.mxu0 0.0
      %2246 = vmatmul.mubr.f32.gmra.mxu0 %v2030
      %v2247 = vpop.f32.mrf.mxu0
      %v2248 = vadd.f32 %v1948, %v2247
      %v2249 = vpop.f32.mrf.mxu0
      %2250 = vmatprep.mubr.f32.mxu0 0.0
      %2251 = vmatmul.mubr.f32.gmra.mxu0 %v2033
      %v2252 = vpop.f32.mrf.mxu0
      %v2253 = vadd.f32 %v1948, %v2252
      %v2254 = vpop.f32.mrf.mxu0
      %2255 = vmatprep.mubr.f32.mxu0 0.0
      %2256 = vmatmul.mubr.f32.gmra.mxu0 %v2036
      %v2257 = vpop.f32.mrf.mxu0
      %v2258 = vadd.f32 %v1948, %v2257
      %v2259 = vpop.f32.mrf.mxu0
      %2260 = vmatprep.mubr.f32.mxu0 0.0
      %2261 = vmatmul.mubr.f32.gmra.mxu0 %v2039
      %v2262 = vpop.f32.mrf.mxu0
      %v2263 = vadd.f32 %v1948, %v2262
      %v2264 = vpop.f32.mrf.mxu0
      %2265 = vmatprep.mubr.f32.mxu0 0.0
      %2266 = vmatmul.mubr.f32.gmra.mxu0 %v2042
      %v2267 = vpop.f32.mrf.mxu0
      %v2268 = vadd.f32 %v1948, %v2267
      %v2269 = vpop.f32.mrf.mxu0
      %2270 = vmatprep.mubr.f32.mxu0 0.0
      %2271 = vmatmul.mubr.f32.gmra.mxu0 %v2045
      %v2272 = vpop.f32.mrf.mxu0
      %v2273 = vadd.f32 %v1948, %v2272
      %v2274 = vpop.f32.mrf.mxu0
      %2275 = vdwg.mxu0
      %v2276 = vmax.f32 %v2118, 0.0
      %v2277 = vmax.f32 %v2123, 0.0
      %v2278 = vmax.f32 %v2128, 0.0
      %v2279 = vmax.f32 %v2133, 0.0
      %v2280 = vmax.f32 %v2138, 0.0
      %v2281 = vmax.f32 %v2143, 0.0
      %v2282 = vmax.f32 %v2148, 0.0
      %v2283 = vmax.f32 %v2153, 0.0
      %v2284 = vmax.f32 %v2158, 0.0
      %v2285 = vmax.f32 %v2163, 0.0
      %v2286 = vmax.f32 %v2168, 0.0
      %v2287 = vmax.f32 %v2173, 0.0
      %v2288 = vmax.f32 %v2178, 0.0
      %v2289 = vmax.f32 %v2183, 0.0
      %v2290 = vmax.f32 %v2188, 0.0
      %v2291 = vmax.f32 %v2193, 0.0
      %v2292 = vmax.f32 %v2198, 0.0
      %v2293 = vmax.f32 %v2203, 0.0
      %v2294 = vmax.f32 %v2208, 0.0
      %v2295 = vmax.f32 %v2213, 0.0
      %v2296 = vmax.f32 %v2218, 0.0
      %v2297 = vmax.f32 %v2223, 0.0
      %v2298 = vmax.f32 %v2228, 0.0
      %v2299 = vmax.f32 %v2233, 0.0
      %v2300 = vmax.f32 %v2238, 0.0
      %v2301 = vmax.f32 %v2243, 0.0
      %v2302 = vmax.f32 %v2248, 0.0
      %v2303 = vmax.f32 %v2253, 0.0
      %v2304 = vmax.f32 %v2258, 0.0
      %v2305 = vmax.f32 %v2263, 0.0
      %v2306 = vmax.f32 %v2268, 0.0
      %v2307 = vmax.f32 %v2273, 0.0
      %s2308 = scalar_lea.vmem [#allocation3], 24
      %2309 = vst.msk [vmem:[%s2308 + $0x1] sm:$0xff] %vm616, %v2276
      %2310 = vst.msk [vmem:[%s2308 + $0x9] sm:$0xff] %vm616, %v2277
      %2311 = vst.msk [vmem:[%s2308 + $0x19] sm:$0xff] %vm616, %v2278
      %2312 = vst.msk [vmem:[%s2308 + $0x21] sm:$0xff] %vm616, %v2279
      %2313 = vst.msk [vmem:[%s2308 + $0x31] sm:$0xff] %vm616, %v2280
      %2314 = vst.msk [vmem:[%s2308 + $0x39] sm:$0xff] %vm616, %v2281
      %2315 = vst.msk [vmem:[%s2308 + $0x49] sm:$0xff] %vm616, %v2282
      %2316 = vst.msk [vmem:[%s2308 + $0x51] sm:$0xff] %vm616, %v2283
      %2317 = vst.msk [vmem:[%s2308 + $0x61] sm:$0xff] %vm616, %v2284
      %2318 = vst.msk [vmem:[%s2308 + $0x69] sm:$0xff] %vm616, %v2285
      %2319 = vst.msk [vmem:[%s2308 + $0x79] sm:$0xff] %vm616, %v2286
      %2320 = vst.msk [vmem:[%s2308 + $0x81] sm:$0xff] %vm616, %v2287
      %2321 = vst.msk [vmem:[%s2308 + $0x91] sm:$0xff] %vm616, %v2288
      %2322 = vst.msk [vmem:[%s2308 + $0x99] sm:$0xff] %vm616, %v2289
      %2323 = vst.msk [vmem:[%s2308 + $0xa9] sm:$0xff] %vm616, %v2290
      %2324 = vst.msk [vmem:[%s2308 + $0xb1] sm:$0xff] %vm616, %v2291
      %2325 = vst.msk [vmem:[%s2308 + $0xc1] sm:$0xff] %vm616, %v2292
      %2326 = vst.msk [vmem:[%s2308 + $0xc9] sm:$0xff] %vm616, %v2293
      %2327 = vst.msk [vmem:[%s2308 + $0xd9] sm:$0xff] %vm616, %v2294
      %2328 = vst.msk [vmem:[%s2308 + $0xe1] sm:$0xff] %vm616, %v2295
      %2329 = vst.msk [vmem:[%s2308 + $0xf1] sm:$0xff] %vm616, %v2296
      %2330 = vst.msk [vmem:[%s2308 + $0xf9] sm:$0xff] %vm616, %v2297
      %2331 = vst.msk [vmem:[%s2308 + $0x109] sm:$0xff] %vm616, %v2298
      %2332 = vst.msk [vmem:[%s2308 + $0x111] sm:$0xff] %vm616, %v2299
      %2333 = vst.msk [vmem:[%s2308 + $0x121] sm:$0xff] %vm616, %v2300
      %2334 = vst.msk [vmem:[%s2308 + $0x129] sm:$0xff] %vm616, %v2301
      %2335 = vst.msk [vmem:[%s2308 + $0x139] sm:$0xff] %vm616, %v2302
      %2336 = vst.msk [vmem:[%s2308 + $0x141] sm:$0xff] %vm616, %v2303
      %2337 = vst.msk [vmem:[%s2308 + $0x151] sm:$0xff] %vm616, %v2304
      %2338 = vst.msk [vmem:[%s2308 + $0x159] sm:$0xff] %vm616, %v2305
      %2339 = vst.msk [vmem:[%s2308 + $0x169] sm:$0xff] %vm616, %v2306
      %2340 = vst.msk [vmem:[%s2308 + $0x171] sm:$0xff] %vm616, %v2307
      %v2341 = vld [vmem:[#allocation3] sm:$0xff]
      %v2342 = vld [vmem:[#allocation3 + $0x8] sm:$0xff]
      %v2343 = vld [vmem:[#allocation3 + $0x10] sm:$0x3]
      %v2344 = vld [vmem:[#allocation3 + $0x18] sm:$0xff]
      %v2345 = vld [vmem:[#allocation3 + $0x20] sm:$0xff]
      %v2346 = vld [vmem:[#allocation3 + $0x28] sm:$0x3]
      %v2347 = vld [vmem:[#allocation3 + $0x30] sm:$0xff]
      %v2348 = vld [vmem:[#allocation3 + $0x38] sm:$0xff]
      %v2349 = vld [vmem:[#allocation3 + $0x40] sm:$0x3]
      %v2350 = vld [vmem:[#allocation3 + $0x48] sm:$0xff]
      %v2351 = vld [vmem:[#allocation3 + $0x50] sm:$0xff]
      %v2352 = vld [vmem:[#allocation3 + $0x58] sm:$0x3]
      %v2353 = vld [vmem:[#allocation3 + $0x60] sm:$0xff]
      %v2354 = vld [vmem:[#allocation3 + $0x68] sm:$0xff]
      %v2355 = vld [vmem:[#allocation3 + $0x70] sm:$0x3]
      %v2356 = vld [vmem:[#allocation3 + $0x78] sm:$0xff]
      %v2357 = vld [vmem:[#allocation3 + $0x80] sm:$0xff]
      %v2358 = vld [vmem:[#allocation3 + $0x88] sm:$0x3]
      %v2359 = vld [vmem:[#allocation3 + $0x90] sm:$0xff]
      %v2360 = vld [vmem:[#allocation3 + $0x98] sm:$0xff]
      %v2361 = vld [vmem:[#allocation3 + $0xa0] sm:$0x3]
      %v2362 = vld [vmem:[#allocation3 + $0xa8] sm:$0xff]
      %v2363 = vld [vmem:[#allocation3 + $0xb0] sm:$0xff]
      %v2364 = vld [vmem:[#allocation3 + $0xb8] sm:$0x3]
      %v2365 = vld [vmem:[#allocation3 + $0xc0] sm:$0xff]
      %v2366 = vld [vmem:[#allocation3 + $0xc8] sm:$0xff]
      %v2367 = vld [vmem:[#allocation3 + $0xd0] sm:$0x3]
      %v2368 = vld [vmem:[#allocation3 + $0xd8] sm:$0xff]
      %v2369 = vld [vmem:[#allocation3 + $0xe0] sm:$0xff]
      %v2370 = vld [vmem:[#allocation3 + $0xe8] sm:$0x3]
      %v2371 = vld [vmem:[#allocation3 + $0xf0] sm:$0xff]
      %v2372 = vld [vmem:[#allocation3 + $0xf8] sm:$0xff]
      %v2373 = vld [vmem:[#allocation3 + $0x100] sm:$0x3]
      %v2374 = vld [vmem:[#allocation3 + $0x108] sm:$0xff]
      %v2375 = vld [vmem:[#allocation3 + $0x110] sm:$0xff]
      %v2376 = vld [vmem:[#allocation3 + $0x118] sm:$0x3]
      %v2377 = vld [vmem:[#allocation3 + $0x120] sm:$0xff]
      %v2378 = vld [vmem:[#allocation3 + $0x128] sm:$0xff]
      %v2379 = vld [vmem:[#allocation3 + $0x130] sm:$0x3]
      %v2380 = vld [vmem:[#allocation3 + $0x138] sm:$0xff]
      %v2381 = vld [vmem:[#allocation3 + $0x140] sm:$0xff]
      %v2382 = vld [vmem:[#allocation3 + $0x148] sm:$0x3]
      %v2383 = vld [vmem:[#allocation3 + $0x150] sm:$0xff]
      %v2384 = vld [vmem:[#allocation3 + $0x158] sm:$0xff]
      %v2385 = vld [vmem:[#allocation3 + $0x160] sm:$0x3]
      %v2386 = vld [vmem:[#allocation3 + $0x168] sm:$0xff]
      %v2387 = vld [vmem:[#allocation3 + $0x170] sm:$0xff]
      %v2388 = vld [vmem:[#allocation3 + $0x178] sm:$0x3]
      %v2389 = vld [vmem:[#allocation3 + $0x180] sm:$0xff]
      %v2390 = vld [vmem:[#allocation3 + $0x188] sm:$0xff]
      %v2391 = vld [vmem:[#allocation3 + $0x190] sm:$0x3]
      %v2392 = vld [vmem:[#allocation3 + $0x198] sm:$0xff]
      %v2393 = vld [vmem:[#allocation3 + $0x1a0] sm:$0xff]
      %v2394 = vld [vmem:[#allocation3 + $0x1a8] sm:$0x3]
      %v2443 = vrot.slane %v2341, 1
      %v2444 = vrot.slane %v2342, 1
      %v2445 = vsel %vm720, %v2443, %v2444
      %v2446 = vrot.slane %v2343, 1
      %v2447 = vsel %vm720, %v2444, %v2446
      %v2448 = vrot.slane %v2344, 1
      %v2449 = vrot.slane %v2345, 1
      %v2450 = vsel %vm720, %v2448, %v2449
      %v2451 = vrot.slane %v2346, 1
      %v2452 = vsel %vm720, %v2449, %v2451
      %v2453 = vrot.slane %v2347, 1
      %v2454 = vrot.slane %v2348, 1
      %v2455 = vsel %vm720, %v2453, %v2454
      %v2456 = vrot.slane %v2349, 1
      %v2457 = vsel %vm720, %v2454, %v2456
      %v2458 = vrot.slane %v2350, 1
      %v2459 = vrot.slane %v2351, 1
      %v2460 = vsel %vm720, %v2458, %v2459
      %v2461 = vrot.slane %v2352, 1
      %v2462 = vsel %vm720, %v2459, %v2461
      %v2463 = vrot.slane %v2353, 1
      %v2464 = vrot.slane %v2354, 1
      %v2465 = vsel %vm720, %v2463, %v2464
      %v2466 = vrot.slane %v2355, 1
      %v2467 = vsel %vm720, %v2464, %v2466
      %v2468 = vrot.slane %v2356, 1
      %v2469 = vrot.slane %v2357, 1
      %v2470 = vsel %vm720, %v2468, %v2469
      %v2471 = vrot.slane %v2358, 1
      %v2472 = vsel %vm720, %v2469, %v2471
      %v2473 = vrot.slane %v2359, 1
      %v2474 = vrot.slane %v2360, 1
      %v2475 = vsel %vm720, %v2473, %v2474
      %v2476 = vrot.slane %v2361, 1
      %v2477 = vsel %vm720, %v2474, %v2476
      %v2478 = vrot.slane %v2362, 1
      %v2479 = vrot.slane %v2363, 1
      %v2480 = vsel %vm720, %v2478, %v2479
      %v2481 = vrot.slane %v2364, 1
      %v2482 = vsel %vm720, %v2479, %v2481
      %v2483 = vrot.slane %v2365, 1
      %v2484 = vrot.slane %v2366, 1
      %v2485 = vsel %vm720, %v2483, %v2484
      %v2486 = vrot.slane %v2367, 1
      %v2487 = vsel %vm720, %v2484, %v2486
      %v2488 = vrot.slane %v2368, 1
      %v2489 = vrot.slane %v2369, 1
      %v2490 = vsel %vm720, %v2488, %v2489
      %v2491 = vrot.slane %v2370, 1
      %v2492 = vsel %vm720, %v2489, %v2491
      %v2493 = vrot.slane %v2371, 1
      %v2494 = vrot.slane %v2372, 1
      %v2495 = vsel %vm720, %v2493, %v2494
      %v2496 = vrot.slane %v2373, 1
      %v2497 = vsel %vm720, %v2494, %v2496
      %v2498 = vrot.slane %v2374, 1
      %v2499 = vrot.slane %v2375, 1
      %v2500 = vsel %vm720, %v2498, %v2499
      %v2501 = vrot.slane %v2376, 1
      %v2502 = vsel %vm720, %v2499, %v2501
      %v2503 = vrot.slane %v2377, 1
      %v2504 = vrot.slane %v2378, 1
      %v2505 = vsel %vm720, %v2503, %v2504
      %v2506 = vrot.slane %v2379, 1
      %v2507 = vsel %vm720, %v2504, %v2506
      %v2508 = vrot.slane %v2380, 1
      %v2509 = vrot.slane %v2381, 1
      %v2510 = vsel %vm720, %v2508, %v2509
      %v2511 = vrot.slane %v2382, 1
      %v2512 = vsel %vm720, %v2509, %v2511
      %v2513 = vrot.slane %v2383, 1
      %v2514 = vrot.slane %v2384, 1
      %v2515 = vsel %vm720, %v2513, %v2514
      %v2516 = vrot.slane %v2385, 1
      %v2517 = vsel %vm720, %v2514, %v2516
      %v2518 = vrot.slane %v2386, 1
      %v2519 = vrot.slane %v2387, 1
      %v2520 = vsel %vm720, %v2518, %v2519
      %v2521 = vrot.slane %v2388, 1
      %v2522 = vsel %vm720, %v2519, %v2521
      %2523 = vrot.lane.b32.xlu0 %v2445, 8
      %v2524 = vpop.permute.xlu0 %2523
      %2525 = vrot.lane.b32.xlu0 %v2447, 8
      %v2526 = vpop.permute.xlu0 %2525
      %2527 = vrot.lane.b32.xlu0 %v2450, 8
      %v2528 = vpop.permute.xlu0 %2527
      %2529 = vrot.lane.b32.xlu0 %v2452, 8
      %v2530 = vpop.permute.xlu0 %2529
      %2531 = vrot.lane.b32.xlu0 %v2455, 8
      %v2532 = vpop.permute.xlu0 %2531
      %2533 = vrot.lane.b32.xlu0 %v2457, 8
      %v2534 = vpop.permute.xlu0 %2533
      %2535 = vrot.lane.b32.xlu0 %v2460, 8
      %v2536 = vpop.permute.xlu0 %2535
      %2537 = vrot.lane.b32.xlu0 %v2462, 8
      %v2538 = vpop.permute.xlu0 %2537
      %2539 = vrot.lane.b32.xlu0 %v2465, 8
      %v2540 = vpop.permute.xlu0 %2539
      %2541 = vrot.lane.b32.xlu0 %v2467, 8
      %v2542 = vpop.permute.xlu0 %2541
      %2543 = vrot.lane.b32.xlu0 %v2470, 8
      %v2544 = vpop.permute.xlu0 %2543
      %2545 = vrot.lane.b32.xlu0 %v2472, 8
      %v2546 = vpop.permute.xlu0 %2545
      %2547 = vrot.lane.b32.xlu0 %v2475, 8
      %v2548 = vpop.permute.xlu0 %2547
      %2549 = vrot.lane.b32.xlu0 %v2477, 8
      %v2550 = vpop.permute.xlu0 %2549
      %2551 = vrot.lane.b32.xlu0 %v2480, 8
      %v2552 = vpop.permute.xlu0 %2551
      %2553 = vrot.lane.b32.xlu0 %v2482, 8
      %v2554 = vpop.permute.xlu0 %2553
      %2555 = vrot.lane.b32.xlu0 %v2485, 8
      %v2556 = vpop.permute.xlu0 %2555
      %2557 = vrot.lane.b32.xlu0 %v2487, 8
      %v2558 = vpop.permute.xlu0 %2557
      %2559 = vrot.lane.b32.xlu0 %v2490, 8
      %v2560 = vpop.permute.xlu0 %2559
      %2561 = vrot.lane.b32.xlu0 %v2492, 8
      %v2562 = vpop.permute.xlu0 %2561
      %2563 = vrot.lane.b32.xlu0 %v2495, 8
      %v2564 = vpop.permute.xlu0 %2563
      %2565 = vrot.lane.b32.xlu0 %v2497, 8
      %v2566 = vpop.permute.xlu0 %2565
      %2567 = vrot.lane.b32.xlu0 %v2500, 8
      %v2568 = vpop.permute.xlu0 %2567
      %2569 = vrot.lane.b32.xlu0 %v2502, 8
      %v2570 = vpop.permute.xlu0 %2569
      %2571 = vrot.lane.b32.xlu0 %v2505, 8
      %v2572 = vpop.permute.xlu0 %2571
      %2573 = vrot.lane.b32.xlu0 %v2507, 8
      %v2574 = vpop.permute.xlu0 %2573
      %2575 = vrot.lane.b32.xlu0 %v2510, 8
      %v2576 = vpop.permute.xlu0 %2575
      %2577 = vrot.lane.b32.xlu0 %v2512, 8
      %v2578 = vpop.permute.xlu0 %2577
      %2579 = vrot.lane.b32.xlu0 %v2515, 8
      %v2580 = vpop.permute.xlu0 %2579
      %2581 = vrot.lane.b32.xlu0 %v2517, 8
      %v2582 = vpop.permute.xlu0 %2581
      %2583 = vrot.lane.b32.xlu0 %v2520, 8
      %v2584 = vpop.permute.xlu0 %2583
      %2585 = vrot.lane.b32.xlu0 %v2522, 8
      %v2586 = vpop.permute.xlu0 %2585
      %v2619 = vrot.slane %v2341, 2
      %v2620 = vrot.slane %v2342, 2
      %v2621 = vsel %vm897, %v2619, %v2620
      %v2622 = vrot.slane %v2343, 2
      %v2623 = vsel %vm897, %v2620, %v2622
      %v2624 = vrot.slane %v2344, 2
      %v2625 = vrot.slane %v2345, 2
      %v2626 = vsel %vm897, %v2624, %v2625
      %v2627 = vrot.slane %v2346, 2
      %v2628 = vsel %vm897, %v2625, %v2627
      %v2629 = vrot.slane %v2347, 2
      %v2630 = vrot.slane %v2348, 2
      %v2631 = vsel %vm897, %v2629, %v2630
      %v2632 = vrot.slane %v2349, 2
      %v2633 = vsel %vm897, %v2630, %v2632
      %v2634 = vrot.slane %v2350, 2
      %v2635 = vrot.slane %v2351, 2
      %v2636 = vsel %vm897, %v2634, %v2635
      %v2637 = vrot.slane %v2352, 2
      %v2638 = vsel %vm897, %v2635, %v2637
      %v2639 = vrot.slane %v2353, 2
      %v2640 = vrot.slane %v2354, 2
      %v2641 = vsel %vm897, %v2639, %v2640
      %v2642 = vrot.slane %v2355, 2
      %v2643 = vsel %vm897, %v2640, %v2642
      %v2644 = vrot.slane %v2356, 2
      %v2645 = vrot.slane %v2357, 2
      %v2646 = vsel %vm897, %v2644, %v2645
      %v2647 = vrot.slane %v2358, 2
      %v2648 = vsel %vm897, %v2645, %v2647
      %v2649 = vrot.slane %v2359, 2
      %v2650 = vrot.slane %v2360, 2
      %v2651 = vsel %vm897, %v2649, %v2650
      %v2652 = vrot.slane %v2361, 2
      %v2653 = vsel %vm897, %v2650, %v2652
      %v2654 = vrot.slane %v2362, 2
      %v2655 = vrot.slane %v2363, 2
      %v2656 = vsel %vm897, %v2654, %v2655
      %v2657 = vrot.slane %v2364, 2
      %v2658 = vsel %vm897, %v2655, %v2657
      %v2659 = vrot.slane %v2365, 2
      %v2660 = vrot.slane %v2366, 2
      %v2661 = vsel %vm897, %v2659, %v2660
      %v2662 = vrot.slane %v2367, 2
      %v2663 = vsel %vm897, %v2660, %v2662
      %v2664 = vrot.slane %v2368, 2
      %v2665 = vrot.slane %v2369, 2
      %v2666 = vsel %vm897, %v2664, %v2665
      %v2667 = vrot.slane %v2370, 2
      %v2668 = vsel %vm897, %v2665, %v2667
      %v2669 = vrot.slane %v2371, 2
      %v2670 = vrot.slane %v2372, 2
      %v2671 = vsel %vm897, %v2669, %v2670
      %v2672 = vrot.slane %v2373, 2
      %v2673 = vsel %vm897, %v2670, %v2672
      %v2674 = vrot.slane %v2374, 2
      %v2675 = vrot.slane %v2375, 2
      %v2676 = vsel %vm897, %v2674, %v2675
      %v2677 = vrot.slane %v2376, 2
      %v2678 = vsel %vm897, %v2675, %v2677
      %v2679 = vrot.slane %v2377, 2
      %v2680 = vrot.slane %v2378, 2
      %v2681 = vsel %vm897, %v2679, %v2680
      %v2682 = vrot.slane %v2379, 2
      %v2683 = vsel %vm897, %v2680, %v2682
      %v2684 = vrot.slane %v2380, 2
      %v2685 = vrot.slane %v2381, 2
      %v2686 = vsel %vm897, %v2684, %v2685
      %v2687 = vrot.slane %v2382, 2
      %v2688 = vsel %vm897, %v2685, %v2687
      %v2689 = vrot.slane %v2383, 2
      %v2690 = vrot.slane %v2384, 2
      %v2691 = vsel %vm897, %v2689, %v2690
      %v2692 = vrot.slane %v2385, 2
      %v2693 = vsel %vm897, %v2690, %v2692
      %v2694 = vrot.slane %v2386, 2
      %v2695 = vrot.slane %v2387, 2
      %v2696 = vsel %vm897, %v2694, %v2695
      %v2697 = vrot.slane %v2388, 2
      %v2698 = vsel %vm897, %v2695, %v2697
      %2699 = vrot.lane.b32.xlu0 %v2621, 16
      %v2700 = vpop.permute.xlu0 %2699
      %2701 = vrot.lane.b32.xlu0 %v2623, 16
      %v2702 = vpop.permute.xlu0 %2701
      %2703 = vrot.lane.b32.xlu0 %v2626, 16
      %v2704 = vpop.permute.xlu0 %2703
      %2705 = vrot.lane.b32.xlu0 %v2628, 16
      %v2706 = vpop.permute.xlu0 %2705
      %2707 = vrot.lane.b32.xlu0 %v2631, 16
      %v2708 = vpop.permute.xlu0 %2707
      %2709 = vrot.lane.b32.xlu0 %v2633, 16
      %v2710 = vpop.permute.xlu0 %2709
      %2711 = vrot.lane.b32.xlu0 %v2636, 16
      %v2712 = vpop.permute.xlu0 %2711
      %2713 = vrot.lane.b32.xlu0 %v2638, 16
      %v2714 = vpop.permute.xlu0 %2713
      %2715 = vrot.lane.b32.xlu0 %v2641, 16
      %v2716 = vpop.permute.xlu0 %2715
      %2717 = vrot.lane.b32.xlu0 %v2643, 16
      %v2718 = vpop.permute.xlu0 %2717
      %2719 = vrot.lane.b32.xlu0 %v2646, 16
      %v2720 = vpop.permute.xlu0 %2719
      %2721 = vrot.lane.b32.xlu0 %v2648, 16
      %v2722 = vpop.permute.xlu0 %2721
      %2723 = vrot.lane.b32.xlu0 %v2651, 16
      %v2724 = vpop.permute.xlu0 %2723
      %2725 = vrot.lane.b32.xlu0 %v2653, 16
      %v2726 = vpop.permute.xlu0 %2725
      %2727 = vrot.lane.b32.xlu0 %v2656, 16
      %v2728 = vpop.permute.xlu0 %2727
      %2729 = vrot.lane.b32.xlu0 %v2658, 16
      %v2730 = vpop.permute.xlu0 %2729
      %2731 = vrot.lane.b32.xlu0 %v2661, 16
      %v2732 = vpop.permute.xlu0 %2731
      %2733 = vrot.lane.b32.xlu0 %v2663, 16
      %v2734 = vpop.permute.xlu0 %2733
      %2735 = vrot.lane.b32.xlu0 %v2666, 16
      %v2736 = vpop.permute.xlu0 %2735
      %2737 = vrot.lane.b32.xlu0 %v2668, 16
      %v2738 = vpop.permute.xlu0 %2737
      %2739 = vrot.lane.b32.xlu0 %v2671, 16
      %v2740 = vpop.permute.xlu0 %2739
      %2741 = vrot.lane.b32.xlu0 %v2673, 16
      %v2742 = vpop.permute.xlu0 %2741
      %2743 = vrot.lane.b32.xlu0 %v2676, 16
      %v2744 = vpop.permute.xlu0 %2743
      %2745 = vrot.lane.b32.xlu0 %v2678, 16
      %v2746 = vpop.permute.xlu0 %2745
      %2747 = vrot.lane.b32.xlu0 %v2681, 16
      %v2748 = vpop.permute.xlu0 %2747
      %2749 = vrot.lane.b32.xlu0 %v2683, 16
      %v2750 = vpop.permute.xlu0 %2749
      %2751 = vrot.lane.b32.xlu0 %v2686, 16
      %v2752 = vpop.permute.xlu0 %2751
      %2753 = vrot.lane.b32.xlu0 %v2688, 16
      %v2754 = vpop.permute.xlu0 %2753
      %2755 = vrot.lane.b32.xlu0 %v2691, 16
      %v2756 = vpop.permute.xlu0 %2755
      %2757 = vrot.lane.b32.xlu0 %v2693, 16
      %v2758 = vpop.permute.xlu0 %2757
      %2759 = vrot.lane.b32.xlu0 %v2696, 16
      %v2760 = vpop.permute.xlu0 %2759
      %2761 = vrot.lane.b32.xlu0 %v2698, 16
      %v2762 = vpop.permute.xlu0 %2761
      %2797 = vrot.lane.b32.xlu0 %v2344, 24
      %v2798 = vpop.permute.xlu0 %2797
      %2799 = vrot.lane.b32.xlu0 %v2345, 24
      %v2800 = vpop.permute.xlu0 %2799
      %2801 = vrot.lane.b32.xlu0 %v2347, 24
      %v2802 = vpop.permute.xlu0 %2801
      %2803 = vrot.lane.b32.xlu0 %v2348, 24
      %v2804 = vpop.permute.xlu0 %2803
      %2805 = vrot.lane.b32.xlu0 %v2350, 24
      %v2806 = vpop.permute.xlu0 %2805
      %2807 = vrot.lane.b32.xlu0 %v2351, 24
      %v2808 = vpop.permute.xlu0 %2807
      %2809 = vrot.lane.b32.xlu0 %v2353, 24
      %v2810 = vpop.permute.xlu0 %2809
      %2811 = vrot.lane.b32.xlu0 %v2354, 24
      %v2812 = vpop.permute.xlu0 %2811
      %2813 = vrot.lane.b32.xlu0 %v2356, 24
      %v2814 = vpop.permute.xlu0 %2813
      %2815 = vrot.lane.b32.xlu0 %v2357, 24
      %v2816 = vpop.permute.xlu0 %2815
      %2817 = vrot.lane.b32.xlu0 %v2359, 24
      %v2818 = vpop.permute.xlu0 %2817
      %2819 = vrot.lane.b32.xlu0 %v2360, 24
      %v2820 = vpop.permute.xlu0 %2819
      %2821 = vrot.lane.b32.xlu0 %v2362, 24
      %v2822 = vpop.permute.xlu0 %2821
      %2823 = vrot.lane.b32.xlu0 %v2363, 24
      %v2824 = vpop.permute.xlu0 %2823
      %2825 = vrot.lane.b32.xlu0 %v2365, 24
      %v2826 = vpop.permute.xlu0 %2825
      %2827 = vrot.lane.b32.xlu0 %v2366, 24
      %v2828 = vpop.permute.xlu0 %2827
      %2829 = vrot.lane.b32.xlu0 %v2368, 24
      %v2830 = vpop.permute.xlu0 %2829
      %2831 = vrot.lane.b32.xlu0 %v2369, 24
      %v2832 = vpop.permute.xlu0 %2831
      %2833 = vrot.lane.b32.xlu0 %v2371, 24
      %v2834 = vpop.permute.xlu0 %2833
      %2835 = vrot.lane.b32.xlu0 %v2372, 24
      %v2836 = vpop.permute.xlu0 %2835
      %2837 = vrot.lane.b32.xlu0 %v2374, 24
      %v2838 = vpop.permute.xlu0 %2837
      %2839 = vrot.lane.b32.xlu0 %v2375, 24
      %v2840 = vpop.permute.xlu0 %2839
      %2841 = vrot.lane.b32.xlu0 %v2377, 24
      %v2842 = vpop.permute.xlu0 %2841
      %2843 = vrot.lane.b32.xlu0 %v2378, 24
      %v2844 = vpop.permute.xlu0 %2843
      %2845 = vrot.lane.b32.xlu0 %v2380, 24
      %v2846 = vpop.permute.xlu0 %2845
      %2847 = vrot.lane.b32.xlu0 %v2381, 24
      %v2848 = vpop.permute.xlu0 %2847
      %2849 = vrot.lane.b32.xlu0 %v2383, 24
      %v2850 = vpop.permute.xlu0 %2849
      %2851 = vrot.lane.b32.xlu0 %v2384, 24
      %v2852 = vpop.permute.xlu0 %2851
      %2853 = vrot.lane.b32.xlu0 %v2386, 24
      %v2854 = vpop.permute.xlu0 %2853
      %2855 = vrot.lane.b32.xlu0 %v2387, 24
      %v2856 = vpop.permute.xlu0 %2855
      %2857 = vrot.lane.b32.xlu0 %v2389, 24
      %v2858 = vpop.permute.xlu0 %2857
      %2859 = vrot.lane.b32.xlu0 %v2390, 24
      %v2860 = vpop.permute.xlu0 %2859
      %v2894 = vrot.slane %v2389, 1
      %v2895 = vrot.slane %v2390, 1
      %v2896 = vsel %vm720, %v2894, %v2895
      %v2897 = vrot.slane %v2391, 1
      %v2898 = vsel %vm720, %v2895, %v2897
      %2899 = vrot.lane.b32.xlu0 %v2450, 32
      %v2900 = vpop.permute.xlu0 %2899
      %2901 = vrot.lane.b32.xlu0 %v2452, 32
      %v2902 = vpop.permute.xlu0 %2901
      %2903 = vrot.lane.b32.xlu0 %v2455, 32
      %v2904 = vpop.permute.xlu0 %2903
      %2905 = vrot.lane.b32.xlu0 %v2457, 32
      %v2906 = vpop.permute.xlu0 %2905
      %2907 = vrot.lane.b32.xlu0 %v2460, 32
      %v2908 = vpop.permute.xlu0 %2907
      %2909 = vrot.lane.b32.xlu0 %v2462, 32
      %v2910 = vpop.permute.xlu0 %2909
      %2911 = vrot.lane.b32.xlu0 %v2465, 32
      %v2912 = vpop.permute.xlu0 %2911
      %2913 = vrot.lane.b32.xlu0 %v2467, 32
      %v2914 = vpop.permute.xlu0 %2913
      %2915 = vrot.lane.b32.xlu0 %v2470, 32
      %v2916 = vpop.permute.xlu0 %2915
      %2917 = vrot.lane.b32.xlu0 %v2472, 32
      %v2918 = vpop.permute.xlu0 %2917
      %2919 = vrot.lane.b32.xlu0 %v2475, 32
      %v2920 = vpop.permute.xlu0 %2919
      %2921 = vrot.lane.b32.xlu0 %v2477, 32
      %v2922 = vpop.permute.xlu0 %2921
      %2923 = vrot.lane.b32.xlu0 %v2480, 32
      %v2924 = vpop.permute.xlu0 %2923
      %2925 = vrot.lane.b32.xlu0 %v2482, 32
      %v2926 = vpop.permute.xlu0 %2925
      %2927 = vrot.lane.b32.xlu0 %v2485, 32
      %v2928 = vpop.permute.xlu0 %2927
      %2929 = vrot.lane.b32.xlu0 %v2487, 32
      %v2930 = vpop.permute.xlu0 %2929
      %2931 = vrot.lane.b32.xlu0 %v2490, 32
      %v2932 = vpop.permute.xlu0 %2931
      %2933 = vrot.lane.b32.xlu0 %v2492, 32
      %v2934 = vpop.permute.xlu0 %2933
      %2935 = vrot.lane.b32.xlu0 %v2495, 32
      %v2936 = vpop.permute.xlu0 %2935
      %2937 = vrot.lane.b32.xlu0 %v2497, 32
      %v2938 = vpop.permute.xlu0 %2937
      %2939 = vrot.lane.b32.xlu0 %v2500, 32
      %v2940 = vpop.permute.xlu0 %2939
      %2941 = vrot.lane.b32.xlu0 %v2502, 32
      %v2942 = vpop.permute.xlu0 %2941
      %2943 = vrot.lane.b32.xlu0 %v2505, 32
      %v2944 = vpop.permute.xlu0 %2943
      %2945 = vrot.lane.b32.xlu0 %v2507, 32
      %v2946 = vpop.permute.xlu0 %2945
      %2947 = vrot.lane.b32.xlu0 %v2510, 32
      %v2948 = vpop.permute.xlu0 %2947
      %2949 = vrot.lane.b32.xlu0 %v2512, 32
      %v2950 = vpop.permute.xlu0 %2949
      %2951 = vrot.lane.b32.xlu0 %v2515, 32
      %v2952 = vpop.permute.xlu0 %2951
      %2953 = vrot.lane.b32.xlu0 %v2517, 32
      %v2954 = vpop.permute.xlu0 %2953
      %2955 = vrot.lane.b32.xlu0 %v2520, 32
      %v2956 = vpop.permute.xlu0 %2955
      %2957 = vrot.lane.b32.xlu0 %v2522, 32
      %v2958 = vpop.permute.xlu0 %2957
      %2959 = vrot.lane.b32.xlu0 %v2896, 32
      %v2960 = vpop.permute.xlu0 %2959
      %2961 = vrot.lane.b32.xlu0 %v2898, 32
      %v2962 = vpop.permute.xlu0 %2961
      %v2995 = vrot.slane %v2389, 2
      %v2996 = vrot.slane %v2390, 2
      %v2997 = vsel %vm897, %v2995, %v2996
      %v2998 = vrot.slane %v2391, 2
      %v2999 = vsel %vm897, %v2996, %v2998
      %3000 = vrot.lane.b32.xlu0 %v2626, 40
      %v3001 = vpop.permute.xlu0 %3000
      %3002 = vrot.lane.b32.xlu0 %v2628, 40
      %v3003 = vpop.permute.xlu0 %3002
      %3004 = vrot.lane.b32.xlu0 %v2631, 40
      %v3005 = vpop.permute.xlu0 %3004
      %3006 = vrot.lane.b32.xlu0 %v2633, 40
      %v3007 = vpop.permute.xlu0 %3006
      %3008 = vrot.lane.b32.xlu0 %v2636, 40
      %v3009 = vpop.permute.xlu0 %3008
      %3010 = vrot.lane.b32.xlu0 %v2638, 40
      %v3011 = vpop.permute.xlu0 %3010
      %3012 = vrot.lane.b32.xlu0 %v2641, 40
      %v3013 = vpop.permute.xlu0 %3012
      %3014 = vrot.lane.b32.xlu0 %v2643, 40
      %v3015 = vpop.permute.xlu0 %3014
      %3016 = vrot.lane.b32.xlu0 %v2646, 40
      %v3017 = vpop.permute.xlu0 %3016
      %3018 = vrot.lane.b32.xlu0 %v2648, 40
      %v3019 = vpop.permute.xlu0 %3018
      %3020 = vrot.lane.b32.xlu0 %v2651, 40
      %v3021 = vpop.permute.xlu0 %3020
      %3022 = vrot.lane.b32.xlu0 %v2653, 40
      %v3023 = vpop.permute.xlu0 %3022
      %3024 = vrot.lane.b32.xlu0 %v2656, 40
      %v3025 = vpop.permute.xlu0 %3024
      %3026 = vrot.lane.b32.xlu0 %v2658, 40
      %v3027 = vpop.permute.xlu0 %3026
      %3028 = vrot.lane.b32.xlu0 %v2661, 40
      %v3029 = vpop.permute.xlu0 %3028
      %3030 = vrot.lane.b32.xlu0 %v2663, 40
      %v3031 = vpop.permute.xlu0 %3030
      %3032 = vrot.lane.b32.xlu0 %v2666, 40
      %v3033 = vpop.permute.xlu0 %3032
      %3034 = vrot.lane.b32.xlu0 %v2668, 40
      %v3035 = vpop.permute.xlu0 %3034
      %3036 = vrot.lane.b32.xlu0 %v2671, 40
      %v3037 = vpop.permute.xlu0 %3036
      %3038 = vrot.lane.b32.xlu0 %v2673, 40
      %v3039 = vpop.permute.xlu0 %3038
      %3040 = vrot.lane.b32.xlu0 %v2676, 40
      %v3041 = vpop.permute.xlu0 %3040
      %3042 = vrot.lane.b32.xlu0 %v2678, 40
      %v3043 = vpop.permute.xlu0 %3042
      %3044 = vrot.lane.b32.xlu0 %v2681, 40
      %v3045 = vpop.permute.xlu0 %3044
      %3046 = vrot.lane.b32.xlu0 %v2683, 40
      %v3047 = vpop.permute.xlu0 %3046
      %3048 = vrot.lane.b32.xlu0 %v2686, 40
      %v3049 = vpop.permute.xlu0 %3048
      %3050 = vrot.lane.b32.xlu0 %v2688, 40
      %v3051 = vpop.permute.xlu0 %3050
      %3052 = vrot.lane.b32.xlu0 %v2691, 40
      %v3053 = vpop.permute.xlu0 %3052
      %3054 = vrot.lane.b32.xlu0 %v2693, 40
      %v3055 = vpop.permute.xlu0 %3054
      %3056 = vrot.lane.b32.xlu0 %v2696, 40
      %v3057 = vpop.permute.xlu0 %3056
      %3058 = vrot.lane.b32.xlu0 %v2698, 40
      %v3059 = vpop.permute.xlu0 %3058
      %3060 = vrot.lane.b32.xlu0 %v2997, 40
      %v3061 = vpop.permute.xlu0 %3060
      %3062 = vrot.lane.b32.xlu0 %v2999, 40
      %v3063 = vpop.permute.xlu0 %3062
      %3098 = vrot.lane.b32.xlu0 %v2347, 48
      %v3099 = vpop.permute.xlu0 %3098
      %3100 = vrot.lane.b32.xlu0 %v2348, 48
      %v3101 = vpop.permute.xlu0 %3100
      %3102 = vrot.lane.b32.xlu0 %v2350, 48
      %v3103 = vpop.permute.xlu0 %3102
      %3104 = vrot.lane.b32.xlu0 %v2351, 48
      %v3105 = vpop.permute.xlu0 %3104
      %3106 = vrot.lane.b32.xlu0 %v2353, 48
      %v3107 = vpop.permute.xlu0 %3106
      %3108 = vrot.lane.b32.xlu0 %v2354, 48
      %v3109 = vpop.permute.xlu0 %3108
      %3110 = vrot.lane.b32.xlu0 %v2356, 48
      %v3111 = vpop.permute.xlu0 %3110
      %3112 = vrot.lane.b32.xlu0 %v2357, 48
      %v3113 = vpop.permute.xlu0 %3112
      %3114 = vrot.lane.b32.xlu0 %v2359, 48
      %v3115 = vpop.permute.xlu0 %3114
      %3116 = vrot.lane.b32.xlu0 %v2360, 48
      %v3117 = vpop.permute.xlu0 %3116
      %3118 = vrot.lane.b32.xlu0 %v2362, 48
      %v3119 = vpop.permute.xlu0 %3118
      %3120 = vrot.lane.b32.xlu0 %v2363, 48
      %v3121 = vpop.permute.xlu0 %3120
      %3122 = vrot.lane.b32.xlu0 %v2365, 48
      %v3123 = vpop.permute.xlu0 %3122
      %3124 = vrot.lane.b32.xlu0 %v2366, 48
      %v3125 = vpop.permute.xlu0 %3124
      %3126 = vrot.lane.b32.xlu0 %v2368, 48
      %v3127 = vpop.permute.xlu0 %3126
      %3128 = vrot.lane.b32.xlu0 %v2369, 48
      %v3129 = vpop.permute.xlu0 %3128
      %3130 = vrot.lane.b32.xlu0 %v2371, 48
      %v3131 = vpop.permute.xlu0 %3130
      %3132 = vrot.lane.b32.xlu0 %v2372, 48
      %v3133 = vpop.permute.xlu0 %3132
      %3134 = vrot.lane.b32.xlu0 %v2374, 48
      %v3135 = vpop.permute.xlu0 %3134
      %3136 = vrot.lane.b32.xlu0 %v2375, 48
      %v3137 = vpop.permute.xlu0 %3136
      %3138 = vrot.lane.b32.xlu0 %v2377, 48
      %v3139 = vpop.permute.xlu0 %3138
      %3140 = vrot.lane.b32.xlu0 %v2378, 48
      %v3141 = vpop.permute.xlu0 %3140
      %3142 = vrot.lane.b32.xlu0 %v2380, 48
      %v3143 = vpop.permute.xlu0 %3142
      %3144 = vrot.lane.b32.xlu0 %v2381, 48
      %v3145 = vpop.permute.xlu0 %3144
      %3146 = vrot.lane.b32.xlu0 %v2383, 48
      %v3147 = vpop.permute.xlu0 %3146
      %3148 = vrot.lane.b32.xlu0 %v2384, 48
      %v3149 = vpop.permute.xlu0 %3148
      %3150 = vrot.lane.b32.xlu0 %v2386, 48
      %v3151 = vpop.permute.xlu0 %3150
      %3152 = vrot.lane.b32.xlu0 %v2387, 48
      %v3153 = vpop.permute.xlu0 %3152
      %3154 = vrot.lane.b32.xlu0 %v2389, 48
      %v3155 = vpop.permute.xlu0 %3154
      %3156 = vrot.lane.b32.xlu0 %v2390, 48
      %v3157 = vpop.permute.xlu0 %3156
      %3158 = vrot.lane.b32.xlu0 %v2392, 48
      %v3159 = vpop.permute.xlu0 %3158
      %3160 = vrot.lane.b32.xlu0 %v2393, 48
      %v3161 = vpop.permute.xlu0 %3160
      %v3195 = vrot.slane %v2392, 1
      %v3196 = vrot.slane %v2393, 1
      %v3197 = vsel %vm720, %v3195, %v3196
      %v3198 = vrot.slane %v2394, 1
      %v3199 = vsel %vm720, %v3196, %v3198
      %3200 = vrot.lane.b32.xlu0 %v2455, 56
      %v3201 = vpop.permute.xlu0 %3200
      %3202 = vrot.lane.b32.xlu0 %v2457, 56
      %v3203 = vpop.permute.xlu0 %3202
      %3204 = vrot.lane.b32.xlu0 %v2460, 56
      %v3205 = vpop.permute.xlu0 %3204
      %3206 = vrot.lane.b32.xlu0 %v2462, 56
      %v3207 = vpop.permute.xlu0 %3206
      %3208 = vrot.lane.b32.xlu0 %v2465, 56
      %v3209 = vpop.permute.xlu0 %3208
      %3210 = vrot.lane.b32.xlu0 %v2467, 56
      %v3211 = vpop.permute.xlu0 %3210
      %3212 = vrot.lane.b32.xlu0 %v2470, 56
      %v3213 = vpop.permute.xlu0 %3212
      %3214 = vrot.lane.b32.xlu0 %v2472, 56
      %v3215 = vpop.permute.xlu0 %3214
      %3216 = vrot.lane.b32.xlu0 %v2475, 56
      %v3217 = vpop.permute.xlu0 %3216
      %3218 = vrot.lane.b32.xlu0 %v2477, 56
      %v3219 = vpop.permute.xlu0 %3218
      %3220 = vrot.lane.b32.xlu0 %v2480, 56
      %v3221 = vpop.permute.xlu0 %3220
      %3222 = vrot.lane.b32.xlu0 %v2482, 56
      %v3223 = vpop.permute.xlu0 %3222
      %3224 = vrot.lane.b32.xlu0 %v2485, 56
      %v3225 = vpop.permute.xlu0 %3224
      %3226 = vrot.lane.b32.xlu0 %v2487, 56
      %v3227 = vpop.permute.xlu0 %3226
      %3228 = vrot.lane.b32.xlu0 %v2490, 56
      %v3229 = vpop.permute.xlu0 %3228
      %3230 = vrot.lane.b32.xlu0 %v2492, 56
      %v3231 = vpop.permute.xlu0 %3230
      %3232 = vrot.lane.b32.xlu0 %v2495, 56
      %v3233 = vpop.permute.xlu0 %3232
      %3234 = vrot.lane.b32.xlu0 %v2497, 56
      %v3235 = vpop.permute.xlu0 %3234
      %3236 = vrot.lane.b32.xlu0 %v2500, 56
      %v3237 = vpop.permute.xlu0 %3236
      %3238 = vrot.lane.b32.xlu0 %v2502, 56
      %v3239 = vpop.permute.xlu0 %3238
      %3240 = vrot.lane.b32.xlu0 %v2505, 56
      %v3241 = vpop.permute.xlu0 %3240
      %3242 = vrot.lane.b32.xlu0 %v2507, 56
      %v3243 = vpop.permute.xlu0 %3242
      %3244 = vrot.lane.b32.xlu0 %v2510, 56
      %v3245 = vpop.permute.xlu0 %3244
      %3246 = vrot.lane.b32.xlu0 %v2512, 56
      %v3247 = vpop.permute.xlu0 %3246
      %3248 = vrot.lane.b32.xlu0 %v2515, 56
      %v3249 = vpop.permute.xlu0 %3248
      %3250 = vrot.lane.b32.xlu0 %v2517, 56
      %v3251 = vpop.permute.xlu0 %3250
      %3252 = vrot.lane.b32.xlu0 %v2520, 56
      %v3253 = vpop.permute.xlu0 %3252
      %3254 = vrot.lane.b32.xlu0 %v2522, 56
      %v3255 = vpop.permute.xlu0 %3254
      %3256 = vrot.lane.b32.xlu0 %v2896, 56
      %v3257 = vpop.permute.xlu0 %3256
      %3258 = vrot.lane.b32.xlu0 %v2898, 56
      %v3259 = vpop.permute.xlu0 %3258
      %3260 = vrot.lane.b32.xlu0 %v3197, 56
      %v3261 = vpop.permute.xlu0 %3260
      %3262 = vrot.lane.b32.xlu0 %v3199, 56
      %v3263 = vpop.permute.xlu0 %3262
      %v3296 = vrot.slane %v2392, 2
      %v3297 = vrot.slane %v2393, 2
      %v3298 = vsel %vm897, %v3296, %v3297
      %v3299 = vrot.slane %v2394, 2
      %v3300 = vsel %vm897, %v3297, %v3299
      %3301 = vrot.lane.b32.xlu0 %v2631, 64
      %v3302 = vpop.permute.xlu0 %3301
      %3303 = vrot.lane.b32.xlu0 %v2633, 64
      %v3304 = vpop.permute.xlu0 %3303
      %3305 = vrot.lane.b32.xlu0 %v2636, 64
      %v3306 = vpop.permute.xlu0 %3305
      %3307 = vrot.lane.b32.xlu0 %v2638, 64
      %v3308 = vpop.permute.xlu0 %3307
      %3309 = vrot.lane.b32.xlu0 %v2641, 64
      %v3310 = vpop.permute.xlu0 %3309
      %3311 = vrot.lane.b32.xlu0 %v2643, 64
      %v3312 = vpop.permute.xlu0 %3311
      %3313 = vrot.lane.b32.xlu0 %v2646, 64
      %v3314 = vpop.permute.xlu0 %3313
      %3315 = vrot.lane.b32.xlu0 %v2648, 64
      %v3316 = vpop.permute.xlu0 %3315
      %3317 = vrot.lane.b32.xlu0 %v2651, 64
      %v3318 = vpop.permute.xlu0 %3317
      %3319 = vrot.lane.b32.xlu0 %v2653, 64
      %v3320 = vpop.permute.xlu0 %3319
      %3321 = vrot.lane.b32.xlu0 %v2656, 64
      %v3322 = vpop.permute.xlu0 %3321
      %3323 = vrot.lane.b32.xlu0 %v2658, 64
      %v3324 = vpop.permute.xlu0 %3323
      %3325 = vrot.lane.b32.xlu0 %v2661, 64
      %v3326 = vpop.permute.xlu0 %3325
      %3327 = vrot.lane.b32.xlu0 %v2663, 64
      %v3328 = vpop.permute.xlu0 %3327
      %3329 = vrot.lane.b32.xlu0 %v2666, 64
      %v3330 = vpop.permute.xlu0 %3329
      %3331 = vrot.lane.b32.xlu0 %v2668, 64
      %v3332 = vpop.permute.xlu0 %3331
      %3333 = vrot.lane.b32.xlu0 %v2671, 64
      %v3334 = vpop.permute.xlu0 %3333
      %3335 = vrot.lane.b32.xlu0 %v2673, 64
      %v3336 = vpop.permute.xlu0 %3335
      %3337 = vrot.lane.b32.xlu0 %v2676, 64
      %v3338 = vpop.permute.xlu0 %3337
      %3339 = vrot.lane.b32.xlu0 %v2678, 64
      %v3340 = vpop.permute.xlu0 %3339
      %3341 = vrot.lane.b32.xlu0 %v2681, 64
      %v3342 = vpop.permute.xlu0 %3341
      %3343 = vrot.lane.b32.xlu0 %v2683, 64
      %v3344 = vpop.permute.xlu0 %3343
      %3345 = vrot.lane.b32.xlu0 %v2686, 64
      %v3346 = vpop.permute.xlu0 %3345
      %3347 = vrot.lane.b32.xlu0 %v2688, 64
      %v3348 = vpop.permute.xlu0 %3347
      %3349 = vrot.lane.b32.xlu0 %v2691, 64
      %v3350 = vpop.permute.xlu0 %3349
      %3351 = vrot.lane.b32.xlu0 %v2693, 64
      %v3352 = vpop.permute.xlu0 %3351
      %3353 = vrot.lane.b32.xlu0 %v2696, 64
      %v3354 = vpop.permute.xlu0 %3353
      %3355 = vrot.lane.b32.xlu0 %v2698, 64
      %v3356 = vpop.permute.xlu0 %3355
      %3357 = vrot.lane.b32.xlu0 %v2997, 64
      %v3358 = vpop.permute.xlu0 %3357
      %3359 = vrot.lane.b32.xlu0 %v2999, 64
      %v3360 = vpop.permute.xlu0 %3359
      %3361 = vrot.lane.b32.xlu0 %v3298, 64
      %v3362 = vpop.permute.xlu0 %3361
      %3363 = vrot.lane.b32.xlu0 %v3300, 64
      %v3364 = vpop.permute.xlu0 %3363
      %v3397 = vsel %vm616, %v2341, %v2524
      %v3398 = vsel %vm616, %v2342, %v2526
      %v3399 = vsel %vm616, %v2344, %v2528
      %v3400 = vsel %vm616, %v2345, %v2530
      %v3401 = vsel %vm616, %v2347, %v2532
      %v3402 = vsel %vm616, %v2348, %v2534
      %v3403 = vsel %vm616, %v2350, %v2536
      %v3404 = vsel %vm616, %v2351, %v2538
      %v3405 = vsel %vm616, %v2353, %v2540
      %v3406 = vsel %vm616, %v2354, %v2542
      %v3407 = vsel %vm616, %v2356, %v2544
      %v3408 = vsel %vm616, %v2357, %v2546
      %v3409 = vsel %vm616, %v2359, %v2548
      %v3410 = vsel %vm616, %v2360, %v2550
      %v3411 = vsel %vm616, %v2362, %v2552
      %v3412 = vsel %vm616, %v2363, %v2554
      %v3413 = vsel %vm616, %v2365, %v2556
      %v3414 = vsel %vm616, %v2366, %v2558
      %v3415 = vsel %vm616, %v2368, %v2560
      %v3416 = vsel %vm616, %v2369, %v2562
      %v3417 = vsel %vm616, %v2371, %v2564
      %v3418 = vsel %vm616, %v2372, %v2566
      %v3419 = vsel %vm616, %v2374, %v2568
      %v3420 = vsel %vm616, %v2375, %v2570
      %v3421 = vsel %vm616, %v2377, %v2572
      %v3422 = vsel %vm616, %v2378, %v2574
      %v3423 = vsel %vm616, %v2380, %v2576
      %v3424 = vsel %vm616, %v2381, %v2578
      %v3425 = vsel %vm616, %v2383, %v2580
      %v3426 = vsel %vm616, %v2384, %v2582
      %v3427 = vsel %vm616, %v2386, %v2584
      %v3428 = vsel %vm616, %v2387, %v2586
      %v3429 = vsel %vm1773, %v3397, %v2700
      %v3430 = vsel %vm1773, %v3398, %v2702
      %v3431 = vsel %vm1773, %v3399, %v2704
      %v3432 = vsel %vm1773, %v3400, %v2706
      %v3433 = vsel %vm1773, %v3401, %v2708
      %v3434 = vsel %vm1773, %v3402, %v2710
      %v3435 = vsel %vm1773, %v3403, %v2712
      %v3436 = vsel %vm1773, %v3404, %v2714
      %v3437 = vsel %vm1773, %v3405, %v2716
      %v3438 = vsel %vm1773, %v3406, %v2718
      %v3439 = vsel %vm1773, %v3407, %v2720
      %v3440 = vsel %vm1773, %v3408, %v2722
      %v3441 = vsel %vm1773, %v3409, %v2724
      %v3442 = vsel %vm1773, %v3410, %v2726
      %v3443 = vsel %vm1773, %v3411, %v2728
      %v3444 = vsel %vm1773, %v3412, %v2730
      %v3445 = vsel %vm1773, %v3413, %v2732
      %v3446 = vsel %vm1773, %v3414, %v2734
      %v3447 = vsel %vm1773, %v3415, %v2736
      %v3448 = vsel %vm1773, %v3416, %v2738
      %v3449 = vsel %vm1773, %v3417, %v2740
      %v3450 = vsel %vm1773, %v3418, %v2742
      %v3451 = vsel %vm1773, %v3419, %v2744
      %v3452 = vsel %vm1773, %v3420, %v2746
      %v3453 = vsel %vm1773, %v3421, %v2748
      %v3454 = vsel %vm1773, %v3422, %v2750
      %v3455 = vsel %vm1773, %v3423, %v2752
      %v3456 = vsel %vm1773, %v3424, %v2754
      %v3457 = vsel %vm1773, %v3425, %v2756
      %v3458 = vsel %vm1773, %v3426, %v2758
      %v3459 = vsel %vm1773, %v3427, %v2760
      %v3460 = vsel %vm1773, %v3428, %v2762
      %v3461 = vsel %vm1839, %v3429, %v2798
      %v3462 = vsel %vm1839, %v3430, %v2800
      %v3463 = vsel %vm1839, %v3431, %v2802
      %v3464 = vsel %vm1839, %v3432, %v2804
      %v3465 = vsel %vm1839, %v3433, %v2806
      %v3466 = vsel %vm1839, %v3434, %v2808
      %v3467 = vsel %vm1839, %v3435, %v2810
      %v3468 = vsel %vm1839, %v3436, %v2812
      %v3469 = vsel %vm1839, %v3437, %v2814
      %v3470 = vsel %vm1839, %v3438, %v2816
      %v3471 = vsel %vm1839, %v3439, %v2818
      %v3472 = vsel %vm1839, %v3440, %v2820
      %v3473 = vsel %vm1839, %v3441, %v2822
      %v3474 = vsel %vm1839, %v3442, %v2824
      %v3475 = vsel %vm1839, %v3443, %v2826
      %v3476 = vsel %vm1839, %v3444, %v2828
      %v3477 = vsel %vm1839, %v3445, %v2830
      %v3478 = vsel %vm1839, %v3446, %v2832
      %v3479 = vsel %vm1839, %v3447, %v2834
      %v3480 = vsel %vm1839, %v3448, %v2836
      %v3481 = vsel %vm1839, %v3449, %v2838
      %v3482 = vsel %vm1839, %v3450, %v2840
      %v3483 = vsel %vm1839, %v3451, %v2842
      %v3484 = vsel %vm1839, %v3452, %v2844
      %v3485 = vsel %vm1839, %v3453, %v2846
      %v3486 = vsel %vm1839, %v3454, %v2848
      %v3487 = vsel %vm1839, %v3455, %v2850
      %v3488 = vsel %vm1839, %v3456, %v2852
      %v3489 = vsel %vm1839, %v3457, %v2854
      %v3490 = vsel %vm1839, %v3458, %v2856
      %v3491 = vsel %vm1839, %v3459, %v2858
      %v3492 = vsel %vm1839, %v3460, %v2860
      %v3493 = vsel %vm1905, %v3461, %v2900
      %v3494 = vsel %vm1905, %v3462, %v2902
      %v3495 = vsel %vm1905, %v3463, %v2904
      %v3496 = vsel %vm1905, %v3464, %v2906
      %v3497 = vsel %vm1905, %v3465, %v2908
      %v3498 = vsel %vm1905, %v3466, %v2910
      %v3499 = vsel %vm1905, %v3467, %v2912
      %v3500 = vsel %vm1905, %v3468, %v2914
      %v3501 = vsel %vm1905, %v3469, %v2916
      %v3502 = vsel %vm1905, %v3470, %v2918
      %v3503 = vsel %vm1905, %v3471, %v2920
      %v3504 = vsel %vm1905, %v3472, %v2922
      %v3505 = vsel %vm1905, %v3473, %v2924
      %v3506 = vsel %vm1905, %v3474, %v2926
      %v3507 = vsel %vm1905, %v3475, %v2928
      %v3508 = vsel %vm1905, %v3476, %v2930
      %v3509 = vsel %vm1905, %v3477, %v2932
      %v3510 = vsel %vm1905, %v3478, %v2934
      %v3511 = vsel %vm1905, %v3479, %v2936
      %v3512 = vsel %vm1905, %v3480, %v2938
      %v3513 = vsel %vm1905, %v3481, %v2940
      %v3514 = vsel %vm1905, %v3482, %v2942
      %v3515 = vsel %vm1905, %v3483, %v2944
      %v3516 = vsel %vm1905, %v3484, %v2946
      %v3517 = vsel %vm1905, %v3485, %v2948
      %v3518 = vsel %vm1905, %v3486, %v2950
      %v3519 = vsel %vm1905, %v3487, %v2952
      %v3520 = vsel %vm1905, %v3488, %v2954
      %v3521 = vsel %vm1905, %v3489, %v2956
      %v3522 = vsel %vm1905, %v3490, %v2958
      %v3523 = vsel %vm1905, %v3491, %v2960
      %v3524 = vsel %vm1905, %v3492, %v2962
      %vm3525 = vcmask 326656
      %v3526 = vsel %vm3525, %v3493, %v3001
      %v3527 = vsel %vm3525, %v3494, %v3003
      %v3528 = vsel %vm3525, %v3495, %v3005
      %v3529 = vsel %vm3525, %v3496, %v3007
      %v3530 = vsel %vm3525, %v3497, %v3009
      %v3531 = vsel %vm3525, %v3498, %v3011
      %v3532 = vsel %vm3525, %v3499, %v3013
      %v3533 = vsel %vm3525, %v3500, %v3015
      %v3534 = vsel %vm3525, %v3501, %v3017
      %v3535 = vsel %vm3525, %v3502, %v3019
      %v3536 = vsel %vm3525, %v3503, %v3021
      %v3537 = vsel %vm3525, %v3504, %v3023
      %v3538 = vsel %vm3525, %v3505, %v3025
      %v3539 = vsel %vm3525, %v3506, %v3027
      %v3540 = vsel %vm3525, %v3507, %v3029
      %v3541 = vsel %vm3525, %v3508, %v3031
      %v3542 = vsel %vm3525, %v3509, %v3033
      %v3543 = vsel %vm3525, %v3510, %v3035
      %v3544 = vsel %vm3525, %v3511, %v3037
      %v3545 = vsel %vm3525, %v3512, %v3039
      %v3546 = vsel %vm3525, %v3513, %v3041
      %v3547 = vsel %vm3525, %v3514, %v3043
      %v3548 = vsel %vm3525, %v3515, %v3045
      %v3549 = vsel %vm3525, %v3516, %v3047
      %v3550 = vsel %vm3525, %v3517, %v3049
      %v3551 = vsel %vm3525, %v3518, %v3051
      %v3552 = vsel %vm3525, %v3519, %v3053
      %v3553 = vsel %vm3525, %v3520, %v3055
      %v3554 = vsel %vm3525, %v3521, %v3057
      %v3555 = vsel %vm3525, %v3522, %v3059
      %v3556 = vsel %vm3525, %v3523, %v3061
      %v3557 = vsel %vm3525, %v3524, %v3063
      %vm3558 = vcmask 392192
      %v3559 = vsel %vm3558, %v3526, %v3099
      %v3560 = vsel %vm3558, %v3527, %v3101
      %v3561 = vsel %vm3558, %v3528, %v3103
      %v3562 = vsel %vm3558, %v3529, %v3105
      %v3563 = vsel %vm3558, %v3530, %v3107
      %v3564 = vsel %vm3558, %v3531, %v3109
      %v3565 = vsel %vm3558, %v3532, %v3111
      %v3566 = vsel %vm3558, %v3533, %v3113
      %v3567 = vsel %vm3558, %v3534, %v3115
      %v3568 = vsel %vm3558, %v3535, %v3117
      %v3569 = vsel %vm3558, %v3536, %v3119
      %v3570 = vsel %vm3558, %v3537, %v3121
      %v3571 = vsel %vm3558, %v3538, %v3123
      %v3572 = vsel %vm3558, %v3539, %v3125
      %v3573 = vsel %vm3558, %v3540, %v3127
      %v3574 = vsel %vm3558, %v3541, %v3129
      %v3575 = vsel %vm3558, %v3542, %v3131
      %v3576 = vsel %vm3558, %v3543, %v3133
      %v3577 = vsel %vm3558, %v3544, %v3135
      %v3578 = vsel %vm3558, %v3545, %v3137
      %v3579 = vsel %vm3558, %v3546, %v3139
      %v3580 = vsel %vm3558, %v3547, %v3141
      %v3581 = vsel %vm3558, %v3548, %v3143
      %v3582 = vsel %vm3558, %v3549, %v3145
      %v3583 = vsel %vm3558, %v3550, %v3147
      %v3584 = vsel %vm3558, %v3551, %v3149
      %v3585 = vsel %vm3558, %v3552, %v3151
      %v3586 = vsel %vm3558, %v3553, %v3153
      %v3587 = vsel %vm3558, %v3554, %v3155
      %v3588 = vsel %vm3558, %v3555, %v3157
      %v3589 = vsel %vm3558, %v3556, %v3159
      %v3590 = vsel %vm3558, %v3557, %v3161
      %vm3591 = vcmask 457728
      %v3592 = vsel %vm3591, %v3559, %v3201
      %v3593 = vsel %vm3591, %v3560, %v3203
      %v3594 = vsel %vm3591, %v3561, %v3205
      %v3595 = vsel %vm3591, %v3562, %v3207
      %v3596 = vsel %vm3591, %v3563, %v3209
      %v3597 = vsel %vm3591, %v3564, %v3211
      %v3598 = vsel %vm3591, %v3565, %v3213
      %v3599 = vsel %vm3591, %v3566, %v3215
      %v3600 = vsel %vm3591, %v3567, %v3217
      %v3601 = vsel %vm3591, %v3568, %v3219
      %v3602 = vsel %vm3591, %v3569, %v3221
      %v3603 = vsel %vm3591, %v3570, %v3223
      %v3604 = vsel %vm3591, %v3571, %v3225
      %v3605 = vsel %vm3591, %v3572, %v3227
      %v3606 = vsel %vm3591, %v3573, %v3229
      %v3607 = vsel %vm3591, %v3574, %v3231
      %v3608 = vsel %vm3591, %v3575, %v3233
      %v3609 = vsel %vm3591, %v3576, %v3235
      %v3610 = vsel %vm3591, %v3577, %v3237
      %v3611 = vsel %vm3591, %v3578, %v3239
      %v3612 = vsel %vm3591, %v3579, %v3241
      %v3613 = vsel %vm3591, %v3580, %v3243
      %v3614 = vsel %vm3591, %v3581, %v3245
      %v3615 = vsel %vm3591, %v3582, %v3247
      %v3616 = vsel %vm3591, %v3583, %v3249
      %v3617 = vsel %vm3591, %v3584, %v3251
      %v3618 = vsel %vm3591, %v3585, %v3253
      %v3619 = vsel %vm3591, %v3586, %v3255
      %v3620 = vsel %vm3591, %v3587, %v3257
      %v3621 = vsel %vm3591, %v3588, %v3259
      %v3622 = vsel %vm3591, %v3589, %v3261
      %v3623 = vsel %vm3591, %v3590, %v3263
      %vm3624 = vcmask 523264
      %v3625 = vsel %vm3624, %v3592, %v3302
      %v3626 = vsel %vm3624, %v3593, %v3304
      %v3627 = vsel %vm3624, %v3594, %v3306
      %v3628 = vsel %vm3624, %v3595, %v3308
      %v3629 = vsel %vm3624, %v3596, %v3310
      %v3630 = vsel %vm3624, %v3597, %v3312
      %v3631 = vsel %vm3624, %v3598, %v3314
      %v3632 = vsel %vm3624, %v3599, %v3316
      %v3633 = vsel %vm3624, %v3600, %v3318
      %v3634 = vsel %vm3624, %v3601, %v3320
      %v3635 = vsel %vm3624, %v3602, %v3322
      %v3636 = vsel %vm3624, %v3603, %v3324
      %v3637 = vsel %vm3624, %v3604, %v3326
      %v3638 = vsel %vm3624, %v3605, %v3328
      %v3639 = vsel %vm3624, %v3606, %v3330
      %v3640 = vsel %vm3624, %v3607, %v3332
      %v3641 = vsel %vm3624, %v3608, %v3334
      %v3642 = vsel %vm3624, %v3609, %v3336
      %v3643 = vsel %vm3624, %v3610, %v3338
      %v3644 = vsel %vm3624, %v3611, %v3340
      %v3645 = vsel %vm3624, %v3612, %v3342
      %v3646 = vsel %vm3624, %v3613, %v3344
      %v3647 = vsel %vm3624, %v3614, %v3346
      %v3648 = vsel %vm3624, %v3615, %v3348
      %v3649 = vsel %vm3624, %v3616, %v3350
      %v3650 = vsel %vm3624, %v3617, %v3352
      %v3651 = vsel %vm3624, %v3618, %v3354
      %v3652 = vsel %vm3624, %v3619, %v3356
      %v3653 = vsel %vm3624, %v3620, %v3358
      %v3654 = vsel %vm3624, %v3621, %v3360
      %v3655 = vsel %vm3624, %v3622, %v3362
      %v3656 = vsel %vm3624, %v3623, %v3364
      %v3657 = vld [vmem:[%s3] sm:$0xff]
      %v3658 = vld [vmem:[%s3 + $0x8] sm:$0xff]
      %v3659 = vld [vmem:[%s3 + $0x10] sm:$0xff]
      %v3660 = vld [vmem:[%s3 + $0x18] sm:$0xff]
      %v3661 = vld [vmem:[%s3 + $0x20] sm:$0xff]
      %v3662 = vld [vmem:[%s3 + $0x28] sm:$0xff]
      %v3663 = vld [vmem:[%s3 + $0x30] sm:$0xff]
      %v3664 = vld [vmem:[%s3 + $0x38] sm:$0xff]
      %v3665 = vld [vmem:[%s3 + $0x40] sm:$0xff]
      %v3666 = vld [vmem:[%s4] sm:$0x1]
      %v3668 = vlaneseq
      %v3669 = vshrl.u32 %v3668, 7
      %v3670 = vsub.s32 0, %v3669
      %v3671 = vrot.slane %v3666, %v3670
      %vm3673 = vcmask 588800
      %v3675 = vsel %vm3673, %v3625, 0
      %v3678 = vsel %vm3673, %v3626, 0
      %v3681 = vsel %vm3673, %v3627, 0
      %v3684 = vsel %vm3673, %v3628, 0
      %v3687 = vsel %vm3673, %v3629, 0
      %v3690 = vsel %vm3673, %v3630, 0
      %v3693 = vsel %vm3673, %v3631, 0
      %v3696 = vsel %vm3673, %v3632, 0
      %v3699 = vsel %vm3673, %v3633, 0
      %v3702 = vsel %vm3673, %v3634, 0
      %v3705 = vsel %vm3673, %v3635, 0
      %v3708 = vsel %vm3673, %v3636, 0
      %v3711 = vsel %vm3673, %v3637, 0
      %v3714 = vsel %vm3673, %v3638, 0
      %v3717 = vsel %vm3673, %v3639, 0
      %v3720 = vsel %vm3673, %v3640, 0
      %v3723 = vsel %vm3673, %v3641, 0
      %v3726 = vsel %vm3673, %v3642, 0
      %v3729 = vsel %vm3673, %v3643, 0
      %v3732 = vsel %vm3673, %v3644, 0
      %v3735 = vsel %vm3673, %v3645, 0
      %v3738 = vsel %vm3673, %v3646, 0
      %v3741 = vsel %vm3673, %v3647, 0
      %v3744 = vsel %vm3673, %v3648, 0
      %v3747 = vsel %vm3673, %v3649, 0
      %v3750 = vsel %vm3673, %v3650, 0
      %v3753 = vsel %vm3673, %v3651, 0
      %v3756 = vsel %vm3673, %v3652, 0
      %v3759 = vsel %vm3673, %v3653, 0
      %v3762 = vsel %vm3673, %v3654, 0
      %v3765 = vsel %vm3673, %v3655, 0
      %v3768 = vsel %vm3673, %v3656, 0
      %3770 = vmatprep.subr.mxu0 0.0
      %3771 = vmatpush1.msra.mxu0 0.0
      %3772 = vmatprep.subr.mxu0 0.0
      %3773 = vmatpush1.msra.mxu0 0.0
      %3774 = vmatprep.subr.mxu0 0.0
      %3775 = vmatpush1.msra.mxu0 0.0
      %3776 = vmatprep.subr.mxu0 0.0
      %3777 = vmatpush1.msra.mxu0 0.0
      %3778 = vmatprep.subr.mxu0 0.0
      %3779 = vmatpush1.msra.mxu0 0.0
      %3780 = vmatprep.subr.mxu0 0.0
      %3781 = vmatpush1.msra.mxu0 0.0
      %3782 = vmatprep.subr.mxu0 0.0
      %3783 = vmatpush1.msra.mxu0 0.0
      %3784 = vmatprep.subr.mxu0 0.0
      %3785 = vmatpush1.msra.mxu0 %v3665
      %3786 = vmatprep.subr.mxu0 0.0
      %3787 = vmatpush1.msra.mxu0 %v3664
      %3788 = vmatprep.subr.mxu0 0.0
      %3789 = vmatpush1.msra.mxu0 %v3663
      %3790 = vmatprep.subr.mxu0 0.0
      %3791 = vmatpush1.msra.mxu0 %v3662
      %3792 = vmatprep.subr.mxu0 0.0
      %3793 = vmatpush1.msra.mxu0 %v3661
      %3794 = vmatprep.subr.mxu0 0.0
      %3795 = vmatpush1.msra.mxu0 %v3660
      %3796 = vmatprep.subr.mxu0 0.0
      %3797 = vmatpush1.msra.mxu0 %v3659
      %3798 = vmatprep.subr.mxu0 0.0
      %3799 = vmatpush1.msra.mxu0 %v3658
      %3800 = vmatprep.subr.mxu0 0.0
      %3801 = vmatpush1.msra.mxu0 %v3657
      %3802 = vmatprep.subr.mxu0 0.0
      %3803 = vmatpush2.msra.mxu0 0.0
      %3804 = vmatprep.subr.mxu0 0.0
      %3805 = vmatpush2.msra.mxu0 0.0
      %3806 = vmatprep.subr.mxu0 0.0
      %3807 = vmatpush2.msra.mxu0 0.0
      %3808 = vmatprep.subr.mxu0 0.0
      %3809 = vmatpush2.msra.mxu0 0.0
      %3810 = vmatprep.subr.mxu0 0.0
      %3811 = vmatpush2.msra.mxu0 0.0
      %3812 = vmatprep.subr.mxu0 0.0
      %3813 = vmatpush2.msra.mxu0 0.0
      %3814 = vmatprep.subr.mxu0 0.0
      %3815 = vmatpush2.msra.mxu0 0.0
      %3816 = vmatprep.subr.mxu0 0.0
      %3817 = vmatpush2.msra.mxu0 0.0
      %3818 = vmatprep.subr.mxu0 0.0
      %3819 = vmatpush2.msra.mxu0 0.0
      %3820 = vmatprep.subr.mxu0 0.0
      %3821 = vmatpush2.msra.mxu0 0.0
      %3822 = vmatprep.subr.mxu0 0.0
      %3823 = vmatpush2.msra.mxu0 0.0
      %3824 = vmatprep.subr.mxu0 0.0
      %3825 = vmatpush2.msra.mxu0 0.0
      %3826 = vmatprep.subr.mxu0 0.0
      %3827 = vmatpush2.msra.mxu0 0.0
      %3828 = vmatprep.subr.mxu0 0.0
      %3829 = vmatpush2.msra.mxu0 0.0
      %3830 = vmatprep.subr.mxu0 0.0
      %3831 = vmatpush2.msra.mxu0 0.0
      %3832 = vmatprep.subr.mxu0 0.0
      %3833 = vmatpush2.msra.mxu0 0.0
      %3834 = vmatprep.mubr.f32.mxu0 0.0
      %3835 = vmatmul.mubr.f32.gmra.mxu0 %v3675
      %v3836 = vpop.f32.mrf.mxu0
      %v3837 = vadd.f32 %v3671, %v3836
      %v3838 = vpop.f32.mrf.mxu0
      %3839 = vmatprep.mubr.f32.mxu0 0.0
      %3840 = vmatmul.mubr.f32.gmra.mxu0 %v3678
      %v3841 = vpop.f32.mrf.mxu0
      %v3842 = vadd.f32 %v3671, %v3841
      %v3843 = vpop.f32.mrf.mxu0
      %3844 = vmatprep.mubr.f32.mxu0 0.0
      %3845 = vmatmul.mubr.f32.gmra.mxu0 %v3681
      %v3846 = vpop.f32.mrf.mxu0
      %v3847 = vadd.f32 %v3671, %v3846
      %v3848 = vpop.f32.mrf.mxu0
      %3849 = vmatprep.mubr.f32.mxu0 0.0
      %3850 = vmatmul.mubr.f32.gmra.mxu0 %v3684
      %v3851 = vpop.f32.mrf.mxu0
      %v3852 = vadd.f32 %v3671, %v3851
      %v3853 = vpop.f32.mrf.mxu0
      %3854 = vmatprep.mubr.f32.mxu0 0.0
      %3855 = vmatmul.mubr.f32.gmra.mxu0 %v3687
      %v3856 = vpop.f32.mrf.mxu0
      %v3857 = vadd.f32 %v3671, %v3856
      %v3858 = vpop.f32.mrf.mxu0
      %3859 = vmatprep.mubr.f32.mxu0 0.0
      %3860 = vmatmul.mubr.f32.gmra.mxu0 %v3690
      %v3861 = vpop.f32.mrf.mxu0
      %v3862 = vadd.f32 %v3671, %v3861
      %v3863 = vpop.f32.mrf.mxu0
      %3864 = vmatprep.mubr.f32.mxu0 0.0
      %3865 = vmatmul.mubr.f32.gmra.mxu0 %v3693
      %v3866 = vpop.f32.mrf.mxu0
      %v3867 = vadd.f32 %v3671, %v3866
      %v3868 = vpop.f32.mrf.mxu0
      %3869 = vmatprep.mubr.f32.mxu0 0.0
      %3870 = vmatmul.mubr.f32.gmra.mxu0 %v3696
      %v3871 = vpop.f32.mrf.mxu0
      %v3872 = vadd.f32 %v3671, %v3871
      %v3873 = vpop.f32.mrf.mxu0
      %3874 = vmatprep.mubr.f32.mxu0 0.0
      %3875 = vmatmul.mubr.f32.gmra.mxu0 %v3699
      %v3876 = vpop.f32.mrf.mxu0
      %v3877 = vadd.f32 %v3671, %v3876
      %v3878 = vpop.f32.mrf.mxu0
      %3879 = vmatprep.mubr.f32.mxu0 0.0
      %3880 = vmatmul.mubr.f32.gmra.mxu0 %v3702
      %v3881 = vpop.f32.mrf.mxu0
      %v3882 = vadd.f32 %v3671, %v3881
      %v3883 = vpop.f32.mrf.mxu0
      %3884 = vmatprep.mubr.f32.mxu0 0.0
      %3885 = vmatmul.mubr.f32.gmra.mxu0 %v3705
      %v3886 = vpop.f32.mrf.mxu0
      %v3887 = vadd.f32 %v3671, %v3886
      %v3888 = vpop.f32.mrf.mxu0
      %3889 = vmatprep.mubr.f32.mxu0 0.0
      %3890 = vmatmul.mubr.f32.gmra.mxu0 %v3708
      %v3891 = vpop.f32.mrf.mxu0
      %v3892 = vadd.f32 %v3671, %v3891
      %v3893 = vpop.f32.mrf.mxu0
      %3894 = vmatprep.mubr.f32.mxu0 0.0
      %3895 = vmatmul.mubr.f32.gmra.mxu0 %v3711
      %v3896 = vpop.f32.mrf.mxu0
      %v3897 = vadd.f32 %v3671, %v3896
      %v3898 = vpop.f32.mrf.mxu0
      %3899 = vmatprep.mubr.f32.mxu0 0.0
      %3900 = vmatmul.mubr.f32.gmra.mxu0 %v3714
      %v3901 = vpop.f32.mrf.mxu0
      %v3902 = vadd.f32 %v3671, %v3901
      %v3903 = vpop.f32.mrf.mxu0
      %3904 = vmatprep.mubr.f32.mxu0 0.0
      %3905 = vmatmul.mubr.f32.gmra.mxu0 %v3717
      %v3906 = vpop.f32.mrf.mxu0
      %v3907 = vadd.f32 %v3671, %v3906
      %v3908 = vpop.f32.mrf.mxu0
      %3909 = vmatprep.mubr.f32.mxu0 0.0
      %3910 = vmatmul.mubr.f32.gmra.mxu0 %v3720
      %v3911 = vpop.f32.mrf.mxu0
      %v3912 = vadd.f32 %v3671, %v3911
      %v3913 = vpop.f32.mrf.mxu0
      %3914 = vmatprep.mubr.f32.mxu0 0.0
      %3915 = vmatmul.mubr.f32.gmra.mxu0 %v3723
      %v3916 = vpop.f32.mrf.mxu0
      %v3917 = vadd.f32 %v3671, %v3916
      %v3918 = vpop.f32.mrf.mxu0
      %3919 = vmatprep.mubr.f32.mxu0 0.0
      %3920 = vmatmul.mubr.f32.gmra.mxu0 %v3726
      %v3921 = vpop.f32.mrf.mxu0
      %v3922 = vadd.f32 %v3671, %v3921
      %v3923 = vpop.f32.mrf.mxu0
      %3924 = vmatprep.mubr.f32.mxu0 0.0
      %3925 = vmatmul.mubr.f32.gmra.mxu0 %v3729
      %v3926 = vpop.f32.mrf.mxu0
      %v3927 = vadd.f32 %v3671, %v3926
      %v3928 = vpop.f32.mrf.mxu0
      %3929 = vmatprep.mubr.f32.mxu0 0.0
      %3930 = vmatmul.mubr.f32.gmra.mxu0 %v3732
      %v3931 = vpop.f32.mrf.mxu0
      %v3932 = vadd.f32 %v3671, %v3931
      %v3933 = vpop.f32.mrf.mxu0
      %3934 = vmatprep.mubr.f32.mxu0 0.0
      %3935 = vmatmul.mubr.f32.gmra.mxu0 %v3735
      %v3936 = vpop.f32.mrf.mxu0
      %v3937 = vadd.f32 %v3671, %v3936
      %v3938 = vpop.f32.mrf.mxu0
      %3939 = vmatprep.mubr.f32.mxu0 0.0
      %3940 = vmatmul.mubr.f32.gmra.mxu0 %v3738
      %v3941 = vpop.f32.mrf.mxu0
      %v3942 = vadd.f32 %v3671, %v3941
      %v3943 = vpop.f32.mrf.mxu0
      %3944 = vmatprep.mubr.f32.mxu0 0.0
      %3945 = vmatmul.mubr.f32.gmra.mxu0 %v3741
      %v3946 = vpop.f32.mrf.mxu0
      %v3947 = vadd.f32 %v3671, %v3946
      %v3948 = vpop.f32.mrf.mxu0
      %3949 = vmatprep.mubr.f32.mxu0 0.0
      %3950 = vmatmul.mubr.f32.gmra.mxu0 %v3744
      %v3951 = vpop.f32.mrf.mxu0
      %v3952 = vadd.f32 %v3671, %v3951
      %v3953 = vpop.f32.mrf.mxu0
      %3954 = vmatprep.mubr.f32.mxu0 0.0
      %3955 = vmatmul.mubr.f32.gmra.mxu0 %v3747
      %v3956 = vpop.f32.mrf.mxu0
      %v3957 = vadd.f32 %v3671, %v3956
      %v3958 = vpop.f32.mrf.mxu0
      %3959 = vmatprep.mubr.f32.mxu0 0.0
      %3960 = vmatmul.mubr.f32.gmra.mxu0 %v3750
      %v3961 = vpop.f32.mrf.mxu0
      %v3962 = vadd.f32 %v3671, %v3961
      %v3963 = vpop.f32.mrf.mxu0
      %3964 = vmatprep.mubr.f32.mxu0 0.0
      %3965 = vmatmul.mubr.f32.gmra.mxu0 %v3753
      %v3966 = vpop.f32.mrf.mxu0
      %v3967 = vadd.f32 %v3671, %v3966
      %v3968 = vpop.f32.mrf.mxu0
      %3969 = vmatprep.mubr.f32.mxu0 0.0
      %3970 = vmatmul.mubr.f32.gmra.mxu0 %v3756
      %v3971 = vpop.f32.mrf.mxu0
      %v3972 = vadd.f32 %v3671, %v3971
      %v3973 = vpop.f32.mrf.mxu0
      %3974 = vmatprep.mubr.f32.mxu0 0.0
      %3975 = vmatmul.mubr.f32.gmra.mxu0 %v3759
      %v3976 = vpop.f32.mrf.mxu0
      %v3977 = vadd.f32 %v3671, %v3976
      %v3978 = vpop.f32.mrf.mxu0
      %3979 = vmatprep.mubr.f32.mxu0 0.0
      %3980 = vmatmul.mubr.f32.gmra.mxu0 %v3762
      %v3981 = vpop.f32.mrf.mxu0
      %v3982 = vadd.f32 %v3671, %v3981
      %v3983 = vpop.f32.mrf.mxu0
      %3984 = vmatprep.mubr.f32.mxu0 0.0
      %3985 = vmatmul.mubr.f32.gmra.mxu0 %v3765
      %v3986 = vpop.f32.mrf.mxu0
      %v3987 = vadd.f32 %v3671, %v3986
      %v3988 = vpop.f32.mrf.mxu0
      %3989 = vmatprep.mubr.f32.mxu0 0.0
      %3990 = vmatmul.mubr.f32.gmra.mxu0 %v3768
      %v3991 = vpop.f32.mrf.mxu0
      %v3992 = vadd.f32 %v3671, %v3991
      %v3993 = vpop.f32.mrf.mxu0
      %3994 = vdwg.mxu0
      %3995 = vst.msk [vmem:[#allocation4] sm:$0xff] %vm616, 0.0
      %3996 = vst.msk [vmem:[#allocation4 + $0x8] sm:$0xff] %vm616, 0.0
      %vm3997 = vcmask 60416
      %3998 = vst.msk [vmem:[#allocation4 + $0x10] sm:$0xf] %vm3997, 0.0
      %3999 = vst.msk [vmem:[#allocation4 + $0x18] sm:$0xff] %vm616, 0.0
      %4000 = vst.msk [vmem:[#allocation4 + $0x20] sm:$0xff] %vm616, 0.0
      %4001 = vst.msk [vmem:[#allocation4 + $0x28] sm:$0xf] %vm3997, 0.0
      %4002 = vst.msk [vmem:[#allocation4 + $0x30] sm:$0xff] %vm616, 0.0
      %4003 = vst.msk [vmem:[#allocation4 + $0x38] sm:$0xff] %vm616, 0.0
      %4004 = vst.msk [vmem:[#allocation4 + $0x40] sm:$0xf] %vm3997, 0.0
      %4005 = vst.msk [vmem:[#allocation4 + $0x48] sm:$0xff] %vm616, 0.0
      %4006 = vst.msk [vmem:[#allocation4 + $0x50] sm:$0xff] %vm616, 0.0
      %4007 = vst.msk [vmem:[#allocation4 + $0x58] sm:$0xf] %vm3997, 0.0
      %4008 = vst.msk [vmem:[#allocation4 + $0x60] sm:$0xff] %vm616, 0.0
      %4009 = vst.msk [vmem:[#allocation4 + $0x68] sm:$0xff] %vm616, 0.0
      %4010 = vst.msk [vmem:[#allocation4 + $0x70] sm:$0xf] %vm3997, 0.0
      %4011 = vst.msk [vmem:[#allocation4 + $0x78] sm:$0xff] %vm616, 0.0
      %4012 = vst.msk [vmem:[#allocation4 + $0x80] sm:$0xff] %vm616, 0.0
      %4013 = vst.msk [vmem:[#allocation4 + $0x88] sm:$0xf] %vm3997, 0.0
      %4014 = vst.msk [vmem:[#allocation4 + $0x90] sm:$0xff] %vm616, 0.0
      %4015 = vst.msk [vmem:[#allocation4 + $0x98] sm:$0xff] %vm616, 0.0
      %4016 = vst.msk [vmem:[#allocation4 + $0xa0] sm:$0xf] %vm3997, 0.0
      %4017 = vst.msk [vmem:[#allocation4 + $0xa8] sm:$0xff] %vm616, 0.0
      %4018 = vst.msk [vmem:[#allocation4 + $0xb0] sm:$0xff] %vm616, 0.0
      %4019 = vst.msk [vmem:[#allocation4 + $0xb8] sm:$0xf] %vm3997, 0.0
      %4020 = vst.msk [vmem:[#allocation4 + $0xc0] sm:$0xff] %vm616, 0.0
      %4021 = vst.msk [vmem:[#allocation4 + $0xc8] sm:$0xff] %vm616, 0.0
      %4022 = vst.msk [vmem:[#allocation4 + $0xd0] sm:$0xf] %vm3997, 0.0
      %4023 = vst.msk [vmem:[#allocation4 + $0xd8] sm:$0xff] %vm616, 0.0
      %4024 = vst.msk [vmem:[#allocation4 + $0xe0] sm:$0xff] %vm616, 0.0
      %4025 = vst.msk [vmem:[#allocation4 + $0xe8] sm:$0xf] %vm3997, 0.0
      %4026 = vst.msk [vmem:[#allocation4 + $0xf0] sm:$0xff] %vm616, 0.0
      %4027 = vst.msk [vmem:[#allocation4 + $0xf8] sm:$0xff] %vm616, 0.0
      %4028 = vst.msk [vmem:[#allocation4 + $0x100] sm:$0xf] %vm3997, 0.0
      %4029 = vst.msk [vmem:[#allocation4 + $0x108] sm:$0xff] %vm616, 0.0
      %4030 = vst.msk [vmem:[#allocation4 + $0x110] sm:$0xff] %vm616, 0.0
      %4031 = vst.msk [vmem:[#allocation4 + $0x118] sm:$0xf] %vm3997, 0.0
      %4032 = vst.msk [vmem:[#allocation4 + $0x120] sm:$0xff] %vm616, 0.0
      %4033 = vst.msk [vmem:[#allocation4 + $0x128] sm:$0xff] %vm616, 0.0
      %4034 = vst.msk [vmem:[#allocation4 + $0x130] sm:$0xf] %vm3997, 0.0
      %4035 = vst.msk [vmem:[#allocation4 + $0x138] sm:$0xff] %vm616, 0.0
      %4036 = vst.msk [vmem:[#allocation4 + $0x140] sm:$0xff] %vm616, 0.0
      %4037 = vst.msk [vmem:[#allocation4 + $0x148] sm:$0xf] %vm3997, 0.0
      %4038 = vst.msk [vmem:[#allocation4 + $0x150] sm:$0xff] %vm616, 0.0
      %4039 = vst.msk [vmem:[#allocation4 + $0x158] sm:$0xff] %vm616, 0.0
      %4040 = vst.msk [vmem:[#allocation4 + $0x160] sm:$0xf] %vm3997, 0.0
      %4041 = vst.msk [vmem:[#allocation4 + $0x168] sm:$0xff] %vm616, 0.0
      %4042 = vst.msk [vmem:[#allocation4 + $0x170] sm:$0xff] %vm616, 0.0
      %4043 = vst.msk [vmem:[#allocation4 + $0x178] sm:$0xf] %vm3997, 0.0
      %4044 = vst.msk [vmem:[#allocation4 + $0x180] sm:$0xff] %vm616, 0.0
      %4045 = vst.msk [vmem:[#allocation4 + $0x188] sm:$0xff] %vm616, 0.0
      %4046 = vst.msk [vmem:[#allocation4 + $0x190] sm:$0xf] %vm3997, 0.0
      %4047 = vst.msk [vmem:[#allocation4 + $0x198] sm:$0xff] %vm616, 0.0
      %4048 = vst.msk [vmem:[#allocation4 + $0x1a0] sm:$0xff] %vm616, 0.0
      %4049 = vst.msk [vmem:[#allocation4 + $0x1a8] sm:$0xf] %vm3997, 0.0
      %4050 = vst.msk [vmem:[#allocation4 + $0x1b0] sm:$0xff] %vm616, 0.0
      %4051 = vst.msk [vmem:[#allocation4 + $0x1b8] sm:$0xff] %vm616, 0.0
      %4052 = vst.msk [vmem:[#allocation4 + $0x1c0] sm:$0xf] %vm3997, 0.0
      %4053 = vst.msk [vmem:[#allocation4 + $0x1c8] sm:$0xff] %vm616, 0.0
      %4054 = vst.msk [vmem:[#allocation4 + $0x1d0] sm:$0xff] %vm616, 0.0
      %4055 = vst.msk [vmem:[#allocation4 + $0x1d8] sm:$0xf] %vm3997, 0.0
      %v4056 = vld [vmem:[%s5] sm:$0xff]
      %v4057 = vld [vmem:[%s5 + $0x8] sm:$0xff]
      %v4058 = vld [vmem:[%s5 + $0x10] sm:$0xff]
      %v4059 = vld [vmem:[%s5 + $0x18] sm:$0xff]
      %v4060 = vld [vmem:[%s5 + $0x20] sm:$0xf]
      %v4061 = vld [vmem:[%s6] sm:$0x1]
      %v4063 = vlaneseq
      %v4064 = vshrl.u32 %v4063, 7
      %v4065 = vsub.s32 0, %v4064
      %v4066 = vrot.slane %v4061, %v4065
      %v4069 = vsel %vm2047, %v4060, 0
      %4071 = vmatprep.subr.mxu0 0.0
      %4072 = vmatpush1.msra.mxu0 0.0
      %4073 = vmatprep.subr.mxu0 0.0
      %4074 = vmatpush1.msra.mxu0 0.0
      %4075 = vmatprep.subr.mxu0 0.0
      %4076 = vmatpush1.msra.mxu0 0.0
      %4077 = vmatprep.subr.mxu0 0.0
      %4078 = vmatpush1.msra.mxu0 0.0
      %4079 = vmatprep.subr.mxu0 0.0
      %4080 = vmatpush1.msra.mxu0 0.0
      %4081 = vmatprep.subr.mxu0 0.0
      %4082 = vmatpush1.msra.mxu0 0.0
      %4083 = vmatprep.subr.mxu0 0.0
      %4084 = vmatpush1.msra.mxu0 0.0
      %4085 = vmatprep.subr.mxu0 0.0
      %4086 = vmatpush1.msra.mxu0 0.0
      %4087 = vmatprep.subr.mxu0 0.0
      %4088 = vmatpush1.msra.mxu0 0.0
      %4089 = vmatprep.subr.mxu0 0.0
      %4090 = vmatpush1.msra.mxu0 0.0
      %4091 = vmatprep.subr.mxu0 0.0
      %4092 = vmatpush1.msra.mxu0 0.0
      %4093 = vmatprep.subr.mxu0 0.0
      %4094 = vmatpush1.msra.mxu0 %v4069
      %4095 = vmatprep.subr.mxu0 0.0
      %4096 = vmatpush1.msra.mxu0 %v4059
      %4097 = vmatprep.subr.mxu0 0.0
      %4098 = vmatpush1.msra.mxu0 %v4058
      %4099 = vmatprep.subr.mxu0 0.0
      %4100 = vmatpush1.msra.mxu0 %v4057
      %4101 = vmatprep.subr.mxu0 0.0
      %4102 = vmatpush1.msra.mxu0 %v4056
      %4103 = vmatprep.subr.mxu0 0.0
      %4104 = vmatpush2.msra.mxu0 0.0
      %4105 = vmatprep.subr.mxu0 0.0
      %4106 = vmatpush2.msra.mxu0 0.0
      %4107 = vmatprep.subr.mxu0 0.0
      %4108 = vmatpush2.msra.mxu0 0.0
      %4109 = vmatprep.subr.mxu0 0.0
      %4110 = vmatpush2.msra.mxu0 0.0
      %4111 = vmatprep.subr.mxu0 0.0
      %4112 = vmatpush2.msra.mxu0 0.0
      %4113 = vmatprep.subr.mxu0 0.0
      %4114 = vmatpush2.msra.mxu0 0.0
      %4115 = vmatprep.subr.mxu0 0.0
      %4116 = vmatpush2.msra.mxu0 0.0
      %4117 = vmatprep.subr.mxu0 0.0
      %4118 = vmatpush2.msra.mxu0 0.0
      %4119 = vmatprep.subr.mxu0 0.0
      %4120 = vmatpush2.msra.mxu0 0.0
      %4121 = vmatprep.subr.mxu0 0.0
      %4122 = vmatpush2.msra.mxu0 0.0
      %4123 = vmatprep.subr.mxu0 0.0
      %4124 = vmatpush2.msra.mxu0 0.0
      %4125 = vmatprep.subr.mxu0 0.0
      %4126 = vmatpush2.msra.mxu0 0.0
      %4127 = vmatprep.subr.mxu0 0.0
      %4128 = vmatpush2.msra.mxu0 0.0
      %4129 = vmatprep.subr.mxu0 0.0
      %4130 = vmatpush2.msra.mxu0 0.0
      %4131 = vmatprep.subr.mxu0 0.0
      %4132 = vmatpush2.msra.mxu0 0.0
      %4133 = vmatprep.subr.mxu0 0.0
      %4134 = vmatpush2.msra.mxu0 0.0
      %4135 = vmatprep.mubr.f32.mxu0 0.0
      %4136 = vmatmul.mubr.f32.gmra.mxu0 %v1952
      %v4137 = vpop.f32.mrf.mxu0
      %v4138 = vadd.f32 %v4066, %v4137
      %v4139 = vpop.f32.mrf.mxu0
      %4140 = vmatprep.mubr.f32.mxu0 0.0
      %4141 = vmatmul.mubr.f32.gmra.mxu0 %v1955
      %v4142 = vpop.f32.mrf.mxu0
      %v4143 = vadd.f32 %v4066, %v4142
      %v4144 = vpop.f32.mrf.mxu0
      %4145 = vmatprep.mubr.f32.mxu0 0.0
      %4146 = vmatmul.mubr.f32.gmra.mxu0 %v1958
      %v4147 = vpop.f32.mrf.mxu0
      %v4148 = vadd.f32 %v4066, %v4147
      %v4149 = vpop.f32.mrf.mxu0
      %4150 = vmatprep.mubr.f32.mxu0 0.0
      %4151 = vmatmul.mubr.f32.gmra.mxu0 %v1961
      %v4152 = vpop.f32.mrf.mxu0
      %v4153 = vadd.f32 %v4066, %v4152
      %v4154 = vpop.f32.mrf.mxu0
      %4155 = vmatprep.mubr.f32.mxu0 0.0
      %4156 = vmatmul.mubr.f32.gmra.mxu0 %v1964
      %v4157 = vpop.f32.mrf.mxu0
      %v4158 = vadd.f32 %v4066, %v4157
      %v4159 = vpop.f32.mrf.mxu0
      %4160 = vmatprep.mubr.f32.mxu0 0.0
      %4161 = vmatmul.mubr.f32.gmra.mxu0 %v1967
      %v4162 = vpop.f32.mrf.mxu0
      %v4163 = vadd.f32 %v4066, %v4162
      %v4164 = vpop.f32.mrf.mxu0
      %4165 = vmatprep.mubr.f32.mxu0 0.0
      %4166 = vmatmul.mubr.f32.gmra.mxu0 %v1970
      %v4167 = vpop.f32.mrf.mxu0
      %v4168 = vadd.f32 %v4066, %v4167
      %v4169 = vpop.f32.mrf.mxu0
      %4170 = vmatprep.mubr.f32.mxu0 0.0
      %4171 = vmatmul.mubr.f32.gmra.mxu0 %v1973
      %v4172 = vpop.f32.mrf.mxu0
      %v4173 = vadd.f32 %v4066, %v4172
      %v4174 = vpop.f32.mrf.mxu0
      %4175 = vmatprep.mubr.f32.mxu0 0.0
      %4176 = vmatmul.mubr.f32.gmra.mxu0 %v1976
      %v4177 = vpop.f32.mrf.mxu0
      %v4178 = vadd.f32 %v4066, %v4177
      %v4179 = vpop.f32.mrf.mxu0
      %4180 = vmatprep.mubr.f32.mxu0 0.0
      %4181 = vmatmul.mubr.f32.gmra.mxu0 %v1979
      %v4182 = vpop.f32.mrf.mxu0
      %v4183 = vadd.f32 %v4066, %v4182
      %v4184 = vpop.f32.mrf.mxu0
      %4185 = vmatprep.mubr.f32.mxu0 0.0
      %4186 = vmatmul.mubr.f32.gmra.mxu0 %v1982
      %v4187 = vpop.f32.mrf.mxu0
      %v4188 = vadd.f32 %v4066, %v4187
      %v4189 = vpop.f32.mrf.mxu0
      %4190 = vmatprep.mubr.f32.mxu0 0.0
      %4191 = vmatmul.mubr.f32.gmra.mxu0 %v1985
      %v4192 = vpop.f32.mrf.mxu0
      %v4193 = vadd.f32 %v4066, %v4192
      %v4194 = vpop.f32.mrf.mxu0
      %4195 = vmatprep.mubr.f32.mxu0 0.0
      %4196 = vmatmul.mubr.f32.gmra.mxu0 %v1988
      %v4197 = vpop.f32.mrf.mxu0
      %v4198 = vadd.f32 %v4066, %v4197
      %v4199 = vpop.f32.mrf.mxu0
      %4200 = vmatprep.mubr.f32.mxu0 0.0
      %4201 = vmatmul.mubr.f32.gmra.mxu0 %v1991
      %v4202 = vpop.f32.mrf.mxu0
      %v4203 = vadd.f32 %v4066, %v4202
      %v4204 = vpop.f32.mrf.mxu0
      %4205 = vmatprep.mubr.f32.mxu0 0.0
      %4206 = vmatmul.mubr.f32.gmra.mxu0 %v1994
      %v4207 = vpop.f32.mrf.mxu0
      %v4208 = vadd.f32 %v4066, %v4207
      %v4209 = vpop.f32.mrf.mxu0
      %4210 = vmatprep.mubr.f32.mxu0 0.0
      %4211 = vmatmul.mubr.f32.gmra.mxu0 %v1997
      %v4212 = vpop.f32.mrf.mxu0
      %v4213 = vadd.f32 %v4066, %v4212
      %v4214 = vpop.f32.mrf.mxu0
      %4215 = vmatprep.mubr.f32.mxu0 0.0
      %4216 = vmatmul.mubr.f32.gmra.mxu0 %v2000
      %v4217 = vpop.f32.mrf.mxu0
      %v4218 = vadd.f32 %v4066, %v4217
      %v4219 = vpop.f32.mrf.mxu0
      %4220 = vmatprep.mubr.f32.mxu0 0.0
      %4221 = vmatmul.mubr.f32.gmra.mxu0 %v2003
      %v4222 = vpop.f32.mrf.mxu0
      %v4223 = vadd.f32 %v4066, %v4222
      %v4224 = vpop.f32.mrf.mxu0
      %4225 = vmatprep.mubr.f32.mxu0 0.0
      %4226 = vmatmul.mubr.f32.gmra.mxu0 %v2006
      %v4227 = vpop.f32.mrf.mxu0
      %v4228 = vadd.f32 %v4066, %v4227
      %v4229 = vpop.f32.mrf.mxu0
      %4230 = vmatprep.mubr.f32.mxu0 0.0
      %4231 = vmatmul.mubr.f32.gmra.mxu0 %v2009
      %v4232 = vpop.f32.mrf.mxu0
      %v4233 = vadd.f32 %v4066, %v4232
      %v4234 = vpop.f32.mrf.mxu0
      %4235 = vmatprep.mubr.f32.mxu0 0.0
      %4236 = vmatmul.mubr.f32.gmra.mxu0 %v2012
      %v4237 = vpop.f32.mrf.mxu0
      %v4238 = vadd.f32 %v4066, %v4237
      %v4239 = vpop.f32.mrf.mxu0
      %4240 = vmatprep.mubr.f32.mxu0 0.0
      %4241 = vmatmul.mubr.f32.gmra.mxu0 %v2015
      %v4242 = vpop.f32.mrf.mxu0
      %v4243 = vadd.f32 %v4066, %v4242
      %v4244 = vpop.f32.mrf.mxu0
      %4245 = vmatprep.mubr.f32.mxu0 0.0
      %4246 = vmatmul.mubr.f32.gmra.mxu0 %v2018
      %v4247 = vpop.f32.mrf.mxu0
      %v4248 = vadd.f32 %v4066, %v4247
      %v4249 = vpop.f32.mrf.mxu0
      %4250 = vmatprep.mubr.f32.mxu0 0.0
      %4251 = vmatmul.mubr.f32.gmra.mxu0 %v2021
      %v4252 = vpop.f32.mrf.mxu0
      %v4253 = vadd.f32 %v4066, %v4252
      %v4254 = vpop.f32.mrf.mxu0
      %4255 = vmatprep.mubr.f32.mxu0 0.0
      %4256 = vmatmul.mubr.f32.gmra.mxu0 %v2024
      %v4257 = vpop.f32.mrf.mxu0
      %v4258 = vadd.f32 %v4066, %v4257
      %v4259 = vpop.f32.mrf.mxu0
      %4260 = vmatprep.mubr.f32.mxu0 0.0
      %4261 = vmatmul.mubr.f32.gmra.mxu0 %v2027
      %v4262 = vpop.f32.mrf.mxu0
      %v4263 = vadd.f32 %v4066, %v4262
      %v4264 = vpop.f32.mrf.mxu0
      %4265 = vmatprep.mubr.f32.mxu0 0.0
      %4266 = vmatmul.mubr.f32.gmra.mxu0 %v2030
      %v4267 = vpop.f32.mrf.mxu0
      %v4268 = vadd.f32 %v4066, %v4267
      %v4269 = vpop.f32.mrf.mxu0
      %4270 = vmatprep.mubr.f32.mxu0 0.0
      %4271 = vmatmul.mubr.f32.gmra.mxu0 %v2033
      %v4272 = vpop.f32.mrf.mxu0
      %v4273 = vadd.f32 %v4066, %v4272
      %v4274 = vpop.f32.mrf.mxu0
      %4275 = vmatprep.mubr.f32.mxu0 0.0
      %4276 = vmatmul.mubr.f32.gmra.mxu0 %v2036
      %v4277 = vpop.f32.mrf.mxu0
      %v4278 = vadd.f32 %v4066, %v4277
      %v4279 = vpop.f32.mrf.mxu0
      %4280 = vmatprep.mubr.f32.mxu0 0.0
      %4281 = vmatmul.mubr.f32.gmra.mxu0 %v2039
      %v4282 = vpop.f32.mrf.mxu0
      %v4283 = vadd.f32 %v4066, %v4282
      %v4284 = vpop.f32.mrf.mxu0
      %4285 = vmatprep.mubr.f32.mxu0 0.0
      %4286 = vmatmul.mubr.f32.gmra.mxu0 %v2042
      %v4287 = vpop.f32.mrf.mxu0
      %v4288 = vadd.f32 %v4066, %v4287
      %v4289 = vpop.f32.mrf.mxu0
      %4290 = vmatprep.mubr.f32.mxu0 0.0
      %4291 = vmatmul.mubr.f32.gmra.mxu0 %v2045
      %v4292 = vpop.f32.mrf.mxu0
      %v4293 = vadd.f32 %v4066, %v4292
      %v4294 = vpop.f32.mrf.mxu0
      %4295 = vdwg.mxu0
      %v4296 = vmax.f32 %v4138, 0.0
      %v4297 = vmax.f32 %v4143, 0.0
      %v4298 = vmax.f32 %v4148, 0.0
      %v4299 = vmax.f32 %v4153, 0.0
      %v4300 = vmax.f32 %v4158, 0.0
      %v4301 = vmax.f32 %v4163, 0.0
      %v4302 = vmax.f32 %v4168, 0.0
      %v4303 = vmax.f32 %v4173, 0.0
      %v4304 = vmax.f32 %v4178, 0.0
      %v4305 = vmax.f32 %v4183, 0.0
      %v4306 = vmax.f32 %v4188, 0.0
      %v4307 = vmax.f32 %v4193, 0.0
      %v4308 = vmax.f32 %v4198, 0.0
      %v4309 = vmax.f32 %v4203, 0.0
      %v4310 = vmax.f32 %v4208, 0.0
      %v4311 = vmax.f32 %v4213, 0.0
      %v4312 = vmax.f32 %v4218, 0.0
      %v4313 = vmax.f32 %v4223, 0.0
      %v4314 = vmax.f32 %v4228, 0.0
      %v4315 = vmax.f32 %v4233, 0.0
      %v4316 = vmax.f32 %v4238, 0.0
      %v4317 = vmax.f32 %v4243, 0.0
      %v4318 = vmax.f32 %v4248, 0.0
      %v4319 = vmax.f32 %v4253, 0.0
      %v4320 = vmax.f32 %v4258, 0.0
      %v4321 = vmax.f32 %v4263, 0.0
      %v4322 = vmax.f32 %v4268, 0.0
      %v4323 = vmax.f32 %v4273, 0.0
      %v4324 = vmax.f32 %v4278, 0.0
      %v4325 = vmax.f32 %v4283, 0.0
      %v4326 = vmax.f32 %v4288, 0.0
      %v4327 = vmax.f32 %v4293, 0.0
      %s4328 = scalar_lea.vmem [#allocation4], 48
      %4329 = vst.msk [vmem:[%s4328 + $0x2] sm:$0xff] %vm616, %v4296
      %4330 = vst.msk [vmem:[%s4328 + $0xa] sm:$0xff] %vm616, %v4297
      %4331 = vst.msk [vmem:[%s4328 + $0x1a] sm:$0xff] %vm616, %v4298
      %4332 = vst.msk [vmem:[%s4328 + $0x22] sm:$0xff] %vm616, %v4299
      %4333 = vst.msk [vmem:[%s4328 + $0x32] sm:$0xff] %vm616, %v4300
      %4334 = vst.msk [vmem:[%s4328 + $0x3a] sm:$0xff] %vm616, %v4301
      %4335 = vst.msk [vmem:[%s4328 + $0x4a] sm:$0xff] %vm616, %v4302
      %4336 = vst.msk [vmem:[%s4328 + $0x52] sm:$0xff] %vm616, %v4303
      %4337 = vst.msk [vmem:[%s4328 + $0x62] sm:$0xff] %vm616, %v4304
      %4338 = vst.msk [vmem:[%s4328 + $0x6a] sm:$0xff] %vm616, %v4305
      %4339 = vst.msk [vmem:[%s4328 + $0x7a] sm:$0xff] %vm616, %v4306
      %4340 = vst.msk [vmem:[%s4328 + $0x82] sm:$0xff] %vm616, %v4307
      %4341 = vst.msk [vmem:[%s4328 + $0x92] sm:$0xff] %vm616, %v4308
      %4342 = vst.msk [vmem:[%s4328 + $0x9a] sm:$0xff] %vm616, %v4309
      %4343 = vst.msk [vmem:[%s4328 + $0xaa] sm:$0xff] %vm616, %v4310
      %4344 = vst.msk [vmem:[%s4328 + $0xb2] sm:$0xff] %vm616, %v4311
      %4345 = vst.msk [vmem:[%s4328 + $0xc2] sm:$0xff] %vm616, %v4312
      %4346 = vst.msk [vmem:[%s4328 + $0xca] sm:$0xff] %vm616, %v4313
      %4347 = vst.msk [vmem:[%s4328 + $0xda] sm:$0xff] %vm616, %v4314
      %4348 = vst.msk [vmem:[%s4328 + $0xe2] sm:$0xff] %vm616, %v4315
      %4349 = vst.msk [vmem:[%s4328 + $0xf2] sm:$0xff] %vm616, %v4316
      %4350 = vst.msk [vmem:[%s4328 + $0xfa] sm:$0xff] %vm616, %v4317
      %4351 = vst.msk [vmem:[%s4328 + $0x10a] sm:$0xff] %vm616, %v4318
      %4352 = vst.msk [vmem:[%s4328 + $0x112] sm:$0xff] %vm616, %v4319
      %4353 = vst.msk [vmem:[%s4328 + $0x122] sm:$0xff] %vm616, %v4320
      %4354 = vst.msk [vmem:[%s4328 + $0x12a] sm:$0xff] %vm616, %v4321
      %4355 = vst.msk [vmem:[%s4328 + $0x13a] sm:$0xff] %vm616, %v4322
      %4356 = vst.msk [vmem:[%s4328 + $0x142] sm:$0xff] %vm616, %v4323
      %4357 = vst.msk [vmem:[%s4328 + $0x152] sm:$0xff] %vm616, %v4324
      %4358 = vst.msk [vmem:[%s4328 + $0x15a] sm:$0xff] %vm616, %v4325
      %4359 = vst.msk [vmem:[%s4328 + $0x16a] sm:$0xff] %vm616, %v4326
      %4360 = vst.msk [vmem:[%s4328 + $0x172] sm:$0xff] %vm616, %v4327
      %4361 = vst.msk [vmem:[#allocation5] sm:$0xff] %vm616, 0.0
      %4362 = vst.msk [vmem:[#allocation5 + $0x8] sm:$0xff] %vm616, 0.0
      %4363 = vst.msk [vmem:[#allocation5 + $0x10] sm:$0xff] %vm616, 0.0
      %4364 = vst.msk [vmem:[#allocation5 + $0x18] sm:$0x3] %vm619, 0.0
      %4365 = vst.msk [vmem:[#allocation5 + $0x20] sm:$0xff] %vm616, 0.0
      %4366 = vst.msk [vmem:[#allocation5 + $0x28] sm:$0xff] %vm616, 0.0
      %4367 = vst.msk [vmem:[#allocation5 + $0x30] sm:$0xff] %vm616, 0.0
      %4368 = vst.msk [vmem:[#allocation5 + $0x38] sm:$0x3] %vm619, 0.0
      %4369 = vst.msk [vmem:[#allocation5 + $0x40] sm:$0xff] %vm616, 0.0
      %4370 = vst.msk [vmem:[#allocation5 + $0x48] sm:$0xff] %vm616, 0.0
      %4371 = vst.msk [vmem:[#allocation5 + $0x50] sm:$0xff] %vm616, 0.0
      %4372 = vst.msk [vmem:[#allocation5 + $0x58] sm:$0x3] %vm619, 0.0
      %4373 = vst.msk [vmem:[#allocation5 + $0x60] sm:$0xff] %vm616, 0.0
      %4374 = vst.msk [vmem:[#allocation5 + $0x68] sm:$0xff] %vm616, 0.0
      %4375 = vst.msk [vmem:[#allocation5 + $0x70] sm:$0xff] %vm616, 0.0
      %4376 = vst.msk [vmem:[#allocation5 + $0x78] sm:$0x3] %vm619, 0.0
      %4377 = vst.msk [vmem:[#allocation5 + $0x80] sm:$0xff] %vm616, 0.0
      %4378 = vst.msk [vmem:[#allocation5 + $0x88] sm:$0xff] %vm616, 0.0
      %4379 = vst.msk [vmem:[#allocation5 + $0x90] sm:$0xff] %vm616, 0.0
      %4380 = vst.msk [vmem:[#allocation5 + $0x98] sm:$0x3] %vm619, 0.0
      %4381 = vst.msk [vmem:[#allocation5 + $0xa0] sm:$0xff] %vm616, 0.0
      %4382 = vst.msk [vmem:[#allocation5 + $0xa8] sm:$0xff] %vm616, 0.0
      %4383 = vst.msk [vmem:[#allocation5 + $0xb0] sm:$0xff] %vm616, 0.0
      %4384 = vst.msk [vmem:[#allocation5 + $0xb8] sm:$0x3] %vm619, 0.0
      %4385 = vst.msk [vmem:[#allocation5 + $0xc0] sm:$0xff] %vm616, 0.0
      %4386 = vst.msk [vmem:[#allocation5 + $0xc8] sm:$0xff] %vm616, 0.0
      %4387 = vst.msk [vmem:[#allocation5 + $0xd0] sm:$0xff] %vm616, 0.0
      %4388 = vst.msk [vmem:[#allocation5 + $0xd8] sm:$0x3] %vm619, 0.0
      %4389 = vst.msk [vmem:[#allocation5 + $0xe0] sm:$0xff] %vm616, 0.0
      %4390 = vst.msk [vmem:[#allocation5 + $0xe8] sm:$0xff] %vm616, 0.0
      %4391 = vst.msk [vmem:[#allocation5 + $0xf0] sm:$0xff] %vm616, 0.0
      %4392 = vst.msk [vmem:[#allocation5 + $0xf8] sm:$0x3] %vm619, 0.0
      %4393 = vst.msk [vmem:[#allocation5 + $0x100] sm:$0xff] %vm616, 0.0
      %4394 = vst.msk [vmem:[#allocation5 + $0x108] sm:$0xff] %vm616, 0.0
      %4395 = vst.msk [vmem:[#allocation5 + $0x110] sm:$0xff] %vm616, 0.0
      %4396 = vst.msk [vmem:[#allocation5 + $0x118] sm:$0x3] %vm619, 0.0
      %4397 = vst.msk [vmem:[#allocation5 + $0x120] sm:$0xff] %vm616, 0.0
      %4398 = vst.msk [vmem:[#allocation5 + $0x128] sm:$0xff] %vm616, 0.0
      %4399 = vst.msk [vmem:[#allocation5 + $0x130] sm:$0xff] %vm616, 0.0
      %4400 = vst.msk [vmem:[#allocation5 + $0x138] sm:$0x3] %vm619, 0.0
      %4401 = vst.msk [vmem:[#allocation5 + $0x140] sm:$0xff] %vm616, 0.0
      %4402 = vst.msk [vmem:[#allocation5 + $0x148] sm:$0xff] %vm616, 0.0
      %4403 = vst.msk [vmem:[#allocation5 + $0x150] sm:$0xff] %vm616, 0.0
      %4404 = vst.msk [vmem:[#allocation5 + $0x158] sm:$0x3] %vm619, 0.0
      %4405 = vst.msk [vmem:[#allocation5 + $0x160] sm:$0xff] %vm616, 0.0
      %4406 = vst.msk [vmem:[#allocation5 + $0x168] sm:$0xff] %vm616, 0.0
      %4407 = vst.msk [vmem:[#allocation5 + $0x170] sm:$0xff] %vm616, 0.0
      %4408 = vst.msk [vmem:[#allocation5 + $0x178] sm:$0x3] %vm619, 0.0
      %4409 = vst.msk [vmem:[#allocation5 + $0x180] sm:$0xff] %vm616, 0.0
      %4410 = vst.msk [vmem:[#allocation5 + $0x188] sm:$0xff] %vm616, 0.0
      %4411 = vst.msk [vmem:[#allocation5 + $0x190] sm:$0xff] %vm616, 0.0
      %4412 = vst.msk [vmem:[#allocation5 + $0x198] sm:$0x3] %vm619, 0.0
      %4413 = vst.msk [vmem:[#allocation5 + $0x1a0] sm:$0xff] %vm616, 0.0
      %4414 = vst.msk [vmem:[#allocation5 + $0x1a8] sm:$0xff] %vm616, 0.0
      %4415 = vst.msk [vmem:[#allocation5 + $0x1b0] sm:$0xff] %vm616, 0.0
      %4416 = vst.msk [vmem:[#allocation5 + $0x1b8] sm:$0x3] %vm619, 0.0
      %4417 = vst.msk [vmem:[#allocation5 + $0x1c0] sm:$0xff] %vm616, 0.0
      %4418 = vst.msk [vmem:[#allocation5 + $0x1c8] sm:$0xff] %vm616, 0.0
      %4419 = vst.msk [vmem:[#allocation5 + $0x1d0] sm:$0xff] %vm616, 0.0
      %4420 = vst.msk [vmem:[#allocation5 + $0x1d8] sm:$0x3] %vm619, 0.0
      %4421 = vst.msk [vmem:[#allocation5 + $0x1e0] sm:$0xff] %vm616, 0.0
      %4422 = vst.msk [vmem:[#allocation5 + $0x1e8] sm:$0xff] %vm616, 0.0
      %4423 = vst.msk [vmem:[#allocation5 + $0x1f0] sm:$0xff] %vm616, 0.0
      %4424 = vst.msk [vmem:[#allocation5 + $0x1f8] sm:$0x3] %vm619, 0.0
      %4425 = vst.msk [vmem:[#allocation5 + $0x200] sm:$0xff] %vm616, 0.0
      %4426 = vst.msk [vmem:[#allocation5 + $0x208] sm:$0xff] %vm616, 0.0
      %4427 = vst.msk [vmem:[#allocation5 + $0x210] sm:$0xff] %vm616, 0.0
      %4428 = vst.msk [vmem:[#allocation5 + $0x218] sm:$0x3] %vm619, 0.0
      %4429 = vst.msk [vmem:[#allocation5 + $0x220] sm:$0xff] %vm616, 0.0
      %4430 = vst.msk [vmem:[#allocation5 + $0x228] sm:$0xff] %vm616, 0.0
      %4431 = vst.msk [vmem:[#allocation5 + $0x230] sm:$0xff] %vm616, 0.0
      %4432 = vst.msk [vmem:[#allocation5 + $0x238] sm:$0x3] %vm619, 0.0
      %4433 = vst.msk [vmem:[#allocation5 + $0x240] sm:$0xff] %vm616, 0.0
      %4434 = vst.msk [vmem:[#allocation5 + $0x248] sm:$0xff] %vm616, 0.0
      %4435 = vst.msk [vmem:[#allocation5 + $0x250] sm:$0xff] %vm616, 0.0
      %4436 = vst.msk [vmem:[#allocation5 + $0x258] sm:$0x3] %vm619, 0.0
      %4437 = vst.msk [vmem:[#allocation5 + $0x260] sm:$0xff] %vm616, 0.0
      %4438 = vst.msk [vmem:[#allocation5 + $0x268] sm:$0xff] %vm616, 0.0
      %4439 = vst.msk [vmem:[#allocation5 + $0x270] sm:$0xff] %vm616, 0.0
      %4440 = vst.msk [vmem:[#allocation5 + $0x278] sm:$0x3] %vm619, 0.0
      %4441 = vst.msk [vmem:[#allocation5 + $0x280] sm:$0xff] %vm616, 0.0
      %4442 = vst.msk [vmem:[#allocation5 + $0x288] sm:$0xff] %vm616, 0.0
      %4443 = vst.msk [vmem:[#allocation5 + $0x290] sm:$0xff] %vm616, 0.0
      %4444 = vst.msk [vmem:[#allocation5 + $0x298] sm:$0x3] %vm619, 0.0
      %4445 = vst.msk [vmem:[#allocation5 + $0x2a0] sm:$0xff] %vm616, 0.0
      %4446 = vst.msk [vmem:[#allocation5 + $0x2a8] sm:$0xff] %vm616, 0.0
      %4447 = vst.msk [vmem:[#allocation5 + $0x2b0] sm:$0xff] %vm616, 0.0
      %4448 = vst.msk [vmem:[#allocation5 + $0x2b8] sm:$0x3] %vm619, 0.0
      %4449 = vst.msk [vmem:[#allocation5 + $0x2c0] sm:$0xff] %vm616, 0.0
      %4450 = vst.msk [vmem:[#allocation5 + $0x2c8] sm:$0xff] %vm616, 0.0
      %4451 = vst.msk [vmem:[#allocation5 + $0x2d0] sm:$0xff] %vm616, 0.0
      %4452 = vst.msk [vmem:[#allocation5 + $0x2d8] sm:$0x3] %vm619, 0.0
      %4453 = vst.msk [vmem:[#allocation5 + $0x2e0] sm:$0xff] %vm616, 0.0
      %4454 = vst.msk [vmem:[#allocation5 + $0x2e8] sm:$0xff] %vm616, 0.0
      %4455 = vst.msk [vmem:[#allocation5 + $0x2f0] sm:$0xff] %vm616, 0.0
      %4456 = vst.msk [vmem:[#allocation5 + $0x2f8] sm:$0x3] %vm619, 0.0
      %4457 = vst.msk [vmem:[#allocation5 + $0x300] sm:$0xff] %vm616, 0.0
      %4458 = vst.msk [vmem:[#allocation5 + $0x308] sm:$0xff] %vm616, 0.0
      %4459 = vst.msk [vmem:[#allocation5 + $0x310] sm:$0xff] %vm616, 0.0
      %4460 = vst.msk [vmem:[#allocation5 + $0x318] sm:$0x3] %vm619, 0.0
      %4461 = vst.msk [vmem:[#allocation5 + $0x320] sm:$0xff] %vm616, 0.0
      %4462 = vst.msk [vmem:[#allocation5 + $0x328] sm:$0xff] %vm616, 0.0
      %4463 = vst.msk [vmem:[#allocation5 + $0x330] sm:$0xff] %vm616, 0.0
      %4464 = vst.msk [vmem:[#allocation5 + $0x338] sm:$0x3] %vm619, 0.0
      %v4465 = vld [vmem:[#allocation4] sm:$0xff]
      %v4466 = vld [vmem:[#allocation4 + $0x8] sm:$0xff]
      %v4467 = vld [vmem:[#allocation4 + $0x10] sm:$0xf]
      %v4468 = vld [vmem:[#allocation4 + $0x18] sm:$0xff]
      %v4469 = vld [vmem:[#allocation4 + $0x20] sm:$0xff]
      %v4470 = vld [vmem:[#allocation4 + $0x28] sm:$0xf]
      %v4471 = vld [vmem:[#allocation4 + $0x30] sm:$0xff]
      %v4472 = vld [vmem:[#allocation4 + $0x38] sm:$0xff]
      %v4473 = vld [vmem:[#allocation4 + $0x40] sm:$0xf]
      %v4474 = vld [vmem:[#allocation4 + $0x48] sm:$0xff]
      %v4475 = vld [vmem:[#allocation4 + $0x50] sm:$0xff]
      %v4476 = vld [vmem:[#allocation4 + $0x58] sm:$0xf]
      %v4477 = vld [vmem:[#allocation4 + $0x60] sm:$0xff]
      %v4478 = vld [vmem:[#allocation4 + $0x68] sm:$0xff]
      %v4479 = vld [vmem:[#allocation4 + $0x70] sm:$0xf]
      %v4480 = vld [vmem:[#allocation4 + $0x78] sm:$0xff]
      %v4481 = vld [vmem:[#allocation4 + $0x80] sm:$0xff]
      %v4482 = vld [vmem:[#allocation4 + $0x88] sm:$0xf]
      %v4483 = vld [vmem:[#allocation4 + $0x90] sm:$0xff]
      %v4484 = vld [vmem:[#allocation4 + $0x98] sm:$0xff]
      %v4485 = vld [vmem:[#allocation4 + $0xa0] sm:$0xf]
      %v4486 = vld [vmem:[#allocation4 + $0xa8] sm:$0xff]
      %v4487 = vld [vmem:[#allocation4 + $0xb0] sm:$0xff]
      %v4488 = vld [vmem:[#allocation4 + $0xb8] sm:$0xf]
      %v4489 = vld [vmem:[#allocation4 + $0xc0] sm:$0xff]
      %v4490 = vld [vmem:[#allocation4 + $0xc8] sm:$0xff]
      %v4491 = vld [vmem:[#allocation4 + $0xd0] sm:$0xf]
      %v4492 = vld [vmem:[#allocation4 + $0xd8] sm:$0xff]
      %v4493 = vld [vmem:[#allocation4 + $0xe0] sm:$0xff]
      %v4494 = vld [vmem:[#allocation4 + $0xe8] sm:$0xf]
      %v4495 = vld [vmem:[#allocation4 + $0xf0] sm:$0xff]
      %v4496 = vld [vmem:[#allocation4 + $0xf8] sm:$0xff]
      %v4497 = vld [vmem:[#allocation4 + $0x100] sm:$0xf]
      %v4498 = vld [vmem:[#allocation4 + $0x108] sm:$0xff]
      %v4499 = vld [vmem:[#allocation4 + $0x110] sm:$0xff]
      %v4500 = vld [vmem:[#allocation4 + $0x118] sm:$0xf]
      %v4501 = vld [vmem:[#allocation4 + $0x120] sm:$0xff]
      %v4502 = vld [vmem:[#allocation4 + $0x128] sm:$0xff]
      %v4503 = vld [vmem:[#allocation4 + $0x130] sm:$0xf]
      %v4504 = vld [vmem:[#allocation4 + $0x138] sm:$0xff]
      %v4505 = vld [vmem:[#allocation4 + $0x140] sm:$0xff]
      %v4506 = vld [vmem:[#allocation4 + $0x148] sm:$0xf]
      %v4507 = vld [vmem:[#allocation4 + $0x150] sm:$0xff]
      %v4508 = vld [vmem:[#allocation4 + $0x158] sm:$0xff]
      %v4509 = vld [vmem:[#allocation4 + $0x160] sm:$0xf]
      %v4510 = vld [vmem:[#allocation4 + $0x168] sm:$0xff]
      %v4511 = vld [vmem:[#allocation4 + $0x170] sm:$0xff]
      %v4512 = vld [vmem:[#allocation4 + $0x178] sm:$0xf]
      %v4513 = vld [vmem:[#allocation4 + $0x180] sm:$0xff]
      %v4514 = vld [vmem:[#allocation4 + $0x188] sm:$0xff]
      %v4515 = vld [vmem:[#allocation4 + $0x190] sm:$0xf]
      %v4516 = vld [vmem:[#allocation4 + $0x198] sm:$0xff]
      %v4517 = vld [vmem:[#allocation4 + $0x1a0] sm:$0xff]
      %v4518 = vld [vmem:[#allocation4 + $0x1a8] sm:$0xf]
      %v4519 = vld [vmem:[#allocation4 + $0x1b0] sm:$0xff]
      %v4520 = vld [vmem:[#allocation4 + $0x1b8] sm:$0xff]
      %v4521 = vld [vmem:[#allocation4 + $0x1c0] sm:$0xf]
      %v4522 = vld [vmem:[#allocation4 + $0x1c8] sm:$0xff]
      %v4523 = vld [vmem:[#allocation4 + $0x1d0] sm:$0xff]
      %v4524 = vld [vmem:[#allocation4 + $0x1d8] sm:$0xf]
      %v4573 = vrot.slane %v4465, 2
      %v4574 = vrot.slane %v4466, 2
      %v4575 = vsel %vm897, %v4573, %v4574
      %v4576 = vrot.slane %v4467, 2
      %v4577 = vsel %vm897, %v4574, %v4576
      %v4578 = vrot.slane %v4468, 2
      %v4579 = vrot.slane %v4469, 2
      %v4580 = vsel %vm897, %v4578, %v4579
      %v4581 = vrot.slane %v4470, 2
      %v4582 = vsel %vm897, %v4579, %v4581
      %v4583 = vrot.slane %v4471, 2
      %v4584 = vrot.slane %v4472, 2
      %v4585 = vsel %vm897, %v4583, %v4584
      %v4586 = vrot.slane %v4473, 2
      %v4587 = vsel %vm897, %v4584, %v4586
      %v4588 = vrot.slane %v4474, 2
      %v4589 = vrot.slane %v4475, 2
      %v4590 = vsel %vm897, %v4588, %v4589
      %v4591 = vrot.slane %v4476, 2
      %v4592 = vsel %vm897, %v4589, %v4591
      %v4593 = vrot.slane %v4477, 2
      %v4594 = vrot.slane %v4478, 2
      %v4595 = vsel %vm897, %v4593, %v4594
      %v4596 = vrot.slane %v4479, 2
      %v4597 = vsel %vm897, %v4594, %v4596
      %v4598 = vrot.slane %v4480, 2
      %v4599 = vrot.slane %v4481, 2
      %v4600 = vsel %vm897, %v4598, %v4599
      %v4601 = vrot.slane %v4482, 2
      %v4602 = vsel %vm897, %v4599, %v4601
      %v4603 = vrot.slane %v4483, 2
      %v4604 = vrot.slane %v4484, 2
      %v4605 = vsel %vm897, %v4603, %v4604
      %v4606 = vrot.slane %v4485, 2
      %v4607 = vsel %vm897, %v4604, %v4606
      %v4608 = vrot.slane %v4486, 2
      %v4609 = vrot.slane %v4487, 2
      %v4610 = vsel %vm897, %v4608, %v4609
      %v4611 = vrot.slane %v4488, 2
      %v4612 = vsel %vm897, %v4609, %v4611
      %v4613 = vrot.slane %v4489, 2
      %v4614 = vrot.slane %v4490, 2
      %v4615 = vsel %vm897, %v4613, %v4614
      %v4616 = vrot.slane %v4491, 2
      %v4617 = vsel %vm897, %v4614, %v4616
      %v4618 = vrot.slane %v4492, 2
      %v4619 = vrot.slane %v4493, 2
      %v4620 = vsel %vm897, %v4618, %v4619
      %v4621 = vrot.slane %v4494, 2
      %v4622 = vsel %vm897, %v4619, %v4621
      %v4623 = vrot.slane %v4495, 2
      %v4624 = vrot.slane %v4496, 2
      %v4625 = vsel %vm897, %v4623, %v4624
      %v4626 = vrot.slane %v4497, 2
      %v4627 = vsel %vm897, %v4624, %v4626
      %v4628 = vrot.slane %v4498, 2
      %v4629 = vrot.slane %v4499, 2
      %v4630 = vsel %vm897, %v4628, %v4629
      %v4631 = vrot.slane %v4500, 2
      %v4632 = vsel %vm897, %v4629, %v4631
      %v4633 = vrot.slane %v4501, 2
      %v4634 = vrot.slane %v4502, 2
      %v4635 = vsel %vm897, %v4633, %v4634
      %v4636 = vrot.slane %v4503, 2
      %v4637 = vsel %vm897, %v4634, %v4636
      %v4638 = vrot.slane %v4504, 2
      %v4639 = vrot.slane %v4505, 2
      %v4640 = vsel %vm897, %v4638, %v4639
      %v4641 = vrot.slane %v4506, 2
      %v4642 = vsel %vm897, %v4639, %v4641
      %v4643 = vrot.slane %v4507, 2
      %v4644 = vrot.slane %v4508, 2
      %v4645 = vsel %vm897, %v4643, %v4644
      %v4646 = vrot.slane %v4509, 2
      %v4647 = vsel %vm897, %v4644, %v4646
      %v4648 = vrot.slane %v4510, 2
      %v4649 = vrot.slane %v4511, 2
      %v4650 = vsel %vm897, %v4648, %v4649
      %v4651 = vrot.slane %v4512, 2
      %v4652 = vsel %vm897, %v4649, %v4651
      %4653 = vrot.lane.b32.xlu0 %v4575, 8
      %v4654 = vpop.permute.xlu0 %4653
      %4655 = vrot.lane.b32.xlu0 %v4577, 8
      %v4656 = vpop.permute.xlu0 %4655
      %4657 = vrot.lane.b32.xlu0 %v4580, 8
      %v4658 = vpop.permute.xlu0 %4657
      %4659 = vrot.lane.b32.xlu0 %v4582, 8
      %v4660 = vpop.permute.xlu0 %4659
      %4661 = vrot.lane.b32.xlu0 %v4585, 8
      %v4662 = vpop.permute.xlu0 %4661
      %4663 = vrot.lane.b32.xlu0 %v4587, 8
      %v4664 = vpop.permute.xlu0 %4663
      %4665 = vrot.lane.b32.xlu0 %v4590, 8
      %v4666 = vpop.permute.xlu0 %4665
      %4667 = vrot.lane.b32.xlu0 %v4592, 8
      %v4668 = vpop.permute.xlu0 %4667
      %4669 = vrot.lane.b32.xlu0 %v4595, 8
      %v4670 = vpop.permute.xlu0 %4669
      %4671 = vrot.lane.b32.xlu0 %v4597, 8
      %v4672 = vpop.permute.xlu0 %4671
      %4673 = vrot.lane.b32.xlu0 %v4600, 8
      %v4674 = vpop.permute.xlu0 %4673
      %4675 = vrot.lane.b32.xlu0 %v4602, 8
      %v4676 = vpop.permute.xlu0 %4675
      %4677 = vrot.lane.b32.xlu0 %v4605, 8
      %v4678 = vpop.permute.xlu0 %4677
      %4679 = vrot.lane.b32.xlu0 %v4607, 8
      %v4680 = vpop.permute.xlu0 %4679
      %4681 = vrot.lane.b32.xlu0 %v4610, 8
      %v4682 = vpop.permute.xlu0 %4681
      %4683 = vrot.lane.b32.xlu0 %v4612, 8
      %v4684 = vpop.permute.xlu0 %4683
      %4685 = vrot.lane.b32.xlu0 %v4615, 8
      %v4686 = vpop.permute.xlu0 %4685
      %4687 = vrot.lane.b32.xlu0 %v4617, 8
      %v4688 = vpop.permute.xlu0 %4687
      %4689 = vrot.lane.b32.xlu0 %v4620, 8
      %v4690 = vpop.permute.xlu0 %4689
      %4691 = vrot.lane.b32.xlu0 %v4622, 8
      %v4692 = vpop.permute.xlu0 %4691
      %4693 = vrot.lane.b32.xlu0 %v4625, 8
      %v4694 = vpop.permute.xlu0 %4693
      %4695 = vrot.lane.b32.xlu0 %v4627, 8
      %v4696 = vpop.permute.xlu0 %4695
      %4697 = vrot.lane.b32.xlu0 %v4630, 8
      %v4698 = vpop.permute.xlu0 %4697
      %4699 = vrot.lane.b32.xlu0 %v4632, 8
      %v4700 = vpop.permute.xlu0 %4699
      %4701 = vrot.lane.b32.xlu0 %v4635, 8
      %v4702 = vpop.permute.xlu0 %4701
      %4703 = vrot.lane.b32.xlu0 %v4637, 8
      %v4704 = vpop.permute.xlu0 %4703
      %4705 = vrot.lane.b32.xlu0 %v4640, 8
      %v4706 = vpop.permute.xlu0 %4705
      %4707 = vrot.lane.b32.xlu0 %v4642, 8
      %v4708 = vpop.permute.xlu0 %4707
      %4709 = vrot.lane.b32.xlu0 %v4645, 8
      %v4710 = vpop.permute.xlu0 %4709
      %4711 = vrot.lane.b32.xlu0 %v4647, 8
      %v4712 = vpop.permute.xlu0 %4711
      %4713 = vrot.lane.b32.xlu0 %v4650, 8
      %v4714 = vpop.permute.xlu0 %4713
      %4715 = vrot.lane.b32.xlu0 %v4652, 8
      %v4716 = vpop.permute.xlu0 %4715
      %v4749 = vrot.slane %v4465, 4
      %v4750 = vrot.slane %v4466, 4
      %v4751 = vsel %vm2047, %v4749, %v4750
      %v4752 = vrot.slane %v4467, 4
      %v4753 = vsel %vm2047, %v4750, %v4752
      %v4754 = vrot.slane %v4468, 4
      %v4755 = vrot.slane %v4469, 4
      %v4756 = vsel %vm2047, %v4754, %v4755
      %v4757 = vrot.slane %v4470, 4
      %v4758 = vsel %vm2047, %v4755, %v4757
      %v4759 = vrot.slane %v4471, 4
      %v4760 = vrot.slane %v4472, 4
      %v4761 = vsel %vm2047, %v4759, %v4760
      %v4762 = vrot.slane %v4473, 4
      %v4763 = vsel %vm2047, %v4760, %v4762
      %v4764 = vrot.slane %v4474, 4
      %v4765 = vrot.slane %v4475, 4
      %v4766 = vsel %vm2047, %v4764, %v4765
      %v4767 = vrot.slane %v4476, 4
      %v4768 = vsel %vm2047, %v4765, %v4767
      %v4769 = vrot.slane %v4477, 4
      %v4770 = vrot.slane %v4478, 4
      %v4771 = vsel %vm2047, %v4769, %v4770
      %v4772 = vrot.slane %v4479, 4
      %v4773 = vsel %vm2047, %v4770, %v4772
      %v4774 = vrot.slane %v4480, 4
      %v4775 = vrot.slane %v4481, 4
      %v4776 = vsel %vm2047, %v4774, %v4775
      %v4777 = vrot.slane %v4482, 4
      %v4778 = vsel %vm2047, %v4775, %v4777
      %v4779 = vrot.slane %v4483, 4
      %v4780 = vrot.slane %v4484, 4
      %v4781 = vsel %vm2047, %v4779, %v4780
      %v4782 = vrot.slane %v4485, 4
      %v4783 = vsel %vm2047, %v4780, %v4782
      %v4784 = vrot.slane %v4486, 4
      %v4785 = vrot.slane %v4487, 4
      %v4786 = vsel %vm2047, %v4784, %v4785
      %v4787 = vrot.slane %v4488, 4
      %v4788 = vsel %vm2047, %v4785, %v4787
      %v4789 = vrot.slane %v4489, 4
      %v4790 = vrot.slane %v4490, 4
      %v4791 = vsel %vm2047, %v4789, %v4790
      %v4792 = vrot.slane %v4491, 4
      %v4793 = vsel %vm2047, %v4790, %v4792
      %v4794 = vrot.slane %v4492, 4
      %v4795 = vrot.slane %v4493, 4
      %v4796 = vsel %vm2047, %v4794, %v4795
      %v4797 = vrot.slane %v4494, 4
      %v4798 = vsel %vm2047, %v4795, %v4797
      %v4799 = vrot.slane %v4495, 4
      %v4800 = vrot.slane %v4496, 4
      %v4801 = vsel %vm2047, %v4799, %v4800
      %v4802 = vrot.slane %v4497, 4
      %v4803 = vsel %vm2047, %v4800, %v4802
      %v4804 = vrot.slane %v4498, 4
      %v4805 = vrot.slane %v4499, 4
      %v4806 = vsel %vm2047, %v4804, %v4805
      %v4807 = vrot.slane %v4500, 4
      %v4808 = vsel %vm2047, %v4805, %v4807
      %v4809 = vrot.slane %v4501, 4
      %v4810 = vrot.slane %v4502, 4
      %v4811 = vsel %vm2047, %v4809, %v4810
      %v4812 = vrot.slane %v4503, 4
      %v4813 = vsel %vm2047, %v4810, %v4812
      %v4814 = vrot.slane %v4504, 4
      %v4815 = vrot.slane %v4505, 4
      %v4816 = vsel %vm2047, %v4814, %v4815
      %v4817 = vrot.slane %v4506, 4
      %v4818 = vsel %vm2047, %v4815, %v4817
      %v4819 = vrot.slane %v4507, 4
      %v4820 = vrot.slane %v4508, 4
      %v4821 = vsel %vm2047, %v4819, %v4820
      %v4822 = vrot.slane %v4509, 4
      %v4823 = vsel %vm2047, %v4820, %v4822
      %v4824 = vrot.slane %v4510, 4
      %v4825 = vrot.slane %v4511, 4
      %v4826 = vsel %vm2047, %v4824, %v4825
      %v4827 = vrot.slane %v4512, 4
      %v4828 = vsel %vm2047, %v4825, %v4827
      %4829 = vrot.lane.b32.xlu0 %v4751, 16
      %v4830 = vpop.permute.xlu0 %4829
      %4831 = vrot.lane.b32.xlu0 %v4753, 16
      %v4832 = vpop.permute.xlu0 %4831
      %4833 = vrot.lane.b32.xlu0 %v4756, 16
      %v4834 = vpop.permute.xlu0 %4833
      %4835 = vrot.lane.b32.xlu0 %v4758, 16
      %v4836 = vpop.permute.xlu0 %4835
      %4837 = vrot.lane.b32.xlu0 %v4761, 16
      %v4838 = vpop.permute.xlu0 %4837
      %4839 = vrot.lane.b32.xlu0 %v4763, 16
      %v4840 = vpop.permute.xlu0 %4839
      %4841 = vrot.lane.b32.xlu0 %v4766, 16
      %v4842 = vpop.permute.xlu0 %4841
      %4843 = vrot.lane.b32.xlu0 %v4768, 16
      %v4844 = vpop.permute.xlu0 %4843
      %4845 = vrot.lane.b32.xlu0 %v4771, 16
      %v4846 = vpop.permute.xlu0 %4845
      %4847 = vrot.lane.b32.xlu0 %v4773, 16
      %v4848 = vpop.permute.xlu0 %4847
      %4849 = vrot.lane.b32.xlu0 %v4776, 16
      %v4850 = vpop.permute.xlu0 %4849
      %4851 = vrot.lane.b32.xlu0 %v4778, 16
      %v4852 = vpop.permute.xlu0 %4851
      %4853 = vrot.lane.b32.xlu0 %v4781, 16
      %v4854 = vpop.permute.xlu0 %4853
      %4855 = vrot.lane.b32.xlu0 %v4783, 16
      %v4856 = vpop.permute.xlu0 %4855
      %4857 = vrot.lane.b32.xlu0 %v4786, 16
      %v4858 = vpop.permute.xlu0 %4857
      %4859 = vrot.lane.b32.xlu0 %v4788, 16
      %v4860 = vpop.permute.xlu0 %4859
      %4861 = vrot.lane.b32.xlu0 %v4791, 16
      %v4862 = vpop.permute.xlu0 %4861
      %4863 = vrot.lane.b32.xlu0 %v4793, 16
      %v4864 = vpop.permute.xlu0 %4863
      %4865 = vrot.lane.b32.xlu0 %v4796, 16
      %v4866 = vpop.permute.xlu0 %4865
      %4867 = vrot.lane.b32.xlu0 %v4798, 16
      %v4868 = vpop.permute.xlu0 %4867
      %4869 = vrot.lane.b32.xlu0 %v4801, 16
      %v4870 = vpop.permute.xlu0 %4869
      %4871 = vrot.lane.b32.xlu0 %v4803, 16
      %v4872 = vpop.permute.xlu0 %4871
      %4873 = vrot.lane.b32.xlu0 %v4806, 16
      %v4874 = vpop.permute.xlu0 %4873
      %4875 = vrot.lane.b32.xlu0 %v4808, 16
      %v4876 = vpop.permute.xlu0 %4875
      %4877 = vrot.lane.b32.xlu0 %v4811, 16
      %v4878 = vpop.permute.xlu0 %4877
      %4879 = vrot.lane.b32.xlu0 %v4813, 16
      %v4880 = vpop.permute.xlu0 %4879
      %4881 = vrot.lane.b32.xlu0 %v4816, 16
      %v4882 = vpop.permute.xlu0 %4881
      %4883 = vrot.lane.b32.xlu0 %v4818, 16
      %v4884 = vpop.permute.xlu0 %4883
      %4885 = vrot.lane.b32.xlu0 %v4821, 16
      %v4886 = vpop.permute.xlu0 %4885
      %4887 = vrot.lane.b32.xlu0 %v4823, 16
      %v4888 = vpop.permute.xlu0 %4887
      %4889 = vrot.lane.b32.xlu0 %v4826, 16
      %v4890 = vpop.permute.xlu0 %4889
      %4891 = vrot.lane.b32.xlu0 %v4828, 16
      %v4892 = vpop.permute.xlu0 %4891
      %4929 = vrot.lane.b32.xlu0 %v4471, 24
      %v4930 = vpop.permute.xlu0 %4929
      %4931 = vrot.lane.b32.xlu0 %v4472, 24
      %v4932 = vpop.permute.xlu0 %4931
      %4933 = vrot.lane.b32.xlu0 %v4474, 24
      %v4934 = vpop.permute.xlu0 %4933
      %4935 = vrot.lane.b32.xlu0 %v4475, 24
      %v4936 = vpop.permute.xlu0 %4935
      %4937 = vrot.lane.b32.xlu0 %v4477, 24
      %v4938 = vpop.permute.xlu0 %4937
      %4939 = vrot.lane.b32.xlu0 %v4478, 24
      %v4940 = vpop.permute.xlu0 %4939
      %4941 = vrot.lane.b32.xlu0 %v4480, 24
      %v4942 = vpop.permute.xlu0 %4941
      %4943 = vrot.lane.b32.xlu0 %v4481, 24
      %v4944 = vpop.permute.xlu0 %4943
      %4945 = vrot.lane.b32.xlu0 %v4483, 24
      %v4946 = vpop.permute.xlu0 %4945
      %4947 = vrot.lane.b32.xlu0 %v4484, 24
      %v4948 = vpop.permute.xlu0 %4947
      %4949 = vrot.lane.b32.xlu0 %v4486, 24
      %v4950 = vpop.permute.xlu0 %4949
      %4951 = vrot.lane.b32.xlu0 %v4487, 24
      %v4952 = vpop.permute.xlu0 %4951
      %4953 = vrot.lane.b32.xlu0 %v4489, 24
      %v4954 = vpop.permute.xlu0 %4953
      %4955 = vrot.lane.b32.xlu0 %v4490, 24
      %v4956 = vpop.permute.xlu0 %4955
      %4957 = vrot.lane.b32.xlu0 %v4492, 24
      %v4958 = vpop.permute.xlu0 %4957
      %4959 = vrot.lane.b32.xlu0 %v4493, 24
      %v4960 = vpop.permute.xlu0 %4959
      %4961 = vrot.lane.b32.xlu0 %v4495, 24
      %v4962 = vpop.permute.xlu0 %4961
      %4963 = vrot.lane.b32.xlu0 %v4496, 24
      %v4964 = vpop.permute.xlu0 %4963
      %4965 = vrot.lane.b32.xlu0 %v4498, 24
      %v4966 = vpop.permute.xlu0 %4965
      %4967 = vrot.lane.b32.xlu0 %v4499, 24
      %v4968 = vpop.permute.xlu0 %4967
      %4969 = vrot.lane.b32.xlu0 %v4501, 24
      %v4970 = vpop.permute.xlu0 %4969
      %4971 = vrot.lane.b32.xlu0 %v4502, 24
      %v4972 = vpop.permute.xlu0 %4971
      %4973 = vrot.lane.b32.xlu0 %v4504, 24
      %v4974 = vpop.permute.xlu0 %4973
      %4975 = vrot.lane.b32.xlu0 %v4505, 24
      %v4976 = vpop.permute.xlu0 %4975
      %4977 = vrot.lane.b32.xlu0 %v4507, 24
      %v4978 = vpop.permute.xlu0 %4977
      %4979 = vrot.lane.b32.xlu0 %v4508, 24
      %v4980 = vpop.permute.xlu0 %4979
      %4981 = vrot.lane.b32.xlu0 %v4510, 24
      %v4982 = vpop.permute.xlu0 %4981
      %4983 = vrot.lane.b32.xlu0 %v4511, 24
      %v4984 = vpop.permute.xlu0 %4983
      %4985 = vrot.lane.b32.xlu0 %v4513, 24
      %v4986 = vpop.permute.xlu0 %4985
      %4987 = vrot.lane.b32.xlu0 %v4514, 24
      %v4988 = vpop.permute.xlu0 %4987
      %4989 = vrot.lane.b32.xlu0 %v4516, 24
      %v4990 = vpop.permute.xlu0 %4989
      %4991 = vrot.lane.b32.xlu0 %v4517, 24
      %v4992 = vpop.permute.xlu0 %4991
      %v5027 = vrot.slane %v4513, 2
      %v5028 = vrot.slane %v4514, 2
      %v5029 = vsel %vm897, %v5027, %v5028
      %v5030 = vrot.slane %v4515, 2
      %v5031 = vsel %vm897, %v5028, %v5030
      %v5032 = vrot.slane %v4516, 2
      %v5033 = vrot.slane %v4517, 2
      %v5034 = vsel %vm897, %v5032, %v5033
      %v5035 = vrot.slane %v4518, 2
      %v5036 = vsel %vm897, %v5033, %v5035
      %5037 = vrot.lane.b32.xlu0 %v4585, 32
      %v5038 = vpop.permute.xlu0 %5037
      %5039 = vrot.lane.b32.xlu0 %v4587, 32
      %v5040 = vpop.permute.xlu0 %5039
      %5041 = vrot.lane.b32.xlu0 %v4590, 32
      %v5042 = vpop.permute.xlu0 %5041
      %5043 = vrot.lane.b32.xlu0 %v4592, 32
      %v5044 = vpop.permute.xlu0 %5043
      %5045 = vrot.lane.b32.xlu0 %v4595, 32
      %v5046 = vpop.permute.xlu0 %5045
      %5047 = vrot.lane.b32.xlu0 %v4597, 32
      %v5048 = vpop.permute.xlu0 %5047
      %5049 = vrot.lane.b32.xlu0 %v4600, 32
      %v5050 = vpop.permute.xlu0 %5049
      %5051 = vrot.lane.b32.xlu0 %v4602, 32
      %v5052 = vpop.permute.xlu0 %5051
      %5053 = vrot.lane.b32.xlu0 %v4605, 32
      %v5054 = vpop.permute.xlu0 %5053
      %5055 = vrot.lane.b32.xlu0 %v4607, 32
      %v5056 = vpop.permute.xlu0 %5055
      %5057 = vrot.lane.b32.xlu0 %v4610, 32
      %v5058 = vpop.permute.xlu0 %5057
      %5059 = vrot.lane.b32.xlu0 %v4612, 32
      %v5060 = vpop.permute.xlu0 %5059
      %5061 = vrot.lane.b32.xlu0 %v4615, 32
      %v5062 = vpop.permute.xlu0 %5061
      %5063 = vrot.lane.b32.xlu0 %v4617, 32
      %v5064 = vpop.permute.xlu0 %5063
      %5065 = vrot.lane.b32.xlu0 %v4620, 32
      %v5066 = vpop.permute.xlu0 %5065
      %5067 = vrot.lane.b32.xlu0 %v4622, 32
      %v5068 = vpop.permute.xlu0 %5067
      %5069 = vrot.lane.b32.xlu0 %v4625, 32
      %v5070 = vpop.permute.xlu0 %5069
      %5071 = vrot.lane.b32.xlu0 %v4627, 32
      %v5072 = vpop.permute.xlu0 %5071
      %5073 = vrot.lane.b32.xlu0 %v4630, 32
      %v5074 = vpop.permute.xlu0 %5073
      %5075 = vrot.lane.b32.xlu0 %v4632, 32
      %v5076 = vpop.permute.xlu0 %5075
      %5077 = vrot.lane.b32.xlu0 %v4635, 32
      %v5078 = vpop.permute.xlu0 %5077
      %5079 = vrot.lane.b32.xlu0 %v4637, 32
      %v5080 = vpop.permute.xlu0 %5079
      %5081 = vrot.lane.b32.xlu0 %v4640, 32
      %v5082 = vpop.permute.xlu0 %5081
      %5083 = vrot.lane.b32.xlu0 %v4642, 32
      %v5084 = vpop.permute.xlu0 %5083
      %5085 = vrot.lane.b32.xlu0 %v4645, 32
      %v5086 = vpop.permute.xlu0 %5085
      %5087 = vrot.lane.b32.xlu0 %v4647, 32
      %v5088 = vpop.permute.xlu0 %5087
      %5089 = vrot.lane.b32.xlu0 %v4650, 32
      %v5090 = vpop.permute.xlu0 %5089
      %5091 = vrot.lane.b32.xlu0 %v4652, 32
      %v5092 = vpop.permute.xlu0 %5091
      %5093 = vrot.lane.b32.xlu0 %v5029, 32
      %v5094 = vpop.permute.xlu0 %5093
      %5095 = vrot.lane.b32.xlu0 %v5031, 32
      %v5096 = vpop.permute.xlu0 %5095
      %5097 = vrot.lane.b32.xlu0 %v5034, 32
      %v5098 = vpop.permute.xlu0 %5097
      %5099 = vrot.lane.b32.xlu0 %v5036, 32
      %v5100 = vpop.permute.xlu0 %5099
      %v5133 = vrot.slane %v4513, 4
      %v5134 = vrot.slane %v4514, 4
      %v5135 = vsel %vm2047, %v5133, %v5134
      %v5136 = vrot.slane %v4515, 4
      %v5137 = vsel %vm2047, %v5134, %v5136
      %v5138 = vrot.slane %v4516, 4
      %v5139 = vrot.slane %v4517, 4
      %v5140 = vsel %vm2047, %v5138, %v5139
      %v5141 = vrot.slane %v4518, 4
      %v5142 = vsel %vm2047, %v5139, %v5141
      %5143 = vrot.lane.b32.xlu0 %v4761, 40
      %v5144 = vpop.permute.xlu0 %5143
      %5145 = vrot.lane.b32.xlu0 %v4763, 40
      %v5146 = vpop.permute.xlu0 %5145
      %5147 = vrot.lane.b32.xlu0 %v4766, 40
      %v5148 = vpop.permute.xlu0 %5147
      %5149 = vrot.lane.b32.xlu0 %v4768, 40
      %v5150 = vpop.permute.xlu0 %5149
      %5151 = vrot.lane.b32.xlu0 %v4771, 40
      %v5152 = vpop.permute.xlu0 %5151
      %5153 = vrot.lane.b32.xlu0 %v4773, 40
      %v5154 = vpop.permute.xlu0 %5153
      %5155 = vrot.lane.b32.xlu0 %v4776, 40
      %v5156 = vpop.permute.xlu0 %5155
      %5157 = vrot.lane.b32.xlu0 %v4778, 40
      %v5158 = vpop.permute.xlu0 %5157
      %5159 = vrot.lane.b32.xlu0 %v4781, 40
      %v5160 = vpop.permute.xlu0 %5159
      %5161 = vrot.lane.b32.xlu0 %v4783, 40
      %v5162 = vpop.permute.xlu0 %5161
      %5163 = vrot.lane.b32.xlu0 %v4786, 40
      %v5164 = vpop.permute.xlu0 %5163
      %5165 = vrot.lane.b32.xlu0 %v4788, 40
      %v5166 = vpop.permute.xlu0 %5165
      %5167 = vrot.lane.b32.xlu0 %v4791, 40
      %v5168 = vpop.permute.xlu0 %5167
      %5169 = vrot.lane.b32.xlu0 %v4793, 40
      %v5170 = vpop.permute.xlu0 %5169
      %5171 = vrot.lane.b32.xlu0 %v4796, 40
      %v5172 = vpop.permute.xlu0 %5171
      %5173 = vrot.lane.b32.xlu0 %v4798, 40
      %v5174 = vpop.permute.xlu0 %5173
      %5175 = vrot.lane.b32.xlu0 %v4801, 40
      %v5176 = vpop.permute.xlu0 %5175
      %5177 = vrot.lane.b32.xlu0 %v4803, 40
      %v5178 = vpop.permute.xlu0 %5177
      %5179 = vrot.lane.b32.xlu0 %v4806, 40
      %v5180 = vpop.permute.xlu0 %5179
      %5181 = vrot.lane.b32.xlu0 %v4808, 40
      %v5182 = vpop.permute.xlu0 %5181
      %5183 = vrot.lane.b32.xlu0 %v4811, 40
      %v5184 = vpop.permute.xlu0 %5183
      %5185 = vrot.lane.b32.xlu0 %v4813, 40
      %v5186 = vpop.permute.xlu0 %5185
      %5187 = vrot.lane.b32.xlu0 %v4816, 40
      %v5188 = vpop.permute.xlu0 %5187
      %5189 = vrot.lane.b32.xlu0 %v4818, 40
      %v5190 = vpop.permute.xlu0 %5189
      %5191 = vrot.lane.b32.xlu0 %v4821, 40
      %v5192 = vpop.permute.xlu0 %5191
      %5193 = vrot.lane.b32.xlu0 %v4823, 40
      %v5194 = vpop.permute.xlu0 %5193
      %5195 = vrot.lane.b32.xlu0 %v4826, 40
      %v5196 = vpop.permute.xlu0 %5195
      %5197 = vrot.lane.b32.xlu0 %v4828, 40
      %v5198 = vpop.permute.xlu0 %5197
      %5199 = vrot.lane.b32.xlu0 %v5135, 40
      %v5200 = vpop.permute.xlu0 %5199
      %5201 = vrot.lane.b32.xlu0 %v5137, 40
      %v5202 = vpop.permute.xlu0 %5201
      %5203 = vrot.lane.b32.xlu0 %v5140, 40
      %v5204 = vpop.permute.xlu0 %5203
      %5205 = vrot.lane.b32.xlu0 %v5142, 40
      %v5206 = vpop.permute.xlu0 %5205
      %5243 = vrot.lane.b32.xlu0 %v4477, 48
      %v5244 = vpop.permute.xlu0 %5243
      %5245 = vrot.lane.b32.xlu0 %v4478, 48
      %v5246 = vpop.permute.xlu0 %5245
      %5247 = vrot.lane.b32.xlu0 %v4480, 48
      %v5248 = vpop.permute.xlu0 %5247
      %5249 = vrot.lane.b32.xlu0 %v4481, 48
      %v5250 = vpop.permute.xlu0 %5249
      %5251 = vrot.lane.b32.xlu0 %v4483, 48
      %v5252 = vpop.permute.xlu0 %5251
      %5253 = vrot.lane.b32.xlu0 %v4484, 48
      %v5254 = vpop.permute.xlu0 %5253
      %5255 = vrot.lane.b32.xlu0 %v4486, 48
      %v5256 = vpop.permute.xlu0 %5255
      %5257 = vrot.lane.b32.xlu0 %v4487, 48
      %v5258 = vpop.permute.xlu0 %5257
      %5259 = vrot.lane.b32.xlu0 %v4489, 48
      %v5260 = vpop.permute.xlu0 %5259
      %5261 = vrot.lane.b32.xlu0 %v4490, 48
      %v5262 = vpop.permute.xlu0 %5261
      %5263 = vrot.lane.b32.xlu0 %v4492, 48
      %v5264 = vpop.permute.xlu0 %5263
      %5265 = vrot.lane.b32.xlu0 %v4493, 48
      %v5266 = vpop.permute.xlu0 %5265
      %5267 = vrot.lane.b32.xlu0 %v4495, 48
      %v5268 = vpop.permute.xlu0 %5267
      %5269 = vrot.lane.b32.xlu0 %v4496, 48
      %v5270 = vpop.permute.xlu0 %5269
      %5271 = vrot.lane.b32.xlu0 %v4498, 48
      %v5272 = vpop.permute.xlu0 %5271
      %5273 = vrot.lane.b32.xlu0 %v4499, 48
      %v5274 = vpop.permute.xlu0 %5273
      %5275 = vrot.lane.b32.xlu0 %v4501, 48
      %v5276 = vpop.permute.xlu0 %5275
      %5277 = vrot.lane.b32.xlu0 %v4502, 48
      %v5278 = vpop.permute.xlu0 %5277
      %5279 = vrot.lane.b32.xlu0 %v4504, 48
      %v5280 = vpop.permute.xlu0 %5279
      %5281 = vrot.lane.b32.xlu0 %v4505, 48
      %v5282 = vpop.permute.xlu0 %5281
      %5283 = vrot.lane.b32.xlu0 %v4507, 48
      %v5284 = vpop.permute.xlu0 %5283
      %5285 = vrot.lane.b32.xlu0 %v4508, 48
      %v5286 = vpop.permute.xlu0 %5285
      %5287 = vrot.lane.b32.xlu0 %v4510, 48
      %v5288 = vpop.permute.xlu0 %5287
      %5289 = vrot.lane.b32.xlu0 %v4511, 48
      %v5290 = vpop.permute.xlu0 %5289
      %5291 = vrot.lane.b32.xlu0 %v4513, 48
      %v5292 = vpop.permute.xlu0 %5291
      %5293 = vrot.lane.b32.xlu0 %v4514, 48
      %v5294 = vpop.permute.xlu0 %5293
      %5295 = vrot.lane.b32.xlu0 %v4516, 48
      %v5296 = vpop.permute.xlu0 %5295
      %5297 = vrot.lane.b32.xlu0 %v4517, 48
      %v5298 = vpop.permute.xlu0 %5297
      %5299 = vrot.lane.b32.xlu0 %v4519, 48
      %v5300 = vpop.permute.xlu0 %5299
      %5301 = vrot.lane.b32.xlu0 %v4520, 48
      %v5302 = vpop.permute.xlu0 %5301
      %5303 = vrot.lane.b32.xlu0 %v4522, 48
      %v5304 = vpop.permute.xlu0 %5303
      %5305 = vrot.lane.b32.xlu0 %v4523, 48
      %v5306 = vpop.permute.xlu0 %5305
      %v5341 = vrot.slane %v4519, 2
      %v5342 = vrot.slane %v4520, 2
      %v5343 = vsel %vm897, %v5341, %v5342
      %v5344 = vrot.slane %v4521, 2
      %v5345 = vsel %vm897, %v5342, %v5344
      %v5346 = vrot.slane %v4522, 2
      %v5347 = vrot.slane %v4523, 2
      %v5348 = vsel %vm897, %v5346, %v5347
      %v5349 = vrot.slane %v4524, 2
      %v5350 = vsel %vm897, %v5347, %v5349
      %5351 = vrot.lane.b32.xlu0 %v4595, 56
      %v5352 = vpop.permute.xlu0 %5351
      %5353 = vrot.lane.b32.xlu0 %v4597, 56
      %v5354 = vpop.permute.xlu0 %5353
      %5355 = vrot.lane.b32.xlu0 %v4600, 56
      %v5356 = vpop.permute.xlu0 %5355
      %5357 = vrot.lane.b32.xlu0 %v4602, 56
      %v5358 = vpop.permute.xlu0 %5357
      %5359 = vrot.lane.b32.xlu0 %v4605, 56
      %v5360 = vpop.permute.xlu0 %5359
      %5361 = vrot.lane.b32.xlu0 %v4607, 56
      %v5362 = vpop.permute.xlu0 %5361
      %5363 = vrot.lane.b32.xlu0 %v4610, 56
      %v5364 = vpop.permute.xlu0 %5363
      %5365 = vrot.lane.b32.xlu0 %v4612, 56
      %v5366 = vpop.permute.xlu0 %5365
      %5367 = vrot.lane.b32.xlu0 %v4615, 56
      %v5368 = vpop.permute.xlu0 %5367
      %5369 = vrot.lane.b32.xlu0 %v4617, 56
      %v5370 = vpop.permute.xlu0 %5369
      %5371 = vrot.lane.b32.xlu0 %v4620, 56
      %v5372 = vpop.permute.xlu0 %5371
      %5373 = vrot.lane.b32.xlu0 %v4622, 56
      %v5374 = vpop.permute.xlu0 %5373
      %5375 = vrot.lane.b32.xlu0 %v4625, 56
      %v5376 = vpop.permute.xlu0 %5375
      %5377 = vrot.lane.b32.xlu0 %v4627, 56
      %v5378 = vpop.permute.xlu0 %5377
      %5379 = vrot.lane.b32.xlu0 %v4630, 56
      %v5380 = vpop.permute.xlu0 %5379
      %5381 = vrot.lane.b32.xlu0 %v4632, 56
      %v5382 = vpop.permute.xlu0 %5381
      %5383 = vrot.lane.b32.xlu0 %v4635, 56
      %v5384 = vpop.permute.xlu0 %5383
      %5385 = vrot.lane.b32.xlu0 %v4637, 56
      %v5386 = vpop.permute.xlu0 %5385
      %5387 = vrot.lane.b32.xlu0 %v4640, 56
      %v5388 = vpop.permute.xlu0 %5387
      %5389 = vrot.lane.b32.xlu0 %v4642, 56
      %v5390 = vpop.permute.xlu0 %5389
      %5391 = vrot.lane.b32.xlu0 %v4645, 56
      %v5392 = vpop.permute.xlu0 %5391
      %5393 = vrot.lane.b32.xlu0 %v4647, 56
      %v5394 = vpop.permute.xlu0 %5393
      %5395 = vrot.lane.b32.xlu0 %v4650, 56
      %v5396 = vpop.permute.xlu0 %5395
      %5397 = vrot.lane.b32.xlu0 %v4652, 56
      %v5398 = vpop.permute.xlu0 %5397
      %5399 = vrot.lane.b32.xlu0 %v5029, 56
      %v5400 = vpop.permute.xlu0 %5399
      %5401 = vrot.lane.b32.xlu0 %v5031, 56
      %v5402 = vpop.permute.xlu0 %5401
      %5403 = vrot.lane.b32.xlu0 %v5034, 56
      %v5404 = vpop.permute.xlu0 %5403
      %5405 = vrot.lane.b32.xlu0 %v5036, 56
      %v5406 = vpop.permute.xlu0 %5405
      %5407 = vrot.lane.b32.xlu0 %v5343, 56
      %v5408 = vpop.permute.xlu0 %5407
      %5409 = vrot.lane.b32.xlu0 %v5345, 56
      %v5410 = vpop.permute.xlu0 %5409
      %5411 = vrot.lane.b32.xlu0 %v5348, 56
      %v5412 = vpop.permute.xlu0 %5411
      %5413 = vrot.lane.b32.xlu0 %v5350, 56
      %v5414 = vpop.permute.xlu0 %5413
      %v5447 = vrot.slane %v4519, 4
      %v5448 = vrot.slane %v4520, 4
      %v5449 = vsel %vm2047, %v5447, %v5448
      %v5450 = vrot.slane %v4521, 4
      %v5451 = vsel %vm2047, %v5448, %v5450
      %v5452 = vrot.slane %v4522, 4
      %v5453 = vrot.slane %v4523, 4
      %v5454 = vsel %vm2047, %v5452, %v5453
      %v5455 = vrot.slane %v4524, 4
      %v5456 = vsel %vm2047, %v5453, %v5455
      %5457 = vrot.lane.b32.xlu0 %v4771, 64
      %v5458 = vpop.permute.xlu0 %5457
      %5459 = vrot.lane.b32.xlu0 %v4773, 64
      %v5460 = vpop.permute.xlu0 %5459
      %5461 = vrot.lane.b32.xlu0 %v4776, 64
      %v5462 = vpop.permute.xlu0 %5461
      %5463 = vrot.lane.b32.xlu0 %v4778, 64
      %v5464 = vpop.permute.xlu0 %5463
      %5465 = vrot.lane.b32.xlu0 %v4781, 64
      %v5466 = vpop.permute.xlu0 %5465
      %5467 = vrot.lane.b32.xlu0 %v4783, 64
      %v5468 = vpop.permute.xlu0 %5467
      %5469 = vrot.lane.b32.xlu0 %v4786, 64
      %v5470 = vpop.permute.xlu0 %5469
      %5471 = vrot.lane.b32.xlu0 %v4788, 64
      %v5472 = vpop.permute.xlu0 %5471
      %5473 = vrot.lane.b32.xlu0 %v4791, 64
      %v5474 = vpop.permute.xlu0 %5473
      %5475 = vrot.lane.b32.xlu0 %v4793, 64
      %v5476 = vpop.permute.xlu0 %5475
      %5477 = vrot.lane.b32.xlu0 %v4796, 64
      %v5478 = vpop.permute.xlu0 %5477
      %5479 = vrot.lane.b32.xlu0 %v4798, 64
      %v5480 = vpop.permute.xlu0 %5479
      %5481 = vrot.lane.b32.xlu0 %v4801, 64
      %v5482 = vpop.permute.xlu0 %5481
      %5483 = vrot.lane.b32.xlu0 %v4803, 64
      %v5484 = vpop.permute.xlu0 %5483
      %5485 = vrot.lane.b32.xlu0 %v4806, 64
      %v5486 = vpop.permute.xlu0 %5485
      %5487 = vrot.lane.b32.xlu0 %v4808, 64
      %v5488 = vpop.permute.xlu0 %5487
      %5489 = vrot.lane.b32.xlu0 %v4811, 64
      %v5490 = vpop.permute.xlu0 %5489
      %5491 = vrot.lane.b32.xlu0 %v4813, 64
      %v5492 = vpop.permute.xlu0 %5491
      %5493 = vrot.lane.b32.xlu0 %v4816, 64
      %v5494 = vpop.permute.xlu0 %5493
      %5495 = vrot.lane.b32.xlu0 %v4818, 64
      %v5496 = vpop.permute.xlu0 %5495
      %5497 = vrot.lane.b32.xlu0 %v4821, 64
      %v5498 = vpop.permute.xlu0 %5497
      %5499 = vrot.lane.b32.xlu0 %v4823, 64
      %v5500 = vpop.permute.xlu0 %5499
      %5501 = vrot.lane.b32.xlu0 %v4826, 64
      %v5502 = vpop.permute.xlu0 %5501
      %5503 = vrot.lane.b32.xlu0 %v4828, 64
      %v5504 = vpop.permute.xlu0 %5503
      %5505 = vrot.lane.b32.xlu0 %v5135, 64
      %v5506 = vpop.permute.xlu0 %5505
      %5507 = vrot.lane.b32.xlu0 %v5137, 64
      %v5508 = vpop.permute.xlu0 %5507
      %5509 = vrot.lane.b32.xlu0 %v5140, 64
      %v5510 = vpop.permute.xlu0 %5509
      %5511 = vrot.lane.b32.xlu0 %v5142, 64
      %v5512 = vpop.permute.xlu0 %5511
      %5513 = vrot.lane.b32.xlu0 %v5449, 64
      %v5514 = vpop.permute.xlu0 %5513
      %5515 = vrot.lane.b32.xlu0 %v5451, 64
      %v5516 = vpop.permute.xlu0 %5515
      %5517 = vrot.lane.b32.xlu0 %v5454, 64
      %v5518 = vpop.permute.xlu0 %5517
      %5519 = vrot.lane.b32.xlu0 %v5456, 64
      %v5520 = vpop.permute.xlu0 %5519
      %v5553 = vsel %vm616, %v4465, %v4654
      %v5554 = vsel %vm616, %v4466, %v4656
      %v5555 = vsel %vm616, %v4468, %v4658
      %v5556 = vsel %vm616, %v4469, %v4660
      %v5557 = vsel %vm616, %v4471, %v4662
      %v5558 = vsel %vm616, %v4472, %v4664
      %v5559 = vsel %vm616, %v4474, %v4666
      %v5560 = vsel %vm616, %v4475, %v4668
      %v5561 = vsel %vm616, %v4477, %v4670
      %v5562 = vsel %vm616, %v4478, %v4672
      %v5563 = vsel %vm616, %v4480, %v4674
      %v5564 = vsel %vm616, %v4481, %v4676
      %v5565 = vsel %vm616, %v4483, %v4678
      %v5566 = vsel %vm616, %v4484, %v4680
      %v5567 = vsel %vm616, %v4486, %v4682
      %v5568 = vsel %vm616, %v4487, %v4684
      %v5569 = vsel %vm616, %v4489, %v4686
      %v5570 = vsel %vm616, %v4490, %v4688
      %v5571 = vsel %vm616, %v4492, %v4690
      %v5572 = vsel %vm616, %v4493, %v4692
      %v5573 = vsel %vm616, %v4495, %v4694
      %v5574 = vsel %vm616, %v4496, %v4696
      %v5575 = vsel %vm616, %v4498, %v4698
      %v5576 = vsel %vm616, %v4499, %v4700
      %v5577 = vsel %vm616, %v4501, %v4702
      %v5578 = vsel %vm616, %v4502, %v4704
      %v5579 = vsel %vm616, %v4504, %v4706
      %v5580 = vsel %vm616, %v4505, %v4708
      %v5581 = vsel %vm616, %v4507, %v4710
      %v5582 = vsel %vm616, %v4508, %v4712
      %v5583 = vsel %vm616, %v4510, %v4714
      %v5584 = vsel %vm616, %v4511, %v4716
      %v5585 = vsel %vm1773, %v5553, %v4830
      %v5586 = vsel %vm1773, %v5554, %v4832
      %v5587 = vsel %vm1773, %v5555, %v4834
      %v5588 = vsel %vm1773, %v5556, %v4836
      %v5589 = vsel %vm1773, %v5557, %v4838
      %v5590 = vsel %vm1773, %v5558, %v4840
      %v5591 = vsel %vm1773, %v5559, %v4842
      %v5592 = vsel %vm1773, %v5560, %v4844
      %v5593 = vsel %vm1773, %v5561, %v4846
      %v5594 = vsel %vm1773, %v5562, %v4848
      %v5595 = vsel %vm1773, %v5563, %v4850
      %v5596 = vsel %vm1773, %v5564, %v4852
      %v5597 = vsel %vm1773, %v5565, %v4854
      %v5598 = vsel %vm1773, %v5566, %v4856
      %v5599 = vsel %vm1773, %v5567, %v4858
      %v5600 = vsel %vm1773, %v5568, %v4860
      %v5601 = vsel %vm1773, %v5569, %v4862
      %v5602 = vsel %vm1773, %v5570, %v4864
      %v5603 = vsel %vm1773, %v5571, %v4866
      %v5604 = vsel %vm1773, %v5572, %v4868
      %v5605 = vsel %vm1773, %v5573, %v4870
      %v5606 = vsel %vm1773, %v5574, %v4872
      %v5607 = vsel %vm1773, %v5575, %v4874
      %v5608 = vsel %vm1773, %v5576, %v4876
      %v5609 = vsel %vm1773, %v5577, %v4878
      %v5610 = vsel %vm1773, %v5578, %v4880
      %v5611 = vsel %vm1773, %v5579, %v4882
      %v5612 = vsel %vm1773, %v5580, %v4884
      %v5613 = vsel %vm1773, %v5581, %v4886
      %v5614 = vsel %vm1773, %v5582, %v4888
      %v5615 = vsel %vm1773, %v5583, %v4890
      %v5616 = vsel %vm1773, %v5584, %v4892
      %v5617 = vsel %vm1839, %v5585, %v4930
      %v5618 = vsel %vm1839, %v5586, %v4932
      %v5619 = vsel %vm1839, %v5587, %v4934
      %v5620 = vsel %vm1839, %v5588, %v4936
      %v5621 = vsel %vm1839, %v5589, %v4938
      %v5622 = vsel %vm1839, %v5590, %v4940
      %v5623 = vsel %vm1839, %v5591, %v4942
      %v5624 = vsel %vm1839, %v5592, %v4944
      %v5625 = vsel %vm1839, %v5593, %v4946
      %v5626 = vsel %vm1839, %v5594, %v4948
      %v5627 = vsel %vm1839, %v5595, %v4950
      %v5628 = vsel %vm1839, %v5596, %v4952
      %v5629 = vsel %vm1839, %v5597, %v4954
      %v5630 = vsel %vm1839, %v5598, %v4956
      %v5631 = vsel %vm1839, %v5599, %v4958
      %v5632 = vsel %vm1839, %v5600, %v4960
      %v5633 = vsel %vm1839, %v5601, %v4962
      %v5634 = vsel %vm1839, %v5602, %v4964
      %v5635 = vsel %vm1839, %v5603, %v4966
      %v5636 = vsel %vm1839, %v5604, %v4968
      %v5637 = vsel %vm1839, %v5605, %v4970
      %v5638 = vsel %vm1839, %v5606, %v4972
      %v5639 = vsel %vm1839, %v5607, %v4974
      %v5640 = vsel %vm1839, %v5608, %v4976
      %v5641 = vsel %vm1839, %v5609, %v4978
      %v5642 = vsel %vm1839, %v5610, %v4980
      %v5643 = vsel %vm1839, %v5611, %v4982
      %v5644 = vsel %vm1839, %v5612, %v4984
      %v5645 = vsel %vm1839, %v5613, %v4986
      %v5646 = vsel %vm1839, %v5614, %v4988
      %v5647 = vsel %vm1839, %v5615, %v4990
      %v5648 = vsel %vm1839, %v5616, %v4992
      %v5649 = vsel %vm1905, %v5617, %v5038
      %v5650 = vsel %vm1905, %v5618, %v5040
      %v5651 = vsel %vm1905, %v5619, %v5042
      %v5652 = vsel %vm1905, %v5620, %v5044
      %v5653 = vsel %vm1905, %v5621, %v5046
      %v5654 = vsel %vm1905, %v5622, %v5048
      %v5655 = vsel %vm1905, %v5623, %v5050
      %v5656 = vsel %vm1905, %v5624, %v5052
      %v5657 = vsel %vm1905, %v5625, %v5054
      %v5658 = vsel %vm1905, %v5626, %v5056
      %v5659 = vsel %vm1905, %v5627, %v5058
      %v5660 = vsel %vm1905, %v5628, %v5060
      %v5661 = vsel %vm1905, %v5629, %v5062
      %v5662 = vsel %vm1905, %v5630, %v5064
      %v5663 = vsel %vm1905, %v5631, %v5066
      %v5664 = vsel %vm1905, %v5632, %v5068
      %v5665 = vsel %vm1905, %v5633, %v5070
      %v5666 = vsel %vm1905, %v5634, %v5072
      %v5667 = vsel %vm1905, %v5635, %v5074
      %v5668 = vsel %vm1905, %v5636, %v5076
      %v5669 = vsel %vm1905, %v5637, %v5078
      %v5670 = vsel %vm1905, %v5638, %v5080
      %v5671 = vsel %vm1905, %v5639, %v5082
      %v5672 = vsel %vm1905, %v5640, %v5084
      %v5673 = vsel %vm1905, %v5641, %v5086
      %v5674 = vsel %vm1905, %v5642, %v5088
      %v5675 = vsel %vm1905, %v5643, %v5090
      %v5676 = vsel %vm1905, %v5644, %v5092
      %v5677 = vsel %vm1905, %v5645, %v5094
      %v5678 = vsel %vm1905, %v5646, %v5096
      %v5679 = vsel %vm1905, %v5647, %v5098
      %v5680 = vsel %vm1905, %v5648, %v5100
      %v5681 = vsel %vm3525, %v5649, %v5144
      %v5682 = vsel %vm3525, %v5650, %v5146
      %v5683 = vsel %vm3525, %v5651, %v5148
      %v5684 = vsel %vm3525, %v5652, %v5150
      %v5685 = vsel %vm3525, %v5653, %v5152
      %v5686 = vsel %vm3525, %v5654, %v5154
      %v5687 = vsel %vm3525, %v5655, %v5156
      %v5688 = vsel %vm3525, %v5656, %v5158
      %v5689 = vsel %vm3525, %v5657, %v5160
      %v5690 = vsel %vm3525, %v5658, %v5162
      %v5691 = vsel %vm3525, %v5659, %v5164
      %v5692 = vsel %vm3525, %v5660, %v5166
      %v5693 = vsel %vm3525, %v5661, %v5168
      %v5694 = vsel %vm3525, %v5662, %v5170
      %v5695 = vsel %vm3525, %v5663, %v5172
      %v5696 = vsel %vm3525, %v5664, %v5174
      %v5697 = vsel %vm3525, %v5665, %v5176
      %v5698 = vsel %vm3525, %v5666, %v5178
      %v5699 = vsel %vm3525, %v5667, %v5180
      %v5700 = vsel %vm3525, %v5668, %v5182
      %v5701 = vsel %vm3525, %v5669, %v5184
      %v5702 = vsel %vm3525, %v5670, %v5186
      %v5703 = vsel %vm3525, %v5671, %v5188
      %v5704 = vsel %vm3525, %v5672, %v5190
      %v5705 = vsel %vm3525, %v5673, %v5192
      %v5706 = vsel %vm3525, %v5674, %v5194
      %v5707 = vsel %vm3525, %v5675, %v5196
      %v5708 = vsel %vm3525, %v5676, %v5198
      %v5709 = vsel %vm3525, %v5677, %v5200
      %v5710 = vsel %vm3525, %v5678, %v5202
      %v5711 = vsel %vm3525, %v5679, %v5204
      %v5712 = vsel %vm3525, %v5680, %v5206
      %v5713 = vsel %vm3558, %v5681, %v5244
      %v5714 = vsel %vm3558, %v5682, %v5246
      %v5715 = vsel %vm3558, %v5683, %v5248
      %v5716 = vsel %vm3558, %v5684, %v5250
      %v5717 = vsel %vm3558, %v5685, %v5252
      %v5718 = vsel %vm3558, %v5686, %v5254
      %v5719 = vsel %vm3558, %v5687, %v5256
      %v5720 = vsel %vm3558, %v5688, %v5258
      %v5721 = vsel %vm3558, %v5689, %v5260
      %v5722 = vsel %vm3558, %v5690, %v5262
      %v5723 = vsel %vm3558, %v5691, %v5264
      %v5724 = vsel %vm3558, %v5692, %v5266
      %v5725 = vsel %vm3558, %v5693, %v5268
      %v5726 = vsel %vm3558, %v5694, %v5270
      %v5727 = vsel %vm3558, %v5695, %v5272
      %v5728 = vsel %vm3558, %v5696, %v5274
      %v5729 = vsel %vm3558, %v5697, %v5276
      %v5730 = vsel %vm3558, %v5698, %v5278
      %v5731 = vsel %vm3558, %v5699, %v5280
      %v5732 = vsel %vm3558, %v5700, %v5282
      %v5733 = vsel %vm3558, %v5701, %v5284
      %v5734 = vsel %vm3558, %v5702, %v5286
      %v5735 = vsel %vm3558, %v5703, %v5288
      %v5736 = vsel %vm3558, %v5704, %v5290
      %v5737 = vsel %vm3558, %v5705, %v5292
      %v5738 = vsel %vm3558, %v5706, %v5294
      %v5739 = vsel %vm3558, %v5707, %v5296
      %v5740 = vsel %vm3558, %v5708, %v5298
      %v5741 = vsel %vm3558, %v5709, %v5300
      %v5742 = vsel %vm3558, %v5710, %v5302
      %v5743 = vsel %vm3558, %v5711, %v5304
      %v5744 = vsel %vm3558, %v5712, %v5306
      %v5745 = vsel %vm3591, %v5713, %v5352
      %v5746 = vsel %vm3591, %v5714, %v5354
      %v5747 = vsel %vm3591, %v5715, %v5356
      %v5748 = vsel %vm3591, %v5716, %v5358
      %v5749 = vsel %vm3591, %v5717, %v5360
      %v5750 = vsel %vm3591, %v5718, %v5362
      %v5751 = vsel %vm3591, %v5719, %v5364
      %v5752 = vsel %vm3591, %v5720, %v5366
      %v5753 = vsel %vm3591, %v5721, %v5368
      %v5754 = vsel %vm3591, %v5722, %v5370
      %v5755 = vsel %vm3591, %v5723, %v5372
      %v5756 = vsel %vm3591, %v5724, %v5374
      %v5757 = vsel %vm3591, %v5725, %v5376
      %v5758 = vsel %vm3591, %v5726, %v5378
      %v5759 = vsel %vm3591, %v5727, %v5380
      %v5760 = vsel %vm3591, %v5728, %v5382
      %v5761 = vsel %vm3591, %v5729, %v5384
      %v5762 = vsel %vm3591, %v5730, %v5386
      %v5763 = vsel %vm3591, %v5731, %v5388
      %v5764 = vsel %vm3591, %v5732, %v5390
      %v5765 = vsel %vm3591, %v5733, %v5392
      %v5766 = vsel %vm3591, %v5734, %v5394
      %v5767 = vsel %vm3591, %v5735, %v5396
      %v5768 = vsel %vm3591, %v5736, %v5398
      %v5769 = vsel %vm3591, %v5737, %v5400
      %v5770 = vsel %vm3591, %v5738, %v5402
      %v5771 = vsel %vm3591, %v5739, %v5404
      %v5772 = vsel %vm3591, %v5740, %v5406
      %v5773 = vsel %vm3591, %v5741, %v5408
      %v5774 = vsel %vm3591, %v5742, %v5410
      %v5775 = vsel %vm3591, %v5743, %v5412
      %v5776 = vsel %vm3591, %v5744, %v5414
      %v5777 = vsel %vm3624, %v5745, %v5458
      %v5778 = vsel %vm3624, %v5746, %v5460
      %v5779 = vsel %vm3624, %v5747, %v5462
      %v5780 = vsel %vm3624, %v5748, %v5464
      %v5781 = vsel %vm3624, %v5749, %v5466
      %v5782 = vsel %vm3624, %v5750, %v5468
      %v5783 = vsel %vm3624, %v5751, %v5470
      %v5784 = vsel %vm3624, %v5752, %v5472
      %v5785 = vsel %vm3624, %v5753, %v5474
      %v5786 = vsel %vm3624, %v5754, %v5476
      %v5787 = vsel %vm3624, %v5755, %v5478
      %v5788 = vsel %vm3624, %v5756, %v5480
      %v5789 = vsel %vm3624, %v5757, %v5482
      %v5790 = vsel %vm3624, %v5758, %v5484
      %v5791 = vsel %vm3624, %v5759, %v5486
      %v5792 = vsel %vm3624, %v5760, %v5488
      %v5793 = vsel %vm3624, %v5761, %v5490
      %v5794 = vsel %vm3624, %v5762, %v5492
      %v5795 = vsel %vm3624, %v5763, %v5494
      %v5796 = vsel %vm3624, %v5764, %v5496
      %v5797 = vsel %vm3624, %v5765, %v5498
      %v5798 = vsel %vm3624, %v5766, %v5500
      %v5799 = vsel %vm3624, %v5767, %v5502
      %v5800 = vsel %vm3624, %v5768, %v5504
      %v5801 = vsel %vm3624, %v5769, %v5506
      %v5802 = vsel %vm3624, %v5770, %v5508
      %v5803 = vsel %vm3624, %v5771, %v5510
      %v5804 = vsel %vm3624, %v5772, %v5512
      %v5805 = vsel %vm3624, %v5773, %v5514
      %v5806 = vsel %vm3624, %v5774, %v5516
      %v5807 = vsel %vm3624, %v5775, %v5518
      %v5808 = vsel %vm3624, %v5776, %v5520
      %v5809 = vld [vmem:[%s7] sm:$0xff]
      %v5810 = vld [vmem:[%s7 + $0x8] sm:$0xff]
      %v5811 = vld [vmem:[%s7 + $0x10] sm:$0xff]
      %v5812 = vld [vmem:[%s7 + $0x18] sm:$0xff]
      %v5813 = vld [vmem:[%s7 + $0x20] sm:$0xff]
      %v5814 = vld [vmem:[%s7 + $0x28] sm:$0xff]
      %v5815 = vld [vmem:[%s7 + $0x30] sm:$0xff]
      %v5816 = vld [vmem:[%s7 + $0x38] sm:$0xff]
      %v5817 = vld [vmem:[%s7 + $0x40] sm:$0xff]
      %v5818 = vld [vmem:[%s8] sm:$0x1]
      %v5820 = vlaneseq
      %v5821 = vshrl.u32 %v5820, 7
      %v5822 = vsub.s32 0, %v5821
      %v5823 = vrot.slane %v5818, %v5822
      %v5826 = vsel %vm3673, %v5777, 0
      %v5829 = vsel %vm3673, %v5778, 0
      %v5832 = vsel %vm3673, %v5779, 0
      %v5835 = vsel %vm3673, %v5780, 0
      %v5838 = vsel %vm3673, %v5781, 0
      %v5841 = vsel %vm3673, %v5782, 0
      %v5844 = vsel %vm3673, %v5783, 0
      %v5847 = vsel %vm3673, %v5784, 0
      %v5850 = vsel %vm3673, %v5785, 0
      %v5853 = vsel %vm3673, %v5786, 0
      %v5856 = vsel %vm3673, %v5787, 0
      %v5859 = vsel %vm3673, %v5788, 0
      %v5862 = vsel %vm3673, %v5789, 0
      %v5865 = vsel %vm3673, %v5790, 0
      %v5868 = vsel %vm3673, %v5791, 0
      %v5871 = vsel %vm3673, %v5792, 0
      %v5874 = vsel %vm3673, %v5793, 0
      %v5877 = vsel %vm3673, %v5794, 0
      %v5880 = vsel %vm3673, %v5795, 0
      %v5883 = vsel %vm3673, %v5796, 0
      %v5886 = vsel %vm3673, %v5797, 0
      %v5889 = vsel %vm3673, %v5798, 0
      %v5892 = vsel %vm3673, %v5799, 0
      %v5895 = vsel %vm3673, %v5800, 0
      %v5898 = vsel %vm3673, %v5801, 0
      %v5901 = vsel %vm3673, %v5802, 0
      %v5904 = vsel %vm3673, %v5803, 0
      %v5907 = vsel %vm3673, %v5804, 0
      %v5910 = vsel %vm3673, %v5805, 0
      %v5913 = vsel %vm3673, %v5806, 0
      %v5916 = vsel %vm3673, %v5807, 0
      %v5919 = vsel %vm3673, %v5808, 0
      %5921 = vmatprep.subr.mxu0 0.0
      %5922 = vmatpush1.msra.mxu0 0.0
      %5923 = vmatprep.subr.mxu0 0.0
      %5924 = vmatpush1.msra.mxu0 0.0
      %5925 = vmatprep.subr.mxu0 0.0
      %5926 = vmatpush1.msra.mxu0 0.0
      %5927 = vmatprep.subr.mxu0 0.0
      %5928 = vmatpush1.msra.mxu0 0.0
      %5929 = vmatprep.subr.mxu0 0.0
      %5930 = vmatpush1.msra.mxu0 0.0
      %5931 = vmatprep.subr.mxu0 0.0
      %5932 = vmatpush1.msra.mxu0 0.0
      %5933 = vmatprep.subr.mxu0 0.0
      %5934 = vmatpush1.msra.mxu0 0.0
      %5935 = vmatprep.subr.mxu0 0.0
      %5936 = vmatpush1.msra.mxu0 %v5817
      %5937 = vmatprep.subr.mxu0 0.0
      %5938 = vmatpush1.msra.mxu0 %v5816
      %5939 = vmatprep.subr.mxu0 0.0
      %5940 = vmatpush1.msra.mxu0 %v5815
      %5941 = vmatprep.subr.mxu0 0.0
      %5942 = vmatpush1.msra.mxu0 %v5814
      %5943 = vmatprep.subr.mxu0 0.0
      %5944 = vmatpush1.msra.mxu0 %v5813
      %5945 = vmatprep.subr.mxu0 0.0
      %5946 = vmatpush1.msra.mxu0 %v5812
      %5947 = vmatprep.subr.mxu0 0.0
      %5948 = vmatpush1.msra.mxu0 %v5811
      %5949 = vmatprep.subr.mxu0 0.0
      %5950 = vmatpush1.msra.mxu0 %v5810
      %5951 = vmatprep.subr.mxu0 0.0
      %5952 = vmatpush1.msra.mxu0 %v5809
      %5953 = vmatprep.subr.mxu0 0.0
      %5954 = vmatpush2.msra.mxu0 0.0
      %5955 = vmatprep.subr.mxu0 0.0
      %5956 = vmatpush2.msra.mxu0 0.0
      %5957 = vmatprep.subr.mxu0 0.0
      %5958 = vmatpush2.msra.mxu0 0.0
      %5959 = vmatprep.subr.mxu0 0.0
      %5960 = vmatpush2.msra.mxu0 0.0
      %5961 = vmatprep.subr.mxu0 0.0
      %5962 = vmatpush2.msra.mxu0 0.0
      %5963 = vmatprep.subr.mxu0 0.0
      %5964 = vmatpush2.msra.mxu0 0.0
      %5965 = vmatprep.subr.mxu0 0.0
      %5966 = vmatpush2.msra.mxu0 0.0
      %5967 = vmatprep.subr.mxu0 0.0
      %5968 = vmatpush2.msra.mxu0 0.0
      %5969 = vmatprep.subr.mxu0 0.0
      %5970 = vmatpush2.msra.mxu0 0.0
      %5971 = vmatprep.subr.mxu0 0.0
      %5972 = vmatpush2.msra.mxu0 0.0
      %5973 = vmatprep.subr.mxu0 0.0
      %5974 = vmatpush2.msra.mxu0 0.0
      %5975 = vmatprep.subr.mxu0 0.0
      %5976 = vmatpush2.msra.mxu0 0.0
      %5977 = vmatprep.subr.mxu0 0.0
      %5978 = vmatpush2.msra.mxu0 0.0
      %5979 = vmatprep.subr.mxu0 0.0
      %5980 = vmatpush2.msra.mxu0 0.0
      %5981 = vmatprep.subr.mxu0 0.0
      %5982 = vmatpush2.msra.mxu0 0.0
      %5983 = vmatprep.subr.mxu0 0.0
      %5984 = vmatpush2.msra.mxu0 0.0
      %5985 = vmatprep.mubr.f32.mxu0 0.0
      %5986 = vmatmul.mubr.f32.gmra.mxu0 %v5826
      %v5987 = vpop.f32.mrf.mxu0
      %v5988 = vadd.f32 %v5823, %v5987
      %v5989 = vpop.f32.mrf.mxu0
      %5990 = vmatprep.mubr.f32.mxu0 0.0
      %5991 = vmatmul.mubr.f32.gmra.mxu0 %v5829
      %v5992 = vpop.f32.mrf.mxu0
      %v5993 = vadd.f32 %v5823, %v5992
      %v5994 = vpop.f32.mrf.mxu0
      %5995 = vmatprep.mubr.f32.mxu0 0.0
      %5996 = vmatmul.mubr.f32.gmra.mxu0 %v5832
      %v5997 = vpop.f32.mrf.mxu0
      %v5998 = vadd.f32 %v5823, %v5997
      %v5999 = vpop.f32.mrf.mxu0
      %6000 = vmatprep.mubr.f32.mxu0 0.0
      %6001 = vmatmul.mubr.f32.gmra.mxu0 %v5835
      %v6002 = vpop.f32.mrf.mxu0
      %v6003 = vadd.f32 %v5823, %v6002
      %v6004 = vpop.f32.mrf.mxu0
      %6005 = vmatprep.mubr.f32.mxu0 0.0
      %6006 = vmatmul.mubr.f32.gmra.mxu0 %v5838
      %v6007 = vpop.f32.mrf.mxu0
      %v6008 = vadd.f32 %v5823, %v6007
      %v6009 = vpop.f32.mrf.mxu0
      %6010 = vmatprep.mubr.f32.mxu0 0.0
      %6011 = vmatmul.mubr.f32.gmra.mxu0 %v5841
      %v6012 = vpop.f32.mrf.mxu0
      %v6013 = vadd.f32 %v5823, %v6012
      %v6014 = vpop.f32.mrf.mxu0
      %6015 = vmatprep.mubr.f32.mxu0 0.0
      %6016 = vmatmul.mubr.f32.gmra.mxu0 %v5844
      %v6017 = vpop.f32.mrf.mxu0
      %v6018 = vadd.f32 %v5823, %v6017
      %v6019 = vpop.f32.mrf.mxu0
      %6020 = vmatprep.mubr.f32.mxu0 0.0
      %6021 = vmatmul.mubr.f32.gmra.mxu0 %v5847
      %v6022 = vpop.f32.mrf.mxu0
      %v6023 = vadd.f32 %v5823, %v6022
      %v6024 = vpop.f32.mrf.mxu0
      %6025 = vmatprep.mubr.f32.mxu0 0.0
      %6026 = vmatmul.mubr.f32.gmra.mxu0 %v5850
      %v6027 = vpop.f32.mrf.mxu0
      %v6028 = vadd.f32 %v5823, %v6027
      %v6029 = vpop.f32.mrf.mxu0
      %6030 = vmatprep.mubr.f32.mxu0 0.0
      %6031 = vmatmul.mubr.f32.gmra.mxu0 %v5853
      %v6032 = vpop.f32.mrf.mxu0
      %v6033 = vadd.f32 %v5823, %v6032
      %v6034 = vpop.f32.mrf.mxu0
      %6035 = vmatprep.mubr.f32.mxu0 0.0
      %6036 = vmatmul.mubr.f32.gmra.mxu0 %v5856
      %v6037 = vpop.f32.mrf.mxu0
      %v6038 = vadd.f32 %v5823, %v6037
      %v6039 = vpop.f32.mrf.mxu0
      %6040 = vmatprep.mubr.f32.mxu0 0.0
      %6041 = vmatmul.mubr.f32.gmra.mxu0 %v5859
      %v6042 = vpop.f32.mrf.mxu0
      %v6043 = vadd.f32 %v5823, %v6042
      %v6044 = vpop.f32.mrf.mxu0
      %6045 = vmatprep.mubr.f32.mxu0 0.0
      %6046 = vmatmul.mubr.f32.gmra.mxu0 %v5862
      %v6047 = vpop.f32.mrf.mxu0
      %v6048 = vadd.f32 %v5823, %v6047
      %v6049 = vpop.f32.mrf.mxu0
      %6050 = vmatprep.mubr.f32.mxu0 0.0
      %6051 = vmatmul.mubr.f32.gmra.mxu0 %v5865
      %v6052 = vpop.f32.mrf.mxu0
      %v6053 = vadd.f32 %v5823, %v6052
      %v6054 = vpop.f32.mrf.mxu0
      %6055 = vmatprep.mubr.f32.mxu0 0.0
      %6056 = vmatmul.mubr.f32.gmra.mxu0 %v5868
      %v6057 = vpop.f32.mrf.mxu0
      %v6058 = vadd.f32 %v5823, %v6057
      %v6059 = vpop.f32.mrf.mxu0
      %6060 = vmatprep.mubr.f32.mxu0 0.0
      %6061 = vmatmul.mubr.f32.gmra.mxu0 %v5871
      %v6062 = vpop.f32.mrf.mxu0
      %v6063 = vadd.f32 %v5823, %v6062
      %v6064 = vpop.f32.mrf.mxu0
      %6065 = vmatprep.mubr.f32.mxu0 0.0
      %6066 = vmatmul.mubr.f32.gmra.mxu0 %v5874
      %v6067 = vpop.f32.mrf.mxu0
      %v6068 = vadd.f32 %v5823, %v6067
      %v6069 = vpop.f32.mrf.mxu0
      %6070 = vmatprep.mubr.f32.mxu0 0.0
      %6071 = vmatmul.mubr.f32.gmra.mxu0 %v5877
      %v6072 = vpop.f32.mrf.mxu0
      %v6073 = vadd.f32 %v5823, %v6072
      %v6074 = vpop.f32.mrf.mxu0
      %6075 = vmatprep.mubr.f32.mxu0 0.0
      %6076 = vmatmul.mubr.f32.gmra.mxu0 %v5880
      %v6077 = vpop.f32.mrf.mxu0
      %v6078 = vadd.f32 %v5823, %v6077
      %v6079 = vpop.f32.mrf.mxu0
      %6080 = vmatprep.mubr.f32.mxu0 0.0
      %6081 = vmatmul.mubr.f32.gmra.mxu0 %v5883
      %v6082 = vpop.f32.mrf.mxu0
      %v6083 = vadd.f32 %v5823, %v6082
      %v6084 = vpop.f32.mrf.mxu0
      %6085 = vmatprep.mubr.f32.mxu0 0.0
      %6086 = vmatmul.mubr.f32.gmra.mxu0 %v5886
      %v6087 = vpop.f32.mrf.mxu0
      %v6088 = vadd.f32 %v5823, %v6087
      %v6089 = vpop.f32.mrf.mxu0
      %6090 = vmatprep.mubr.f32.mxu0 0.0
      %6091 = vmatmul.mubr.f32.gmra.mxu0 %v5889
      %v6092 = vpop.f32.mrf.mxu0
      %v6093 = vadd.f32 %v5823, %v6092
      %v6094 = vpop.f32.mrf.mxu0
      %6095 = vmatprep.mubr.f32.mxu0 0.0
      %6096 = vmatmul.mubr.f32.gmra.mxu0 %v5892
      %v6097 = vpop.f32.mrf.mxu0
      %v6098 = vadd.f32 %v5823, %v6097
      %v6099 = vpop.f32.mrf.mxu0
      %6100 = vmatprep.mubr.f32.mxu0 0.0
      %6101 = vmatmul.mubr.f32.gmra.mxu0 %v5895
      %v6102 = vpop.f32.mrf.mxu0
      %v6103 = vadd.f32 %v5823, %v6102
      %v6104 = vpop.f32.mrf.mxu0
      %6105 = vmatprep.mubr.f32.mxu0 0.0
      %6106 = vmatmul.mubr.f32.gmra.mxu0 %v5898
      %v6107 = vpop.f32.mrf.mxu0
      %v6108 = vadd.f32 %v5823, %v6107
      %v6109 = vpop.f32.mrf.mxu0
      %6110 = vmatprep.mubr.f32.mxu0 0.0
      %6111 = vmatmul.mubr.f32.gmra.mxu0 %v5901
      %v6112 = vpop.f32.mrf.mxu0
      %v6113 = vadd.f32 %v5823, %v6112
      %v6114 = vpop.f32.mrf.mxu0
      %6115 = vmatprep.mubr.f32.mxu0 0.0
      %6116 = vmatmul.mubr.f32.gmra.mxu0 %v5904
      %v6117 = vpop.f32.mrf.mxu0
      %v6118 = vadd.f32 %v5823, %v6117
      %v6119 = vpop.f32.mrf.mxu0
      %6120 = vmatprep.mubr.f32.mxu0 0.0
      %6121 = vmatmul.mubr.f32.gmra.mxu0 %v5907
      %v6122 = vpop.f32.mrf.mxu0
      %v6123 = vadd.f32 %v5823, %v6122
      %v6124 = vpop.f32.mrf.mxu0
      %6125 = vmatprep.mubr.f32.mxu0 0.0
      %6126 = vmatmul.mubr.f32.gmra.mxu0 %v5910
      %v6127 = vpop.f32.mrf.mxu0
      %v6128 = vadd.f32 %v5823, %v6127
      %v6129 = vpop.f32.mrf.mxu0
      %6130 = vmatprep.mubr.f32.mxu0 0.0
      %6131 = vmatmul.mubr.f32.gmra.mxu0 %v5913
      %v6132 = vpop.f32.mrf.mxu0
      %v6133 = vadd.f32 %v5823, %v6132
      %v6134 = vpop.f32.mrf.mxu0
      %6135 = vmatprep.mubr.f32.mxu0 0.0
      %6136 = vmatmul.mubr.f32.gmra.mxu0 %v5916
      %v6137 = vpop.f32.mrf.mxu0
      %v6138 = vadd.f32 %v5823, %v6137
      %v6139 = vpop.f32.mrf.mxu0
      %6140 = vmatprep.mubr.f32.mxu0 0.0
      %6141 = vmatmul.mubr.f32.gmra.mxu0 %v5919
      %v6142 = vpop.f32.mrf.mxu0
      %v6143 = vadd.f32 %v5823, %v6142
      %v6144 = vpop.f32.mrf.mxu0
      %6145 = vdwg.mxu0
      %v6146 = vmax.f32 %v5988, 0.0
      %v6147 = vmax.f32 %v5993, 0.0
      %v6148 = vmax.f32 %v5998, 0.0
      %v6149 = vmax.f32 %v6003, 0.0
      %v6150 = vmax.f32 %v6008, 0.0
      %v6151 = vmax.f32 %v6013, 0.0
      %v6152 = vmax.f32 %v6018, 0.0
      %v6153 = vmax.f32 %v6023, 0.0
      %v6154 = vmax.f32 %v6028, 0.0
      %v6155 = vmax.f32 %v6033, 0.0
      %v6156 = vmax.f32 %v6038, 0.0
      %v6157 = vmax.f32 %v6043, 0.0
      %v6158 = vmax.f32 %v6048, 0.0
      %v6159 = vmax.f32 %v6053, 0.0
      %v6160 = vmax.f32 %v6058, 0.0
      %v6161 = vmax.f32 %v6063, 0.0
      %v6162 = vmax.f32 %v6068, 0.0
      %v6163 = vmax.f32 %v6073, 0.0
      %v6164 = vmax.f32 %v6078, 0.0
      %v6165 = vmax.f32 %v6083, 0.0
      %v6166 = vmax.f32 %v6088, 0.0
      %v6167 = vmax.f32 %v6093, 0.0
      %v6168 = vmax.f32 %v6098, 0.0
      %v6169 = vmax.f32 %v6103, 0.0
      %v6170 = vmax.f32 %v6108, 0.0
      %v6171 = vmax.f32 %v6113, 0.0
      %v6172 = vmax.f32 %v6118, 0.0
      %v6173 = vmax.f32 %v6123, 0.0
      %v6174 = vmax.f32 %v6128, 0.0
      %v6175 = vmax.f32 %v6133, 0.0
      %v6176 = vmax.f32 %v6138, 0.0
      %v6177 = vmax.f32 %v6143, 0.0
      %s6178 = scalar_lea.vmem [#allocation5], 160
      %6179 = vst.msk [vmem:[%s6178 + $0x5] sm:$0xff] %vm616, %v6146
      %6180 = vst.msk [vmem:[%s6178 + $0xd] sm:$0xff] %vm616, %v6147
      %6181 = vst.msk [vmem:[%s6178 + $0x25] sm:$0xff] %vm616, %v6148
      %6182 = vst.msk [vmem:[%s6178 + $0x2d] sm:$0xff] %vm616, %v6149
      %6183 = vst.msk [vmem:[%s6178 + $0x45] sm:$0xff] %vm616, %v6150
      %6184 = vst.msk [vmem:[%s6178 + $0x4d] sm:$0xff] %vm616, %v6151
      %6185 = vst.msk [vmem:[%s6178 + $0x65] sm:$0xff] %vm616, %v6152
      %6186 = vst.msk [vmem:[%s6178 + $0x6d] sm:$0xff] %vm616, %v6153
      %6187 = vst.msk [vmem:[%s6178 + $0x85] sm:$0xff] %vm616, %v6154
      %6188 = vst.msk [vmem:[%s6178 + $0x8d] sm:$0xff] %vm616, %v6155
      %6189 = vst.msk [vmem:[%s6178 + $0xa5] sm:$0xff] %vm616, %v6156
      %6190 = vst.msk [vmem:[%s6178 + $0xad] sm:$0xff] %vm616, %v6157
      %6191 = vst.msk [vmem:[%s6178 + $0xc5] sm:$0xff] %vm616, %v6158
      %6192 = vst.msk [vmem:[%s6178 + $0xcd] sm:$0xff] %vm616, %v6159
      %6193 = vst.msk [vmem:[%s6178 + $0xe5] sm:$0xff] %vm616, %v6160
      %6194 = vst.msk [vmem:[%s6178 + $0xed] sm:$0xff] %vm616, %v6161
      %6195 = vst.msk [vmem:[%s6178 + $0x105] sm:$0xff] %vm616, %v6162
      %6196 = vst.msk [vmem:[%s6178 + $0x10d] sm:$0xff] %vm616, %v6163
      %6197 = vst.msk [vmem:[%s6178 + $0x125] sm:$0xff] %vm616, %v6164
      %6198 = vst.msk [vmem:[%s6178 + $0x12d] sm:$0xff] %vm616, %v6165
      %6199 = vst.msk [vmem:[%s6178 + $0x145] sm:$0xff] %vm616, %v6166
      %6200 = vst.msk [vmem:[%s6178 + $0x14d] sm:$0xff] %vm616, %v6167
      %6201 = vst.msk [vmem:[%s6178 + $0x165] sm:$0xff] %vm616, %v6168
      %6202 = vst.msk [vmem:[%s6178 + $0x16d] sm:$0xff] %vm616, %v6169
      %6203 = vst.msk [vmem:[%s6178 + $0x185] sm:$0xff] %vm616, %v6170
      %6204 = vst.msk [vmem:[%s6178 + $0x18d] sm:$0xff] %vm616, %v6171
      %6205 = vst.msk [vmem:[%s6178 + $0x1a5] sm:$0xff] %vm616, %v6172
      %6206 = vst.msk [vmem:[%s6178 + $0x1ad] sm:$0xff] %vm616, %v6173
      %6207 = vst.msk [vmem:[%s6178 + $0x1c5] sm:$0xff] %vm616, %v6174
      %6208 = vst.msk [vmem:[%s6178 + $0x1cd] sm:$0xff] %vm616, %v6175
      %6209 = vst.msk [vmem:[%s6178 + $0x1e5] sm:$0xff] %vm616, %v6176
      %6210 = vst.msk [vmem:[%s6178 + $0x1ed] sm:$0xff] %vm616, %v6177
      %v6211 = vld [vmem:[#allocation5] sm:$0xff]
      %v6212 = vld [vmem:[#allocation5 + $0x8] sm:$0xff]
      %v6213 = vld [vmem:[#allocation5 + $0x10] sm:$0xff]
      %v6214 = vld [vmem:[#allocation5 + $0x18] sm:$0x3]
      %v6215 = vld [vmem:[#allocation5 + $0x20] sm:$0xff]
      %v6216 = vld [vmem:[#allocation5 + $0x28] sm:$0xff]
      %v6217 = vld [vmem:[#allocation5 + $0x30] sm:$0xff]
      %v6218 = vld [vmem:[#allocation5 + $0x38] sm:$0x3]
      %v6219 = vld [vmem:[#allocation5 + $0x40] sm:$0xff]
      %v6220 = vld [vmem:[#allocation5 + $0x48] sm:$0xff]
      %v6221 = vld [vmem:[#allocation5 + $0x50] sm:$0xff]
      %v6222 = vld [vmem:[#allocation5 + $0x58] sm:$0x3]
      %v6223 = vld [vmem:[#allocation5 + $0x60] sm:$0xff]
      %v6224 = vld [vmem:[#allocation5 + $0x68] sm:$0xff]
      %v6225 = vld [vmem:[#allocation5 + $0x70] sm:$0xff]
      %v6226 = vld [vmem:[#allocation5 + $0x78] sm:$0x3]
      %v6227 = vld [vmem:[#allocation5 + $0x80] sm:$0xff]
      %v6228 = vld [vmem:[#allocation5 + $0x88] sm:$0xff]
      %v6229 = vld [vmem:[#allocation5 + $0x90] sm:$0xff]
      %v6230 = vld [vmem:[#allocation5 + $0x98] sm:$0x3]
      %v6231 = vld [vmem:[#allocation5 + $0xa0] sm:$0xff]
      %v6232 = vld [vmem:[#allocation5 + $0xa8] sm:$0xff]
      %v6233 = vld [vmem:[#allocation5 + $0xb0] sm:$0xff]
      %v6234 = vld [vmem:[#allocation5 + $0xb8] sm:$0x3]
      %v6235 = vld [vmem:[#allocation5 + $0xc0] sm:$0xff]
      %v6236 = vld [vmem:[#allocation5 + $0xc8] sm:$0xff]
      %v6237 = vld [vmem:[#allocation5 + $0xd0] sm:$0xff]
      %v6238 = vld [vmem:[#allocation5 + $0xd8] sm:$0x3]
      %v6239 = vld [vmem:[#allocation5 + $0xe0] sm:$0xff]
      %v6240 = vld [vmem:[#allocation5 + $0xe8] sm:$0xff]
      %v6241 = vld [vmem:[#allocation5 + $0xf0] sm:$0xff]
      %v6242 = vld [vmem:[#allocation5 + $0xf8] sm:$0x3]
      %v6243 = vld [vmem:[#allocation5 + $0x100] sm:$0xff]
      %v6244 = vld [vmem:[#allocation5 + $0x108] sm:$0xff]
      %v6245 = vld [vmem:[#allocation5 + $0x110] sm:$0xff]
      %v6246 = vld [vmem:[#allocation5 + $0x118] sm:$0x3]
      %v6247 = vld [vmem:[#allocation5 + $0x120] sm:$0xff]
      %v6248 = vld [vmem:[#allocation5 + $0x128] sm:$0xff]
      %v6249 = vld [vmem:[#allocation5 + $0x130] sm:$0xff]
      %v6250 = vld [vmem:[#allocation5 + $0x138] sm:$0x3]
      %v6251 = vld [vmem:[#allocation5 + $0x140] sm:$0xff]
      %v6252 = vld [vmem:[#allocation5 + $0x148] sm:$0xff]
      %v6253 = vld [vmem:[#allocation5 + $0x150] sm:$0xff]
      %v6254 = vld [vmem:[#allocation5 + $0x158] sm:$0x3]
      %v6255 = vld [vmem:[#allocation5 + $0x160] sm:$0xff]
      %v6256 = vld [vmem:[#allocation5 + $0x168] sm:$0xff]
      %v6257 = vld [vmem:[#allocation5 + $0x170] sm:$0xff]
      %v6258 = vld [vmem:[#allocation5 + $0x178] sm:$0x3]
      %v6259 = vld [vmem:[#allocation5 + $0x180] sm:$0xff]
      %v6260 = vld [vmem:[#allocation5 + $0x188] sm:$0xff]
      %v6261 = vld [vmem:[#allocation5 + $0x190] sm:$0xff]
      %v6262 = vld [vmem:[#allocation5 + $0x198] sm:$0x3]
      %v6263 = vld [vmem:[#allocation5 + $0x1a0] sm:$0xff]
      %v6264 = vld [vmem:[#allocation5 + $0x1a8] sm:$0xff]
      %v6265 = vld [vmem:[#allocation5 + $0x1b0] sm:$0xff]
      %v6266 = vld [vmem:[#allocation5 + $0x1b8] sm:$0x3]
      %v6267 = vld [vmem:[#allocation5 + $0x1c0] sm:$0xff]
      %v6268 = vld [vmem:[#allocation5 + $0x1c8] sm:$0xff]
      %v6269 = vld [vmem:[#allocation5 + $0x1d0] sm:$0xff]
      %v6270 = vld [vmem:[#allocation5 + $0x1d8] sm:$0x3]
      %v6271 = vld [vmem:[#allocation5 + $0x1e0] sm:$0xff]
      %v6272 = vld [vmem:[#allocation5 + $0x1e8] sm:$0xff]
      %v6273 = vld [vmem:[#allocation5 + $0x1f0] sm:$0xff]
      %v6274 = vld [vmem:[#allocation5 + $0x1f8] sm:$0x3]
      %v6275 = vld [vmem:[#allocation5 + $0x200] sm:$0xff]
      %v6276 = vld [vmem:[#allocation5 + $0x208] sm:$0xff]
      %v6277 = vld [vmem:[#allocation5 + $0x210] sm:$0xff]
      %v6278 = vld [vmem:[#allocation5 + $0x218] sm:$0x3]
      %v6279 = vld [vmem:[#allocation5 + $0x220] sm:$0xff]
      %v6280 = vld [vmem:[#allocation5 + $0x228] sm:$0xff]
      %v6281 = vld [vmem:[#allocation5 + $0x230] sm:$0xff]
      %v6282 = vld [vmem:[#allocation5 + $0x238] sm:$0x3]
      %v6283 = vld [vmem:[#allocation5 + $0x240] sm:$0xff]
      %v6284 = vld [vmem:[#allocation5 + $0x248] sm:$0xff]
      %v6285 = vld [vmem:[#allocation5 + $0x250] sm:$0xff]
      %v6286 = vld [vmem:[#allocation5 + $0x258] sm:$0x3]
      %v6287 = vld [vmem:[#allocation5 + $0x260] sm:$0xff]
      %v6288 = vld [vmem:[#allocation5 + $0x268] sm:$0xff]
      %v6289 = vld [vmem:[#allocation5 + $0x270] sm:$0xff]
      %v6290 = vld [vmem:[#allocation5 + $0x278] sm:$0x3]
      %v6291 = vld [vmem:[#allocation5 + $0x280] sm:$0xff]
      %v6292 = vld [vmem:[#allocation5 + $0x288] sm:$0xff]
      %v6293 = vld [vmem:[#allocation5 + $0x290] sm:$0xff]
      %v6294 = vld [vmem:[#allocation5 + $0x298] sm:$0x3]
      %v6295 = vld [vmem:[#allocation5 + $0x2a0] sm:$0xff]
      %v6296 = vld [vmem:[#allocation5 + $0x2a8] sm:$0xff]
      %v6297 = vld [vmem:[#allocation5 + $0x2b0] sm:$0xff]
      %v6298 = vld [vmem:[#allocation5 + $0x2b8] sm:$0x3]
      %v6299 = vld [vmem:[#allocation5 + $0x2c0] sm:$0xff]
      %v6300 = vld [vmem:[#allocation5 + $0x2c8] sm:$0xff]
      %v6301 = vld [vmem:[#allocation5 + $0x2d0] sm:$0xff]
      %v6302 = vld [vmem:[#allocation5 + $0x2d8] sm:$0x3]
      %v6303 = vld [vmem:[#allocation5 + $0x2e0] sm:$0xff]
      %v6304 = vld [vmem:[#allocation5 + $0x2e8] sm:$0xff]
      %v6305 = vld [vmem:[#allocation5 + $0x2f0] sm:$0xff]
      %v6306 = vld [vmem:[#allocation5 + $0x2f8] sm:$0x3]
      %v6307 = vld [vmem:[#allocation5 + $0x300] sm:$0xff]
      %v6308 = vld [vmem:[#allocation5 + $0x308] sm:$0xff]
      %v6309 = vld [vmem:[#allocation5 + $0x310] sm:$0xff]
      %v6310 = vld [vmem:[#allocation5 + $0x318] sm:$0x3]
      %v6311 = vld [vmem:[#allocation5 + $0x320] sm:$0xff]
      %v6312 = vld [vmem:[#allocation5 + $0x328] sm:$0xff]
      %v6313 = vld [vmem:[#allocation5 + $0x330] sm:$0xff]
      %v6314 = vld [vmem:[#allocation5 + $0x338] sm:$0x3]
      %vm6363 = vcmask 1042432
      %v6364 = vrot.slane %v6211, 5
      %v6365 = vrot.slane %v6212, 5
      %v6366 = vsel %vm6363, %v6364, %v6365
      %v6367 = vrot.slane %v6213, 5
      %v6368 = vsel %vm6363, %v6365, %v6367
      %v6369 = vrot.slane %v6215, 5
      %v6370 = vrot.slane %v6216, 5
      %v6371 = vsel %vm6363, %v6369, %v6370
      %v6372 = vrot.slane %v6217, 5
      %v6373 = vsel %vm6363, %v6370, %v6372
      %v6374 = vrot.slane %v6219, 5
      %v6375 = vrot.slane %v6220, 5
      %v6376 = vsel %vm6363, %v6374, %v6375
      %v6377 = vrot.slane %v6221, 5
      %v6378 = vsel %vm6363, %v6375, %v6377
      %v6379 = vrot.slane %v6223, 5
      %v6380 = vrot.slane %v6224, 5
      %v6381 = vsel %vm6363, %v6379, %v6380
      %v6382 = vrot.slane %v6225, 5
      %v6383 = vsel %vm6363, %v6380, %v6382
      %v6384 = vrot.slane %v6227, 5
      %v6385 = vrot.slane %v6228, 5
      %v6386 = vsel %vm6363, %v6384, %v6385
      %v6387 = vrot.slane %v6229, 5
      %v6388 = vsel %vm6363, %v6385, %v6387
      %v6389 = vrot.slane %v6231, 5
      %v6390 = vrot.slane %v6232, 5
      %v6391 = vsel %vm6363, %v6389, %v6390
      %v6392 = vrot.slane %v6233, 5
      %v6393 = vsel %vm6363, %v6390, %v6392
      %v6394 = vrot.slane %v6235, 5
      %v6395 = vrot.slane %v6236, 5
      %v6396 = vsel %vm6363, %v6394, %v6395
      %v6397 = vrot.slane %v6237, 5
      %v6398 = vsel %vm6363, %v6395, %v6397
      %v6399 = vrot.slane %v6239, 5
      %v6400 = vrot.slane %v6240, 5
      %v6401 = vsel %vm6363, %v6399, %v6400
      %v6402 = vrot.slane %v6241, 5
      %v6403 = vsel %vm6363, %v6400, %v6402
      %v6404 = vrot.slane %v6243, 5
      %v6405 = vrot.slane %v6244, 5
      %v6406 = vsel %vm6363, %v6404, %v6405
      %v6407 = vrot.slane %v6245, 5
      %v6408 = vsel %vm6363, %v6405, %v6407
      %v6409 = vrot.slane %v6247, 5
      %v6410 = vrot.slane %v6248, 5
      %v6411 = vsel %vm6363, %v6409, %v6410
      %v6412 = vrot.slane %v6249, 5
      %v6413 = vsel %vm6363, %v6410, %v6412
      %v6414 = vrot.slane %v6251, 5
      %v6415 = vrot.slane %v6252, 5
      %v6416 = vsel %vm6363, %v6414, %v6415
      %v6417 = vrot.slane %v6253, 5
      %v6418 = vsel %vm6363, %v6415, %v6417
      %v6419 = vrot.slane %v6255, 5
      %v6420 = vrot.slane %v6256, 5
      %v6421 = vsel %vm6363, %v6419, %v6420
      %v6422 = vrot.slane %v6257, 5
      %v6423 = vsel %vm6363, %v6420, %v6422
      %v6424 = vrot.slane %v6259, 5
      %v6425 = vrot.slane %v6260, 5
      %v6426 = vsel %vm6363, %v6424, %v6425
      %v6427 = vrot.slane %v6261, 5
      %v6428 = vsel %vm6363, %v6425, %v6427
      %v6429 = vrot.slane %v6263, 5
      %v6430 = vrot.slane %v6264, 5
      %v6431 = vsel %vm6363, %v6429, %v6430
      %v6432 = vrot.slane %v6265, 5
      %v6433 = vsel %vm6363, %v6430, %v6432
      %v6434 = vrot.slane %v6267, 5
      %v6435 = vrot.slane %v6268, 5
      %v6436 = vsel %vm6363, %v6434, %v6435
      %v6437 = vrot.slane %v6269, 5
      %v6438 = vsel %vm6363, %v6435, %v6437
      %v6439 = vrot.slane %v6271, 5
      %v6440 = vrot.slane %v6272, 5
      %v6441 = vsel %vm6363, %v6439, %v6440
      %v6442 = vrot.slane %v6273, 5
      %v6443 = vsel %vm6363, %v6440, %v6442
      %6444 = vrot.lane.b32.xlu0 %v6366, 8
      %v6445 = vpop.permute.xlu0 %6444
      %6446 = vrot.lane.b32.xlu0 %v6368, 8
      %v6447 = vpop.permute.xlu0 %6446
      %6448 = vrot.lane.b32.xlu0 %v6371, 8
      %v6449 = vpop.permute.xlu0 %6448
      %6450 = vrot.lane.b32.xlu0 %v6373, 8
      %v6451 = vpop.permute.xlu0 %6450
      %6452 = vrot.lane.b32.xlu0 %v6376, 8
      %v6453 = vpop.permute.xlu0 %6452
      %6454 = vrot.lane.b32.xlu0 %v6378, 8
      %v6455 = vpop.permute.xlu0 %6454
      %6456 = vrot.lane.b32.xlu0 %v6381, 8
      %v6457 = vpop.permute.xlu0 %6456
      %6458 = vrot.lane.b32.xlu0 %v6383, 8
      %v6459 = vpop.permute.xlu0 %6458
      %6460 = vrot.lane.b32.xlu0 %v6386, 8
      %v6461 = vpop.permute.xlu0 %6460
      %6462 = vrot.lane.b32.xlu0 %v6388, 8
      %v6463 = vpop.permute.xlu0 %6462
      %6464 = vrot.lane.b32.xlu0 %v6391, 8
      %v6465 = vpop.permute.xlu0 %6464
      %6466 = vrot.lane.b32.xlu0 %v6393, 8
      %v6467 = vpop.permute.xlu0 %6466
      %6468 = vrot.lane.b32.xlu0 %v6396, 8
      %v6469 = vpop.permute.xlu0 %6468
      %6470 = vrot.lane.b32.xlu0 %v6398, 8
      %v6471 = vpop.permute.xlu0 %6470
      %6472 = vrot.lane.b32.xlu0 %v6401, 8
      %v6473 = vpop.permute.xlu0 %6472
      %6474 = vrot.lane.b32.xlu0 %v6403, 8
      %v6475 = vpop.permute.xlu0 %6474
      %6476 = vrot.lane.b32.xlu0 %v6406, 8
      %v6477 = vpop.permute.xlu0 %6476
      %6478 = vrot.lane.b32.xlu0 %v6408, 8
      %v6479 = vpop.permute.xlu0 %6478
      %6480 = vrot.lane.b32.xlu0 %v6411, 8
      %v6481 = vpop.permute.xlu0 %6480
      %6482 = vrot.lane.b32.xlu0 %v6413, 8
      %v6483 = vpop.permute.xlu0 %6482
      %6484 = vrot.lane.b32.xlu0 %v6416, 8
      %v6485 = vpop.permute.xlu0 %6484
      %6486 = vrot.lane.b32.xlu0 %v6418, 8
      %v6487 = vpop.permute.xlu0 %6486
      %6488 = vrot.lane.b32.xlu0 %v6421, 8
      %v6489 = vpop.permute.xlu0 %6488
      %6490 = vrot.lane.b32.xlu0 %v6423, 8
      %v6491 = vpop.permute.xlu0 %6490
      %6492 = vrot.lane.b32.xlu0 %v6426, 8
      %v6493 = vpop.permute.xlu0 %6492
      %6494 = vrot.lane.b32.xlu0 %v6428, 8
      %v6495 = vpop.permute.xlu0 %6494
      %6496 = vrot.lane.b32.xlu0 %v6431, 8
      %v6497 = vpop.permute.xlu0 %6496
      %6498 = vrot.lane.b32.xlu0 %v6433, 8
      %v6499 = vpop.permute.xlu0 %6498
      %6500 = vrot.lane.b32.xlu0 %v6436, 8
      %v6501 = vpop.permute.xlu0 %6500
      %6502 = vrot.lane.b32.xlu0 %v6438, 8
      %v6503 = vpop.permute.xlu0 %6502
      %6504 = vrot.lane.b32.xlu0 %v6441, 8
      %v6505 = vpop.permute.xlu0 %6504
      %6506 = vrot.lane.b32.xlu0 %v6443, 8
      %v6507 = vpop.permute.xlu0 %6506
      %v6556 = vrot.slane %v6212, 2
      %v6557 = vrot.slane %v6213, 2
      %v6558 = vsel %vm897, %v6556, %v6557
      %v6559 = vrot.slane %v6214, 2
      %v6560 = vsel %vm897, %v6557, %v6559
      %v6561 = vrot.slane %v6216, 2
      %v6562 = vrot.slane %v6217, 2
      %v6563 = vsel %vm897, %v6561, %v6562
      %v6564 = vrot.slane %v6218, 2
      %v6565 = vsel %vm897, %v6562, %v6564
      %v6566 = vrot.slane %v6220, 2
      %v6567 = vrot.slane %v6221, 2
      %v6568 = vsel %vm897, %v6566, %v6567
      %v6569 = vrot.slane %v6222, 2
      %v6570 = vsel %vm897, %v6567, %v6569
      %v6571 = vrot.slane %v6224, 2
      %v6572 = vrot.slane %v6225, 2
      %v6573 = vsel %vm897, %v6571, %v6572
      %v6574 = vrot.slane %v6226, 2
      %v6575 = vsel %vm897, %v6572, %v6574
      %v6576 = vrot.slane %v6228, 2
      %v6577 = vrot.slane %v6229, 2
      %v6578 = vsel %vm897, %v6576, %v6577
      %v6579 = vrot.slane %v6230, 2
      %v6580 = vsel %vm897, %v6577, %v6579
      %v6581 = vrot.slane %v6232, 2
      %v6582 = vrot.slane %v6233, 2
      %v6583 = vsel %vm897, %v6581, %v6582
      %v6584 = vrot.slane %v6234, 2
      %v6585 = vsel %vm897, %v6582, %v6584
      %v6586 = vrot.slane %v6236, 2
      %v6587 = vrot.slane %v6237, 2
      %v6588 = vsel %vm897, %v6586, %v6587
      %v6589 = vrot.slane %v6238, 2
      %v6590 = vsel %vm897, %v6587, %v6589
      %v6591 = vrot.slane %v6240, 2
      %v6592 = vrot.slane %v6241, 2
      %v6593 = vsel %vm897, %v6591, %v6592
      %v6594 = vrot.slane %v6242, 2
      %v6595 = vsel %vm897, %v6592, %v6594
      %v6596 = vrot.slane %v6244, 2
      %v6597 = vrot.slane %v6245, 2
      %v6598 = vsel %vm897, %v6596, %v6597
      %v6599 = vrot.slane %v6246, 2
      %v6600 = vsel %vm897, %v6597, %v6599
      %v6601 = vrot.slane %v6248, 2
      %v6602 = vrot.slane %v6249, 2
      %v6603 = vsel %vm897, %v6601, %v6602
      %v6604 = vrot.slane %v6250, 2
      %v6605 = vsel %vm897, %v6602, %v6604
      %v6606 = vrot.slane %v6252, 2
      %v6607 = vrot.slane %v6253, 2
      %v6608 = vsel %vm897, %v6606, %v6607
      %v6609 = vrot.slane %v6254, 2
      %v6610 = vsel %vm897, %v6607, %v6609
      %v6611 = vrot.slane %v6256, 2
      %v6612 = vrot.slane %v6257, 2
      %v6613 = vsel %vm897, %v6611, %v6612
      %v6614 = vrot.slane %v6258, 2
      %v6615 = vsel %vm897, %v6612, %v6614
      %v6616 = vrot.slane %v6260, 2
      %v6617 = vrot.slane %v6261, 2
      %v6618 = vsel %vm897, %v6616, %v6617
      %v6619 = vrot.slane %v6262, 2
      %v6620 = vsel %vm897, %v6617, %v6619
      %v6621 = vrot.slane %v6264, 2
      %v6622 = vrot.slane %v6265, 2
      %v6623 = vsel %vm897, %v6621, %v6622
      %v6624 = vrot.slane %v6266, 2
      %v6625 = vsel %vm897, %v6622, %v6624
      %v6626 = vrot.slane %v6268, 2
      %v6627 = vrot.slane %v6269, 2
      %v6628 = vsel %vm897, %v6626, %v6627
      %v6629 = vrot.slane %v6270, 2
      %v6630 = vsel %vm897, %v6627, %v6629
      %v6631 = vrot.slane %v6272, 2
      %v6632 = vrot.slane %v6273, 2
      %v6633 = vsel %vm897, %v6631, %v6632
      %v6634 = vrot.slane %v6274, 2
      %v6635 = vsel %vm897, %v6632, %v6634
      %6636 = vrot.lane.b32.xlu0 %v6558, 16
      %v6637 = vpop.permute.xlu0 %6636
      %6638 = vrot.lane.b32.xlu0 %v6560, 16
      %v6639 = vpop.permute.xlu0 %6638
      %6640 = vrot.lane.b32.xlu0 %v6563, 16
      %v6641 = vpop.permute.xlu0 %6640
      %6642 = vrot.lane.b32.xlu0 %v6565, 16
      %v6643 = vpop.permute.xlu0 %6642
      %6644 = vrot.lane.b32.xlu0 %v6568, 16
      %v6645 = vpop.permute.xlu0 %6644
      %6646 = vrot.lane.b32.xlu0 %v6570, 16
      %v6647 = vpop.permute.xlu0 %6646
      %6648 = vrot.lane.b32.xlu0 %v6573, 16
      %v6649 = vpop.permute.xlu0 %6648
      %6650 = vrot.lane.b32.xlu0 %v6575, 16
      %v6651 = vpop.permute.xlu0 %6650
      %6652 = vrot.lane.b32.xlu0 %v6578, 16
      %v6653 = vpop.permute.xlu0 %6652
      %6654 = vrot.lane.b32.xlu0 %v6580, 16
      %v6655 = vpop.permute.xlu0 %6654
      %6656 = vrot.lane.b32.xlu0 %v6583, 16
      %v6657 = vpop.permute.xlu0 %6656
      %6658 = vrot.lane.b32.xlu0 %v6585, 16
      %v6659 = vpop.permute.xlu0 %6658
      %6660 = vrot.lane.b32.xlu0 %v6588, 16
      %v6661 = vpop.permute.xlu0 %6660
      %6662 = vrot.lane.b32.xlu0 %v6590, 16
      %v6663 = vpop.permute.xlu0 %6662
      %6664 = vrot.lane.b32.xlu0 %v6593, 16
      %v6665 = vpop.permute.xlu0 %6664
      %6666 = vrot.lane.b32.xlu0 %v6595, 16
      %v6667 = vpop.permute.xlu0 %6666
      %6668 = vrot.lane.b32.xlu0 %v6598, 16
      %v6669 = vpop.permute.xlu0 %6668
      %6670 = vrot.lane.b32.xlu0 %v6600, 16
      %v6671 = vpop.permute.xlu0 %6670
      %6672 = vrot.lane.b32.xlu0 %v6603, 16
      %v6673 = vpop.permute.xlu0 %6672
      %6674 = vrot.lane.b32.xlu0 %v6605, 16
      %v6675 = vpop.permute.xlu0 %6674
      %6676 = vrot.lane.b32.xlu0 %v6608, 16
      %v6677 = vpop.permute.xlu0 %6676
      %6678 = vrot.lane.b32.xlu0 %v6610, 16
      %v6679 = vpop.permute.xlu0 %6678
      %6680 = vrot.lane.b32.xlu0 %v6613, 16
      %v6681 = vpop.permute.xlu0 %6680
      %6682 = vrot.lane.b32.xlu0 %v6615, 16
      %v6683 = vpop.permute.xlu0 %6682
      %6684 = vrot.lane.b32.xlu0 %v6618, 16
      %v6685 = vpop.permute.xlu0 %6684
      %6686 = vrot.lane.b32.xlu0 %v6620, 16
      %v6687 = vpop.permute.xlu0 %6686
      %6688 = vrot.lane.b32.xlu0 %v6623, 16
      %v6689 = vpop.permute.xlu0 %6688
      %6690 = vrot.lane.b32.xlu0 %v6625, 16
      %v6691 = vpop.permute.xlu0 %6690
      %6692 = vrot.lane.b32.xlu0 %v6628, 16
      %v6693 = vpop.permute.xlu0 %6692
      %6694 = vrot.lane.b32.xlu0 %v6630, 16
      %v6695 = vpop.permute.xlu0 %6694
      %6696 = vrot.lane.b32.xlu0 %v6633, 16
      %v6697 = vpop.permute.xlu0 %6696
      %6698 = vrot.lane.b32.xlu0 %v6635, 16
      %v6699 = vpop.permute.xlu0 %6698
      %6742 = vrot.lane.b32.xlu0 %v6231, 24
      %v6743 = vpop.permute.xlu0 %6742
      %6744 = vrot.lane.b32.xlu0 %v6232, 24
      %v6745 = vpop.permute.xlu0 %6744
      %6746 = vrot.lane.b32.xlu0 %v6235, 24
      %v6747 = vpop.permute.xlu0 %6746
      %6748 = vrot.lane.b32.xlu0 %v6236, 24
      %v6749 = vpop.permute.xlu0 %6748
      %6750 = vrot.lane.b32.xlu0 %v6239, 24
      %v6751 = vpop.permute.xlu0 %6750
      %6752 = vrot.lane.b32.xlu0 %v6240, 24
      %v6753 = vpop.permute.xlu0 %6752
      %6754 = vrot.lane.b32.xlu0 %v6243, 24
      %v6755 = vpop.permute.xlu0 %6754
      %6756 = vrot.lane.b32.xlu0 %v6244, 24
      %v6757 = vpop.permute.xlu0 %6756
      %6758 = vrot.lane.b32.xlu0 %v6247, 24
      %v6759 = vpop.permute.xlu0 %6758
      %6760 = vrot.lane.b32.xlu0 %v6248, 24
      %v6761 = vpop.permute.xlu0 %6760
      %6762 = vrot.lane.b32.xlu0 %v6251, 24
      %v6763 = vpop.permute.xlu0 %6762
      %6764 = vrot.lane.b32.xlu0 %v6252, 24
      %v6765 = vpop.permute.xlu0 %6764
      %6766 = vrot.lane.b32.xlu0 %v6255, 24
      %v6767 = vpop.permute.xlu0 %6766
      %6768 = vrot.lane.b32.xlu0 %v6256, 24
      %v6769 = vpop.permute.xlu0 %6768
      %6770 = vrot.lane.b32.xlu0 %v6259, 24
      %v6771 = vpop.permute.xlu0 %6770
      %6772 = vrot.lane.b32.xlu0 %v6260, 24
      %v6773 = vpop.permute.xlu0 %6772
      %6774 = vrot.lane.b32.xlu0 %v6263, 24
      %v6775 = vpop.permute.xlu0 %6774
      %6776 = vrot.lane.b32.xlu0 %v6264, 24
      %v6777 = vpop.permute.xlu0 %6776
      %6778 = vrot.lane.b32.xlu0 %v6267, 24
      %v6779 = vpop.permute.xlu0 %6778
      %6780 = vrot.lane.b32.xlu0 %v6268, 24
      %v6781 = vpop.permute.xlu0 %6780
      %6782 = vrot.lane.b32.xlu0 %v6271, 24
      %v6783 = vpop.permute.xlu0 %6782
      %6784 = vrot.lane.b32.xlu0 %v6272, 24
      %v6785 = vpop.permute.xlu0 %6784
      %6786 = vrot.lane.b32.xlu0 %v6275, 24
      %v6787 = vpop.permute.xlu0 %6786
      %6788 = vrot.lane.b32.xlu0 %v6276, 24
      %v6789 = vpop.permute.xlu0 %6788
      %6790 = vrot.lane.b32.xlu0 %v6279, 24
      %v6791 = vpop.permute.xlu0 %6790
      %6792 = vrot.lane.b32.xlu0 %v6280, 24
      %v6793 = vpop.permute.xlu0 %6792
      %6794 = vrot.lane.b32.xlu0 %v6283, 24
      %v6795 = vpop.permute.xlu0 %6794
      %6796 = vrot.lane.b32.xlu0 %v6284, 24
      %v6797 = vpop.permute.xlu0 %6796
      %6798 = vrot.lane.b32.xlu0 %v6287, 24
      %v6799 = vpop.permute.xlu0 %6798
      %6800 = vrot.lane.b32.xlu0 %v6288, 24
      %v6801 = vpop.permute.xlu0 %6800
      %6802 = vrot.lane.b32.xlu0 %v6291, 24
      %v6803 = vpop.permute.xlu0 %6802
      %6804 = vrot.lane.b32.xlu0 %v6292, 24
      %v6805 = vpop.permute.xlu0 %6804
      %v6843 = vrot.slane %v6275, 5
      %v6844 = vrot.slane %v6276, 5
      %v6845 = vsel %vm6363, %v6843, %v6844
      %v6846 = vrot.slane %v6277, 5
      %v6847 = vsel %vm6363, %v6844, %v6846
      %v6848 = vrot.slane %v6279, 5
      %v6849 = vrot.slane %v6280, 5
      %v6850 = vsel %vm6363, %v6848, %v6849
      %v6851 = vrot.slane %v6281, 5
      %v6852 = vsel %vm6363, %v6849, %v6851
      %v6853 = vrot.slane %v6283, 5
      %v6854 = vrot.slane %v6284, 5
      %v6855 = vsel %vm6363, %v6853, %v6854
      %v6856 = vrot.slane %v6285, 5
      %v6857 = vsel %vm6363, %v6854, %v6856
      %v6858 = vrot.slane %v6287, 5
      %v6859 = vrot.slane %v6288, 5
      %v6860 = vsel %vm6363, %v6858, %v6859
      %v6861 = vrot.slane %v6289, 5
      %v6862 = vsel %vm6363, %v6859, %v6861
      %v6863 = vrot.slane %v6291, 5
      %v6864 = vrot.slane %v6292, 5
      %v6865 = vsel %vm6363, %v6863, %v6864
      %v6866 = vrot.slane %v6293, 5
      %v6867 = vsel %vm6363, %v6864, %v6866
      %6868 = vrot.lane.b32.xlu0 %v6391, 32
      %v6869 = vpop.permute.xlu0 %6868
      %6870 = vrot.lane.b32.xlu0 %v6393, 32
      %v6871 = vpop.permute.xlu0 %6870
      %6872 = vrot.lane.b32.xlu0 %v6396, 32
      %v6873 = vpop.permute.xlu0 %6872
      %6874 = vrot.lane.b32.xlu0 %v6398, 32
      %v6875 = vpop.permute.xlu0 %6874
      %6876 = vrot.lane.b32.xlu0 %v6401, 32
      %v6877 = vpop.permute.xlu0 %6876
      %6878 = vrot.lane.b32.xlu0 %v6403, 32
      %v6879 = vpop.permute.xlu0 %6878
      %6880 = vrot.lane.b32.xlu0 %v6406, 32
      %v6881 = vpop.permute.xlu0 %6880
      %6882 = vrot.lane.b32.xlu0 %v6408, 32
      %v6883 = vpop.permute.xlu0 %6882
      %6884 = vrot.lane.b32.xlu0 %v6411, 32
      %v6885 = vpop.permute.xlu0 %6884
      %6886 = vrot.lane.b32.xlu0 %v6413, 32
      %v6887 = vpop.permute.xlu0 %6886
      %6888 = vrot.lane.b32.xlu0 %v6416, 32
      %v6889 = vpop.permute.xlu0 %6888
      %6890 = vrot.lane.b32.xlu0 %v6418, 32
      %v6891 = vpop.permute.xlu0 %6890
      %6892 = vrot.lane.b32.xlu0 %v6421, 32
      %v6893 = vpop.permute.xlu0 %6892
      %6894 = vrot.lane.b32.xlu0 %v6423, 32
      %v6895 = vpop.permute.xlu0 %6894
      %6896 = vrot.lane.b32.xlu0 %v6426, 32
      %v6897 = vpop.permute.xlu0 %6896
      %6898 = vrot.lane.b32.xlu0 %v6428, 32
      %v6899 = vpop.permute.xlu0 %6898
      %6900 = vrot.lane.b32.xlu0 %v6431, 32
      %v6901 = vpop.permute.xlu0 %6900
      %6902 = vrot.lane.b32.xlu0 %v6433, 32
      %v6903 = vpop.permute.xlu0 %6902
      %6904 = vrot.lane.b32.xlu0 %v6436, 32
      %v6905 = vpop.permute.xlu0 %6904
      %6906 = vrot.lane.b32.xlu0 %v6438, 32
      %v6907 = vpop.permute.xlu0 %6906
      %6908 = vrot.lane.b32.xlu0 %v6441, 32
      %v6909 = vpop.permute.xlu0 %6908
      %6910 = vrot.lane.b32.xlu0 %v6443, 32
      %v6911 = vpop.permute.xlu0 %6910
      %6912 = vrot.lane.b32.xlu0 %v6845, 32
      %v6913 = vpop.permute.xlu0 %6912
      %6914 = vrot.lane.b32.xlu0 %v6847, 32
      %v6915 = vpop.permute.xlu0 %6914
      %6916 = vrot.lane.b32.xlu0 %v6850, 32
      %v6917 = vpop.permute.xlu0 %6916
      %6918 = vrot.lane.b32.xlu0 %v6852, 32
      %v6919 = vpop.permute.xlu0 %6918
      %6920 = vrot.lane.b32.xlu0 %v6855, 32
      %v6921 = vpop.permute.xlu0 %6920
      %6922 = vrot.lane.b32.xlu0 %v6857, 32
      %v6923 = vpop.permute.xlu0 %6922
      %6924 = vrot.lane.b32.xlu0 %v6860, 32
      %v6925 = vpop.permute.xlu0 %6924
      %6926 = vrot.lane.b32.xlu0 %v6862, 32
      %v6927 = vpop.permute.xlu0 %6926
      %6928 = vrot.lane.b32.xlu0 %v6865, 32
      %v6929 = vpop.permute.xlu0 %6928
      %6930 = vrot.lane.b32.xlu0 %v6867, 32
      %v6931 = vpop.permute.xlu0 %6930
      %v6969 = vrot.slane %v6276, 2
      %v6970 = vrot.slane %v6277, 2
      %v6971 = vsel %vm897, %v6969, %v6970
      %v6972 = vrot.slane %v6278, 2
      %v6973 = vsel %vm897, %v6970, %v6972
      %v6974 = vrot.slane %v6280, 2
      %v6975 = vrot.slane %v6281, 2
      %v6976 = vsel %vm897, %v6974, %v6975
      %v6977 = vrot.slane %v6282, 2
      %v6978 = vsel %vm897, %v6975, %v6977
      %v6979 = vrot.slane %v6284, 2
      %v6980 = vrot.slane %v6285, 2
      %v6981 = vsel %vm897, %v6979, %v6980
      %v6982 = vrot.slane %v6286, 2
      %v6983 = vsel %vm897, %v6980, %v6982
      %v6984 = vrot.slane %v6288, 2
      %v6985 = vrot.slane %v6289, 2
      %v6986 = vsel %vm897, %v6984, %v6985
      %v6987 = vrot.slane %v6290, 2
      %v6988 = vsel %vm897, %v6985, %v6987
      %v6989 = vrot.slane %v6292, 2
      %v6990 = vrot.slane %v6293, 2
      %v6991 = vsel %vm897, %v6989, %v6990
      %v6992 = vrot.slane %v6294, 2
      %v6993 = vsel %vm897, %v6990, %v6992
      %6994 = vrot.lane.b32.xlu0 %v6583, 40
      %v6995 = vpop.permute.xlu0 %6994
      %6996 = vrot.lane.b32.xlu0 %v6585, 40
      %v6997 = vpop.permute.xlu0 %6996
      %6998 = vrot.lane.b32.xlu0 %v6588, 40
      %v6999 = vpop.permute.xlu0 %6998
      %7000 = vrot.lane.b32.xlu0 %v6590, 40
      %v7001 = vpop.permute.xlu0 %7000
      %7002 = vrot.lane.b32.xlu0 %v6593, 40
      %v7003 = vpop.permute.xlu0 %7002
      %7004 = vrot.lane.b32.xlu0 %v6595, 40
      %v7005 = vpop.permute.xlu0 %7004
      %7006 = vrot.lane.b32.xlu0 %v6598, 40
      %v7007 = vpop.permute.xlu0 %7006
      %7008 = vrot.lane.b32.xlu0 %v6600, 40
      %v7009 = vpop.permute.xlu0 %7008
      %7010 = vrot.lane.b32.xlu0 %v6603, 40
      %v7011 = vpop.permute.xlu0 %7010
      %7012 = vrot.lane.b32.xlu0 %v6605, 40
      %v7013 = vpop.permute.xlu0 %7012
      %7014 = vrot.lane.b32.xlu0 %v6608, 40
      %v7015 = vpop.permute.xlu0 %7014
      %7016 = vrot.lane.b32.xlu0 %v6610, 40
      %v7017 = vpop.permute.xlu0 %7016
      %7018 = vrot.lane.b32.xlu0 %v6613, 40
      %v7019 = vpop.permute.xlu0 %7018
      %7020 = vrot.lane.b32.xlu0 %v6615, 40
      %v7021 = vpop.permute.xlu0 %7020
      %7022 = vrot.lane.b32.xlu0 %v6618, 40
      %v7023 = vpop.permute.xlu0 %7022
      %7024 = vrot.lane.b32.xlu0 %v6620, 40
      %v7025 = vpop.permute.xlu0 %7024
      %7026 = vrot.lane.b32.xlu0 %v6623, 40
      %v7027 = vpop.permute.xlu0 %7026
      %7028 = vrot.lane.b32.xlu0 %v6625, 40
      %v7029 = vpop.permute.xlu0 %7028
      %7030 = vrot.lane.b32.xlu0 %v6628, 40
      %v7031 = vpop.permute.xlu0 %7030
      %7032 = vrot.lane.b32.xlu0 %v6630, 40
      %v7033 = vpop.permute.xlu0 %7032
      %7034 = vrot.lane.b32.xlu0 %v6633, 40
      %v7035 = vpop.permute.xlu0 %7034
      %7036 = vrot.lane.b32.xlu0 %v6635, 40
      %v7037 = vpop.permute.xlu0 %7036
      %7038 = vrot.lane.b32.xlu0 %v6971, 40
      %v7039 = vpop.permute.xlu0 %7038
      %7040 = vrot.lane.b32.xlu0 %v6973, 40
      %v7041 = vpop.permute.xlu0 %7040
      %7042 = vrot.lane.b32.xlu0 %v6976, 40
      %v7043 = vpop.permute.xlu0 %7042
      %7044 = vrot.lane.b32.xlu0 %v6978, 40
      %v7045 = vpop.permute.xlu0 %7044
      %7046 = vrot.lane.b32.xlu0 %v6981, 40
      %v7047 = vpop.permute.xlu0 %7046
      %7048 = vrot.lane.b32.xlu0 %v6983, 40
      %v7049 = vpop.permute.xlu0 %7048
      %7050 = vrot.lane.b32.xlu0 %v6986, 40
      %v7051 = vpop.permute.xlu0 %7050
      %7052 = vrot.lane.b32.xlu0 %v6988, 40
      %v7053 = vpop.permute.xlu0 %7052
      %7054 = vrot.lane.b32.xlu0 %v6991, 40
      %v7055 = vpop.permute.xlu0 %7054
      %7056 = vrot.lane.b32.xlu0 %v6993, 40
      %v7057 = vpop.permute.xlu0 %7056
      %7100 = vrot.lane.b32.xlu0 %v6251, 48
      %v7101 = vpop.permute.xlu0 %7100
      %7102 = vrot.lane.b32.xlu0 %v6252, 48
      %v7103 = vpop.permute.xlu0 %7102
      %7104 = vrot.lane.b32.xlu0 %v6255, 48
      %v7105 = vpop.permute.xlu0 %7104
      %7106 = vrot.lane.b32.xlu0 %v6256, 48
      %v7107 = vpop.permute.xlu0 %7106
      %7108 = vrot.lane.b32.xlu0 %v6259, 48
      %v7109 = vpop.permute.xlu0 %7108
      %7110 = vrot.lane.b32.xlu0 %v6260, 48
      %v7111 = vpop.permute.xlu0 %7110
      %7112 = vrot.lane.b32.xlu0 %v6263, 48
      %v7113 = vpop.permute.xlu0 %7112
      %7114 = vrot.lane.b32.xlu0 %v6264, 48
      %v7115 = vpop.permute.xlu0 %7114
      %7116 = vrot.lane.b32.xlu0 %v6267, 48
      %v7117 = vpop.permute.xlu0 %7116
      %7118 = vrot.lane.b32.xlu0 %v6268, 48
      %v7119 = vpop.permute.xlu0 %7118
      %7120 = vrot.lane.b32.xlu0 %v6271, 48
      %v7121 = vpop.permute.xlu0 %7120
      %7122 = vrot.lane.b32.xlu0 %v6272, 48
      %v7123 = vpop.permute.xlu0 %7122
      %7124 = vrot.lane.b32.xlu0 %v6275, 48
      %v7125 = vpop.permute.xlu0 %7124
      %7126 = vrot.lane.b32.xlu0 %v6276, 48
      %v7127 = vpop.permute.xlu0 %7126
      %7128 = vrot.lane.b32.xlu0 %v6279, 48
      %v7129 = vpop.permute.xlu0 %7128
      %7130 = vrot.lane.b32.xlu0 %v6280, 48
      %v7131 = vpop.permute.xlu0 %7130
      %7132 = vrot.lane.b32.xlu0 %v6283, 48
      %v7133 = vpop.permute.xlu0 %7132
      %7134 = vrot.lane.b32.xlu0 %v6284, 48
      %v7135 = vpop.permute.xlu0 %7134
      %7136 = vrot.lane.b32.xlu0 %v6287, 48
      %v7137 = vpop.permute.xlu0 %7136
      %7138 = vrot.lane.b32.xlu0 %v6288, 48
      %v7139 = vpop.permute.xlu0 %7138
      %7140 = vrot.lane.b32.xlu0 %v6291, 48
      %v7141 = vpop.permute.xlu0 %7140
      %7142 = vrot.lane.b32.xlu0 %v6292, 48
      %v7143 = vpop.permute.xlu0 %7142
      %7144 = vrot.lane.b32.xlu0 %v6295, 48
      %v7145 = vpop.permute.xlu0 %7144
      %7146 = vrot.lane.b32.xlu0 %v6296, 48
      %v7147 = vpop.permute.xlu0 %7146
      %7148 = vrot.lane.b32.xlu0 %v6299, 48
      %v7149 = vpop.permute.xlu0 %7148
      %7150 = vrot.lane.b32.xlu0 %v6300, 48
      %v7151 = vpop.permute.xlu0 %7150
      %7152 = vrot.lane.b32.xlu0 %v6303, 48
      %v7153 = vpop.permute.xlu0 %7152
      %7154 = vrot.lane.b32.xlu0 %v6304, 48
      %v7155 = vpop.permute.xlu0 %7154
      %7156 = vrot.lane.b32.xlu0 %v6307, 48
      %v7157 = vpop.permute.xlu0 %7156
      %7158 = vrot.lane.b32.xlu0 %v6308, 48
      %v7159 = vpop.permute.xlu0 %7158
      %7160 = vrot.lane.b32.xlu0 %v6311, 48
      %v7161 = vpop.permute.xlu0 %7160
      %7162 = vrot.lane.b32.xlu0 %v6312, 48
      %v7163 = vpop.permute.xlu0 %7162
      %v7201 = vrot.slane %v6295, 5
      %v7202 = vrot.slane %v6296, 5
      %v7203 = vsel %vm6363, %v7201, %v7202
      %v7204 = vrot.slane %v6297, 5
      %v7205 = vsel %vm6363, %v7202, %v7204
      %v7206 = vrot.slane %v6299, 5
      %v7207 = vrot.slane %v6300, 5
      %v7208 = vsel %vm6363, %v7206, %v7207
      %v7209 = vrot.slane %v6301, 5
      %v7210 = vsel %vm6363, %v7207, %v7209
      %v7211 = vrot.slane %v6303, 5
      %v7212 = vrot.slane %v6304, 5
      %v7213 = vsel %vm6363, %v7211, %v7212
      %v7214 = vrot.slane %v6305, 5
      %v7215 = vsel %vm6363, %v7212, %v7214
      %v7216 = vrot.slane %v6307, 5
      %v7217 = vrot.slane %v6308, 5
      %v7218 = vsel %vm6363, %v7216, %v7217
      %v7219 = vrot.slane %v6309, 5
      %v7220 = vsel %vm6363, %v7217, %v7219
      %v7221 = vrot.slane %v6311, 5
      %v7222 = vrot.slane %v6312, 5
      %v7223 = vsel %vm6363, %v7221, %v7222
      %v7224 = vrot.slane %v6313, 5
      %v7225 = vsel %vm6363, %v7222, %v7224
      %7226 = vrot.lane.b32.xlu0 %v6416, 56
      %v7227 = vpop.permute.xlu0 %7226
      %7228 = vrot.lane.b32.xlu0 %v6418, 56
      %v7229 = vpop.permute.xlu0 %7228
      %7230 = vrot.lane.b32.xlu0 %v6421, 56
      %v7231 = vpop.permute.xlu0 %7230
      %7232 = vrot.lane.b32.xlu0 %v6423, 56
      %v7233 = vpop.permute.xlu0 %7232
      %7234 = vrot.lane.b32.xlu0 %v6426, 56
      %v7235 = vpop.permute.xlu0 %7234
      %7236 = vrot.lane.b32.xlu0 %v6428, 56
      %v7237 = vpop.permute.xlu0 %7236
      %7238 = vrot.lane.b32.xlu0 %v6431, 56
      %v7239 = vpop.permute.xlu0 %7238
      %7240 = vrot.lane.b32.xlu0 %v6433, 56
      %v7241 = vpop.permute.xlu0 %7240
      %7242 = vrot.lane.b32.xlu0 %v6436, 56
      %v7243 = vpop.permute.xlu0 %7242
      %7244 = vrot.lane.b32.xlu0 %v6438, 56
      %v7245 = vpop.permute.xlu0 %7244
      %7246 = vrot.lane.b32.xlu0 %v6441, 56
      %v7247 = vpop.permute.xlu0 %7246
      %7248 = vrot.lane.b32.xlu0 %v6443, 56
      %v7249 = vpop.permute.xlu0 %7248
      %7250 = vrot.lane.b32.xlu0 %v6845, 56
      %v7251 = vpop.permute.xlu0 %7250
      %7252 = vrot.lane.b32.xlu0 %v6847, 56
      %v7253 = vpop.permute.xlu0 %7252
      %7254 = vrot.lane.b32.xlu0 %v6850, 56
      %v7255 = vpop.permute.xlu0 %7254
      %7256 = vrot.lane.b32.xlu0 %v6852, 56
      %v7257 = vpop.permute.xlu0 %7256
      %7258 = vrot.lane.b32.xlu0 %v6855, 56
      %v7259 = vpop.permute.xlu0 %7258
      %7260 = vrot.lane.b32.xlu0 %v6857, 56
      %v7261 = vpop.permute.xlu0 %7260
      %7262 = vrot.lane.b32.xlu0 %v6860, 56
      %v7263 = vpop.permute.xlu0 %7262
      %7264 = vrot.lane.b32.xlu0 %v6862, 56
      %v7265 = vpop.permute.xlu0 %7264
      %7266 = vrot.lane.b32.xlu0 %v6865, 56
      %v7267 = vpop.permute.xlu0 %7266
      %7268 = vrot.lane.b32.xlu0 %v6867, 56
      %v7269 = vpop.permute.xlu0 %7268
      %7270 = vrot.lane.b32.xlu0 %v7203, 56
      %v7271 = vpop.permute.xlu0 %7270
      %7272 = vrot.lane.b32.xlu0 %v7205, 56
      %v7273 = vpop.permute.xlu0 %7272
      %7274 = vrot.lane.b32.xlu0 %v7208, 56
      %v7275 = vpop.permute.xlu0 %7274
      %7276 = vrot.lane.b32.xlu0 %v7210, 56
      %v7277 = vpop.permute.xlu0 %7276
      %7278 = vrot.lane.b32.xlu0 %v7213, 56
      %v7279 = vpop.permute.xlu0 %7278
      %7280 = vrot.lane.b32.xlu0 %v7215, 56
      %v7281 = vpop.permute.xlu0 %7280
      %7282 = vrot.lane.b32.xlu0 %v7218, 56
      %v7283 = vpop.permute.xlu0 %7282
      %7284 = vrot.lane.b32.xlu0 %v7220, 56
      %v7285 = vpop.permute.xlu0 %7284
      %7286 = vrot.lane.b32.xlu0 %v7223, 56
      %v7287 = vpop.permute.xlu0 %7286
      %7288 = vrot.lane.b32.xlu0 %v7225, 56
      %v7289 = vpop.permute.xlu0 %7288
      %v7327 = vrot.slane %v6296, 2
      %v7328 = vrot.slane %v6297, 2
      %v7329 = vsel %vm897, %v7327, %v7328
      %v7330 = vrot.slane %v6298, 2
      %v7331 = vsel %vm897, %v7328, %v7330
      %v7332 = vrot.slane %v6300, 2
      %v7333 = vrot.slane %v6301, 2
      %v7334 = vsel %vm897, %v7332, %v7333
      %v7335 = vrot.slane %v6302, 2
      %v7336 = vsel %vm897, %v7333, %v7335
      %v7337 = vrot.slane %v6304, 2
      %v7338 = vrot.slane %v6305, 2
      %v7339 = vsel %vm897, %v7337, %v7338
      %v7340 = vrot.slane %v6306, 2
      %v7341 = vsel %vm897, %v7338, %v7340
      %v7342 = vrot.slane %v6308, 2
      %v7343 = vrot.slane %v6309, 2
      %v7344 = vsel %vm897, %v7342, %v7343
      %v7345 = vrot.slane %v6310, 2
      %v7346 = vsel %vm897, %v7343, %v7345
      %v7347 = vrot.slane %v6312, 2
      %v7348 = vrot.slane %v6313, 2
      %v7349 = vsel %vm897, %v7347, %v7348
      %v7350 = vrot.slane %v6314, 2
      %v7351 = vsel %vm897, %v7348, %v7350
      %7352 = vrot.lane.b32.xlu0 %v6608, 64
      %v7353 = vpop.permute.xlu0 %7352
      %7354 = vrot.lane.b32.xlu0 %v6610, 64
      %v7355 = vpop.permute.xlu0 %7354
      %7356 = vrot.lane.b32.xlu0 %v6613, 64
      %v7357 = vpop.permute.xlu0 %7356
      %7358 = vrot.lane.b32.xlu0 %v6615, 64
      %v7359 = vpop.permute.xlu0 %7358
      %7360 = vrot.lane.b32.xlu0 %v6618, 64
      %v7361 = vpop.permute.xlu0 %7360
      %7362 = vrot.lane.b32.xlu0 %v6620, 64
      %v7363 = vpop.permute.xlu0 %7362
      %7364 = vrot.lane.b32.xlu0 %v6623, 64
      %v7365 = vpop.permute.xlu0 %7364
      %7366 = vrot.lane.b32.xlu0 %v6625, 64
      %v7367 = vpop.permute.xlu0 %7366
      %7368 = vrot.lane.b32.xlu0 %v6628, 64
      %v7369 = vpop.permute.xlu0 %7368
      %7370 = vrot.lane.b32.xlu0 %v6630, 64
      %v7371 = vpop.permute.xlu0 %7370
      %7372 = vrot.lane.b32.xlu0 %v6633, 64
      %v7373 = vpop.permute.xlu0 %7372
      %7374 = vrot.lane.b32.xlu0 %v6635, 64
      %v7375 = vpop.permute.xlu0 %7374
      %7376 = vrot.lane.b32.xlu0 %v6971, 64
      %v7377 = vpop.permute.xlu0 %7376
      %7378 = vrot.lane.b32.xlu0 %v6973, 64
      %v7379 = vpop.permute.xlu0 %7378
      %7380 = vrot.lane.b32.xlu0 %v6976, 64
      %v7381 = vpop.permute.xlu0 %7380
      %7382 = vrot.lane.b32.xlu0 %v6978, 64
      %v7383 = vpop.permute.xlu0 %7382
      %7384 = vrot.lane.b32.xlu0 %v6981, 64
      %v7385 = vpop.permute.xlu0 %7384
      %7386 = vrot.lane.b32.xlu0 %v6983, 64
      %v7387 = vpop.permute.xlu0 %7386
      %7388 = vrot.lane.b32.xlu0 %v6986, 64
      %v7389 = vpop.permute.xlu0 %7388
      %7390 = vrot.lane.b32.xlu0 %v6988, 64
      %v7391 = vpop.permute.xlu0 %7390
      %7392 = vrot.lane.b32.xlu0 %v6991, 64
      %v7393 = vpop.permute.xlu0 %7392
      %7394 = vrot.lane.b32.xlu0 %v6993, 64
      %v7395 = vpop.permute.xlu0 %7394
      %7396 = vrot.lane.b32.xlu0 %v7329, 64
      %v7397 = vpop.permute.xlu0 %7396
      %7398 = vrot.lane.b32.xlu0 %v7331, 64
      %v7399 = vpop.permute.xlu0 %7398
      %7400 = vrot.lane.b32.xlu0 %v7334, 64
      %v7401 = vpop.permute.xlu0 %7400
      %7402 = vrot.lane.b32.xlu0 %v7336, 64
      %v7403 = vpop.permute.xlu0 %7402
      %7404 = vrot.lane.b32.xlu0 %v7339, 64
      %v7405 = vpop.permute.xlu0 %7404
      %7406 = vrot.lane.b32.xlu0 %v7341, 64
      %v7407 = vpop.permute.xlu0 %7406
      %7408 = vrot.lane.b32.xlu0 %v7344, 64
      %v7409 = vpop.permute.xlu0 %7408
      %7410 = vrot.lane.b32.xlu0 %v7346, 64
      %v7411 = vpop.permute.xlu0 %7410
      %7412 = vrot.lane.b32.xlu0 %v7349, 64
      %v7413 = vpop.permute.xlu0 %7412
      %7414 = vrot.lane.b32.xlu0 %v7351, 64
      %v7415 = vpop.permute.xlu0 %7414
      %v7448 = vsel %vm616, %v6211, %v6445
      %v7449 = vsel %vm616, %v6212, %v6447
      %v7450 = vsel %vm616, %v6215, %v6449
      %v7451 = vsel %vm616, %v6216, %v6451
      %v7452 = vsel %vm616, %v6219, %v6453
      %v7453 = vsel %vm616, %v6220, %v6455
      %v7454 = vsel %vm616, %v6223, %v6457
      %v7455 = vsel %vm616, %v6224, %v6459
      %v7456 = vsel %vm616, %v6227, %v6461
      %v7457 = vsel %vm616, %v6228, %v6463
      %v7458 = vsel %vm616, %v6231, %v6465
      %v7459 = vsel %vm616, %v6232, %v6467
      %v7460 = vsel %vm616, %v6235, %v6469
      %v7461 = vsel %vm616, %v6236, %v6471
      %v7462 = vsel %vm616, %v6239, %v6473
      %v7463 = vsel %vm616, %v6240, %v6475
      %v7464 = vsel %vm616, %v6243, %v6477
      %v7465 = vsel %vm616, %v6244, %v6479
      %v7466 = vsel %vm616, %v6247, %v6481
      %v7467 = vsel %vm616, %v6248, %v6483
      %v7468 = vsel %vm616, %v6251, %v6485
      %v7469 = vsel %vm616, %v6252, %v6487
      %v7470 = vsel %vm616, %v6255, %v6489
      %v7471 = vsel %vm616, %v6256, %v6491
      %v7472 = vsel %vm616, %v6259, %v6493
      %v7473 = vsel %vm616, %v6260, %v6495
      %v7474 = vsel %vm616, %v6263, %v6497
      %v7475 = vsel %vm616, %v6264, %v6499
      %v7476 = vsel %vm616, %v6267, %v6501
      %v7477 = vsel %vm616, %v6268, %v6503
      %v7478 = vsel %vm616, %v6271, %v6505
      %v7479 = vsel %vm616, %v6272, %v6507
      %v7480 = vsel %vm1773, %v7448, %v6637
      %v7481 = vsel %vm1773, %v7449, %v6639
      %v7482 = vsel %vm1773, %v7450, %v6641
      %v7483 = vsel %vm1773, %v7451, %v6643
      %v7484 = vsel %vm1773, %v7452, %v6645
      %v7485 = vsel %vm1773, %v7453, %v6647
      %v7486 = vsel %vm1773, %v7454, %v6649
      %v7487 = vsel %vm1773, %v7455, %v6651
      %v7488 = vsel %vm1773, %v7456, %v6653
      %v7489 = vsel %vm1773, %v7457, %v6655
      %v7490 = vsel %vm1773, %v7458, %v6657
      %v7491 = vsel %vm1773, %v7459, %v6659
      %v7492 = vsel %vm1773, %v7460, %v6661
      %v7493 = vsel %vm1773, %v7461, %v6663
      %v7494 = vsel %vm1773, %v7462, %v6665
      %v7495 = vsel %vm1773, %v7463, %v6667
      %v7496 = vsel %vm1773, %v7464, %v6669
      %v7497 = vsel %vm1773, %v7465, %v6671
      %v7498 = vsel %vm1773, %v7466, %v6673
      %v7499 = vsel %vm1773, %v7467, %v6675
      %v7500 = vsel %vm1773, %v7468, %v6677
      %v7501 = vsel %vm1773, %v7469, %v6679
      %v7502 = vsel %vm1773, %v7470, %v6681
      %v7503 = vsel %vm1773, %v7471, %v6683
      %v7504 = vsel %vm1773, %v7472, %v6685
      %v7505 = vsel %vm1773, %v7473, %v6687
      %v7506 = vsel %vm1773, %v7474, %v6689
      %v7507 = vsel %vm1773, %v7475, %v6691
      %v7508 = vsel %vm1773, %v7476, %v6693
      %v7509 = vsel %vm1773, %v7477, %v6695
      %v7510 = vsel %vm1773, %v7478, %v6697
      %v7511 = vsel %vm1773, %v7479, %v6699
      %v7512 = vsel %vm1839, %v7480, %v6743
      %v7513 = vsel %vm1839, %v7481, %v6745
      %v7514 = vsel %vm1839, %v7482, %v6747
      %v7515 = vsel %vm1839, %v7483, %v6749
      %v7516 = vsel %vm1839, %v7484, %v6751
      %v7517 = vsel %vm1839, %v7485, %v6753
      %v7518 = vsel %vm1839, %v7486, %v6755
      %v7519 = vsel %vm1839, %v7487, %v6757
      %v7520 = vsel %vm1839, %v7488, %v6759
      %v7521 = vsel %vm1839, %v7489, %v6761
      %v7522 = vsel %vm1839, %v7490, %v6763
      %v7523 = vsel %vm1839, %v7491, %v6765
      %v7524 = vsel %vm1839, %v7492, %v6767
      %v7525 = vsel %vm1839, %v7493, %v6769
      %v7526 = vsel %vm1839, %v7494, %v6771
      %v7527 = vsel %vm1839, %v7495, %v6773
      %v7528 = vsel %vm1839, %v7496, %v6775
      %v7529 = vsel %vm1839, %v7497, %v6777
      %v7530 = vsel %vm1839, %v7498, %v6779
      %v7531 = vsel %vm1839, %v7499, %v6781
      %v7532 = vsel %vm1839, %v7500, %v6783
      %v7533 = vsel %vm1839, %v7501, %v6785
      %v7534 = vsel %vm1839, %v7502, %v6787
      %v7535 = vsel %vm1839, %v7503, %v6789
      %v7536 = vsel %vm1839, %v7504, %v6791
      %v7537 = vsel %vm1839, %v7505, %v6793
      %v7538 = vsel %vm1839, %v7506, %v6795
      %v7539 = vsel %vm1839, %v7507, %v6797
      %v7540 = vsel %vm1839, %v7508, %v6799
      %v7541 = vsel %vm1839, %v7509, %v6801
      %v7542 = vsel %vm1839, %v7510, %v6803
      %v7543 = vsel %vm1839, %v7511, %v6805
      %v7544 = vsel %vm1905, %v7512, %v6869
      %v7545 = vsel %vm1905, %v7513, %v6871
      %v7546 = vsel %vm1905, %v7514, %v6873
      %v7547 = vsel %vm1905, %v7515, %v6875
      %v7548 = vsel %vm1905, %v7516, %v6877
      %v7549 = vsel %vm1905, %v7517, %v6879
      %v7550 = vsel %vm1905, %v7518, %v6881
      %v7551 = vsel %vm1905, %v7519, %v6883
      %v7552 = vsel %vm1905, %v7520, %v6885
      %v7553 = vsel %vm1905, %v7521, %v6887
      %v7554 = vsel %vm1905, %v7522, %v6889
      %v7555 = vsel %vm1905, %v7523, %v6891
      %v7556 = vsel %vm1905, %v7524, %v6893
      %v7557 = vsel %vm1905, %v7525, %v6895
      %v7558 = vsel %vm1905, %v7526, %v6897
      %v7559 = vsel %vm1905, %v7527, %v6899
      %v7560 = vsel %vm1905, %v7528, %v6901
      %v7561 = vsel %vm1905, %v7529, %v6903
      %v7562 = vsel %vm1905, %v7530, %v6905
      %v7563 = vsel %vm1905, %v7531, %v6907
      %v7564 = vsel %vm1905, %v7532, %v6909
      %v7565 = vsel %vm1905, %v7533, %v6911
      %v7566 = vsel %vm1905, %v7534, %v6913
      %v7567 = vsel %vm1905, %v7535, %v6915
      %v7568 = vsel %vm1905, %v7536, %v6917
      %v7569 = vsel %vm1905, %v7537, %v6919
      %v7570 = vsel %vm1905, %v7538, %v6921
      %v7571 = vsel %vm1905, %v7539, %v6923
      %v7572 = vsel %vm1905, %v7540, %v6925
      %v7573 = vsel %vm1905, %v7541, %v6927
      %v7574 = vsel %vm1905, %v7542, %v6929
      %v7575 = vsel %vm1905, %v7543, %v6931
      %v7576 = vsel %vm3525, %v7544, %v6995
      %v7577 = vsel %vm3525, %v7545, %v6997
      %v7578 = vsel %vm3525, %v7546, %v6999
      %v7579 = vsel %vm3525, %v7547, %v7001
      %v7580 = vsel %vm3525, %v7548, %v7003
      %v7581 = vsel %vm3525, %v7549, %v7005
      %v7582 = vsel %vm3525, %v7550, %v7007
      %v7583 = vsel %vm3525, %v7551, %v7009
      %v7584 = vsel %vm3525, %v7552, %v7011
      %v7585 = vsel %vm3525, %v7553, %v7013
      %v7586 = vsel %vm3525, %v7554, %v7015
      %v7587 = vsel %vm3525, %v7555, %v7017
      %v7588 = vsel %vm3525, %v7556, %v7019
      %v7589 = vsel %vm3525, %v7557, %v7021
      %v7590 = vsel %vm3525, %v7558, %v7023
      %v7591 = vsel %vm3525, %v7559, %v7025
      %v7592 = vsel %vm3525, %v7560, %v7027
      %v7593 = vsel %vm3525, %v7561, %v7029
      %v7594 = vsel %vm3525, %v7562, %v7031
      %v7595 = vsel %vm3525, %v7563, %v7033
      %v7596 = vsel %vm3525, %v7564, %v7035
      %v7597 = vsel %vm3525, %v7565, %v7037
      %v7598 = vsel %vm3525, %v7566, %v7039
      %v7599 = vsel %vm3525, %v7567, %v7041
      %v7600 = vsel %vm3525, %v7568, %v7043
      %v7601 = vsel %vm3525, %v7569, %v7045
      %v7602 = vsel %vm3525, %v7570, %v7047
      %v7603 = vsel %vm3525, %v7571, %v7049
      %v7604 = vsel %vm3525, %v7572, %v7051
      %v7605 = vsel %vm3525, %v7573, %v7053
      %v7606 = vsel %vm3525, %v7574, %v7055
      %v7607 = vsel %vm3525, %v7575, %v7057
      %v7608 = vsel %vm3558, %v7576, %v7101
      %v7609 = vsel %vm3558, %v7577, %v7103
      %v7610 = vsel %vm3558, %v7578, %v7105
      %v7611 = vsel %vm3558, %v7579, %v7107
      %v7612 = vsel %vm3558, %v7580, %v7109
      %v7613 = vsel %vm3558, %v7581, %v7111
      %v7614 = vsel %vm3558, %v7582, %v7113
      %v7615 = vsel %vm3558, %v7583, %v7115
      %v7616 = vsel %vm3558, %v7584, %v7117
      %v7617 = vsel %vm3558, %v7585, %v7119
      %v7618 = vsel %vm3558, %v7586, %v7121
      %v7619 = vsel %vm3558, %v7587, %v7123
      %v7620 = vsel %vm3558, %v7588, %v7125
      %v7621 = vsel %vm3558, %v7589, %v7127
      %v7622 = vsel %vm3558, %v7590, %v7129
      %v7623 = vsel %vm3558, %v7591, %v7131
      %v7624 = vsel %vm3558, %v7592, %v7133
      %v7625 = vsel %vm3558, %v7593, %v7135
      %v7626 = vsel %vm3558, %v7594, %v7137
      %v7627 = vsel %vm3558, %v7595, %v7139
      %v7628 = vsel %vm3558, %v7596, %v7141
      %v7629 = vsel %vm3558, %v7597, %v7143
      %v7630 = vsel %vm3558, %v7598, %v7145
      %v7631 = vsel %vm3558, %v7599, %v7147
      %v7632 = vsel %vm3558, %v7600, %v7149
      %v7633 = vsel %vm3558, %v7601, %v7151
      %v7634 = vsel %vm3558, %v7602, %v7153
      %v7635 = vsel %vm3558, %v7603, %v7155
      %v7636 = vsel %vm3558, %v7604, %v7157
      %v7637 = vsel %vm3558, %v7605, %v7159
      %v7638 = vsel %vm3558, %v7606, %v7161
      %v7639 = vsel %vm3558, %v7607, %v7163
      %v7640 = vsel %vm3591, %v7608, %v7227
      %v7641 = vsel %vm3591, %v7609, %v7229
      %v7642 = vsel %vm3591, %v7610, %v7231
      %v7643 = vsel %vm3591, %v7611, %v7233
      %v7644 = vsel %vm3591, %v7612, %v7235
      %v7645 = vsel %vm3591, %v7613, %v7237
      %v7646 = vsel %vm3591, %v7614, %v7239
      %v7647 = vsel %vm3591, %v7615, %v7241
      %v7648 = vsel %vm3591, %v7616, %v7243
      %v7649 = vsel %vm3591, %v7617, %v7245
      %v7650 = vsel %vm3591, %v7618, %v7247
      %v7651 = vsel %vm3591, %v7619, %v7249
      %v7652 = vsel %vm3591, %v7620, %v7251
      %v7653 = vsel %vm3591, %v7621, %v7253
      %v7654 = vsel %vm3591, %v7622, %v7255
      %v7655 = vsel %vm3591, %v7623, %v7257
      %v7656 = vsel %vm3591, %v7624, %v7259
      %v7657 = vsel %vm3591, %v7625, %v7261
      %v7658 = vsel %vm3591, %v7626, %v7263
      %v7659 = vsel %vm3591, %v7627, %v7265
      %v7660 = vsel %vm3591, %v7628, %v7267
      %v7661 = vsel %vm3591, %v7629, %v7269
      %v7662 = vsel %vm3591, %v7630, %v7271
      %v7663 = vsel %vm3591, %v7631, %v7273
      %v7664 = vsel %vm3591, %v7632, %v7275
      %v7665 = vsel %vm3591, %v7633, %v7277
      %v7666 = vsel %vm3591, %v7634, %v7279
      %v7667 = vsel %vm3591, %v7635, %v7281
      %v7668 = vsel %vm3591, %v7636, %v7283
      %v7669 = vsel %vm3591, %v7637, %v7285
      %v7670 = vsel %vm3591, %v7638, %v7287
      %v7671 = vsel %vm3591, %v7639, %v7289
      %v7672 = vsel %vm3624, %v7640, %v7353
      %v7673 = vsel %vm3624, %v7641, %v7355
      %v7674 = vsel %vm3624, %v7642, %v7357
      %v7675 = vsel %vm3624, %v7643, %v7359
      %v7676 = vsel %vm3624, %v7644, %v7361
      %v7677 = vsel %vm3624, %v7645, %v7363
      %v7678 = vsel %vm3624, %v7646, %v7365
      %v7679 = vsel %vm3624, %v7647, %v7367
      %v7680 = vsel %vm3624, %v7648, %v7369
      %v7681 = vsel %vm3624, %v7649, %v7371
      %v7682 = vsel %vm3624, %v7650, %v7373
      %v7683 = vsel %vm3624, %v7651, %v7375
      %v7684 = vsel %vm3624, %v7652, %v7377
      %v7685 = vsel %vm3624, %v7653, %v7379
      %v7686 = vsel %vm3624, %v7654, %v7381
      %v7687 = vsel %vm3624, %v7655, %v7383
      %v7688 = vsel %vm3624, %v7656, %v7385
      %v7689 = vsel %vm3624, %v7657, %v7387
      %v7690 = vsel %vm3624, %v7658, %v7389
      %v7691 = vsel %vm3624, %v7659, %v7391
      %v7692 = vsel %vm3624, %v7660, %v7393
      %v7693 = vsel %vm3624, %v7661, %v7395
      %v7694 = vsel %vm3624, %v7662, %v7397
      %v7695 = vsel %vm3624, %v7663, %v7399
      %v7696 = vsel %vm3624, %v7664, %v7401
      %v7697 = vsel %vm3624, %v7665, %v7403
      %v7698 = vsel %vm3624, %v7666, %v7405
      %v7699 = vsel %vm3624, %v7667, %v7407
      %v7700 = vsel %vm3624, %v7668, %v7409
      %v7701 = vsel %vm3624, %v7669, %v7411
      %v7702 = vsel %vm3624, %v7670, %v7413
      %v7703 = vsel %vm3624, %v7671, %v7415
      %v7704 = vld [vmem:[%s9] sm:$0xff]
      %v7705 = vld [vmem:[%s9 + $0x8] sm:$0xff]
      %v7706 = vld [vmem:[%s9 + $0x10] sm:$0xff]
      %v7707 = vld [vmem:[%s9 + $0x18] sm:$0xff]
      %v7708 = vld [vmem:[%s9 + $0x20] sm:$0xff]
      %v7709 = vld [vmem:[%s9 + $0x28] sm:$0xff]
      %v7710 = vld [vmem:[%s9 + $0x30] sm:$0xff]
      %v7711 = vld [vmem:[%s9 + $0x38] sm:$0xff]
      %v7712 = vld [vmem:[%s9 + $0x40] sm:$0xff]
      %v7713 = vld [vmem:[%s10] sm:$0x1]
      %v7715 = vlaneseq
      %v7716 = vshrl.u32 %v7715, 7
      %v7717 = vsub.s32 0, %v7716
      %v7718 = vrot.slane %v7713, %v7717
      %v7721 = vsel %vm3673, %v7672, 0
      %v7724 = vsel %vm3673, %v7673, 0
      %v7727 = vsel %vm3673, %v7674, 0
      %v7730 = vsel %vm3673, %v7675, 0
      %v7733 = vsel %vm3673, %v7676, 0
      %v7736 = vsel %vm3673, %v7677, 0
      %v7739 = vsel %vm3673, %v7678, 0
      %v7742 = vsel %vm3673, %v7679, 0
      %v7745 = vsel %vm3673, %v7680, 0
      %v7748 = vsel %vm3673, %v7681, 0
      %v7751 = vsel %vm3673, %v7682, 0
      %v7754 = vsel %vm3673, %v7683, 0
      %v7757 = vsel %vm3673, %v7684, 0
      %v7760 = vsel %vm3673, %v7685, 0
      %v7763 = vsel %vm3673, %v7686, 0
      %v7766 = vsel %vm3673, %v7687, 0
      %v7769 = vsel %vm3673, %v7688, 0
      %v7772 = vsel %vm3673, %v7689, 0
      %v7775 = vsel %vm3673, %v7690, 0
      %v7778 = vsel %vm3673, %v7691, 0
      %v7781 = vsel %vm3673, %v7692, 0
      %v7784 = vsel %vm3673, %v7693, 0
      %v7787 = vsel %vm3673, %v7694, 0
      %v7790 = vsel %vm3673, %v7695, 0
      %v7793 = vsel %vm3673, %v7696, 0
      %v7796 = vsel %vm3673, %v7697, 0
      %v7799 = vsel %vm3673, %v7698, 0
      %v7802 = vsel %vm3673, %v7699, 0
      %v7805 = vsel %vm3673, %v7700, 0
      %v7808 = vsel %vm3673, %v7701, 0
      %v7811 = vsel %vm3673, %v7702, 0
      %v7814 = vsel %vm3673, %v7703, 0
      %7816 = vmatprep.subr.mxu0 0.0
      %7817 = vmatpush1.msra.mxu0 0.0
      %7818 = vmatprep.subr.mxu0 0.0
      %7819 = vmatpush1.msra.mxu0 0.0
      %7820 = vmatprep.subr.mxu0 0.0
      %7821 = vmatpush1.msra.mxu0 0.0
      %7822 = vmatprep.subr.mxu0 0.0
      %7823 = vmatpush1.msra.mxu0 0.0
      %7824 = vmatprep.subr.mxu0 0.0
      %7825 = vmatpush1.msra.mxu0 0.0
      %7826 = vmatprep.subr.mxu0 0.0
      %7827 = vmatpush1.msra.mxu0 0.0
      %7828 = vmatprep.subr.mxu0 0.0
      %7829 = vmatpush1.msra.mxu0 0.0
      %7830 = vmatprep.subr.mxu0 0.0
      %7831 = vmatpush1.msra.mxu0 %v7712
      %7832 = vmatprep.subr.mxu0 0.0
      %7833 = vmatpush1.msra.mxu0 %v7711
      %7834 = vmatprep.subr.mxu0 0.0
      %7835 = vmatpush1.msra.mxu0 %v7710
      %7836 = vmatprep.subr.mxu0 0.0
      %7837 = vmatpush1.msra.mxu0 %v7709
      %7838 = vmatprep.subr.mxu0 0.0
      %7839 = vmatpush1.msra.mxu0 %v7708
      %7840 = vmatprep.subr.mxu0 0.0
      %7841 = vmatpush1.msra.mxu0 %v7707
      %7842 = vmatprep.subr.mxu0 0.0
      %7843 = vmatpush1.msra.mxu0 %v7706
      %7844 = vmatprep.subr.mxu0 0.0
      %7845 = vmatpush1.msra.mxu0 %v7705
      %7846 = vmatprep.subr.mxu0 0.0
      %7847 = vmatpush1.msra.mxu0 %v7704
      %7848 = vmatprep.subr.mxu0 0.0
      %7849 = vmatpush2.msra.mxu0 0.0
      %7850 = vmatprep.subr.mxu0 0.0
      %7851 = vmatpush2.msra.mxu0 0.0
      %7852 = vmatprep.subr.mxu0 0.0
      %7853 = vmatpush2.msra.mxu0 0.0
      %7854 = vmatprep.subr.mxu0 0.0
      %7855 = vmatpush2.msra.mxu0 0.0
      %7856 = vmatprep.subr.mxu0 0.0
      %7857 = vmatpush2.msra.mxu0 0.0
      %7858 = vmatprep.subr.mxu0 0.0
      %7859 = vmatpush2.msra.mxu0 0.0
      %7860 = vmatprep.subr.mxu0 0.0
      %7861 = vmatpush2.msra.mxu0 0.0
      %7862 = vmatprep.subr.mxu0 0.0
      %7863 = vmatpush2.msra.mxu0 0.0
      %7864 = vmatprep.subr.mxu0 0.0
      %7865 = vmatpush2.msra.mxu0 0.0
      %7866 = vmatprep.subr.mxu0 0.0
      %7867 = vmatpush2.msra.mxu0 0.0
      %7868 = vmatprep.subr.mxu0 0.0
      %7869 = vmatpush2.msra.mxu0 0.0
      %7870 = vmatprep.subr.mxu0 0.0
      %7871 = vmatpush2.msra.mxu0 0.0
      %7872 = vmatprep.subr.mxu0 0.0
      %7873 = vmatpush2.msra.mxu0 0.0
      %7874 = vmatprep.subr.mxu0 0.0
      %7875 = vmatpush2.msra.mxu0 0.0
      %7876 = vmatprep.subr.mxu0 0.0
      %7877 = vmatpush2.msra.mxu0 0.0
      %7878 = vmatprep.subr.mxu0 0.0
      %7879 = vmatpush2.msra.mxu0 0.0
      %7880 = vmatprep.mubr.f32.mxu0 0.0
      %7881 = vmatmul.mubr.f32.gmra.mxu0 %v7721
      %v7882 = vpop.f32.mrf.mxu0
      %v7883 = vadd.f32 %v7718, %v7882
      %v7884 = vpop.f32.mrf.mxu0
      %7885 = vmatprep.mubr.f32.mxu0 0.0
      %7886 = vmatmul.mubr.f32.gmra.mxu0 %v7724
      %v7887 = vpop.f32.mrf.mxu0
      %v7888 = vadd.f32 %v7718, %v7887
      %v7889 = vpop.f32.mrf.mxu0
      %7890 = vmatprep.mubr.f32.mxu0 0.0
      %7891 = vmatmul.mubr.f32.gmra.mxu0 %v7727
      %v7892 = vpop.f32.mrf.mxu0
      %v7893 = vadd.f32 %v7718, %v7892
      %v7894 = vpop.f32.mrf.mxu0
      %7895 = vmatprep.mubr.f32.mxu0 0.0
      %7896 = vmatmul.mubr.f32.gmra.mxu0 %v7730
      %v7897 = vpop.f32.mrf.mxu0
      %v7898 = vadd.f32 %v7718, %v7897
      %v7899 = vpop.f32.mrf.mxu0
      %7900 = vmatprep.mubr.f32.mxu0 0.0
      %7901 = vmatmul.mubr.f32.gmra.mxu0 %v7733
      %v7902 = vpop.f32.mrf.mxu0
      %v7903 = vadd.f32 %v7718, %v7902
      %v7904 = vpop.f32.mrf.mxu0
      %7905 = vmatprep.mubr.f32.mxu0 0.0
      %7906 = vmatmul.mubr.f32.gmra.mxu0 %v7736
      %v7907 = vpop.f32.mrf.mxu0
      %v7908 = vadd.f32 %v7718, %v7907
      %v7909 = vpop.f32.mrf.mxu0
      %7910 = vmatprep.mubr.f32.mxu0 0.0
      %7911 = vmatmul.mubr.f32.gmra.mxu0 %v7739
      %v7912 = vpop.f32.mrf.mxu0
      %v7913 = vadd.f32 %v7718, %v7912
      %v7914 = vpop.f32.mrf.mxu0
      %7915 = vmatprep.mubr.f32.mxu0 0.0
      %7916 = vmatmul.mubr.f32.gmra.mxu0 %v7742
      %v7917 = vpop.f32.mrf.mxu0
      %v7918 = vadd.f32 %v7718, %v7917
      %v7919 = vpop.f32.mrf.mxu0
      %7920 = vmatprep.mubr.f32.mxu0 0.0
      %7921 = vmatmul.mubr.f32.gmra.mxu0 %v7745
      %v7922 = vpop.f32.mrf.mxu0
      %v7923 = vadd.f32 %v7718, %v7922
      %v7924 = vpop.f32.mrf.mxu0
      %7925 = vmatprep.mubr.f32.mxu0 0.0
      %7926 = vmatmul.mubr.f32.gmra.mxu0 %v7748
      %v7927 = vpop.f32.mrf.mxu0
      %v7928 = vadd.f32 %v7718, %v7927
      %v7929 = vpop.f32.mrf.mxu0
      %7930 = vmatprep.mubr.f32.mxu0 0.0
      %7931 = vmatmul.mubr.f32.gmra.mxu0 %v7751
      %v7932 = vpop.f32.mrf.mxu0
      %v7933 = vadd.f32 %v7718, %v7932
      %v7934 = vpop.f32.mrf.mxu0
      %7935 = vmatprep.mubr.f32.mxu0 0.0
      %7936 = vmatmul.mubr.f32.gmra.mxu0 %v7754
      %v7937 = vpop.f32.mrf.mxu0
      %v7938 = vadd.f32 %v7718, %v7937
      %v7939 = vpop.f32.mrf.mxu0
      %7940 = vmatprep.mubr.f32.mxu0 0.0
      %7941 = vmatmul.mubr.f32.gmra.mxu0 %v7757
      %v7942 = vpop.f32.mrf.mxu0
      %v7943 = vadd.f32 %v7718, %v7942
      %v7944 = vpop.f32.mrf.mxu0
      %7945 = vmatprep.mubr.f32.mxu0 0.0
      %7946 = vmatmul.mubr.f32.gmra.mxu0 %v7760
      %v7947 = vpop.f32.mrf.mxu0
      %v7948 = vadd.f32 %v7718, %v7947
      %v7949 = vpop.f32.mrf.mxu0
      %7950 = vmatprep.mubr.f32.mxu0 0.0
      %7951 = vmatmul.mubr.f32.gmra.mxu0 %v7763
      %v7952 = vpop.f32.mrf.mxu0
      %v7953 = vadd.f32 %v7718, %v7952
      %v7954 = vpop.f32.mrf.mxu0
      %7955 = vmatprep.mubr.f32.mxu0 0.0
      %7956 = vmatmul.mubr.f32.gmra.mxu0 %v7766
      %v7957 = vpop.f32.mrf.mxu0
      %v7958 = vadd.f32 %v7718, %v7957
      %v7959 = vpop.f32.mrf.mxu0
      %7960 = vmatprep.mubr.f32.mxu0 0.0
      %7961 = vmatmul.mubr.f32.gmra.mxu0 %v7769
      %v7962 = vpop.f32.mrf.mxu0
      %v7963 = vadd.f32 %v7718, %v7962
      %v7964 = vpop.f32.mrf.mxu0
      %7965 = vmatprep.mubr.f32.mxu0 0.0
      %7966 = vmatmul.mubr.f32.gmra.mxu0 %v7772
      %v7967 = vpop.f32.mrf.mxu0
      %v7968 = vadd.f32 %v7718, %v7967
      %v7969 = vpop.f32.mrf.mxu0
      %7970 = vmatprep.mubr.f32.mxu0 0.0
      %7971 = vmatmul.mubr.f32.gmra.mxu0 %v7775
      %v7972 = vpop.f32.mrf.mxu0
      %v7973 = vadd.f32 %v7718, %v7972
      %v7974 = vpop.f32.mrf.mxu0
      %7975 = vmatprep.mubr.f32.mxu0 0.0
      %7976 = vmatmul.mubr.f32.gmra.mxu0 %v7778
      %v7977 = vpop.f32.mrf.mxu0
      %v7978 = vadd.f32 %v7718, %v7977
      %v7979 = vpop.f32.mrf.mxu0
      %7980 = vmatprep.mubr.f32.mxu0 0.0
      %7981 = vmatmul.mubr.f32.gmra.mxu0 %v7781
      %v7982 = vpop.f32.mrf.mxu0
      %v7983 = vadd.f32 %v7718, %v7982
      %v7984 = vpop.f32.mrf.mxu0
      %7985 = vmatprep.mubr.f32.mxu0 0.0
      %7986 = vmatmul.mubr.f32.gmra.mxu0 %v7784
      %v7987 = vpop.f32.mrf.mxu0
      %v7988 = vadd.f32 %v7718, %v7987
      %v7989 = vpop.f32.mrf.mxu0
      %7990 = vmatprep.mubr.f32.mxu0 0.0
      %7991 = vmatmul.mubr.f32.gmra.mxu0 %v7787
      %v7992 = vpop.f32.mrf.mxu0
      %v7993 = vadd.f32 %v7718, %v7992
      %v7994 = vpop.f32.mrf.mxu0
      %7995 = vmatprep.mubr.f32.mxu0 0.0
      %7996 = vmatmul.mubr.f32.gmra.mxu0 %v7790
      %v7997 = vpop.f32.mrf.mxu0
      %v7998 = vadd.f32 %v7718, %v7997
      %v7999 = vpop.f32.mrf.mxu0
      %8000 = vmatprep.mubr.f32.mxu0 0.0
      %8001 = vmatmul.mubr.f32.gmra.mxu0 %v7793
      %v8002 = vpop.f32.mrf.mxu0
      %v8003 = vadd.f32 %v7718, %v8002
      %v8004 = vpop.f32.mrf.mxu0
      %8005 = vmatprep.mubr.f32.mxu0 0.0
      %8006 = vmatmul.mubr.f32.gmra.mxu0 %v7796
      %v8007 = vpop.f32.mrf.mxu0
      %v8008 = vadd.f32 %v7718, %v8007
      %v8009 = vpop.f32.mrf.mxu0
      %8010 = vmatprep.mubr.f32.mxu0 0.0
      %8011 = vmatmul.mubr.f32.gmra.mxu0 %v7799
      %v8012 = vpop.f32.mrf.mxu0
      %v8013 = vadd.f32 %v7718, %v8012
      %v8014 = vpop.f32.mrf.mxu0
      %8015 = vmatprep.mubr.f32.mxu0 0.0
      %8016 = vmatmul.mubr.f32.gmra.mxu0 %v7802
      %v8017 = vpop.f32.mrf.mxu0
      %v8018 = vadd.f32 %v7718, %v8017
      %v8019 = vpop.f32.mrf.mxu0
      %8020 = vmatprep.mubr.f32.mxu0 0.0
      %8021 = vmatmul.mubr.f32.gmra.mxu0 %v7805
      %v8022 = vpop.f32.mrf.mxu0
      %v8023 = vadd.f32 %v7718, %v8022
      %v8024 = vpop.f32.mrf.mxu0
      %8025 = vmatprep.mubr.f32.mxu0 0.0
      %8026 = vmatmul.mubr.f32.gmra.mxu0 %v7808
      %v8027 = vpop.f32.mrf.mxu0
      %v8028 = vadd.f32 %v7718, %v8027
      %v8029 = vpop.f32.mrf.mxu0
      %8030 = vmatprep.mubr.f32.mxu0 0.0
      %8031 = vmatmul.mubr.f32.gmra.mxu0 %v7811
      %v8032 = vpop.f32.mrf.mxu0
      %v8033 = vadd.f32 %v7718, %v8032
      %v8034 = vpop.f32.mrf.mxu0
      %8035 = vmatprep.mubr.f32.mxu0 0.0
      %8036 = vmatmul.mubr.f32.gmra.mxu0 %v7814
      %v8037 = vpop.f32.mrf.mxu0
      %v8038 = vadd.f32 %v7718, %v8037
      %v8039 = vpop.f32.mrf.mxu0
      %8040 = vdwg.mxu0
      %v8041 = vld [vmem:[%s435] sm:$0xff]
      %v8042 = vld [vmem:[%s435 + $0x8] sm:$0xff]
      %v8043 = vld [vmem:[%s435 + $0x10] sm:$0xff]
      %v8044 = vld [vmem:[%s435 + $0x18] sm:$0xff]
      %v8045 = vld [vmem:[%s435 + $0x20] sm:$0xff]
      %v8046 = vld [vmem:[%s435 + $0x28] sm:$0xff]
      %v8047 = vld [vmem:[%s435 + $0x30] sm:$0xff]
      %v8048 = vld [vmem:[%s435 + $0x38] sm:$0xff]
      %v8049 = vld [vmem:[%s435 + $0x40] sm:$0xff]
      %v8050 = vld [vmem:[%s435 + $0x48] sm:$0xff]
      %v8051 = vld [vmem:[%s435 + $0x50] sm:$0xff]
      %v8052 = vld [vmem:[%s435 + $0x58] sm:$0xff]
      %v8053 = vld [vmem:[%s435 + $0x60] sm:$0xff]
      %v8054 = vld [vmem:[%s435 + $0x68] sm:$0xff]
      %v8055 = vld [vmem:[%s435 + $0x70] sm:$0xff]
      %v8056 = vld [vmem:[%s435 + $0x78] sm:$0xff]
      %v8057 = vld [vmem:[%s435 + $0x80] sm:$0xff]
      %v8058 = vld [vmem:[%s435 + $0x88] sm:$0xff]
      %v8059 = vld [vmem:[%s435 + $0x90] sm:$0xff]
      %v8060 = vld [vmem:[%s435 + $0x98] sm:$0xff]
      %v8061 = vld [vmem:[%s435 + $0xa0] sm:$0xff]
      %v8062 = vld [vmem:[%s435 + $0xa8] sm:$0xff]
      %v8063 = vld [vmem:[%s435 + $0xb0] sm:$0xff]
      %v8064 = vld [vmem:[%s435 + $0xb8] sm:$0xff]
      %v8065 = vld [vmem:[%s435 + $0xc0] sm:$0xff]
      %v8066 = vld [vmem:[%s435 + $0xc8] sm:$0xff]
      %v8067 = vld [vmem:[%s435 + $0xd0] sm:$0xff]
      %v8068 = vld [vmem:[%s435 + $0xd8] sm:$0xff]
      %v8069 = vld [vmem:[%s435 + $0xe0] sm:$0xff]
      %v8070 = vld [vmem:[%s435 + $0xe8] sm:$0xff]
      %v8071 = vld [vmem:[%s435 + $0xf0] sm:$0xff]
      %v8072 = vld [vmem:[%s435 + $0xf8] sm:$0xff]
      %v8073 = vld [vmem:[%s11] sm:$0xf]
      %v8074 = vld [vmem:[%s12] sm:$0x1]
      %v8076 = vlaneseq
      %v8077 = vshrl.u32 %v8076, 7
      %v8078 = vsub.s32 0, %v8077
      %v8079 = vrot.slane %v8074, %v8078
      %v8082 = vsel %vm441, %v8041, 0
      %v8085 = vsel %vm441, %v8042, 0
      %v8088 = vsel %vm441, %v8043, 0
      %v8091 = vsel %vm441, %v8044, 0
      %v8094 = vsel %vm441, %v8045, 0
      %v8097 = vsel %vm441, %v8046, 0
      %v8100 = vsel %vm441, %v8047, 0
      %v8103 = vsel %vm441, %v8048, 0
      %v8106 = vsel %vm441, %v8049, 0
      %v8109 = vsel %vm441, %v8050, 0
      %v8112 = vsel %vm441, %v8051, 0
      %v8115 = vsel %vm441, %v8052, 0
      %v8118 = vsel %vm441, %v8053, 0
      %v8121 = vsel %vm441, %v8054, 0
      %v8124 = vsel %vm441, %v8055, 0
      %v8127 = vsel %vm441, %v8056, 0
      %v8130 = vsel %vm441, %v8057, 0
      %v8133 = vsel %vm441, %v8058, 0
      %v8136 = vsel %vm441, %v8059, 0
      %v8139 = vsel %vm441, %v8060, 0
      %v8142 = vsel %vm441, %v8061, 0
      %v8145 = vsel %vm441, %v8062, 0
      %v8148 = vsel %vm441, %v8063, 0
      %v8151 = vsel %vm441, %v8064, 0
      %v8154 = vsel %vm441, %v8065, 0
      %v8157 = vsel %vm441, %v8066, 0
      %v8160 = vsel %vm441, %v8067, 0
      %v8163 = vsel %vm441, %v8068, 0
      %v8166 = vsel %vm441, %v8069, 0
      %v8169 = vsel %vm441, %v8070, 0
      %v8172 = vsel %vm441, %v8071, 0
      %v8175 = vsel %vm441, %v8072, 0
      %v8178 = vsel %vm2047, %v8073, 0
      %8180 = vmatprep.subr.mxu0 0.0
      %8181 = vmatpush1.msra.mxu0 0.0
      %8182 = vmatprep.subr.mxu0 0.0
      %8183 = vmatpush1.msra.mxu0 0.0
      %8184 = vmatprep.subr.mxu0 0.0
      %8185 = vmatpush1.msra.mxu0 0.0
      %8186 = vmatprep.subr.mxu0 0.0
      %8187 = vmatpush1.msra.mxu0 0.0
      %8188 = vmatprep.subr.mxu0 0.0
      %8189 = vmatpush1.msra.mxu0 0.0
      %8190 = vmatprep.subr.mxu0 0.0
      %8191 = vmatpush1.msra.mxu0 0.0
      %8192 = vmatprep.subr.mxu0 0.0
      %8193 = vmatpush1.msra.mxu0 0.0
      %8194 = vmatprep.subr.mxu0 0.0
      %8195 = vmatpush1.msra.mxu0 0.0
      %8196 = vmatprep.subr.mxu0 0.0
      %8197 = vmatpush1.msra.mxu0 0.0
      %8198 = vmatprep.subr.mxu0 0.0
      %8199 = vmatpush1.msra.mxu0 0.0
      %8200 = vmatprep.subr.mxu0 0.0
      %8201 = vmatpush1.msra.mxu0 0.0
      %8202 = vmatprep.subr.mxu0 0.0
      %8203 = vmatpush1.msra.mxu0 0.0
      %8204 = vmatprep.subr.mxu0 0.0
      %8205 = vmatpush1.msra.mxu0 0.0
      %8206 = vmatprep.subr.mxu0 0.0
      %8207 = vmatpush1.msra.mxu0 0.0
      %8208 = vmatprep.subr.mxu0 0.0
      %8209 = vmatpush1.msra.mxu0 0.0
      %8210 = vmatprep.subr.mxu0 0.0
      %8211 = vmatpush1.msra.mxu0 %v8178
      %8212 = vmatprep.subr.mxu0 0.0
      %8213 = vmatpush2.msra.mxu0 0.0
      %8214 = vmatprep.subr.mxu0 0.0
      %8215 = vmatpush2.msra.mxu0 0.0
      %8216 = vmatprep.subr.mxu0 0.0
      %8217 = vmatpush2.msra.mxu0 0.0
      %8218 = vmatprep.subr.mxu0 0.0
      %8219 = vmatpush2.msra.mxu0 0.0
      %8220 = vmatprep.subr.mxu0 0.0
      %8221 = vmatpush2.msra.mxu0 0.0
      %8222 = vmatprep.subr.mxu0 0.0
      %8223 = vmatpush2.msra.mxu0 0.0
      %8224 = vmatprep.subr.mxu0 0.0
      %8225 = vmatpush2.msra.mxu0 0.0
      %8226 = vmatprep.subr.mxu0 0.0
      %8227 = vmatpush2.msra.mxu0 0.0
      %8228 = vmatprep.subr.mxu0 0.0
      %8229 = vmatpush2.msra.mxu0 0.0
      %8230 = vmatprep.subr.mxu0 0.0
      %8231 = vmatpush2.msra.mxu0 0.0
      %8232 = vmatprep.subr.mxu0 0.0
      %8233 = vmatpush2.msra.mxu0 0.0
      %8234 = vmatprep.subr.mxu0 0.0
      %8235 = vmatpush2.msra.mxu0 0.0
      %8236 = vmatprep.subr.mxu0 0.0
      %8237 = vmatpush2.msra.mxu0 0.0
      %8238 = vmatprep.subr.mxu0 0.0
      %8239 = vmatpush2.msra.mxu0 0.0
      %8240 = vmatprep.subr.mxu0 0.0
      %8241 = vmatpush2.msra.mxu0 0.0
      %8242 = vmatprep.subr.mxu0 0.0
      %8243 = vmatpush2.msra.mxu0 0.0
      %8244 = vmatprep.mubr.f32.mxu0 0.0
      %8245 = vmatmul.mubr.f32.gmra.mxu0 %v8082
      %v8246 = vpop.f32.mrf.mxu0
      %v8247 = vadd.f32 %v8079, %v8246
      %v8248 = vpop.f32.mrf.mxu0
      %8249 = vmatprep.mubr.f32.mxu0 0.0
      %8250 = vmatmul.mubr.f32.gmra.mxu0 %v8085
      %v8251 = vpop.f32.mrf.mxu0
      %v8252 = vadd.f32 %v8079, %v8251
      %v8253 = vpop.f32.mrf.mxu0
      %8254 = vmatprep.mubr.f32.mxu0 0.0
      %8255 = vmatmul.mubr.f32.gmra.mxu0 %v8088
      %v8256 = vpop.f32.mrf.mxu0
      %v8257 = vadd.f32 %v8079, %v8256
      %v8258 = vpop.f32.mrf.mxu0
      %8259 = vmatprep.mubr.f32.mxu0 0.0
      %8260 = vmatmul.mubr.f32.gmra.mxu0 %v8091
      %v8261 = vpop.f32.mrf.mxu0
      %v8262 = vadd.f32 %v8079, %v8261
      %v8263 = vpop.f32.mrf.mxu0
      %8264 = vmatprep.mubr.f32.mxu0 0.0
      %8265 = vmatmul.mubr.f32.gmra.mxu0 %v8094
      %v8266 = vpop.f32.mrf.mxu0
      %v8267 = vadd.f32 %v8079, %v8266
      %v8268 = vpop.f32.mrf.mxu0
      %8269 = vmatprep.mubr.f32.mxu0 0.0
      %8270 = vmatmul.mubr.f32.gmra.mxu0 %v8097
      %v8271 = vpop.f32.mrf.mxu0
      %v8272 = vadd.f32 %v8079, %v8271
      %v8273 = vpop.f32.mrf.mxu0
      %8274 = vmatprep.mubr.f32.mxu0 0.0
      %8275 = vmatmul.mubr.f32.gmra.mxu0 %v8100
      %v8276 = vpop.f32.mrf.mxu0
      %v8277 = vadd.f32 %v8079, %v8276
      %v8278 = vpop.f32.mrf.mxu0
      %8279 = vmatprep.mubr.f32.mxu0 0.0
      %8280 = vmatmul.mubr.f32.gmra.mxu0 %v8103
      %v8281 = vpop.f32.mrf.mxu0
      %v8282 = vadd.f32 %v8079, %v8281
      %v8283 = vpop.f32.mrf.mxu0
      %8284 = vmatprep.mubr.f32.mxu0 0.0
      %8285 = vmatmul.mubr.f32.gmra.mxu0 %v8106
      %v8286 = vpop.f32.mrf.mxu0
      %v8287 = vadd.f32 %v8079, %v8286
      %v8288 = vpop.f32.mrf.mxu0
      %8289 = vmatprep.mubr.f32.mxu0 0.0
      %8290 = vmatmul.mubr.f32.gmra.mxu0 %v8109
      %v8291 = vpop.f32.mrf.mxu0
      %v8292 = vadd.f32 %v8079, %v8291
      %v8293 = vpop.f32.mrf.mxu0
      %8294 = vmatprep.mubr.f32.mxu0 0.0
      %8295 = vmatmul.mubr.f32.gmra.mxu0 %v8112
      %v8296 = vpop.f32.mrf.mxu0
      %v8297 = vadd.f32 %v8079, %v8296
      %v8298 = vpop.f32.mrf.mxu0
      %8299 = vmatprep.mubr.f32.mxu0 0.0
      %8300 = vmatmul.mubr.f32.gmra.mxu0 %v8115
      %v8301 = vpop.f32.mrf.mxu0
      %v8302 = vadd.f32 %v8079, %v8301
      %v8303 = vpop.f32.mrf.mxu0
      %8304 = vmatprep.mubr.f32.mxu0 0.0
      %8305 = vmatmul.mubr.f32.gmra.mxu0 %v8118
      %v8306 = vpop.f32.mrf.mxu0
      %v8307 = vadd.f32 %v8079, %v8306
      %v8308 = vpop.f32.mrf.mxu0
      %8309 = vmatprep.mubr.f32.mxu0 0.0
      %8310 = vmatmul.mubr.f32.gmra.mxu0 %v8121
      %v8311 = vpop.f32.mrf.mxu0
      %v8312 = vadd.f32 %v8079, %v8311
      %v8313 = vpop.f32.mrf.mxu0
      %8314 = vmatprep.mubr.f32.mxu0 0.0
      %8315 = vmatmul.mubr.f32.gmra.mxu0 %v8124
      %v8316 = vpop.f32.mrf.mxu0
      %v8317 = vadd.f32 %v8079, %v8316
      %v8318 = vpop.f32.mrf.mxu0
      %8319 = vmatprep.mubr.f32.mxu0 0.0
      %8320 = vmatmul.mubr.f32.gmra.mxu0 %v8127
      %v8321 = vpop.f32.mrf.mxu0
      %v8322 = vadd.f32 %v8079, %v8321
      %v8323 = vpop.f32.mrf.mxu0
      %8324 = vmatprep.mubr.f32.mxu0 0.0
      %8325 = vmatmul.mubr.f32.gmra.mxu0 %v8130
      %v8326 = vpop.f32.mrf.mxu0
      %v8327 = vadd.f32 %v8079, %v8326
      %v8328 = vpop.f32.mrf.mxu0
      %8329 = vmatprep.mubr.f32.mxu0 0.0
      %8330 = vmatmul.mubr.f32.gmra.mxu0 %v8133
      %v8331 = vpop.f32.mrf.mxu0
      %v8332 = vadd.f32 %v8079, %v8331
      %v8333 = vpop.f32.mrf.mxu0
      %8334 = vmatprep.mubr.f32.mxu0 0.0
      %8335 = vmatmul.mubr.f32.gmra.mxu0 %v8136
      %v8336 = vpop.f32.mrf.mxu0
      %v8337 = vadd.f32 %v8079, %v8336
      %v8338 = vpop.f32.mrf.mxu0
      %8339 = vmatprep.mubr.f32.mxu0 0.0
      %8340 = vmatmul.mubr.f32.gmra.mxu0 %v8139
      %v8341 = vpop.f32.mrf.mxu0
      %v8342 = vadd.f32 %v8079, %v8341
      %v8343 = vpop.f32.mrf.mxu0
      %8344 = vmatprep.mubr.f32.mxu0 0.0
      %8345 = vmatmul.mubr.f32.gmra.mxu0 %v8142
      %v8346 = vpop.f32.mrf.mxu0
      %v8347 = vadd.f32 %v8079, %v8346
      %v8348 = vpop.f32.mrf.mxu0
      %8349 = vmatprep.mubr.f32.mxu0 0.0
      %8350 = vmatmul.mubr.f32.gmra.mxu0 %v8145
      %v8351 = vpop.f32.mrf.mxu0
      %v8352 = vadd.f32 %v8079, %v8351
      %v8353 = vpop.f32.mrf.mxu0
      %8354 = vmatprep.mubr.f32.mxu0 0.0
      %8355 = vmatmul.mubr.f32.gmra.mxu0 %v8148
      %v8356 = vpop.f32.mrf.mxu0
      %v8357 = vadd.f32 %v8079, %v8356
      %v8358 = vpop.f32.mrf.mxu0
      %8359 = vmatprep.mubr.f32.mxu0 0.0
      %8360 = vmatmul.mubr.f32.gmra.mxu0 %v8151
      %v8361 = vpop.f32.mrf.mxu0
      %v8362 = vadd.f32 %v8079, %v8361
      %v8363 = vpop.f32.mrf.mxu0
      %8364 = vmatprep.mubr.f32.mxu0 0.0
      %8365 = vmatmul.mubr.f32.gmra.mxu0 %v8154
      %v8366 = vpop.f32.mrf.mxu0
      %v8367 = vadd.f32 %v8079, %v8366
      %v8368 = vpop.f32.mrf.mxu0
      %8369 = vmatprep.mubr.f32.mxu0 0.0
      %8370 = vmatmul.mubr.f32.gmra.mxu0 %v8157
      %v8371 = vpop.f32.mrf.mxu0
      %v8372 = vadd.f32 %v8079, %v8371
      %v8373 = vpop.f32.mrf.mxu0
      %8374 = vmatprep.mubr.f32.mxu0 0.0
      %8375 = vmatmul.mubr.f32.gmra.mxu0 %v8160
      %v8376 = vpop.f32.mrf.mxu0
      %v8377 = vadd.f32 %v8079, %v8376
      %v8378 = vpop.f32.mrf.mxu0
      %8379 = vmatprep.mubr.f32.mxu0 0.0
      %8380 = vmatmul.mubr.f32.gmra.mxu0 %v8163
      %v8381 = vpop.f32.mrf.mxu0
      %v8382 = vadd.f32 %v8079, %v8381
      %v8383 = vpop.f32.mrf.mxu0
      %8384 = vmatprep.mubr.f32.mxu0 0.0
      %8385 = vmatmul.mubr.f32.gmra.mxu0 %v8166
      %v8386 = vpop.f32.mrf.mxu0
      %v8387 = vadd.f32 %v8079, %v8386
      %v8388 = vpop.f32.mrf.mxu0
      %8389 = vmatprep.mubr.f32.mxu0 0.0
      %8390 = vmatmul.mubr.f32.gmra.mxu0 %v8169
      %v8391 = vpop.f32.mrf.mxu0
      %v8392 = vadd.f32 %v8079, %v8391
      %v8393 = vpop.f32.mrf.mxu0
      %8394 = vmatprep.mubr.f32.mxu0 0.0
      %8395 = vmatmul.mubr.f32.gmra.mxu0 %v8172
      %v8396 = vpop.f32.mrf.mxu0
      %v8397 = vadd.f32 %v8079, %v8396
      %v8398 = vpop.f32.mrf.mxu0
      %8399 = vmatprep.mubr.f32.mxu0 0.0
      %8400 = vmatmul.mubr.f32.gmra.mxu0 %v8175
      %v8401 = vpop.f32.mrf.mxu0
      %v8402 = vadd.f32 %v8079, %v8401
      %v8403 = vpop.f32.mrf.mxu0
      %8404 = vdwg.mxu0
      %v8405 = vadd.f32 %v3837, %v7883
      %v8406 = vadd.f32 %v3842, %v7888
      %v8407 = vadd.f32 %v3847, %v7893
      %v8408 = vadd.f32 %v3852, %v7898
      %v8409 = vadd.f32 %v3857, %v7903
      %v8410 = vadd.f32 %v3862, %v7908
      %v8411 = vadd.f32 %v3867, %v7913
      %v8412 = vadd.f32 %v3872, %v7918
      %v8413 = vadd.f32 %v3877, %v7923
      %v8414 = vadd.f32 %v3882, %v7928
      %v8415 = vadd.f32 %v3887, %v7933
      %v8416 = vadd.f32 %v3892, %v7938
      %v8417 = vadd.f32 %v3897, %v7943
      %v8418 = vadd.f32 %v3902, %v7948
      %v8419 = vadd.f32 %v3907, %v7953
      %v8420 = vadd.f32 %v3912, %v7958
      %v8421 = vadd.f32 %v3917, %v7963
      %v8422 = vadd.f32 %v3922, %v7968
      %v8423 = vadd.f32 %v3927, %v7973
      %v8424 = vadd.f32 %v3932, %v7978
      %v8425 = vadd.f32 %v3937, %v7983
      %v8426 = vadd.f32 %v3942, %v7988
      %v8427 = vadd.f32 %v3947, %v7993
      %v8428 = vadd.f32 %v3952, %v7998
      %v8429 = vadd.f32 %v3957, %v8003
      %v8430 = vadd.f32 %v3962, %v8008
      %v8431 = vadd.f32 %v3967, %v8013
      %v8432 = vadd.f32 %v3972, %v8018
      %v8433 = vadd.f32 %v3977, %v8023
      %v8434 = vadd.f32 %v3982, %v8028
      %v8435 = vadd.f32 %v3987, %v8033
      %v8436 = vadd.f32 %v3992, %v8038
      %v8437 = vadd.f32 %v8405, %v8247
      %v8438 = vadd.f32 %v8406, %v8252
      %v8439 = vadd.f32 %v8407, %v8257
      %v8440 = vadd.f32 %v8408, %v8262
      %v8441 = vadd.f32 %v8409, %v8267
      %v8442 = vadd.f32 %v8410, %v8272
      %v8443 = vadd.f32 %v8411, %v8277
      %v8444 = vadd.f32 %v8412, %v8282
      %v8445 = vadd.f32 %v8413, %v8287
      %v8446 = vadd.f32 %v8414, %v8292
      %v8447 = vadd.f32 %v8415, %v8297
      %v8448 = vadd.f32 %v8416, %v8302
      %v8449 = vadd.f32 %v8417, %v8307
      %v8450 = vadd.f32 %v8418, %v8312
      %v8451 = vadd.f32 %v8419, %v8317
      %v8452 = vadd.f32 %v8420, %v8322
      %v8453 = vadd.f32 %v8421, %v8327
      %v8454 = vadd.f32 %v8422, %v8332
      %v8455 = vadd.f32 %v8423, %v8337
      %v8456 = vadd.f32 %v8424, %v8342
      %v8457 = vadd.f32 %v8425, %v8347
      %v8458 = vadd.f32 %v8426, %v8352
      %v8459 = vadd.f32 %v8427, %v8357
      %v8460 = vadd.f32 %v8428, %v8362
      %v8461 = vadd.f32 %v8429, %v8367
      %v8462 = vadd.f32 %v8430, %v8372
      %v8463 = vadd.f32 %v8431, %v8377
      %v8464 = vadd.f32 %v8432, %v8382
      %v8465 = vadd.f32 %v8433, %v8387
      %v8466 = vadd.f32 %v8434, %v8392
      %v8467 = vadd.f32 %v8435, %v8397
      %v8468 = vadd.f32 %v8436, %v8402
      %v8469 = vmax.f32 %v8437, 0.0
      %v8470 = vmax.f32 %v8438, 0.0
      %v8471 = vmax.f32 %v8439, 0.0
      %v8472 = vmax.f32 %v8440, 0.0
      %v8473 = vmax.f32 %v8441, 0.0
      %v8474 = vmax.f32 %v8442, 0.0
      %v8475 = vmax.f32 %v8443, 0.0
      %v8476 = vmax.f32 %v8444, 0.0
      %v8477 = vmax.f32 %v8445, 0.0
      %v8478 = vmax.f32 %v8446, 0.0
      %v8479 = vmax.f32 %v8447, 0.0
      %v8480 = vmax.f32 %v8448, 0.0
      %v8481 = vmax.f32 %v8449, 0.0
      %v8482 = vmax.f32 %v8450, 0.0
      %v8483 = vmax.f32 %v8451, 0.0
      %v8484 = vmax.f32 %v8452, 0.0
      %v8485 = vmax.f32 %v8453, 0.0
      %v8486 = vmax.f32 %v8454, 0.0
      %v8487 = vmax.f32 %v8455, 0.0
      %v8488 = vmax.f32 %v8456, 0.0
      %v8489 = vmax.f32 %v8457, 0.0
      %v8490 = vmax.f32 %v8458, 0.0
      %v8491 = vmax.f32 %v8459, 0.0
      %v8492 = vmax.f32 %v8460, 0.0
      %v8493 = vmax.f32 %v8461, 0.0
      %v8494 = vmax.f32 %v8462, 0.0
      %v8495 = vmax.f32 %v8463, 0.0
      %v8496 = vmax.f32 %v8464, 0.0
      %v8497 = vmax.f32 %v8465, 0.0
      %v8498 = vmax.f32 %v8466, 0.0
      %v8499 = vmax.f32 %v8467, 0.0
      %v8500 = vmax.f32 %v8468, 0.0
      %8501 = vst.msk [vmem:[%s440] sm:$0xff] %vm616, %v8469
      %8502 = vst.msk [vmem:[%s440 + $0x8] sm:$0xff] %vm616, %v8470
      %8503 = vst.msk [vmem:[%s440 + $0x10] sm:$0xff] %vm616, %v8471
      %8504 = vst.msk [vmem:[%s440 + $0x18] sm:$0xff] %vm616, %v8472
      %8505 = vst.msk [vmem:[%s440 + $0x20] sm:$0xff] %vm616, %v8473
      %8506 = vst.msk [vmem:[%s440 + $0x28] sm:$0xff] %vm616, %v8474
      %8507 = vst.msk [vmem:[%s440 + $0x30] sm:$0xff] %vm616, %v8475
      %8508 = vst.msk [vmem:[%s440 + $0x38] sm:$0xff] %vm616, %v8476
      %8509 = vst.msk [vmem:[%s440 + $0x40] sm:$0xff] %vm616, %v8477
      %8510 = vst.msk [vmem:[%s440 + $0x48] sm:$0xff] %vm616, %v8478
      %8511 = vst.msk [vmem:[%s440 + $0x50] sm:$0xff] %vm616, %v8479
      %8512 = vst.msk [vmem:[%s440 + $0x58] sm:$0xff] %vm616, %v8480
      %8513 = vst.msk [vmem:[%s440 + $0x60] sm:$0xff] %vm616, %v8481
      %8514 = vst.msk [vmem:[%s440 + $0x68] sm:$0xff] %vm616, %v8482
      %8515 = vst.msk [vmem:[%s440 + $0x70] sm:$0xff] %vm616, %v8483
      %8516 = vst.msk [vmem:[%s440 + $0x78] sm:$0xff] %vm616, %v8484
      %8517 = vst.msk [vmem:[%s440 + $0x80] sm:$0xff] %vm616, %v8485
      %8518 = vst.msk [vmem:[%s440 + $0x88] sm:$0xff] %vm616, %v8486
      %8519 = vst.msk [vmem:[%s440 + $0x90] sm:$0xff] %vm616, %v8487
      %8520 = vst.msk [vmem:[%s440 + $0x98] sm:$0xff] %vm616, %v8488
      %8521 = vst.msk [vmem:[%s440 + $0xa0] sm:$0xff] %vm616, %v8489
      %8522 = vst.msk [vmem:[%s440 + $0xa8] sm:$0xff] %vm616, %v8490
      %8523 = vst.msk [vmem:[%s440 + $0xb0] sm:$0xff] %vm616, %v8491
      %8524 = vst.msk [vmem:[%s440 + $0xb8] sm:$0xff] %vm616, %v8492
      %8525 = vst.msk [vmem:[%s440 + $0xc0] sm:$0xff] %vm616, %v8493
      %8526 = vst.msk [vmem:[%s440 + $0xc8] sm:$0xff] %vm616, %v8494
      %8527 = vst.msk [vmem:[%s440 + $0xd0] sm:$0xff] %vm616, %v8495
      %8528 = vst.msk [vmem:[%s440 + $0xd8] sm:$0xff] %vm616, %v8496
      %8529 = vst.msk [vmem:[%s440 + $0xe0] sm:$0xff] %vm616, %v8497
      %8530 = vst.msk [vmem:[%s440 + $0xe8] sm:$0xff] %vm616, %v8498
      %8531 = vst.msk [vmem:[%s440 + $0xf0] sm:$0xff] %vm616, %v8499
      %8532 = vst.msk [vmem:[%s440 + $0xf8] sm:$0xff] %vm616, %v8500
      %p8533 = scmp.lt.s32.totalorder %s24, 1
      %s8534 = scalar_select %p8533, %s24, 1
      %s8535 = smul.addr %s8534, 32
      %s8536 = smul.addr %s8535, 8
      %s8537 = scalar_lea.vmem %s13, %s8536
      // Predicated region
      $region73: #{res_dilation_block_forward.1} parent=71 // pred_check
        %p8538 = pneg %p320
      $region74: #{res_dilation_block_forward.1} parent=71 // pred_check_branch
        %8540 = sbr.rel (%p8538) target = $region76
      $region75: #{res_dilation_block_forward.1} parent=71 // pred_region
        _
      $region76: #{res_dilation_block_forward.1} parent=71 // pred_fallthru
        _
    $region72: #{res_dilation_block_forward.1} parent=5 // pred_fallthru
      _
    %p8541 = scmp.le.s32.totalorder 2, %s19
    // Predicated region
    $region77: #{res_dilation_block_forward.1} parent=5 // pred_check
      %p8542 = pneg %p8541
    $region78: #{res_dilation_block_forward.1} parent=5 // pred_check_branch
      %8544 = sbr.rel (%p8542) target = $region80
    $region79: #{res_dilation_block_forward.1} parent=5 // pred_region
      %s8545 = ssub.s32 %s19, 2
      // Predicated region
      $region81: #{res_dilation_block_forward.1} parent=79 // pred_check
        %p8546 = pneg %p326
      $region82: #{res_dilation_block_forward.1} parent=79 // pred_check_branch
        %8548 = sbr.rel (%p8546) target = $region84
      $region83: #{res_dilation_block_forward.1} parent=79 // pred_region
        %p8549 = scmp.lt.s32.totalorder %s25, 1
        %s8550 = scalar_select %p8549, %s25, 1
        %s8551 = smul.addr %s8550, 32
        %s8552 = smul.addr %s8551, 8
        %s8553 = scalar_lea.vmem %s13, %s8552
      $region84: #{res_dilation_block_forward.1} parent=79 // pred_fallthru
        _
    $region80: #{res_dilation_block_forward.1} parent=5 // pred_fallthru
      _
  $region6: #{res_dilation_block_forward.1} parent=0 // loop_footer
    %s23 = sadd.s32 1, %s19
  $region7: #{res_dilation_block_forward.1} parent=0 // loop_footer_branch
    %18 = sbr.rel target = $region3
  $region8: #{res_dilation_block_forward.1} parent=0 // loop_exit
    _

</llo_original>
